<compile_context>
chip_gen: v6e
topology: v6e:2x2x1
jax: 0.10.0
libtpu: 0.0.40
codegen_flags: <defaults>
</compile_context>

<pallas_src>
import functools

import jax
import jax.numpy as jnp
from jax import lax
from jax.experimental import pallas as pl
from jax.experimental.pallas import tpu as pltpu


def _decoder_layer_kernel(*refs, n_head, d_k, d_v, eps, has_mask,
                          return_attention):
    it = iter(refs)
    dec_ref = next(it)
    enc_ref = next(it)
    bias_ref = next(it) if has_mask else None
    (wq1_ref, wk1_ref, wv1_ref, wo1_ref, g1_ref, b1_ref,
     wq2_ref, wk2_ref, wv2_ref, wo2_ref, g2_ref, b2_ref,
     w1_ref, fb1_ref, w2_ref, fb2_ref, g3_ref, b3_ref) = [next(it)
                                                          for _ in range(18)]
    out_ref = next(it)
    attn1_ref = next(it) if return_attention else None
    attn2_ref = next(it) if return_attention else None
    proj_ref = next(it)                      # VMEM scratch (Bb*Lq, d_model) f32

    Bb, Lq, d_model = dec_ref.shape
    Lk = enc_ref.shape[1]
    mm_dtype = wq1_ref.dtype                 # matmul operand dtype (bf16 here)

    # Fold the batch block into the row (sublane) dim for full-width matmuls.
    dec = dec_ref[...].reshape(Bb * Lq, d_model)            # f32
    enc = enc_ref[...].reshape(Bb * Lk, d_model)            # f32
    # Additive mask bias (0 / -1e9), computed once in the wrapper.
    attn_bias1 = bias_ref[...].astype(jnp.float32) if has_mask else None

    inv_scale = jnp.float32(1.0 / (d_k ** 0.5))             # compile-time const

    def layer_norm(x, gamma, beta):
        # single-pass mean / E[x^2]  (one cross-lane reduction fewer)
        mu = jnp.mean(x, axis=-1, keepdims=True)
        msq = jnp.mean(x * x, axis=-1, keepdims=True)
        var = msq - mu * mu
        return (x - mu) * lax.rsqrt(var + eps) * gamma + beta

    def mha(x_q, x_kv, len_q, len_kv, wq, wk, wv, wo, gamma, beta,
            bias, attn_out):
        # --- full-width projections (one matmul per tensor, bf16 in / f32 acc)
        Q = jnp.dot(x_q.astype(mm_dtype), wq,
                    preferred_element_type=jnp.float32).astype(mm_dtype)
        K = jnp.dot(x_kv.astype(mm_dtype), wk,
                    preferred_element_type=jnp.float32).astype(mm_dtype)
        V = jnp.dot(x_kv.astype(mm_dtype), wv,
                    preferred_element_type=jnp.float32).astype(mm_dtype)

        for b in range(Bb):                  # static, small batch block
            q_b = Q[b * len_q:(b + 1) * len_q, :]
            k_b = K[b * len_kv:(b + 1) * len_kv, :]
            v_b = V[b * len_kv:(b + 1) * len_kv, :]
            heads = []
            for h in range(n_head):          # static, small
                q_h = q_b[:, h * d_k:(h + 1) * d_k]
                k_h = k_b[:, h * d_k:(h + 1) * d_k]
                v_h = v_b[:, h * d_v:(h + 1) * d_v]
                # q_h @ k_h^T without explicit transpose; constant scale mul.
                s = lax.dot_general(q_h, k_h, (((1,), (1,)), ((), ())),
                                    preferred_element_type=jnp.float32) * inv_scale
                if bias is not None:
                    s = s + bias[b]          # additive mask bias (hoisted)
                m = jnp.max(s, axis=-1, keepdims=True)
                e = jnp.exp(s - m)
                p = e * pl.reciprocal(jnp.sum(e, axis=-1, keepdims=True),
                                      approx=True)
                if attn_out is not None:
                    attn_out[b, h] = p.astype(attn_out.dtype)
                heads.append(jnp.dot(p.astype(mm_dtype), v_h,
                                     preferred_element_type=jnp.float32))
            # concat-of-heads then ONE output projection (K = n_head*d_v)
            o_cat = jnp.concatenate(heads, axis=-1)           # (len_q, H*d_v)
            ctx_b = jnp.dot(o_cat.astype(mm_dtype), wo,
                            preferred_element_type=jnp.float32)
            proj_ref[pl.ds(b * len_q, len_q), :] = ctx_b      # direct VMEM store

        # dropout = identity (eval) -> residual -> LayerNorm   (all f32)
        return layer_norm(proj_ref[...] + x_q, gamma, beta)

    # --- sublayer 1: masked multi-head self-attention ------------------------
    x1 = mha(dec, dec, Lq, Lq,
             wq1_ref[...], wk1_ref[...], wv1_ref[...], wo1_ref[...],
             g1_ref[...], b1_ref[...], attn_bias1, attn1_ref)

    # --- sublayer 2: cross attention over encoder output (mask=None) ---------
    x2 = mha(x1, enc, Lq, Lk,
             wq2_ref[...], wk2_ref[...], wv2_ref[...], wo2_ref[...],
             g2_ref[...], b2_ref[...], None, attn2_ref)

    # --- sublayer 3: position-wise feed-forward -------------------------------
    hdn = jnp.maximum(
        jnp.dot(x2.astype(mm_dtype), w1_ref[...],
                preferred_element_type=jnp.float32) + fb1_ref[...], 0.0)
    ffn = jnp.dot(hdn.astype(mm_dtype), w2_ref[...],
                  preferred_element_type=jnp.float32) + fb2_ref[...]
    x3 = layer_norm(ffn + x2, g3_ref[...], b3_ref[...])

    out_ref[...] = x3.reshape(Bb, Lq, d_model).astype(out_ref.dtype)


def _select_block_b(B, Lq, Lk, d_model, d_ff, n_head, d_k, d_v, *,
                    weight_bytes, mm_bytes, vmem_budget, min_grid_steps,
                    return_attention, has_mask):
    """Largest batch block whose estimated VMEM footprint fits the budget,
    leaving at least min_grid_steps grid steps (set 2 on v7x for its 2 TCs)."""
    f32 = 4
    lkv = max(Lq, Lk)

    def estimate(bb):
        n = 2 * bb * (Lq + Lk) * d_model * f32           # dec/enc (dbl-buffered)
        n += 2 * bb * Lq * d_model * f32                  # output (dbl-buffered)
        if has_mask:
            n += 2 * bb * Lq * Lq * 2                     # bf16 additive bias
        if return_attention:
            n += 2 * bb * n_head * Lq * (Lq + Lk) * f32   # attention probs
        n += bb * Lq * d_model * f32                      # proj scratch
        n += bb * Lq * d_ff * f32                         # FFN hidden
        n += 3 * bb * lkv * n_head * max(d_k, d_v) * mm_bytes   # Q / K / V
        n += 2 * bb * Lq * lkv * f32                      # scores / probs
        n += 4 * bb * Lq * d_model * f32                  # live x1/x2 slabs
        return n + weight_bytes

    for bb in sorted((d for d in range(1, B + 1) if B % d == 0), reverse=True):
        if B // bb >= min_grid_steps and estimate(bb) <= vmem_budget:
            return bb
    return 1


def decoder_layer(dec_input, enc_output, params, mask=None, *,
                  n_head, d_k, d_v, eps=1e-6, block_b=None,
                  return_attention=False,
                  matmul_dtype=jnp.bfloat16,
                  min_grid_steps=1,                 # v5e/v6e: 1 TC; use 2 on v7x
                  vmem_budget_bytes=64 * 1024 * 1024):
    """Forward pass of DecoderLayer.

    Returns (output (B,Lq,d_model),
             masked_self_attention (B,n_head,Lq,Lq) or None,
             self_attention        (B,n_head,Lq,Lk) or None).
    """
    B, Lq, d_model = dec_input.shape
    Lk = enc_output.shape[1]
    d_ff = params["w1"].shape[1]
    has_mask = mask is not None

    weight_names = ["wq1", "wk1", "wv1", "wo1", "g1", "b1",
                    "wq2", "wk2", "wv2", "wo2", "g2", "b2",
                    "w1", "fb1", "w2", "fb2", "g3", "b3"]
    mm_names = {"wq1", "wk1", "wv1", "wo1", "wq2", "wk2", "wv2", "wo2",
                "w1", "w2"}
    # Matmul weights in bf16 at the boundary (half the DMA/VMEM); LN/bias f32.
    weights = [params[n].astype(matmul_dtype) if n in mm_names
               else params[n].astype(jnp.float32) for n in weight_names]
    weight_bytes = 2 * sum(int(w.size) * w.dtype.itemsize for w in weights)

    if block_b is None:
        block_b = _select_block_b(
            B, Lq, Lk, d_model, d_ff, n_head, d_k, d_v,
            weight_bytes=weight_bytes,
            mm_bytes=jnp.dtype(matmul_dtype).itemsize,
            vmem_budget=vmem_budget_bytes,
            min_grid_steps=min_grid_steps,
            return_attention=return_attention,
            has_mask=has_mask)
    assert B % block_b == 0
    grid = (B // block_b,)

    inputs = [dec_input.astype(jnp.float32), enc_output.astype(jnp.float32)]
    if has_mask:
        # PyTorch masked_fill(mask==0, -1e9) == additive bias here for any row
        # with at least one visible position (always true for causal masks).
        attn_bias = jnp.where(mask == 0, jnp.float32(-1e9),
                              jnp.float32(0.0)).astype(jnp.bfloat16)
        inputs.append(attn_bias)
    inputs += weights

    kernel = functools.partial(_decoder_layer_kernel,
                               n_head=n_head, d_k=d_k, d_v=d_v, eps=eps,
                               has_mask=has_mask,
                               return_attention=return_attention)

    def batched(shape):
        nd = len(shape)
        return pl.BlockSpec((block_b,) + tuple(shape[1:]),
                            lambda g, _nd=nd: (g,) + (0,) * (_nd - 1))

    def resident(arr, single_buffer):
        nd = arr.ndim
        if single_buffer:
            # Constant index_map -> second pipeline buffer is wasted VMEM.
            return pl.BlockSpec(arr.shape, lambda g, _nd=nd: (0,) * _nd,
                                pipeline_mode=pl.Buffered(1))
        return pl.BlockSpec(arr.shape, lambda g, _nd=nd: (0,) * _nd)

    out_shapes = [jax.ShapeDtypeStruct((B, Lq, d_model), dec_input.dtype)]
    out_specs = [batched((B, Lq, d_model))]
    if return_attention:
        out_shapes += [jax.ShapeDtypeStruct((B, n_head, Lq, Lq), jnp.float32),
                       jax.ShapeDtypeStruct((B, n_head, Lq, Lk), jnp.float32)]
        out_specs += [batched((B, n_head, Lq, Lq)),
                      batched((B, n_head, Lq, Lk))]

    def build(single_buffer_weights):
        in_specs = [batched(dec_input.shape), batched(enc_output.shape)]
        if has_mask:
            in_specs.append(batched((B, Lq, Lq)))
        in_specs += [resident(w, single_buffer_weights) for w in weights]
        return pl.pallas_call(
            kernel,
            out_shape=tuple(out_shapes),
            grid_spec=pltpu.PrefetchScalarGridSpec(
                num_scalar_prefetch=0,
                grid=grid,
                in_specs=in_specs,
                out_specs=out_specs,
                scratch_shapes=[pltpu.VMEM((block_b * Lq, d_model),
                                           jnp.float32)]),
            compiler_params=pltpu.CompilerParams(
                dimension_semantics=("parallel",),
                vmem_limit_bytes=vmem_budget_bytes),
        )

    try:
        results = build(True)(*inputs)
    except Exception:
        # pipeline_mode=pl.Buffered(1) unavailable on this jax version ->
        # fall back to default double-buffered resident weights.
        results = build(False)(*inputs)

    if return_attention:
        out, masked_self_attn, self_attn = results
        return out, masked_self_attn, self_attn
    return results[0], None, None


def init_params(key, d_model, d_ff, n_head, d_k, d_v):
    ks = jax.random.split(key, 12)
    s = 0.05

    def lin(k, fan_in, fan_out):
        return jax.random.normal(k, (fan_in, fan_out), jnp.float32) * s

    return {
        # masked self-attention MHA
        "wq1": lin(ks[0], d_model, n_head * d_k),
        "wk1": lin(ks[1], d_model, n_head * d_k),
        "wv1": lin(ks[2], d_model, n_head * d_v),
        "wo1": lin(ks[3], n_head * d_v, d_model),
        "g1": jnp.ones((1, d_model), jnp.float32),
        "b1": jnp.zeros((1, d_model), jnp.float32),
        # cross-attention MHA
        "wq2": lin(ks[4], d_model, n_head * d_k),
        "wk2": lin(ks[5], d_model, n_head * d_k),
        "wv2": lin(ks[6], d_model, n_head * d_v),
        "wo2": lin(ks[7], n_head * d_v, d_model),
        "g2": jnp.ones((1, d_model), jnp.float32),
        "b2": jnp.zeros((1, d_model), jnp.float32),
        # position-wise feed-forward (Linear has bias in PyTorch)
        "w1": lin(ks[8], d_model, d_ff),
        "fb1": jax.random.normal(ks[9], (1, d_ff), jnp.float32) * s,
        "w2": lin(ks[10], d_ff, d_model),
        "fb2": jax.random.normal(ks[11], (1, d_model), jnp.float32) * s,
        "g3": jnp.ones((1, d_model), jnp.float32),
        "b3": jnp.zeros((1, d_model), jnp.float32),
    }


if __name__ == "__main__":
    B, L_dec, L_enc, d_model, d_ff = 2, 8, 16, 32, 64
    n_head, d_k, d_v = 4, 8, 8

    key = jax.random.PRNGKey(0)
    kd, ke, kp = jax.random.split(key, 3)
    dec_input = jax.random.normal(kd, (B, L_dec, d_model), jnp.float32)
    enc_output = jax.random.normal(ke, (B, L_enc, d_model), jnp.float32)
    params = init_params(kp, d_model, d_ff, n_head, d_k, d_v)

    # pad/subsequent (causal) mask for the first sublayer: 1 = allowed
    causal = jnp.tril(jnp.ones((L_dec, L_dec), jnp.int32))
    mask = jnp.broadcast_to(causal, (B, L_dec, L_dec))

    out, mattn, cattn = decoder_layer(
        dec_input, enc_output, params, mask,
        n_head=n_head, d_k=d_k, d_v=d_v,
        return_attention=True)              # request probs only for validation
    jax.block_until_ready((out, mattn, cattn))

    # ---------------- pure-JAX reference (PyTorch semantics, eval mode) ------
    def ref(dec, enc, m, p):
        def mha(xq, xkv, wq, wk, wv, wo, g, be, msk):
            Bq, Lq_, _ = xq.shape
            Lk_ = xkv.shape[1]
            Q = (xq @ wq).reshape(Bq, Lq_, n_head, d_k).transpose(0, 2, 1, 3)
            K = (xkv @ wk).reshape(Bq, Lk_, n_head, d_k).transpose(0, 2, 1, 3)
            V = (xkv @ wv).reshape(Bq, Lk_, n_head, d_v).transpose(0, 2, 1, 3)
            s = jnp.einsum("bhqd,bhkd->bhqk", Q, K) / (d_k ** 0.5)
            if msk is not None:
                s = jnp.where(msk[:, None, :, :] == 0, -1e9, s)
            a = jax.nn.softmax(s, axis=-1)
            o = jnp.einsum("bhqk,bhkd->bhqd", a, V)
            o = o.transpose(0, 2, 1, 3).reshape(Bq, Lq_, n_head * d_v)
            x = o @ wo + xq
            mu = x.mean(-1, keepdims=True)
            var = ((x - mu) ** 2).mean(-1, keepdims=True)
            return (x - mu) / jnp.sqrt(var + 1e-6) * g[0] + be[0], a

        x1, a1 = mha(dec, dec, p["wq1"], p["wk1"], p["wv1"], p["wo1"],
                     p["g1"], p["b1"], m)
        x2, a2 = mha(x1, enc, p["wq2"], p["wk2"], p["wv2"], p["wo2"],
                     p["g2"], p["b2"], None)
        h = jnp.maximum(x2 @ p["w1"] + p["fb1"][0], 0.0)
        f = h @ p["w2"] + p["fb2"][0]
        x = f + x2
        mu = x.mean(-1, keepdims=True)
        var = ((x - mu) ** 2).mean(-1, keepdims=True)
        y = (x - mu) / jnp.sqrt(var + 1e-6) * p["g3"][0] + p["b3"][0]
        return y, a1, a2

    out_r, a1_r, a2_r = ref(dec_input, enc_output, mask, params)
    # bf16 matmul operands + approx reciprocal -> looser tolerances than f32.
    assert jnp.allclose(out, out_r, atol=5e-2, rtol=5e-2), \
        float(jnp.max(jnp.abs(out - out_r)))
    assert jnp.allclose(mattn, a1_r, atol=2e-2, rtol=5e-2), \
        float(jnp.max(jnp.abs(mattn - a1_r)))
    assert jnp.allclose(cattn, a2_r, atol=2e-2, rtol=5e-2), \
        float(jnp.max(jnp.abs(cattn - a2_r)))

    print("KERNEL_OK")
</pallas_src>

<mosaic_0001>
module attributes {stable_mosaic.version = 11 : i64} {
  func.func @_decoder_layer_kernel(%arg0: i32, %arg1: memref<2x8x32xf32, #tpu.memory_space<vmem>>, %arg2: memref<2x16x32xf32, #tpu.memory_space<vmem>>, %arg3: memref<2x8x8xbf16, #tpu.memory_space<vmem>>, %arg4: memref<32x32xbf16, #tpu.memory_space<vmem>>, %arg5: memref<32x32xbf16, #tpu.memory_space<vmem>>, %arg6: memref<32x32xbf16, #tpu.memory_space<vmem>>, %arg7: memref<32x32xbf16, #tpu.memory_space<vmem>>, %arg8: memref<1x32xf32, #tpu.memory_space<vmem>>, %arg9: memref<1x32xf32, #tpu.memory_space<vmem>>, %arg10: memref<32x32xbf16, #tpu.memory_space<vmem>>, %arg11: memref<32x32xbf16, #tpu.memory_space<vmem>>, %arg12: memref<32x32xbf16, #tpu.memory_space<vmem>>, %arg13: memref<32x32xbf16, #tpu.memory_space<vmem>>, %arg14: memref<1x32xf32, #tpu.memory_space<vmem>>, %arg15: memref<1x32xf32, #tpu.memory_space<vmem>>, %arg16: memref<32x64xbf16, #tpu.memory_space<vmem>>, %arg17: memref<1x64xf32, #tpu.memory_space<vmem>>, %arg18: memref<64x32xbf16, #tpu.memory_space<vmem>>, %arg19: memref<1x32xf32, #tpu.memory_space<vmem>>, %arg20: memref<1x32xf32, #tpu.memory_space<vmem>>, %arg21: memref<1x32xf32, #tpu.memory_space<vmem>>, %arg22: memref<2x8x32xf32, #tpu.memory_space<vmem>>, %arg23: memref<2x4x8x8xf32, #tpu.memory_space<vmem>>, %arg24: memref<2x4x8x16xf32, #tpu.memory_space<vmem>>, %arg25: memref<16x32xf32, #tpu.memory_space<vmem>>) attributes {dimension_semantics = [#tpu.dimension_semantics<parallel>], iteration_bounds = array<i64: 1>, scalar_prefetch = 0 : i64, scratch_operands = 1 : i64, tpu.core_type = #tpu.core_type<tc>, window_params = [{transform_indices = @transform_0, window_bounds = array<i64: 2, 8, 32>}, {transform_indices = @transform_1, window_bounds = array<i64: 2, 16, 32>}, {transform_indices = @transform_2, window_bounds = array<i64: 2, 8, 8>}, {pipeline_mode = #tpu.pipeline_mode<synchronous>, transform_indices = @transform_3, window_bounds = array<i64: 32, 32>}, {pipeline_mode = #tpu.pipeline_mode<synchronous>, transform_indices = @transform_4, window_bounds = array<i64: 32, 32>}, {pipeline_mode = #tpu.pipeline_mode<synchronous>, transform_indices = @transform_5, window_bounds = array<i64: 32, 32>}, {pipeline_mode = #tpu.pipeline_mode<synchronous>, transform_indices = @transform_6, window_bounds = array<i64: 32, 32>}, {pipeline_mode = #tpu.pipeline_mode<synchronous>, transform_indices = @transform_7, window_bounds = array<i64: 1, 32>}, {pipeline_mode = #tpu.pipeline_mode<synchronous>, transform_indices = @transform_8, window_bounds = array<i64: 1, 32>}, {pipeline_mode = #tpu.pipeline_mode<synchronous>, transform_indices = @transform_9, window_bounds = array<i64: 32, 32>}, {pipeline_mode = #tpu.pipeline_mode<synchronous>, transform_indices = @transform_10, window_bounds = array<i64: 32, 32>}, {pipeline_mode = #tpu.pipeline_mode<synchronous>, transform_indices = @transform_11, window_bounds = array<i64: 32, 32>}, {pipeline_mode = #tpu.pipeline_mode<synchronous>, transform_indices = @transform_12, window_bounds = array<i64: 32, 32>}, {pipeline_mode = #tpu.pipeline_mode<synchronous>, transform_indices = @transform_13, window_bounds = array<i64: 1, 32>}, {pipeline_mode = #tpu.pipeline_mode<synchronous>, transform_indices = @transform_14, window_bounds = array<i64: 1, 32>}, {pipeline_mode = #tpu.pipeline_mode<synchronous>, transform_indices = @transform_15, window_bounds = array<i64: 32, 64>}, {pipeline_mode = #tpu.pipeline_mode<synchronous>, transform_indices = @transform_16, window_bounds = array<i64: 1, 64>}, {pipeline_mode = #tpu.pipeline_mode<synchronous>, transform_indices = @transform_17, window_bounds = array<i64: 64, 32>}, {pipeline_mode = #tpu.pipeline_mode<synchronous>, transform_indices = @transform_18, window_bounds = array<i64: 1, 32>}, {pipeline_mode = #tpu.pipeline_mode<synchronous>, transform_indices = @transform_19, window_bounds = array<i64: 1, 32>}, {pipeline_mode = #tpu.pipeline_mode<synchronous>, transform_indices = @transform_20, window_bounds = array<i64: 1, 32>}, {transform_indices = @transform_21, window_bounds = array<i64: 2, 8, 32>}, {transform_indices = @transform_22, window_bounds = array<i64: 2, 4, 8, 8>}, {transform_indices = @transform_23, window_bounds = array<i64: 2, 4, 8, 16>}]} {
    %c0 = arith.constant 0 : index
    %c0_0 = arith.constant 0 : index
    %c0_1 = arith.constant 0 : index
    %0 = vector.load %arg1[%c0, %c0_0, %c0_1] : memref<2x8x32xf32, #tpu.memory_space<vmem>>, vector<2x8x32xf32>
    %1 = vector.shape_cast %0 : vector<2x8x32xf32> to vector<16x32xf32>
    %c0_2 = arith.constant 0 : index
    %c0_3 = arith.constant 0 : index
    %c0_4 = arith.constant 0 : index
    %2 = vector.load %arg2[%c0_2, %c0_3, %c0_4] : memref<2x16x32xf32, #tpu.memory_space<vmem>>, vector<2x16x32xf32>
    %3 = vector.shape_cast %2 : vector<2x16x32xf32> to vector<32x32xf32>
    %c0_5 = arith.constant 0 : index
    %c0_6 = arith.constant 0 : index
    %c0_7 = arith.constant 0 : index
    %4 = vector.load %arg3[%c0_5, %c0_6, %c0_7] : memref<2x8x8xbf16, #tpu.memory_space<vmem>>, vector<2x8x8xbf16>
    %5 = arith.extf %4 : vector<2x8x8xbf16> to vector<2x8x8xf32>
    %c0_8 = arith.constant 0 : index
    %c0_9 = arith.constant 0 : index
    %6 = vector.load %arg4[%c0_8, %c0_9] : memref<32x32xbf16, #tpu.memory_space<vmem>>, vector<32x32xbf16>
    %c0_10 = arith.constant 0 : index
    %c0_11 = arith.constant 0 : index
    %7 = vector.load %arg5[%c0_10, %c0_11] : memref<32x32xbf16, #tpu.memory_space<vmem>>, vector<32x32xbf16>
    %c0_12 = arith.constant 0 : index
    %c0_13 = arith.constant 0 : index
    %8 = vector.load %arg6[%c0_12, %c0_13] : memref<32x32xbf16, #tpu.memory_space<vmem>>, vector<32x32xbf16>
    %c0_14 = arith.constant 0 : index
    %c0_15 = arith.constant 0 : index
    %9 = vector.load %arg7[%c0_14, %c0_15] : memref<32x32xbf16, #tpu.memory_space<vmem>>, vector<32x32xbf16>
    %c0_16 = arith.constant 0 : index
    %c0_17 = arith.constant 0 : index
    %10 = vector.load %arg8[%c0_16, %c0_17] : memref<1x32xf32, #tpu.memory_space<vmem>>, vector<1x32xf32>
    %c0_18 = arith.constant 0 : index
    %c0_19 = arith.constant 0 : index
    %11 = vector.load %arg9[%c0_18, %c0_19] : memref<1x32xf32, #tpu.memory_space<vmem>>, vector<1x32xf32>
    %12 = arith.truncf %1 : vector<16x32xf32> to vector<16x32xbf16>
    %cst = arith.constant dense<0.000000e+00> : vector<16x32xf32>
    %13 = tpu.matmul %12, %6, %cst {dimension_numbers = #tpu.dot_dimension_numbers<[1], [0], [0], [1], [0, 0, 1, 1], [], []>} : vector<16x32xbf16>, vector<32x32xbf16>, vector<16x32xf32> -> vector<16x32xf32>
    %14 = arith.truncf %13 : vector<16x32xf32> to vector<16x32xbf16>
    %15 = arith.truncf %1 : vector<16x32xf32> to vector<16x32xbf16>
    %cst_20 = arith.constant dense<0.000000e+00> : vector<16x32xf32>
    %16 = tpu.matmul %15, %7, %cst_20 {dimension_numbers = #tpu.dot_dimension_numbers<[1], [0], [0], [1], [0, 0, 1, 1], [], []>} : vector<16x32xbf16>, vector<32x32xbf16>, vector<16x32xf32> -> vector<16x32xf32>
    %17 = arith.truncf %16 : vector<16x32xf32> to vector<16x32xbf16>
    %18 = arith.truncf %1 : vector<16x32xf32> to vector<16x32xbf16>
    %cst_21 = arith.constant dense<0.000000e+00> : vector<16x32xf32>
    %19 = tpu.matmul %18, %8, %cst_21 {dimension_numbers = #tpu.dot_dimension_numbers<[1], [0], [0], [1], [0, 0, 1, 1], [], []>} : vector<16x32xbf16>, vector<32x32xbf16>, vector<16x32xf32> -> vector<16x32xf32>
    %20 = arith.truncf %19 : vector<16x32xf32> to vector<16x32xbf16>
    %21 = vector.extract_strided_slice %14 {offsets = [0, 0], sizes = [8, 32], strides = [1, 1]} : vector<16x32xbf16> to vector<8x32xbf16>
    %22 = vector.extract_strided_slice %17 {offsets = [0, 0], sizes = [8, 32], strides = [1, 1]} : vector<16x32xbf16> to vector<8x32xbf16>
    %23 = vector.extract_strided_slice %20 {offsets = [0, 0], sizes = [8, 32], strides = [1, 1]} : vector<16x32xbf16> to vector<8x32xbf16>
    %24 = vector.extract_strided_slice %21 {offsets = [0, 0], sizes = [8, 8], strides = [1, 1]} : vector<8x32xbf16> to vector<8x8xbf16>
    %25 = vector.extract_strided_slice %22 {offsets = [0, 0], sizes = [8, 8], strides = [1, 1]} : vector<8x32xbf16> to vector<8x8xbf16>
    %26 = vector.extract_strided_slice %23 {offsets = [0, 0], sizes = [8, 8], strides = [1, 1]} : vector<8x32xbf16> to vector<8x8xbf16>
    %cst_22 = arith.constant dense<0.000000e+00> : vector<8x8xf32>
    %27 = tpu.matmul %24, %25, %cst_22 {dimension_numbers = #tpu.dot_dimension_numbers<[1], [1], [0], [0], [0, 0, 1, 0], [], []>} : vector<8x8xbf16>, vector<8x8xbf16>, vector<8x8xf32> -> vector<8x8xf32>
    %cst_23 = arith.constant 0.353553385 : f32
    %28 = vector.broadcast %cst_23 : f32 to vector<8x8xf32>
    %29 = arith.mulf %27, %28 : vector<8x8xf32>
    %30 = vector.extract_strided_slice %5 {offsets = [0, 0, 0], sizes = [1, 8, 8], strides = [1, 1, 1]} : vector<2x8x8xf32> to vector<1x8x8xf32>
    %31 = vector.shape_cast %30 : vector<1x8x8xf32> to vector<8x8xf32>
    %32 = arith.addf %29, %31 : vector<8x8xf32>
    %cst_24 = arith.constant dense<0xFF800000> : vector<8xf32>
    %33 = vector.multi_reduction <maximumf>, %32, %cst_24 [1] : vector<8x8xf32> to vector<8xf32>
    %34 = vector.shape_cast %33 : vector<8xf32> to vector<8x1xf32>
    %35 = vector.broadcast %34 : vector<8x1xf32> to vector<8x8xf32>
    %36 = arith.subf %32, %35 : vector<8x8xf32>
    %37 = math.exp %36 : vector<8x8xf32>
    %cst_25 = arith.constant dense<0.000000e+00> : vector<8xf32>
    %38 = vector.multi_reduction <add>, %37, %cst_25 [1] : vector<8x8xf32> to vector<8xf32>
    %39 = vector.shape_cast %38 : vector<8xf32> to vector<8x1xf32>
    %40 = tpu.reciprocal %39 {approx = true} : vector<8x1xf32> -> vector<8x1xf32>
    %41 = vector.broadcast %40 : vector<8x1xf32> to vector<8x8xf32>
    %42 = arith.mulf %37, %41 : vector<8x8xf32>
    %c0_26 = arith.constant 0 : index
    %c0_27 = arith.constant 0 : index
    %c0_28 = arith.constant 0 : index
    %c0_29 = arith.constant 0 : index
    %43 = vector.load %arg23[%c0_26, %c0_27, %c0_28, %c0_29] : memref<2x4x8x8xf32, #tpu.memory_space<vmem>>, vector<1x1x8x8xf32>
    %44 = vector.shape_cast %43 : vector<1x1x8x8xf32> to vector<8x8xf32>
    %45 = vector.shape_cast %42 : vector<8x8xf32> to vector<1x1x8x8xf32>
    tpu.vector_store %arg23[%c0_26, %c0_27, %c0_28, %c0_29], %45 {strides = array<i32>} : memref<2x4x8x8xf32, #tpu.memory_space<vmem>>, vector<1x1x8x8xf32>,
    %46 = arith.truncf %42 : vector<8x8xf32> to vector<8x8xbf16>
    %cst_30 = arith.constant dense<0.000000e+00> : vector<8x8xf32>
    %47 = tpu.matmul %46, %26, %cst_30 {dimension_numbers = #tpu.dot_dimension_numbers<[1], [0], [0], [1], [0, 0, 1, 1], [], []>} : vector<8x8xbf16>, vector<8x8xbf16>, vector<8x8xf32> -> vector<8x8xf32>
    %48 = vector.extract_strided_slice %21 {offsets = [0, 8], sizes = [8, 8], strides = [1, 1]} : vector<8x32xbf16> to vector<8x8xbf16>
    %49 = vector.extract_strided_slice %22 {offsets = [0, 8], sizes = [8, 8], strides = [1, 1]} : vector<8x32xbf16> to vector<8x8xbf16>
    %50 = vector.extract_strided_slice %23 {offsets = [0, 8], sizes = [8, 8], strides = [1, 1]} : vector<8x32xbf16> to vector<8x8xbf16>
    %cst_31 = arith.constant dense<0.000000e+00> : vector<8x8xf32>
    %51 = tpu.matmul %48, %49, %cst_31 {dimension_numbers = #tpu.dot_dimension_numbers<[1], [1], [0], [0], [0, 0, 1, 0], [], []>} : vector<8x8xbf16>, vector<8x8xbf16>, vector<8x8xf32> -> vector<8x8xf32>
    %cst_32 = arith.constant 0.353553385 : f32
    %52 = vector.broadcast %cst_32 : f32 to vector<8x8xf32>
    %53 = arith.mulf %51, %52 : vector<8x8xf32>
    %54 = vector.extract_strided_slice %5 {offsets = [0, 0, 0], sizes = [1, 8, 8], strides = [1, 1, 1]} : vector<2x8x8xf32> to vector<1x8x8xf32>
    %55 = vector.shape_cast %54 : vector<1x8x8xf32> to vector<8x8xf32>
    %56 = arith.addf %53, %55 : vector<8x8xf32>
    %cst_33 = arith.constant dense<0xFF800000> : vector<8xf32>
    %57 = vector.multi_reduction <maximumf>, %56, %cst_33 [1] : vector<8x8xf32> to vector<8xf32>
    %58 = vector.shape_cast %57 : vector<8xf32> to vector<8x1xf32>
    %59 = vector.broadcast %58 : vector<8x1xf32> to vector<8x8xf32>
    %60 = arith.subf %56, %59 : vector<8x8xf32>
    %61 = math.exp %60 : vector<8x8xf32>
    %cst_34 = arith.constant dense<0.000000e+00> : vector<8xf32>
    %62 = vector.multi_reduction <add>, %61, %cst_34 [1] : vector<8x8xf32> to vector<8xf32>
    %63 = vector.shape_cast %62 : vector<8xf32> to vector<8x1xf32>
    %64 = tpu.reciprocal %63 {approx = true} : vector<8x1xf32> -> vector<8x1xf32>
    %65 = vector.broadcast %64 : vector<8x1xf32> to vector<8x8xf32>
    %66 = arith.mulf %61, %65 : vector<8x8xf32>
    %c0_35 = arith.constant 0 : index
    %c1 = arith.constant 1 : index
    %c0_36 = arith.constant 0 : index
    %c0_37 = arith.constant 0 : index
    %67 = vector.load %arg23[%c0_35, %c1, %c0_36, %c0_37] : memref<2x4x8x8xf32, #tpu.memory_space<vmem>>, vector<1x1x8x8xf32>
    %68 = vector.shape_cast %67 : vector<1x1x8x8xf32> to vector<8x8xf32>
    %69 = vector.shape_cast %66 : vector<8x8xf32> to vector<1x1x8x8xf32>
    tpu.vector_store %arg23[%c0_35, %c1, %c0_36, %c0_37], %69 {strides = array<i32>} : memref<2x4x8x8xf32, #tpu.memory_space<vmem>>, vector<1x1x8x8xf32>,
    %70 = arith.truncf %66 : vector<8x8xf32> to vector<8x8xbf16>
    %cst_38 = arith.constant dense<0.000000e+00> : vector<8x8xf32>
    %71 = tpu.matmul %70, %50, %cst_38 {dimension_numbers = #tpu.dot_dimension_numbers<[1], [0], [0], [1], [0, 0, 1, 1], [], []>} : vector<8x8xbf16>, vector<8x8xbf16>, vector<8x8xf32> -> vector<8x8xf32>
    %72 = vector.extract_strided_slice %21 {offsets = [0, 16], sizes = [8, 8], strides = [1, 1]} : vector<8x32xbf16> to vector<8x8xbf16>
    %73 = vector.extract_strided_slice %22 {offsets = [0, 16], sizes = [8, 8], strides = [1, 1]} : vector<8x32xbf16> to vector<8x8xbf16>
    %74 = vector.extract_strided_slice %23 {offsets = [0, 16], sizes = [8, 8], strides = [1, 1]} : vector<8x32xbf16> to vector<8x8xbf16>
    %cst_39 = arith.constant dense<0.000000e+00> : vector<8x8xf32>
    %75 = tpu.matmul %72, %73, %cst_39 {dimension_numbers = #tpu.dot_dimension_numbers<[1], [1], [0], [0], [0, 0, 1, 0], [], []>} : vector<8x8xbf16>, vector<8x8xbf16>, vector<8x8xf32> -> vector<8x8xf32>
    %cst_40 = arith.constant 0.353553385 : f32
    %76 = vector.broadcast %cst_40 : f32 to vector<8x8xf32>
    %77 = arith.mulf %75, %76 : vector<8x8xf32>
    %78 = vector.extract_strided_slice %5 {offsets = [0, 0, 0], sizes = [1, 8, 8], strides = [1, 1, 1]} : vector<2x8x8xf32> to vector<1x8x8xf32>
    %79 = vector.shape_cast %78 : vector<1x8x8xf32> to vector<8x8xf32>
    %80 = arith.addf %77, %79 : vector<8x8xf32>
    %cst_41 = arith.constant dense<0xFF800000> : vector<8xf32>
    %81 = vector.multi_reduction <maximumf>, %80, %cst_41 [1] : vector<8x8xf32> to vector<8xf32>
    %82 = vector.shape_cast %81 : vector<8xf32> to vector<8x1xf32>
    %83 = vector.broadcast %82 : vector<8x1xf32> to vector<8x8xf32>
    %84 = arith.subf %80, %83 : vector<8x8xf32>
    %85 = math.exp %84 : vector<8x8xf32>
    %cst_42 = arith.constant dense<0.000000e+00> : vector<8xf32>
    %86 = vector.multi_reduction <add>, %85, %cst_42 [1] : vector<8x8xf32> to vector<8xf32>
    %87 = vector.shape_cast %86 : vector<8xf32> to vector<8x1xf32>
    %88 = tpu.reciprocal %87 {approx = true} : vector<8x1xf32> -> vector<8x1xf32>
    %89 = vector.broadcast %88 : vector<8x1xf32> to vector<8x8xf32>
    %90 = arith.mulf %85, %89 : vector<8x8xf32>
    %c0_43 = arith.constant 0 : index
    %c2 = arith.constant 2 : index
    %c0_44 = arith.constant 0 : index
    %c0_45 = arith.constant 0 : index
    %91 = vector.load %arg23[%c0_43, %c2, %c0_44, %c0_45] : memref<2x4x8x8xf32, #tpu.memory_space<vmem>>, vector<1x1x8x8xf32>
    %92 = vector.shape_cast %91 : vector<1x1x8x8xf32> to vector<8x8xf32>
    %93 = vector.shape_cast %90 : vector<8x8xf32> to vector<1x1x8x8xf32>
    tpu.vector_store %arg23[%c0_43, %c2, %c0_44, %c0_45], %93 {strides = array<i32>} : memref<2x4x8x8xf32, #tpu.memory_space<vmem>>, vector<1x1x8x8xf32>,
    %94 = arith.truncf %90 : vector<8x8xf32> to vector<8x8xbf16>
    %cst_46 = arith.constant dense<0.000000e+00> : vector<8x8xf32>
    %95 = tpu.matmul %94, %74, %cst_46 {dimension_numbers = #tpu.dot_dimension_numbers<[1], [0], [0], [1], [0, 0, 1, 1], [], []>} : vector<8x8xbf16>, vector<8x8xbf16>, vector<8x8xf32> -> vector<8x8xf32>
    %96 = vector.extract_strided_slice %21 {offsets = [0, 24], sizes = [8, 8], strides = [1, 1]} : vector<8x32xbf16> to vector<8x8xbf16>
    %97 = vector.extract_strided_slice %22 {offsets = [0, 24], sizes = [8, 8], strides = [1, 1]} : vector<8x32xbf16> to vector<8x8xbf16>
    %98 = vector.extract_strided_slice %23 {offsets = [0, 24], sizes = [8, 8], strides = [1, 1]} : vector<8x32xbf16> to vector<8x8xbf16>
    %cst_47 = arith.constant dense<0.000000e+00> : vector<8x8xf32>
    %99 = tpu.matmul %96, %97, %cst_47 {dimension_numbers = #tpu.dot_dimension_numbers<[1], [1], [0], [0], [0, 0, 1, 0], [], []>} : vector<8x8xbf16>, vector<8x8xbf16>, vector<8x8xf32> -> vector<8x8xf32>
    %cst_48 = arith.constant 0.353553385 : f32
    %100 = vector.broadcast %cst_48 : f32 to vector<8x8xf32>
    %101 = arith.mulf %99, %100 : vector<8x8xf32>
    %102 = vector.extract_strided_slice %5 {offsets = [0, 0, 0], sizes = [1, 8, 8], strides = [1, 1, 1]} : vector<2x8x8xf32> to vector<1x8x8xf32>
    %103 = vector.shape_cast %102 : vector<1x8x8xf32> to vector<8x8xf32>
    %104 = arith.addf %101, %103 : vector<8x8xf32>
    %cst_49 = arith.constant dense<0xFF800000> : vector<8xf32>
    %105 = vector.multi_reduction <maximumf>, %104, %cst_49 [1] : vector<8x8xf32> to vector<8xf32>
    %106 = vector.shape_cast %105 : vector<8xf32> to vector<8x1xf32>
    %107 = vector.broadcast %106 : vector<8x1xf32> to vector<8x8xf32>
    %108 = arith.subf %104, %107 : vector<8x8xf32>
    %109 = math.exp %108 : vector<8x8xf32>
    %cst_50 = arith.constant dense<0.000000e+00> : vector<8xf32>
    %110 = vector.multi_reduction <add>, %109, %cst_50 [1] : vector<8x8xf32> to vector<8xf32>
    %111 = vector.shape_cast %110 : vector<8xf32> to vector<8x1xf32>
    %112 = tpu.reciprocal %111 {approx = true} : vector<8x1xf32> -> vector<8x1xf32>
    %113 = vector.broadcast %112 : vector<8x1xf32> to vector<8x8xf32>
    %114 = arith.mulf %109, %113 : vector<8x8xf32>
    %c0_51 = arith.constant 0 : index
    %c3 = arith.constant 3 : index
    %c0_52 = arith.constant 0 : index
    %c0_53 = arith.constant 0 : index
    %115 = vector.load %arg23[%c0_51, %c3, %c0_52, %c0_53] : memref<2x4x8x8xf32, #tpu.memory_space<vmem>>, vector<1x1x8x8xf32>
    %116 = vector.shape_cast %115 : vector<1x1x8x8xf32> to vector<8x8xf32>
    %117 = vector.shape_cast %114 : vector<8x8xf32> to vector<1x1x8x8xf32>
    tpu.vector_store %arg23[%c0_51, %c3, %c0_52, %c0_53], %117 {strides = array<i32>} : memref<2x4x8x8xf32, #tpu.memory_space<vmem>>, vector<1x1x8x8xf32>,
    %118 = arith.truncf %114 : vector<8x8xf32> to vector<8x8xbf16>
    %cst_54 = arith.constant dense<0.000000e+00> : vector<8x8xf32>
    %119 = tpu.matmul %118, %98, %cst_54 {dimension_numbers = #tpu.dot_dimension_numbers<[1], [0], [0], [1], [0, 0, 1, 1], [], []>} : vector<8x8xbf16>, vector<8x8xbf16>, vector<8x8xf32> -> vector<8x8xf32>
    %120 = tpu.concatenate %47, %71, %95, %119 in 1 : vector<8x8xf32>, vector<8x8xf32>, vector<8x8xf32>, vector<8x8xf32> -> vector<8x32xf32>
    %121 = arith.truncf %120 : vector<8x32xf32> to vector<8x32xbf16>
    %cst_55 = arith.constant dense<0.000000e+00> : vector<8x32xf32>
    %122 = tpu.matmul %121, %9, %cst_55 {dimension_numbers = #tpu.dot_dimension_numbers<[1], [0], [0], [1], [0, 0, 1, 1], [], []>} : vector<8x32xbf16>, vector<32x32xbf16>, vector<8x32xf32> -> vector<8x32xf32>
    %c0_56 = arith.constant 0 : index
    %c0_57 = arith.constant 0 : index
    %123 = vector.load %arg25[%c0_56, %c0_57] : memref<16x32xf32, #tpu.memory_space<vmem>>, vector<8x32xf32>
    tpu.vector_store %arg25[%c0_56, %c0_57], %122 {strides = array<i32>} : memref<16x32xf32, #tpu.memory_space<vmem>>, vector<8x32xf32>,
    %124 = vector.extract_strided_slice %14 {offsets = [8, 0], sizes = [8, 32], strides = [1, 1]} : vector<16x32xbf16> to vector<8x32xbf16>
    %125 = vector.extract_strided_slice %17 {offsets = [8, 0], sizes = [8, 32], strides = [1, 1]} : vector<16x32xbf16> to vector<8x32xbf16>
    %126 = vector.extract_strided_slice %20 {offsets = [8, 0], sizes = [8, 32], strides = [1, 1]} : vector<16x32xbf16> to vector<8x32xbf16>
    %127 = vector.extract_strided_slice %124 {offsets = [0, 0], sizes = [8, 8], strides = [1, 1]} : vector<8x32xbf16> to vector<8x8xbf16>
    %128 = vector.extract_strided_slice %125 {offsets = [0, 0], sizes = [8, 8], strides = [1, 1]} : vector<8x32xbf16> to vector<8x8xbf16>
    %129 = vector.extract_strided_slice %126 {offsets = [0, 0], sizes = [8, 8], strides = [1, 1]} : vector<8x32xbf16> to vector<8x8xbf16>
    %cst_58 = arith.constant dense<0.000000e+00> : vector<8x8xf32>
    %130 = tpu.matmul %127, %128, %cst_58 {dimension_numbers = #tpu.dot_dimension_numbers<[1], [1], [0], [0], [0, 0, 1, 0], [], []>} : vector<8x8xbf16>, vector<8x8xbf16>, vector<8x8xf32> -> vector<8x8xf32>
    %cst_59 = arith.constant 0.353553385 : f32
    %131 = vector.broadcast %cst_59 : f32 to vector<8x8xf32>
    %132 = arith.mulf %130, %131 : vector<8x8xf32>
    %133 = vector.extract_strided_slice %5 {offsets = [1, 0, 0], sizes = [1, 8, 8], strides = [1, 1, 1]} : vector<2x8x8xf32> to vector<1x8x8xf32>
    %134 = vector.shape_cast %133 : vector<1x8x8xf32> to vector<8x8xf32>
    %135 = arith.addf %132, %134 : vector<8x8xf32>
    %cst_60 = arith.constant dense<0xFF800000> : vector<8xf32>
    %136 = vector.multi_reduction <maximumf>, %135, %cst_60 [1] : vector<8x8xf32> to vector<8xf32>
    %137 = vector.shape_cast %136 : vector<8xf32> to vector<8x1xf32>
    %138 = vector.broadcast %137 : vector<8x1xf32> to vector<8x8xf32>
    %139 = arith.subf %135, %138 : vector<8x8xf32>
    %140 = math.exp %139 : vector<8x8xf32>
    %cst_61 = arith.constant dense<0.000000e+00> : vector<8xf32>
    %141 = vector.multi_reduction <add>, %140, %cst_61 [1] : vector<8x8xf32> to vector<8xf32>
    %142 = vector.shape_cast %141 : vector<8xf32> to vector<8x1xf32>
    %143 = tpu.reciprocal %142 {approx = true} : vector<8x1xf32> -> vector<8x1xf32>
    %144 = vector.broadcast %143 : vector<8x1xf32> to vector<8x8xf32>
    %145 = arith.mulf %140, %144 : vector<8x8xf32>
    %c1_62 = arith.constant 1 : index
    %c0_63 = arith.constant 0 : index
    %c0_64 = arith.constant 0 : index
    %c0_65 = arith.constant 0 : index
    %146 = vector.load %arg23[%c1_62, %c0_63, %c0_64, %c0_65] : memref<2x4x8x8xf32, #tpu.memory_space<vmem>>, vector<1x1x8x8xf32>
    %147 = vector.shape_cast %146 : vector<1x1x8x8xf32> to vector<8x8xf32>
    %148 = vector.shape_cast %145 : vector<8x8xf32> to vector<1x1x8x8xf32>
    tpu.vector_store %arg23[%c1_62, %c0_63, %c0_64, %c0_65], %148 {strides = array<i32>} : memref<2x4x8x8xf32, #tpu.memory_space<vmem>>, vector<1x1x8x8xf32>,
    %149 = arith.truncf %145 : vector<8x8xf32> to vector<8x8xbf16>
    %cst_66 = arith.constant dense<0.000000e+00> : vector<8x8xf32>
    %150 = tpu.matmul %149, %129, %cst_66 {dimension_numbers = #tpu.dot_dimension_numbers<[1], [0], [0], [1], [0, 0, 1, 1], [], []>} : vector<8x8xbf16>, vector<8x8xbf16>, vector<8x8xf32> -> vector<8x8xf32>
    %151 = vector.extract_strided_slice %124 {offsets = [0, 8], sizes = [8, 8], strides = [1, 1]} : vector<8x32xbf16> to vector<8x8xbf16>
    %152 = vector.extract_strided_slice %125 {offsets = [0, 8], sizes = [8, 8], strides = [1, 1]} : vector<8x32xbf16> to vector<8x8xbf16>
    %153 = vector.extract_strided_slice %126 {offsets = [0, 8], sizes = [8, 8], strides = [1, 1]} : vector<8x32xbf16> to vector<8x8xbf16>
    %cst_67 = arith.constant dense<0.000000e+00> : vector<8x8xf32>
    %154 = tpu.matmul %151, %152, %cst_67 {dimension_numbers = #tpu.dot_dimension_numbers<[1], [1], [0], [0], [0, 0, 1, 0], [], []>} : vector<8x8xbf16>, vector<8x8xbf16>, vector<8x8xf32> -> vector<8x8xf32>
    %cst_68 = arith.constant 0.353553385 : f32
    %155 = vector.broadcast %cst_68 : f32 to vector<8x8xf32>
    %156 = arith.mulf %154, %155 : vector<8x8xf32>
    %157 = vector.extract_strided_slice %5 {offsets = [1, 0, 0], sizes = [1, 8, 8], strides = [1, 1, 1]} : vector<2x8x8xf32> to vector<1x8x8xf32>
    %158 = vector.shape_cast %157 : vector<1x8x8xf32> to vector<8x8xf32>
    %159 = arith.addf %156, %158 : vector<8x8xf32>
    %cst_69 = arith.constant dense<0xFF800000> : vector<8xf32>
    %160 = vector.multi_reduction <maximumf>, %159, %cst_69 [1] : vector<8x8xf32> to vector<8xf32>
    %161 = vector.shape_cast %160 : vector<8xf32> to vector<8x1xf32>
    %162 = vector.broadcast %161 : vector<8x1xf32> to vector<8x8xf32>
    %163 = arith.subf %159, %162 : vector<8x8xf32>
    %164 = math.exp %163 : vector<8x8xf32>
    %cst_70 = arith.constant dense<0.000000e+00> : vector<8xf32>
    %165 = vector.multi_reduction <add>, %164, %cst_70 [1] : vector<8x8xf32> to vector<8xf32>
    %166 = vector.shape_cast %165 : vector<8xf32> to vector<8x1xf32>
    %167 = tpu.reciprocal %166 {approx = true} : vector<8x1xf32> -> vector<8x1xf32>
    %168 = vector.broadcast %167 : vector<8x1xf32> to vector<8x8xf32>
    %169 = arith.mulf %164, %168 : vector<8x8xf32>
    %c1_71 = arith.constant 1 : index
    %c1_72 = arith.constant 1 : index
    %c0_73 = arith.constant 0 : index
    %c0_74 = arith.constant 0 : index
    %170 = vector.load %arg23[%c1_71, %c1_72, %c0_73, %c0_74] : memref<2x4x8x8xf32, #tpu.memory_space<vmem>>, vector<1x1x8x8xf32>
    %171 = vector.shape_cast %170 : vector<1x1x8x8xf32> to vector<8x8xf32>
    %172 = vector.shape_cast %169 : vector<8x8xf32> to vector<1x1x8x8xf32>
    tpu.vector_store %arg23[%c1_71, %c1_72, %c0_73, %c0_74], %172 {strides = array<i32>} : memref<2x4x8x8xf32, #tpu.memory_space<vmem>>, vector<1x1x8x8xf32>,
    %173 = arith.truncf %169 : vector<8x8xf32> to vector<8x8xbf16>
    %cst_75 = arith.constant dense<0.000000e+00> : vector<8x8xf32>
    %174 = tpu.matmul %173, %153, %cst_75 {dimension_numbers = #tpu.dot_dimension_numbers<[1], [0], [0], [1], [0, 0, 1, 1], [], []>} : vector<8x8xbf16>, vector<8x8xbf16>, vector<8x8xf32> -> vector<8x8xf32>
    %175 = vector.extract_strided_slice %124 {offsets = [0, 16], sizes = [8, 8], strides = [1, 1]} : vector<8x32xbf16> to vector<8x8xbf16>
    %176 = vector.extract_strided_slice %125 {offsets = [0, 16], sizes = [8, 8], strides = [1, 1]} : vector<8x32xbf16> to vector<8x8xbf16>
    %177 = vector.extract_strided_slice %126 {offsets = [0, 16], sizes = [8, 8], strides = [1, 1]} : vector<8x32xbf16> to vector<8x8xbf16>
    %cst_76 = arith.constant dense<0.000000e+00> : vector<8x8xf32>
    %178 = tpu.matmul %175, %176, %cst_76 {dimension_numbers = #tpu.dot_dimension_numbers<[1], [1], [0], [0], [0, 0, 1, 0], [], []>} : vector<8x8xbf16>, vector<8x8xbf16>, vector<8x8xf32> -> vector<8x8xf32>
    %cst_77 = arith.constant 0.353553385 : f32
    %179 = vector.broadcast %cst_77 : f32 to vector<8x8xf32>
    %180 = arith.mulf %178, %179 : vector<8x8xf32>
    %181 = vector.extract_strided_slice %5 {offsets = [1, 0, 0], sizes = [1, 8, 8], strides = [1, 1, 1]} : vector<2x8x8xf32> to vector<1x8x8xf32>
    %182 = vector.shape_cast %181 : vector<1x8x8xf32> to vector<8x8xf32>
    %183 = arith.addf %180, %182 : vector<8x8xf32>
    %cst_78 = arith.constant dense<0xFF800000> : vector<8xf32>
    %184 = vector.multi_reduction <maximumf>, %183, %cst_78 [1] : vector<8x8xf32> to vector<8xf32>
    %185 = vector.shape_cast %184 : vector<8xf32> to vector<8x1xf32>
    %186 = vector.broadcast %185 : vector<8x1xf32> to vector<8x8xf32>
    %187 = arith.subf %183, %186 : vector<8x8xf32>
    %188 = math.exp %187 : vector<8x8xf32>
    %cst_79 = arith.constant dense<0.000000e+00> : vector<8xf32>
    %189 = vector.multi_reduction <add>, %188, %cst_79 [1] : vector<8x8xf32> to vector<8xf32>
    %190 = vector.shape_cast %189 : vector<8xf32> to vector<8x1xf32>
    %191 = tpu.reciprocal %190 {approx = true} : vector<8x1xf32> -> vector<8x1xf32>
    %192 = vector.broadcast %191 : vector<8x1xf32> to vector<8x8xf32>
    %193 = arith.mulf %188, %192 : vector<8x8xf32>
    %c1_80 = arith.constant 1 : index
    %c2_81 = arith.constant 2 : index
    %c0_82 = arith.constant 0 : index
    %c0_83 = arith.constant 0 : index
    %194 = vector.load %arg23[%c1_80, %c2_81, %c0_82, %c0_83] : memref<2x4x8x8xf32, #tpu.memory_space<vmem>>, vector<1x1x8x8xf32>
    %195 = vector.shape_cast %194 : vector<1x1x8x8xf32> to vector<8x8xf32>
    %196 = vector.shape_cast %193 : vector<8x8xf32> to vector<1x1x8x8xf32>
    tpu.vector_store %arg23[%c1_80, %c2_81, %c0_82, %c0_83], %196 {strides = array<i32>} : memref<2x4x8x8xf32, #tpu.memory_space<vmem>>, vector<1x1x8x8xf32>,
    %197 = arith.truncf %193 : vector<8x8xf32> to vector<8x8xbf16>
    %cst_84 = arith.constant dense<0.000000e+00> : vector<8x8xf32>
    %198 = tpu.matmul %197, %177, %cst_84 {dimension_numbers = #tpu.dot_dimension_numbers<[1], [0], [0], [1], [0, 0, 1, 1], [], []>} : vector<8x8xbf16>, vector<8x8xbf16>, vector<8x8xf32> -> vector<8x8xf32>
    %199 = vector.extract_strided_slice %124 {offsets = [0, 24], sizes = [8, 8], strides = [1, 1]} : vector<8x32xbf16> to vector<8x8xbf16>
    %200 = vector.extract_strided_slice %125 {offsets = [0, 24], sizes = [8, 8], strides = [1, 1]} : vector<8x32xbf16> to vector<8x8xbf16>
    %201 = vector.extract_strided_slice %126 {offsets = [0, 24], sizes = [8, 8], strides = [1, 1]} : vector<8x32xbf16> to vector<8x8xbf16>
    %cst_85 = arith.constant dense<0.000000e+00> : vector<8x8xf32>
    %202 = tpu.matmul %199, %200, %cst_85 {dimension_numbers = #tpu.dot_dimension_numbers<[1], [1], [0], [0], [0, 0, 1, 0], [], []>} : vector<8x8xbf16>, vector<8x8xbf16>, vector<8x8xf32> -> vector<8x8xf32>
    %cst_86 = arith.constant 0.353553385 : f32
    %203 = vector.broadcast %cst_86 : f32 to vector<8x8xf32>
    %204 = arith.mulf %202, %203 : vector<8x8xf32>
    %205 = vector.extract_strided_slice %5 {offsets = [1, 0, 0], sizes = [1, 8, 8], strides = [1, 1, 1]} : vector<2x8x8xf32> to vector<1x8x8xf32>
    %206 = vector.shape_cast %205 : vector<1x8x8xf32> to vector<8x8xf32>
    %207 = arith.addf %204, %206 : vector<8x8xf32>
    %cst_87 = arith.constant dense<0xFF800000> : vector<8xf32>
    %208 = vector.multi_reduction <maximumf>, %207, %cst_87 [1] : vector<8x8xf32> to vector<8xf32>
    %209 = vector.shape_cast %208 : vector<8xf32> to vector<8x1xf32>
    %210 = vector.broadcast %209 : vector<8x1xf32> to vector<8x8xf32>
    %211 = arith.subf %207, %210 : vector<8x8xf32>
    %212 = math.exp %211 : vector<8x8xf32>
    %cst_88 = arith.constant dense<0.000000e+00> : vector<8xf32>
    %213 = vector.multi_reduction <add>, %212, %cst_88 [1] : vector<8x8xf32> to vector<8xf32>
    %214 = vector.shape_cast %213 : vector<8xf32> to vector<8x1xf32>
    %215 = tpu.reciprocal %214 {approx = true} : vector<8x1xf32> -> vector<8x1xf32>
    %216 = vector.broadcast %215 : vector<8x1xf32> to vector<8x8xf32>
    %217 = arith.mulf %212, %216 : vector<8x8xf32>
    %c1_89 = arith.constant 1 : index
    %c3_90 = arith.constant 3 : index
    %c0_91 = arith.constant 0 : index
    %c0_92 = arith.constant 0 : index
    %218 = vector.load %arg23[%c1_89, %c3_90, %c0_91, %c0_92] : memref<2x4x8x8xf32, #tpu.memory_space<vmem>>, vector<1x1x8x8xf32>
    %219 = vector.shape_cast %218 : vector<1x1x8x8xf32> to vector<8x8xf32>
    %220 = vector.shape_cast %217 : vector<8x8xf32> to vector<1x1x8x8xf32>
    tpu.vector_store %arg23[%c1_89, %c3_90, %c0_91, %c0_92], %220 {strides = array<i32>} : memref<2x4x8x8xf32, #tpu.memory_space<vmem>>, vector<1x1x8x8xf32>,
    %221 = arith.truncf %217 : vector<8x8xf32> to vector<8x8xbf16>
    %cst_93 = arith.constant dense<0.000000e+00> : vector<8x8xf32>
    %222 = tpu.matmul %221, %201, %cst_93 {dimension_numbers = #tpu.dot_dimension_numbers<[1], [0], [0], [1], [0, 0, 1, 1], [], []>} : vector<8x8xbf16>, vector<8x8xbf16>, vector<8x8xf32> -> vector<8x8xf32>
    %223 = tpu.concatenate %150, %174, %198, %222 in 1 : vector<8x8xf32>, vector<8x8xf32>, vector<8x8xf32>, vector<8x8xf32> -> vector<8x32xf32>
    %224 = arith.truncf %223 : vector<8x32xf32> to vector<8x32xbf16>
    %cst_94 = arith.constant dense<0.000000e+00> : vector<8x32xf32>
    %225 = tpu.matmul %224, %9, %cst_94 {dimension_numbers = #tpu.dot_dimension_numbers<[1], [0], [0], [1], [0, 0, 1, 1], [], []>} : vector<8x32xbf16>, vector<32x32xbf16>, vector<8x32xf32> -> vector<8x32xf32>
    %c8 = arith.constant 8 : index
    %c0_95 = arith.constant 0 : index
    %226 = vector.load %arg25[%c8, %c0_95] : memref<16x32xf32, #tpu.memory_space<vmem>>, vector<8x32xf32>
    tpu.vector_store %arg25[%c8, %c0_95], %225 {strides = array<i32>} : memref<16x32xf32, #tpu.memory_space<vmem>>, vector<8x32xf32>,
    %c0_96 = arith.constant 0 : index
    %c0_97 = arith.constant 0 : index
    %227 = vector.load %arg25[%c0_96, %c0_97] : memref<16x32xf32, #tpu.memory_space<vmem>>, vector<16x32xf32>
    %228 = arith.addf %227, %1 : vector<16x32xf32>
    %cst_98 = arith.constant dense<0.000000e+00> : vector<16xf32>
    %229 = vector.multi_reduction <add>, %228, %cst_98 [1] : vector<16x32xf32> to vector<16xf32>
    %230 = vector.shape_cast %229 : vector<16xf32> to vector<16x1xf32>
    %cst_99 = arith.constant 3.200000e+01 : f32
    %231 = vector.broadcast %cst_99 : f32 to vector<16x1xf32>
    %232 = arith.divf %230, %231 : vector<16x1xf32>
    %233 = arith.mulf %228, %228 : vector<16x32xf32>
    %cst_100 = arith.constant dense<0.000000e+00> : vector<16xf32>
    %234 = vector.multi_reduction <add>, %233, %cst_100 [1] : vector<16x32xf32> to vector<16xf32>
    %235 = vector.shape_cast %234 : vector<16xf32> to vector<16x1xf32>
    %cst_101 = arith.constant 3.200000e+01 : f32
    %236 = vector.broadcast %cst_101 : f32 to vector<16x1xf32>
    %237 = arith.divf %235, %236 : vector<16x1xf32>
    %238 = arith.mulf %232, %232 : vector<16x1xf32>
    %239 = arith.subf %237, %238 : vector<16x1xf32>
    %240 = vector.broadcast %232 : vector<16x1xf32> to vector<16x32xf32>
    %241 = arith.subf %228, %240 : vector<16x32xf32>
    %cst_102 = arith.constant 9.99999997E-7 : f32
    %242 = vector.broadcast %cst_102 : f32 to vector<16x1xf32>
    %243 = arith.addf %239, %242 : vector<16x1xf32>
    %244 = math.rsqrt %243 : vector<16x1xf32>
    %245 = vector.broadcast %244 : vector<16x1xf32> to vector<16x32xf32>
    %246 = arith.mulf %241, %245 : vector<16x32xf32>
    %247 = vector.broadcast %10 : vector<1x32xf32> to vector<16x32xf32>
    %248 = arith.mulf %246, %247 : vector<16x32xf32>
    %249 = vector.broadcast %11 : vector<1x32xf32> to vector<16x32xf32>
    %250 = arith.addf %248, %249 : vector<16x32xf32>
    %c0_103 = arith.constant 0 : index
    %c0_104 = arith.constant 0 : index
    %251 = vector.load %arg10[%c0_103, %c0_104] : memref<32x32xbf16, #tpu.memory_space<vmem>>, vector<32x32xbf16>
    %c0_105 = arith.constant 0 : index
    %c0_106 = arith.constant 0 : index
    %252 = vector.load %arg11[%c0_105, %c0_106] : memref<32x32xbf16, #tpu.memory_space<vmem>>, vector<32x32xbf16>
    %c0_107 = arith.constant 0 : index
    %c0_108 = arith.constant 0 : index
    %253 = vector.load %arg12[%c0_107, %c0_108] : memref<32x32xbf16, #tpu.memory_space<vmem>>, vector<32x32xbf16>
    %c0_109 = arith.constant 0 : index
    %c0_110 = arith.constant 0 : index
    %254 = vector.load %arg13[%c0_109, %c0_110] : memref<32x32xbf16, #tpu.memory_space<vmem>>, vector<32x32xbf16>
    %c0_111 = arith.constant 0 : index
    %c0_112 = arith.constant 0 : index
    %255 = vector.load %arg14[%c0_111, %c0_112] : memref<1x32xf32, #tpu.memory_space<vmem>>, vector<1x32xf32>
    %c0_113 = arith.constant 0 : index
    %c0_114 = arith.constant 0 : index
    %256 = vector.load %arg15[%c0_113, %c0_114] : memref<1x32xf32, #tpu.memory_space<vmem>>, vector<1x32xf32>
    %257 = arith.truncf %250 : vector<16x32xf32> to vector<16x32xbf16>
    %cst_115 = arith.constant dense<0.000000e+00> : vector<16x32xf32>
    %258 = tpu.matmul %257, %251, %cst_115 {dimension_numbers = #tpu.dot_dimension_numbers<[1], [0], [0], [1], [0, 0, 1, 1], [], []>} : vector<16x32xbf16>, vector<32x32xbf16>, vector<16x32xf32> -> vector<16x32xf32>
    %259 = arith.truncf %258 : vector<16x32xf32> to vector<16x32xbf16>
    %260 = arith.truncf %3 : vector<32x32xf32> to vector<32x32xbf16>
    %cst_116 = arith.constant dense<0.000000e+00> : vector<32x32xf32>
    %261 = tpu.matmul %260, %252, %cst_116 {dimension_numbers = #tpu.dot_dimension_numbers<[1], [0], [0], [1], [0, 0, 1, 1], [], []>} : vector<32x32xbf16>, vector<32x32xbf16>, vector<32x32xf32> -> vector<32x32xf32>
    %262 = arith.truncf %261 : vector<32x32xf32> to vector<32x32xbf16>
    %263 = arith.truncf %3 : vector<32x32xf32> to vector<32x32xbf16>
    %cst_117 = arith.constant dense<0.000000e+00> : vector<32x32xf32>
    %264 = tpu.matmul %263, %253, %cst_117 {dimension_numbers = #tpu.dot_dimension_numbers<[1], [0], [0], [1], [0, 0, 1, 1], [], []>} : vector<32x32xbf16>, vector<32x32xbf16>, vector<32x32xf32> -> vector<32x32xf32>
    %265 = arith.truncf %264 : vector<32x32xf32> to vector<32x32xbf16>
    %266 = vector.extract_strided_slice %259 {offsets = [0, 0], sizes = [8, 32], strides = [1, 1]} : vector<16x32xbf16> to vector<8x32xbf16>
    %267 = vector.extract_strided_slice %262 {offsets = [0, 0], sizes = [16, 32], strides = [1, 1]} : vector<32x32xbf16> to vector<16x32xbf16>
    %268 = vector.extract_strided_slice %265 {offsets = [0, 0], sizes = [16, 32], strides = [1, 1]} : vector<32x32xbf16> to vector<16x32xbf16>
    %269 = vector.extract_strided_slice %266 {offsets = [0, 0], sizes = [8, 8], strides = [1, 1]} : vector<8x32xbf16> to vector<8x8xbf16>
    %270 = vector.extract_strided_slice %267 {offsets = [0, 0], sizes = [16, 8], strides = [1, 1]} : vector<16x32xbf16> to vector<16x8xbf16>
    %271 = vector.extract_strided_slice %268 {offsets = [0, 0], sizes = [16, 8], strides = [1, 1]} : vector<16x32xbf16> to vector<16x8xbf16>
    %cst_118 = arith.constant dense<0.000000e+00> : vector<8x16xf32>
    %272 = tpu.matmul %269, %270, %cst_118 {dimension_numbers = #tpu.dot_dimension_numbers<[1], [1], [0], [0], [0, 0, 1, 0], [], []>} : vector<8x8xbf16>, vector<16x8xbf16>, vector<8x16xf32> -> vector<8x16xf32>
    %cst_119 = arith.constant 0.353553385 : f32
    %273 = vector.broadcast %cst_119 : f32 to vector<8x16xf32>
    %274 = arith.mulf %272, %273 : vector<8x16xf32>
    %cst_120 = arith.constant dense<0xFF800000> : vector<8xf32>
    %275 = vector.multi_reduction <maximumf>, %274, %cst_120 [1] : vector<8x16xf32> to vector<8xf32>
    %276 = vector.shape_cast %275 : vector<8xf32> to vector<8x1xf32>
    %277 = vector.broadcast %276 : vector<8x1xf32> to vector<8x16xf32>
    %278 = arith.subf %274, %277 : vector<8x16xf32>
    %279 = math.exp %278 : vector<8x16xf32>
    %cst_121 = arith.constant dense<0.000000e+00> : vector<8xf32>
    %280 = vector.multi_reduction <add>, %279, %cst_121 [1] : vector<8x16xf32> to vector<8xf32>
    %281 = vector.shape_cast %280 : vector<8xf32> to vector<8x1xf32>
    %282 = tpu.reciprocal %281 {approx = true} : vector<8x1xf32> -> vector<8x1xf32>
    %283 = vector.broadcast %282 : vector<8x1xf32> to vector<8x16xf32>
    %284 = arith.mulf %279, %283 : vector<8x16xf32>
    %c0_122 = arith.constant 0 : index
    %c0_123 = arith.constant 0 : index
    %c0_124 = arith.constant 0 : index
    %c0_125 = arith.constant 0 : index
    %285 = vector.load %arg24[%c0_122, %c0_123, %c0_124, %c0_125] : memref<2x4x8x16xf32, #tpu.memory_space<vmem>>, vector<1x1x8x16xf32>
    %286 = vector.shape_cast %285 : vector<1x1x8x16xf32> to vector<8x16xf32>
    %287 = vector.shape_cast %284 : vector<8x16xf32> to vector<1x1x8x16xf32>
    tpu.vector_store %arg24[%c0_122, %c0_123, %c0_124, %c0_125], %287 {strides = array<i32>} : memref<2x4x8x16xf32, #tpu.memory_space<vmem>>, vector<1x1x8x16xf32>,
    %288 = arith.truncf %284 : vector<8x16xf32> to vector<8x16xbf16>
    %cst_126 = arith.constant dense<0.000000e+00> : vector<8x8xf32>
    %289 = tpu.matmul %288, %271, %cst_126 {dimension_numbers = #tpu.dot_dimension_numbers<[1], [0], [0], [1], [0, 0, 1, 1], [], []>} : vector<8x16xbf16>, vector<16x8xbf16>, vector<8x8xf32> -> vector<8x8xf32>
    %290 = vector.extract_strided_slice %266 {offsets = [0, 8], sizes = [8, 8], strides = [1, 1]} : vector<8x32xbf16> to vector<8x8xbf16>
    %291 = vector.extract_strided_slice %267 {offsets = [0, 8], sizes = [16, 8], strides = [1, 1]} : vector<16x32xbf16> to vector<16x8xbf16>
    %292 = vector.extract_strided_slice %268 {offsets = [0, 8], sizes = [16, 8], strides = [1, 1]} : vector<16x32xbf16> to vector<16x8xbf16>
    %cst_127 = arith.constant dense<0.000000e+00> : vector<8x16xf32>
    %293 = tpu.matmul %290, %291, %cst_127 {dimension_numbers = #tpu.dot_dimension_numbers<[1], [1], [0], [0], [0, 0, 1, 0], [], []>} : vector<8x8xbf16>, vector<16x8xbf16>, vector<8x16xf32> -> vector<8x16xf32>
    %cst_128 = arith.constant 0.353553385 : f32
    %294 = vector.broadcast %cst_128 : f32 to vector<8x16xf32>
    %295 = arith.mulf %293, %294 : vector<8x16xf32>
    %cst_129 = arith.constant dense<0xFF800000> : vector<8xf32>
    %296 = vector.multi_reduction <maximumf>, %295, %cst_129 [1] : vector<8x16xf32> to vector<8xf32>
    %297 = vector.shape_cast %296 : vector<8xf32> to vector<8x1xf32>
    %298 = vector.broadcast %297 : vector<8x1xf32> to vector<8x16xf32>
    %299 = arith.subf %295, %298 : vector<8x16xf32>
    %300 = math.exp %299 : vector<8x16xf32>
    %cst_130 = arith.constant dense<0.000000e+00> : vector<8xf32>
    %301 = vector.multi_reduction <add>, %300, %cst_130 [1] : vector<8x16xf32> to vector<8xf32>
    %302 = vector.shape_cast %301 : vector<8xf32> to vector<8x1xf32>
    %303 = tpu.reciprocal %302 {approx = true} : vector<8x1xf32> -> vector<8x1xf32>
    %304 = vector.broadcast %303 : vector<8x1xf32> to vector<8x16xf32>
    %305 = arith.mulf %300, %304 : vector<8x16xf32>
    %c0_131 = arith.constant 0 : index
    %c1_132 = arith.constant 1 : index
    %c0_133 = arith.constant 0 : index
    %c0_134 = arith.constant 0 : index
    %306 = vector.load %arg24[%c0_131, %c1_132, %c0_133, %c0_134] : memref<2x4x8x16xf32, #tpu.memory_space<vmem>>, vector<1x1x8x16xf32>
    %307 = vector.shape_cast %306 : vector<1x1x8x16xf32> to vector<8x16xf32>
    %308 = vector.shape_cast %305 : vector<8x16xf32> to vector<1x1x8x16xf32>
    tpu.vector_store %arg24[%c0_131, %c1_132, %c0_133, %c0_134], %308 {strides = array<i32>} : memref<2x4x8x16xf32, #tpu.memory_space<vmem>>, vector<1x1x8x16xf32>,
    %309 = arith.truncf %305 : vector<8x16xf32> to vector<8x16xbf16>
    %cst_135 = arith.constant dense<0.000000e+00> : vector<8x8xf32>
    %310 = tpu.matmul %309, %292, %cst_135 {dimension_numbers = #tpu.dot_dimension_numbers<[1], [0], [0], [1], [0, 0, 1, 1], [], []>} : vector<8x16xbf16>, vector<16x8xbf16>, vector<8x8xf32> -> vector<8x8xf32>
    %311 = vector.extract_strided_slice %266 {offsets = [0, 16], sizes = [8, 8], strides = [1, 1]} : vector<8x32xbf16> to vector<8x8xbf16>
    %312 = vector.extract_strided_slice %267 {offsets = [0, 16], sizes = [16, 8], strides = [1, 1]} : vector<16x32xbf16> to vector<16x8xbf16>
    %313 = vector.extract_strided_slice %268 {offsets = [0, 16], sizes = [16, 8], strides = [1, 1]} : vector<16x32xbf16> to vector<16x8xbf16>
    %cst_136 = arith.constant dense<0.000000e+00> : vector<8x16xf32>
    %314 = tpu.matmul %311, %312, %cst_136 {dimension_numbers = #tpu.dot_dimension_numbers<[1], [1], [0], [0], [0, 0, 1, 0], [], []>} : vector<8x8xbf16>, vector<16x8xbf16>, vector<8x16xf32> -> vector<8x16xf32>
    %cst_137 = arith.constant 0.353553385 : f32
    %315 = vector.broadcast %cst_137 : f32 to vector<8x16xf32>
    %316 = arith.mulf %314, %315 : vector<8x16xf32>
    %cst_138 = arith.constant dense<0xFF800000> : vector<8xf32>
    %317 = vector.multi_reduction <maximumf>, %316, %cst_138 [1] : vector<8x16xf32> to vector<8xf32>
    %318 = vector.shape_cast %317 : vector<8xf32> to vector<8x1xf32>
    %319 = vector.broadcast %318 : vector<8x1xf32> to vector<8x16xf32>
    %320 = arith.subf %316, %319 : vector<8x16xf32>
    %321 = math.exp %320 : vector<8x16xf32>
    %cst_139 = arith.constant dense<0.000000e+00> : vector<8xf32>
    %322 = vector.multi_reduction <add>, %321, %cst_139 [1] : vector<8x16xf32> to vector<8xf32>
    %323 = vector.shape_cast %322 : vector<8xf32> to vector<8x1xf32>
    %324 = tpu.reciprocal %323 {approx = true} : vector<8x1xf32> -> vector<8x1xf32>
    %325 = vector.broadcast %324 : vector<8x1xf32> to vector<8x16xf32>
    %326 = arith.mulf %321, %325 : vector<8x16xf32>
    %c0_140 = arith.constant 0 : index
    %c2_141 = arith.constant 2 : index
    %c0_142 = arith.constant 0 : index
    %c0_143 = arith.constant 0 : index
    %327 = vector.load %arg24[%c0_140, %c2_141, %c0_142, %c0_143] : memref<2x4x8x16xf32, #tpu.memory_space<vmem>>, vector<1x1x8x16xf32>
    %328 = vector.shape_cast %327 : vector<1x1x8x16xf32> to vector<8x16xf32>
    %329 = vector.shape_cast %326 : vector<8x16xf32> to vector<1x1x8x16xf32>
    tpu.vector_store %arg24[%c0_140, %c2_141, %c0_142, %c0_143], %329 {strides = array<i32>} : memref<2x4x8x16xf32, #tpu.memory_space<vmem>>, vector<1x1x8x16xf32>,
    %330 = arith.truncf %326 : vector<8x16xf32> to vector<8x16xbf16>
    %cst_144 = arith.constant dense<0.000000e+00> : vector<8x8xf32>
    %331 = tpu.matmul %330, %313, %cst_144 {dimension_numbers = #tpu.dot_dimension_numbers<[1], [0], [0], [1], [0, 0, 1, 1], [], []>} : vector<8x16xbf16>, vector<16x8xbf16>, vector<8x8xf32> -> vector<8x8xf32>
    %332 = vector.extract_strided_slice %266 {offsets = [0, 24], sizes = [8, 8], strides = [1, 1]} : vector<8x32xbf16> to vector<8x8xbf16>
    %333 = vector.extract_strided_slice %267 {offsets = [0, 24], sizes = [16, 8], strides = [1, 1]} : vector<16x32xbf16> to vector<16x8xbf16>
    %334 = vector.extract_strided_slice %268 {offsets = [0, 24], sizes = [16, 8], strides = [1, 1]} : vector<16x32xbf16> to vector<16x8xbf16>
    %cst_145 = arith.constant dense<0.000000e+00> : vector<8x16xf32>
    %335 = tpu.matmul %332, %333, %cst_145 {dimension_numbers = #tpu.dot_dimension_numbers<[1], [1], [0], [0], [0, 0, 1, 0], [], []>} : vector<8x8xbf16>, vector<16x8xbf16>, vector<8x16xf32> -> vector<8x16xf32>
    %cst_146 = arith.constant 0.353553385 : f32
    %336 = vector.broadcast %cst_146 : f32 to vector<8x16xf32>
    %337 = arith.mulf %335, %336 : vector<8x16xf32>
    %cst_147 = arith.constant dense<0xFF800000> : vector<8xf32>
    %338 = vector.multi_reduction <maximumf>, %337, %cst_147 [1] : vector<8x16xf32> to vector<8xf32>
    %339 = vector.shape_cast %338 : vector<8xf32> to vector<8x1xf32>
    %340 = vector.broadcast %339 : vector<8x1xf32> to vector<8x16xf32>
    %341 = arith.subf %337, %340 : vector<8x16xf32>
    %342 = math.exp %341 : vector<8x16xf32>
    %cst_148 = arith.constant dense<0.000000e+00> : vector<8xf32>
    %343 = vector.multi_reduction <add>, %342, %cst_148 [1] : vector<8x16xf32> to vector<8xf32>
    %344 = vector.shape_cast %343 : vector<8xf32> to vector<8x1xf32>
    %345 = tpu.reciprocal %344 {approx = true} : vector<8x1xf32> -> vector<8x1xf32>
    %346 = vector.broadcast %345 : vector<8x1xf32> to vector<8x16xf32>
    %347 = arith.mulf %342, %346 : vector<8x16xf32>
    %c0_149 = arith.constant 0 : index
    %c3_150 = arith.constant 3 : index
    %c0_151 = arith.constant 0 : index
    %c0_152 = arith.constant 0 : index
    %348 = vector.load %arg24[%c0_149, %c3_150, %c0_151, %c0_152] : memref<2x4x8x16xf32, #tpu.memory_space<vmem>>, vector<1x1x8x16xf32>
    %349 = vector.shape_cast %348 : vector<1x1x8x16xf32> to vector<8x16xf32>
    %350 = vector.shape_cast %347 : vector<8x16xf32> to vector<1x1x8x16xf32>
    tpu.vector_store %arg24[%c0_149, %c3_150, %c0_151, %c0_152], %350 {strides = array<i32>} : memref<2x4x8x16xf32, #tpu.memory_space<vmem>>, vector<1x1x8x16xf32>,
    %351 = arith.truncf %347 : vector<8x16xf32> to vector<8x16xbf16>
    %cst_153 = arith.constant dense<0.000000e+00> : vector<8x8xf32>
    %352 = tpu.matmul %351, %334, %cst_153 {dimension_numbers = #tpu.dot_dimension_numbers<[1], [0], [0], [1], [0, 0, 1, 1], [], []>} : vector<8x16xbf16>, vector<16x8xbf16>, vector<8x8xf32> -> vector<8x8xf32>
    %353 = tpu.concatenate %289, %310, %331, %352 in 1 : vector<8x8xf32>, vector<8x8xf32>, vector<8x8xf32>, vector<8x8xf32> -> vector<8x32xf32>
    %354 = arith.truncf %353 : vector<8x32xf32> to vector<8x32xbf16>
    %cst_154 = arith.constant dense<0.000000e+00> : vector<8x32xf32>
    %355 = tpu.matmul %354, %254, %cst_154 {dimension_numbers = #tpu.dot_dimension_numbers<[1], [0], [0], [1], [0, 0, 1, 1], [], []>} : vector<8x32xbf16>, vector<32x32xbf16>, vector<8x32xf32> -> vector<8x32xf32>
    %c0_155 = arith.constant 0 : index
    %c0_156 = arith.constant 0 : index
    %356 = vector.load %arg25[%c0_155, %c0_156] : memref<16x32xf32, #tpu.memory_space<vmem>>, vector<8x32xf32>
    tpu.vector_store %arg25[%c0_155, %c0_156], %355 {strides = array<i32>} : memref<16x32xf32, #tpu.memory_space<vmem>>, vector<8x32xf32>,
    %357 = vector.extract_strided_slice %259 {offsets = [8, 0], sizes = [8, 32], strides = [1, 1]} : vector<16x32xbf16> to vector<8x32xbf16>
    %358 = vector.extract_strided_slice %262 {offsets = [16, 0], sizes = [16, 32], strides = [1, 1]} : vector<32x32xbf16> to vector<16x32xbf16>
    %359 = vector.extract_strided_slice %265 {offsets = [16, 0], sizes = [16, 32], strides = [1, 1]} : vector<32x32xbf16> to vector<16x32xbf16>
    %360 = vector.extract_strided_slice %357 {offsets = [0, 0], sizes = [8, 8], strides = [1, 1]} : vector<8x32xbf16> to vector<8x8xbf16>
    %361 = vector.extract_strided_slice %358 {offsets = [0, 0], sizes = [16, 8], strides = [1, 1]} : vector<16x32xbf16> to vector<16x8xbf16>
    %362 = vector.extract_strided_slice %359 {offsets = [0, 0], sizes = [16, 8], strides = [1, 1]} : vector<16x32xbf16> to vector<16x8xbf16>
    %cst_157 = arith.constant dense<0.000000e+00> : vector<8x16xf32>
    %363 = tpu.matmul %360, %361, %cst_157 {dimension_numbers = #tpu.dot_dimension_numbers<[1], [1], [0], [0], [0, 0, 1, 0], [], []>} : vector<8x8xbf16>, vector<16x8xbf16>, vector<8x16xf32> -> vector<8x16xf32>
    %cst_158 = arith.constant 0.353553385 : f32
    %364 = vector.broadcast %cst_158 : f32 to vector<8x16xf32>
    %365 = arith.mulf %363, %364 : vector<8x16xf32>
    %cst_159 = arith.constant dense<0xFF800000> : vector<8xf32>
    %366 = vector.multi_reduction <maximumf>, %365, %cst_159 [1] : vector<8x16xf32> to vector<8xf32>
    %367 = vector.shape_cast %366 : vector<8xf32> to vector<8x1xf32>
    %368 = vector.broadcast %367 : vector<8x1xf32> to vector<8x16xf32>
    %369 = arith.subf %365, %368 : vector<8x16xf32>
    %370 = math.exp %369 : vector<8x16xf32>
    %cst_160 = arith.constant dense<0.000000e+00> : vector<8xf32>
    %371 = vector.multi_reduction <add>, %370, %cst_160 [1] : vector<8x16xf32> to vector<8xf32>
    %372 = vector.shape_cast %371 : vector<8xf32> to vector<8x1xf32>
    %373 = tpu.reciprocal %372 {approx = true} : vector<8x1xf32> -> vector<8x1xf32>
    %374 = vector.broadcast %373 : vector<8x1xf32> to vector<8x16xf32>
    %375 = arith.mulf %370, %374 : vector<8x16xf32>
    %c1_161 = arith.constant 1 : index
    %c0_162 = arith.constant 0 : index
    %c0_163 = arith.constant 0 : index
    %c0_164 = arith.constant 0 : index
    %376 = vector.load %arg24[%c1_161, %c0_162, %c0_163, %c0_164] : memref<2x4x8x16xf32, #tpu.memory_space<vmem>>, vector<1x1x8x16xf32>
    %377 = vector.shape_cast %376 : vector<1x1x8x16xf32> to vector<8x16xf32>
    %378 = vector.shape_cast %375 : vector<8x16xf32> to vector<1x1x8x16xf32>
    tpu.vector_store %arg24[%c1_161, %c0_162, %c0_163, %c0_164], %378 {strides = array<i32>} : memref<2x4x8x16xf32, #tpu.memory_space<vmem>>, vector<1x1x8x16xf32>,
    %379 = arith.truncf %375 : vector<8x16xf32> to vector<8x16xbf16>
    %cst_165 = arith.constant dense<0.000000e+00> : vector<8x8xf32>
    %380 = tpu.matmul %379, %362, %cst_165 {dimension_numbers = #tpu.dot_dimension_numbers<[1], [0], [0], [1], [0, 0, 1, 1], [], []>} : vector<8x16xbf16>, vector<16x8xbf16>, vector<8x8xf32> -> vector<8x8xf32>
    %381 = vector.extract_strided_slice %357 {offsets = [0, 8], sizes = [8, 8], strides = [1, 1]} : vector<8x32xbf16> to vector<8x8xbf16>
    %382 = vector.extract_strided_slice %358 {offsets = [0, 8], sizes = [16, 8], strides = [1, 1]} : vector<16x32xbf16> to vector<16x8xbf16>
    %383 = vector.extract_strided_slice %359 {offsets = [0, 8], sizes = [16, 8], strides = [1, 1]} : vector<16x32xbf16> to vector<16x8xbf16>
    %cst_166 = arith.constant dense<0.000000e+00> : vector<8x16xf32>
    %384 = tpu.matmul %381, %382, %cst_166 {dimension_numbers = #tpu.dot_dimension_numbers<[1], [1], [0], [0], [0, 0, 1, 0], [], []>} : vector<8x8xbf16>, vector<16x8xbf16>, vector<8x16xf32> -> vector<8x16xf32>
    %cst_167 = arith.constant 0.353553385 : f32
    %385 = vector.broadcast %cst_167 : f32 to vector<8x16xf32>
    %386 = arith.mulf %384, %385 : vector<8x16xf32>
    %cst_168 = arith.constant dense<0xFF800000> : vector<8xf32>
    %387 = vector.multi_reduction <maximumf>, %386, %cst_168 [1] : vector<8x16xf32> to vector<8xf32>
    %388 = vector.shape_cast %387 : vector<8xf32> to vector<8x1xf32>
    %389 = vector.broadcast %388 : vector<8x1xf32> to vector<8x16xf32>
    %390 = arith.subf %386, %389 : vector<8x16xf32>
    %391 = math.exp %390 : vector<8x16xf32>
    %cst_169 = arith.constant dense<0.000000e+00> : vector<8xf32>
    %392 = vector.multi_reduction <add>, %391, %cst_169 [1] : vector<8x16xf32> to vector<8xf32>
    %393 = vector.shape_cast %392 : vector<8xf32> to vector<8x1xf32>
    %394 = tpu.reciprocal %393 {approx = true} : vector<8x1xf32> -> vector<8x1xf32>
    %395 = vector.broadcast %394 : vector<8x1xf32> to vector<8x16xf32>
    %396 = arith.mulf %391, %395 : vector<8x16xf32>
    %c1_170 = arith.constant 1 : index
    %c1_171 = arith.constant 1 : index
    %c0_172 = arith.constant 0 : index
    %c0_173 = arith.constant 0 : index
    %397 = vector.load %arg24[%c1_170, %c1_171, %c0_172, %c0_173] : memref<2x4x8x16xf32, #tpu.memory_space<vmem>>, vector<1x1x8x16xf32>
    %398 = vector.shape_cast %397 : vector<1x1x8x16xf32> to vector<8x16xf32>
    %399 = vector.shape_cast %396 : vector<8x16xf32> to vector<1x1x8x16xf32>
    tpu.vector_store %arg24[%c1_170, %c1_171, %c0_172, %c0_173], %399 {strides = array<i32>} : memref<2x4x8x16xf32, #tpu.memory_space<vmem>>, vector<1x1x8x16xf32>,
    %400 = arith.truncf %396 : vector<8x16xf32> to vector<8x16xbf16>
    %cst_174 = arith.constant dense<0.000000e+00> : vector<8x8xf32>
    %401 = tpu.matmul %400, %383, %cst_174 {dimension_numbers = #tpu.dot_dimension_numbers<[1], [0], [0], [1], [0, 0, 1, 1], [], []>} : vector<8x16xbf16>, vector<16x8xbf16>, vector<8x8xf32> -> vector<8x8xf32>
    %402 = vector.extract_strided_slice %357 {offsets = [0, 16], sizes = [8, 8], strides = [1, 1]} : vector<8x32xbf16> to vector<8x8xbf16>
    %403 = vector.extract_strided_slice %358 {offsets = [0, 16], sizes = [16, 8], strides = [1, 1]} : vector<16x32xbf16> to vector<16x8xbf16>
    %404 = vector.extract_strided_slice %359 {offsets = [0, 16], sizes = [16, 8], strides = [1, 1]} : vector<16x32xbf16> to vector<16x8xbf16>
    %cst_175 = arith.constant dense<0.000000e+00> : vector<8x16xf32>
    %405 = tpu.matmul %402, %403, %cst_175 {dimension_numbers = #tpu.dot_dimension_numbers<[1], [1], [0], [0], [0, 0, 1, 0], [], []>} : vector<8x8xbf16>, vector<16x8xbf16>, vector<8x16xf32> -> vector<8x16xf32>
    %cst_176 = arith.constant 0.353553385 : f32
    %406 = vector.broadcast %cst_176 : f32 to vector<8x16xf32>
    %407 = arith.mulf %405, %406 : vector<8x16xf32>
    %cst_177 = arith.constant dense<0xFF800000> : vector<8xf32>
    %408 = vector.multi_reduction <maximumf>, %407, %cst_177 [1] : vector<8x16xf32> to vector<8xf32>
    %409 = vector.shape_cast %408 : vector<8xf32> to vector<8x1xf32>
    %410 = vector.broadcast %409 : vector<8x1xf32> to vector<8x16xf32>
    %411 = arith.subf %407, %410 : vector<8x16xf32>
    %412 = math.exp %411 : vector<8x16xf32>
    %cst_178 = arith.constant dense<0.000000e+00> : vector<8xf32>
    %413 = vector.multi_reduction <add>, %412, %cst_178 [1] : vector<8x16xf32> to vector<8xf32>
    %414 = vector.shape_cast %413 : vector<8xf32> to vector<8x1xf32>
    %415 = tpu.reciprocal %414 {approx = true} : vector<8x1xf32> -> vector<8x1xf32>
    %416 = vector.broadcast %415 : vector<8x1xf32> to vector<8x16xf32>
    %417 = arith.mulf %412, %416 : vector<8x16xf32>
    %c1_179 = arith.constant 1 : index
    %c2_180 = arith.constant 2 : index
    %c0_181 = arith.constant 0 : index
    %c0_182 = arith.constant 0 : index
    %418 = vector.load %arg24[%c1_179, %c2_180, %c0_181, %c0_182] : memref<2x4x8x16xf32, #tpu.memory_space<vmem>>, vector<1x1x8x16xf32>
    %419 = vector.shape_cast %418 : vector<1x1x8x16xf32> to vector<8x16xf32>
    %420 = vector.shape_cast %417 : vector<8x16xf32> to vector<1x1x8x16xf32>
    tpu.vector_store %arg24[%c1_179, %c2_180, %c0_181, %c0_182], %420 {strides = array<i32>} : memref<2x4x8x16xf32, #tpu.memory_space<vmem>>, vector<1x1x8x16xf32>,
    %421 = arith.truncf %417 : vector<8x16xf32> to vector<8x16xbf16>
    %cst_183 = arith.constant dense<0.000000e+00> : vector<8x8xf32>
    %422 = tpu.matmul %421, %404, %cst_183 {dimension_numbers = #tpu.dot_dimension_numbers<[1], [0], [0], [1], [0, 0, 1, 1], [], []>} : vector<8x16xbf16>, vector<16x8xbf16>, vector<8x8xf32> -> vector<8x8xf32>
    %423 = vector.extract_strided_slice %357 {offsets = [0, 24], sizes = [8, 8], strides = [1, 1]} : vector<8x32xbf16> to vector<8x8xbf16>
    %424 = vector.extract_strided_slice %358 {offsets = [0, 24], sizes = [16, 8], strides = [1, 1]} : vector<16x32xbf16> to vector<16x8xbf16>
    %425 = vector.extract_strided_slice %359 {offsets = [0, 24], sizes = [16, 8], strides = [1, 1]} : vector<16x32xbf16> to vector<16x8xbf16>
    %cst_184 = arith.constant dense<0.000000e+00> : vector<8x16xf32>
    %426 = tpu.matmul %423, %424, %cst_184 {dimension_numbers = #tpu.dot_dimension_numbers<[1], [1], [0], [0], [0, 0, 1, 0], [], []>} : vector<8x8xbf16>, vector<16x8xbf16>, vector<8x16xf32> -> vector<8x16xf32>
    %cst_185 = arith.constant 0.353553385 : f32
    %427 = vector.broadcast %cst_185 : f32 to vector<8x16xf32>
    %428 = arith.mulf %426, %427 : vector<8x16xf32>
    %cst_186 = arith.constant dense<0xFF800000> : vector<8xf32>
    %429 = vector.multi_reduction <maximumf>, %428, %cst_186 [1] : vector<8x16xf32> to vector<8xf32>
    %430 = vector.shape_cast %429 : vector<8xf32> to vector<8x1xf32>
    %431 = vector.broadcast %430 : vector<8x1xf32> to vector<8x16xf32>
    %432 = arith.subf %428, %431 : vector<8x16xf32>
    %433 = math.exp %432 : vector<8x16xf32>
    %cst_187 = arith.constant dense<0.000000e+00> : vector<8xf32>
    %434 = vector.multi_reduction <add>, %433, %cst_187 [1] : vector<8x16xf32> to vector<8xf32>
    %435 = vector.shape_cast %434 : vector<8xf32> to vector<8x1xf32>
    %436 = tpu.reciprocal %435 {approx = true} : vector<8x1xf32> -> vector<8x1xf32>
    %437 = vector.broadcast %436 : vector<8x1xf32> to vector<8x16xf32>
    %438 = arith.mulf %433, %437 : vector<8x16xf32>
    %c1_188 = arith.constant 1 : index
    %c3_189 = arith.constant 3 : index
    %c0_190 = arith.constant 0 : index
    %c0_191 = arith.constant 0 : index
    %439 = vector.load %arg24[%c1_188, %c3_189, %c0_190, %c0_191] : memref<2x4x8x16xf32, #tpu.memory_space<vmem>>, vector<1x1x8x16xf32>
    %440 = vector.shape_cast %439 : vector<1x1x8x16xf32> to vector<8x16xf32>
    %441 = vector.shape_cast %438 : vector<8x16xf32> to vector<1x1x8x16xf32>
    tpu.vector_store %arg24[%c1_188, %c3_189, %c0_190, %c0_191], %441 {strides = array<i32>} : memref<2x4x8x16xf32, #tpu.memory_space<vmem>>, vector<1x1x8x16xf32>,
    %442 = arith.truncf %438 : vector<8x16xf32> to vector<8x16xbf16>
    %cst_192 = arith.constant dense<0.000000e+00> : vector<8x8xf32>
    %443 = tpu.matmul %442, %425, %cst_192 {dimension_numbers = #tpu.dot_dimension_numbers<[1], [0], [0], [1], [0, 0, 1, 1], [], []>} : vector<8x16xbf16>, vector<16x8xbf16>, vector<8x8xf32> -> vector<8x8xf32>
    %444 = tpu.concatenate %380, %401, %422, %443 in 1 : vector<8x8xf32>, vector<8x8xf32>, vector<8x8xf32>, vector<8x8xf32> -> vector<8x32xf32>
    %445 = arith.truncf %444 : vector<8x32xf32> to vector<8x32xbf16>
    %cst_193 = arith.constant dense<0.000000e+00> : vector<8x32xf32>
    %446 = tpu.matmul %445, %254, %cst_193 {dimension_numbers = #tpu.dot_dimension_numbers<[1], [0], [0], [1], [0, 0, 1, 1], [], []>} : vector<8x32xbf16>, vector<32x32xbf16>, vector<8x32xf32> -> vector<8x32xf32>
    %c8_194 = arith.constant 8 : index
    %c0_195 = arith.constant 0 : index
    %447 = vector.load %arg25[%c8_194, %c0_195] : memref<16x32xf32, #tpu.memory_space<vmem>>, vector<8x32xf32>
    tpu.vector_store %arg25[%c8_194, %c0_195], %446 {strides = array<i32>} : memref<16x32xf32, #tpu.memory_space<vmem>>, vector<8x32xf32>,
    %c0_196 = arith.constant 0 : index
    %c0_197 = arith.constant 0 : index
    %448 = vector.load %arg25[%c0_196, %c0_197] : memref<16x32xf32, #tpu.memory_space<vmem>>, vector<16x32xf32>
    %449 = arith.addf %448, %250 : vector<16x32xf32>
    %cst_198 = arith.constant dense<0.000000e+00> : vector<16xf32>
    %450 = vector.multi_reduction <add>, %449, %cst_198 [1] : vector<16x32xf32> to vector<16xf32>
    %451 = vector.shape_cast %450 : vector<16xf32> to vector<16x1xf32>
    %cst_199 = arith.constant 3.200000e+01 : f32
    %452 = vector.broadcast %cst_199 : f32 to vector<16x1xf32>
    %453 = arith.divf %451, %452 : vector<16x1xf32>
    %454 = arith.mulf %449, %449 : vector<16x32xf32>
    %cst_200 = arith.constant dense<0.000000e+00> : vector<16xf32>
    %455 = vector.multi_reduction <add>, %454, %cst_200 [1] : vector<16x32xf32> to vector<16xf32>
    %456 = vector.shape_cast %455 : vector<16xf32> to vector<16x1xf32>
    %cst_201 = arith.constant 3.200000e+01 : f32
    %457 = vector.broadcast %cst_201 : f32 to vector<16x1xf32>
    %458 = arith.divf %456, %457 : vector<16x1xf32>
    %459 = arith.mulf %453, %453 : vector<16x1xf32>
    %460 = arith.subf %458, %459 : vector<16x1xf32>
    %461 = vector.broadcast %453 : vector<16x1xf32> to vector<16x32xf32>
    %462 = arith.subf %449, %461 : vector<16x32xf32>
    %cst_202 = arith.constant 9.99999997E-7 : f32
    %463 = vector.broadcast %cst_202 : f32 to vector<16x1xf32>
    %464 = arith.addf %460, %463 : vector<16x1xf32>
    %465 = math.rsqrt %464 : vector<16x1xf32>
    %466 = vector.broadcast %465 : vector<16x1xf32> to vector<16x32xf32>
    %467 = arith.mulf %462, %466 : vector<16x32xf32>
    %468 = vector.broadcast %255 : vector<1x32xf32> to vector<16x32xf32>
    %469 = arith.mulf %467, %468 : vector<16x32xf32>
    %470 = vector.broadcast %256 : vector<1x32xf32> to vector<16x32xf32>
    %471 = arith.addf %469, %470 : vector<16x32xf32>
    %472 = arith.truncf %471 : vector<16x32xf32> to vector<16x32xbf16>
    %c0_203 = arith.constant 0 : index
    %c0_204 = arith.constant 0 : index
    %473 = vector.load %arg16[%c0_203, %c0_204] : memref<32x64xbf16, #tpu.memory_space<vmem>>, vector<32x64xbf16>
    %cst_205 = arith.constant dense<0.000000e+00> : vector<16x64xf32>
    %474 = tpu.matmul %472, %473, %cst_205 {dimension_numbers = #tpu.dot_dimension_numbers<[1], [0], [0], [1], [0, 0, 1, 1], [], []>} : vector<16x32xbf16>, vector<32x64xbf16>, vector<16x64xf32> -> vector<16x64xf32>
    %c0_206 = arith.constant 0 : index
    %c0_207 = arith.constant 0 : index
    %475 = vector.load %arg17[%c0_206, %c0_207] : memref<1x64xf32, #tpu.memory_space<vmem>>, vector<1x64xf32>
    %476 = vector.broadcast %475 : vector<1x64xf32> to vector<16x64xf32>
    %477 = arith.addf %474, %476 : vector<16x64xf32>
    %cst_208 = arith.constant 0.000000e+00 : f32
    %478 = vector.broadcast %cst_208 : f32 to vector<16x64xf32>
    %479 = arith.maximumf %477, %478 : vector<16x64xf32>
    %480 = arith.truncf %479 : vector<16x64xf32> to vector<16x64xbf16>
    %c0_209 = arith.constant 0 : index
    %c0_210 = arith.constant 0 : index
    %481 = vector.load %arg18[%c0_209, %c0_210] : memref<64x32xbf16, #tpu.memory_space<vmem>>, vector<64x32xbf16>
    %cst_211 = arith.constant dense<0.000000e+00> : vector<16x32xf32>
    %482 = tpu.matmul %480, %481, %cst_211 {dimension_numbers = #tpu.dot_dimension_numbers<[1], [0], [0], [1], [0, 0, 1, 1], [], []>} : vector<16x64xbf16>, vector<64x32xbf16>, vector<16x32xf32> -> vector<16x32xf32>
    %c0_212 = arith.constant 0 : index
    %c0_213 = arith.constant 0 : index
    %483 = vector.load %arg19[%c0_212, %c0_213] : memref<1x32xf32, #tpu.memory_space<vmem>>, vector<1x32xf32>
    %484 = vector.broadcast %483 : vector<1x32xf32> to vector<16x32xf32>
    %485 = arith.addf %482, %484 : vector<16x32xf32>
    %486 = arith.addf %485, %471 : vector<16x32xf32>
    %c0_214 = arith.constant 0 : index
    %c0_215 = arith.constant 0 : index
    %487 = vector.load %arg20[%c0_214, %c0_215] : memref<1x32xf32, #tpu.memory_space<vmem>>, vector<1x32xf32>
    %c0_216 = arith.constant 0 : index
    %c0_217 = arith.constant 0 : index
    %488 = vector.load %arg21[%c0_216, %c0_217] : memref<1x32xf32, #tpu.memory_space<vmem>>, vector<1x32xf32>
    %cst_218 = arith.constant dense<0.000000e+00> : vector<16xf32>
    %489 = vector.multi_reduction <add>, %486, %cst_218 [1] : vector<16x32xf32> to vector<16xf32>
    %490 = vector.shape_cast %489 : vector<16xf32> to vector<16x1xf32>
    %cst_219 = arith.constant 3.200000e+01 : f32
    %491 = vector.broadcast %cst_219 : f32 to vector<16x1xf32>
    %492 = arith.divf %490, %491 : vector<16x1xf32>
    %493 = arith.mulf %486, %486 : vector<16x32xf32>
    %cst_220 = arith.constant dense<0.000000e+00> : vector<16xf32>
    %494 = vector.multi_reduction <add>, %493, %cst_220 [1] : vector<16x32xf32> to vector<16xf32>
    %495 = vector.shape_cast %494 : vector<16xf32> to vector<16x1xf32>
    %cst_221 = arith.constant 3.200000e+01 : f32
    %496 = vector.broadcast %cst_221 : f32 to vector<16x1xf32>
    %497 = arith.divf %495, %496 : vector<16x1xf32>
    %498 = arith.mulf %492, %492 : vector<16x1xf32>
    %499 = arith.subf %497, %498 : vector<16x1xf32>
    %500 = vector.broadcast %492 : vector<16x1xf32> to vector<16x32xf32>
    %501 = arith.subf %486, %500 : vector<16x32xf32>
    %cst_222 = arith.constant 9.99999997E-7 : f32
    %502 = vector.broadcast %cst_222 : f32 to vector<16x1xf32>
    %503 = arith.addf %499, %502 : vector<16x1xf32>
    %504 = math.rsqrt %503 : vector<16x1xf32>
    %505 = vector.broadcast %504 : vector<16x1xf32> to vector<16x32xf32>
    %506 = arith.mulf %501, %505 : vector<16x32xf32>
    %507 = vector.broadcast %487 : vector<1x32xf32> to vector<16x32xf32>
    %508 = arith.mulf %506, %507 : vector<16x32xf32>
    %509 = vector.broadcast %488 : vector<1x32xf32> to vector<16x32xf32>
    %510 = arith.addf %508, %509 : vector<16x32xf32>
    %511 = vector.shape_cast %510 : vector<16x32xf32> to vector<2x8x32xf32>
    %c0_223 = arith.constant 0 : index
    %c0_224 = arith.constant 0 : index
    %c0_225 = arith.constant 0 : index
    %512 = vector.load %arg22[%c0_223, %c0_224, %c0_225] : memref<2x8x32xf32, #tpu.memory_space<vmem>>, vector<2x8x32xf32>
    tpu.vector_store %arg22[%c0_223, %c0_224, %c0_225], %511 {strides = array<i32>} : memref<2x8x32xf32, #tpu.memory_space<vmem>>, vector<2x8x32xf32>,
    return
  }
  func.func @transform_0(%arg0: i32) -> (i32, i32, i32) {
    %c0_i32 = arith.constant 0 : i32
    %c0_i32_0 = arith.constant 0 : i32
    %c0_i32_1 = arith.constant 0 : i32
    return %arg0, %c0_i32, %c0_i32_0 : i32, i32, i32
  }
  func.func @transform_1(%arg0: i32) -> (i32, i32, i32) {
    %c0_i32 = arith.constant 0 : i32
    %c0_i32_0 = arith.constant 0 : i32
    %c0_i32_1 = arith.constant 0 : i32
    return %arg0, %c0_i32, %c0_i32_0 : i32, i32, i32
  }
  func.func @transform_2(%arg0: i32) -> (i32, i32, i32) {
    %c0_i32 = arith.constant 0 : i32
    %c0_i32_0 = arith.constant 0 : i32
    %c0_i32_1 = arith.constant 0 : i32
    return %arg0, %c0_i32, %c0_i32_0 : i32, i32, i32
  }
  func.func @transform_3(%arg0: i32) -> (i32, i32) {
    %c0_i32 = arith.constant 0 : i32
    %c0_i32_0 = arith.constant 0 : i32
    %c0_i32_1 = arith.constant 0 : i32
    return %c0_i32, %c0_i32_0 : i32, i32
  }
  func.func @transform_4(%arg0: i32) -> (i32, i32) {
    %c0_i32 = arith.constant 0 : i32
    %c0_i32_0 = arith.constant 0 : i32
    %c0_i32_1 = arith.constant 0 : i32
    return %c0_i32, %c0_i32_0 : i32, i32
  }
  func.func @transform_5(%arg0: i32) -> (i32, i32) {
    %c0_i32 = arith.constant 0 : i32
    %c0_i32_0 = arith.constant 0 : i32
    %c0_i32_1 = arith.constant 0 : i32
    return %c0_i32, %c0_i32_0 : i32, i32
  }
  func.func @transform_6(%arg0: i32) -> (i32, i32) {
    %c0_i32 = arith.constant 0 : i32
    %c0_i32_0 = arith.constant 0 : i32
    %c0_i32_1 = arith.constant 0 : i32
    return %c0_i32, %c0_i32_0 : i32, i32
  }
  func.func @transform_7(%arg0: i32) -> (i32, i32) {
    %c0_i32 = arith.constant 0 : i32
    %c0_i32_0 = arith.constant 0 : i32
    %c0_i32_1 = arith.constant 0 : i32
    return %c0_i32, %c0_i32_0 : i32, i32
  }
  func.func @transform_8(%arg0: i32) -> (i32, i32) {
    %c0_i32 = arith.constant 0 : i32
    %c0_i32_0 = arith.constant 0 : i32
    %c0_i32_1 = arith.constant 0 : i32
    return %c0_i32, %c0_i32_0 : i32, i32
  }
  func.func @transform_9(%arg0: i32) -> (i32, i32) {
    %c0_i32 = arith.constant 0 : i32
    %c0_i32_0 = arith.constant 0 : i32
    %c0_i32_1 = arith.constant 0 : i32
    return %c0_i32, %c0_i32_0 : i32, i32
  }
  func.func @transform_10(%arg0: i32) -> (i32, i32) {
    %c0_i32 = arith.constant 0 : i32
    %c0_i32_0 = arith.constant 0 : i32
    %c0_i32_1 = arith.constant 0 : i32
    return %c0_i32, %c0_i32_0 : i32, i32
  }
  func.func @transform_11(%arg0: i32) -> (i32, i32) {
    %c0_i32 = arith.constant 0 : i32
    %c0_i32_0 = arith.constant 0 : i32
    %c0_i32_1 = arith.constant 0 : i32
    return %c0_i32, %c0_i32_0 : i32, i32
  }
  func.func @transform_12(%arg0: i32) -> (i32, i32) {
    %c0_i32 = arith.constant 0 : i32
    %c0_i32_0 = arith.constant 0 : i32
    %c0_i32_1 = arith.constant 0 : i32
    return %c0_i32, %c0_i32_0 : i32, i32
  }
  func.func @transform_13(%arg0: i32) -> (i32, i32) {
    %c0_i32 = arith.constant 0 : i32
    %c0_i32_0 = arith.constant 0 : i32
    %c0_i32_1 = arith.constant 0 : i32
    return %c0_i32, %c0_i32_0 : i32, i32
  }
  func.func @transform_14(%arg0: i32) -> (i32, i32) {
    %c0_i32 = arith.constant 0 : i32
    %c0_i32_0 = arith.constant 0 : i32
    %c0_i32_1 = arith.constant 0 : i32
    return %c0_i32, %c0_i32_0 : i32, i32
  }
  func.func @transform_15(%arg0: i32) -> (i32, i32) {
    %c0_i32 = arith.constant 0 : i32
    %c0_i32_0 = arith.constant 0 : i32
    %c0_i32_1 = arith.constant 0 : i32
    return %c0_i32, %c0_i32_0 : i32, i32
  }
  func.func @transform_16(%arg0: i32) -> (i32, i32) {
    %c0_i32 = arith.constant 0 : i32
    %c0_i32_0 = arith.constant 0 : i32
    %c0_i32_1 = arith.constant 0 : i32
    return %c0_i32, %c0_i32_0 : i32, i32
  }
  func.func @transform_17(%arg0: i32) -> (i32, i32) {
    %c0_i32 = arith.constant 0 : i32
    %c0_i32_0 = arith.constant 0 : i32
    %c0_i32_1 = arith.constant 0 : i32
    return %c0_i32, %c0_i32_0 : i32, i32
  }
  func.func @transform_18(%arg0: i32) -> (i32, i32) {
    %c0_i32 = arith.constant 0 : i32
    %c0_i32_0 = arith.constant 0 : i32
    %c0_i32_1 = arith.constant 0 : i32
    return %c0_i32, %c0_i32_0 : i32, i32
  }
  func.func @transform_19(%arg0: i32) -> (i32, i32) {
    %c0_i32 = arith.constant 0 : i32
    %c0_i32_0 = arith.constant 0 : i32
    %c0_i32_1 = arith.constant 0 : i32
    return %c0_i32, %c0_i32_0 : i32, i32
  }
  func.func @transform_20(%arg0: i32) -> (i32, i32) {
    %c0_i32 = arith.constant 0 : i32
    %c0_i32_0 = arith.constant 0 : i32
    %c0_i32_1 = arith.constant 0 : i32
    return %c0_i32, %c0_i32_0 : i32, i32
  }
  func.func @transform_21(%arg0: i32) -> (i32, i32, i32) {
    %c0_i32 = arith.constant 0 : i32
    %c0_i32_0 = arith.constant 0 : i32
    %c0_i32_1 = arith.constant 0 : i32
    return %arg0, %c0_i32, %c0_i32_0 : i32, i32, i32
  }
  func.func @transform_22(%arg0: i32) -> (i32, i32, i32, i32) {
    %c0_i32 = arith.constant 0 : i32
    %c0_i32_0 = arith.constant 0 : i32
    %c0_i32_1 = arith.constant 0 : i32
    %c0_i32_2 = arith.constant 0 : i32
    return %arg0, %c0_i32, %c0_i32_0, %c0_i32_1 : i32, i32, i32, i32
  }
  func.func @transform_23(%arg0: i32) -> (i32, i32, i32, i32) {
    %c0_i32 = arith.constant 0 : i32
    %c0_i32_0 = arith.constant 0 : i32
    %c0_i32_1 = arith.constant 0 : i32
    %c0_i32_2 = arith.constant 0 : i32
    return %arg0, %c0_i32, %c0_i32_0, %c0_i32_1 : i32, i32, i32, i32
  }
}

module attributes {stable_mosaic.version = 11 : i64} {
  func.func @_decoder_layer_kernel(%arg0: i32, %arg1: memref<2x8x32xf32, #tpu.memory_space<vmem>>, %arg2: memref<2x16x32xf32, #tpu.memory_space<vmem>>, %arg3: memref<2x8x8xbf16, #tpu.memory_space<vmem>>, %arg4: memref<32x32xbf16, #tpu.memory_space<vmem>>, %arg5: memref<32x32xbf16, #tpu.memory_space<vmem>>, %arg6: memref<32x32xbf16, #tpu.memory_space<vmem>>, %arg7: memref<32x32xbf16, #tpu.memory_space<vmem>>, %arg8: memref<1x32xf32, #tpu.memory_space<vmem>>, %arg9: memref<1x32xf32, #tpu.memory_space<vmem>>, %arg10: memref<32x32xbf16, #tpu.memory_space<vmem>>, %arg11: memref<32x32xbf16, #tpu.memory_space<vmem>>, %arg12: memref<32x32xbf16, #tpu.memory_space<vmem>>, %arg13: memref<32x32xbf16, #tpu.memory_space<vmem>>, %arg14: memref<1x32xf32, #tpu.memory_space<vmem>>, %arg15: memref<1x32xf32, #tpu.memory_space<vmem>>, %arg16: memref<32x64xbf16, #tpu.memory_space<vmem>>, %arg17: memref<1x64xf32, #tpu.memory_space<vmem>>, %arg18: memref<64x32xbf16, #tpu.memory_space<vmem>>, %arg19: memref<1x32xf32, #tpu.memory_space<vmem>>, %arg20: memref<1x32xf32, #tpu.memory_space<vmem>>, %arg21: memref<1x32xf32, #tpu.memory_space<vmem>>, %arg22: memref<2x8x32xf32, #tpu.memory_space<vmem>>, %arg23: memref<2x4x8x8xf32, #tpu.memory_space<vmem>>, %arg24: memref<2x4x8x16xf32, #tpu.memory_space<vmem>>, %arg25: memref<16x32xf32, #tpu.memory_space<vmem>>) attributes {dimension_semantics = [#tpu.dimension_semantics<parallel>], iteration_bounds = array<i64: 1>, scalar_prefetch = 0 : i64, scratch_operands = 1 : i64, tpu.core_type = #tpu.core_type<tc>, window_params = [{transform_indices = @transform_0, window_bounds = array<i64: 2, 8, 32>}, {transform_indices = @transform_1, window_bounds = array<i64: 2, 16, 32>}, {transform_indices = @transform_2, window_bounds = array<i64: 2, 8, 8>}, {pipeline_mode = #tpu.pipeline_mode<synchronous>, transform_indices = @transform_3, window_bounds = array<i64: 32, 32>}, {pipeline_mode = #tpu.pipeline_mode<synchronous>, transform_indices = @transform_4, window_bounds = array<i64: 32, 32>}, {pipeline_mode = #tpu.pipeline_mode<synchronous>, transform_indices = @transform_5, window_bounds = array<i64: 32, 32>}, {pipeline_mode = #tpu.pipeline_mode<synchronous>, transform_indices = @transform_6, window_bounds = array<i64: 32, 32>}, {pipeline_mode = #tpu.pipeline_mode<synchronous>, transform_indices = @transform_7, window_bounds = array<i64: 1, 32>}, {pipeline_mode = #tpu.pipeline_mode<synchronous>, transform_indices = @transform_8, window_bounds = array<i64: 1, 32>}, {pipeline_mode = #tpu.pipeline_mode<synchronous>, transform_indices = @transform_9, window_bounds = array<i64: 32, 32>}, {pipeline_mode = #tpu.pipeline_mode<synchronous>, transform_indices = @transform_10, window_bounds = array<i64: 32, 32>}, {pipeline_mode = #tpu.pipeline_mode<synchronous>, transform_indices = @transform_11, window_bounds = array<i64: 32, 32>}, {pipeline_mode = #tpu.pipeline_mode<synchronous>, transform_indices = @transform_12, window_bounds = array<i64: 32, 32>}, {pipeline_mode = #tpu.pipeline_mode<synchronous>, transform_indices = @transform_13, window_bounds = array<i64: 1, 32>}, {pipeline_mode = #tpu.pipeline_mode<synchronous>, transform_indices = @transform_14, window_bounds = array<i64: 1, 32>}, {pipeline_mode = #tpu.pipeline_mode<synchronous>, transform_indices = @transform_15, window_bounds = array<i64: 32, 64>}, {pipeline_mode = #tpu.pipeline_mode<synchronous>, transform_indices = @transform_16, window_bounds = array<i64: 1, 64>}, {pipeline_mode = #tpu.pipeline_mode<synchronous>, transform_indices = @transform_17, window_bounds = array<i64: 64, 32>}, {pipeline_mode = #tpu.pipeline_mode<synchronous>, transform_indices = @transform_18, window_bounds = array<i64: 1, 32>}, {pipeline_mode = #tpu.pipeline_mode<synchronous>, transform_indices = @transform_19, window_bounds = array<i64: 1, 32>}, {pipeline_mode = #tpu.pipeline_mode<synchronous>, transform_indices = @transform_20, window_bounds = array<i64: 1, 32>}, {transform_indices = @transform_21, window_bounds = array<i64: 2, 8, 32>}, {transform_indices = @transform_22, window_bounds = array<i64: 2, 4, 8, 8>}, {transform_indices = @transform_23, window_bounds = array<i64: 2, 4, 8, 16>}]} {
    %c0 = arith.constant 0 : index
    %c0_0 = arith.constant 0 : index
    %c0_1 = arith.constant 0 : index
    %0 = vector.load %arg1[%c0, %c0_0, %c0_1] : memref<2x8x32xf32, #tpu.memory_space<vmem>>, vector<2x8x32xf32>
    %1 = vector.shape_cast %0 : vector<2x8x32xf32> to vector<16x32xf32>
    %c0_2 = arith.constant 0 : index
    %c0_3 = arith.constant 0 : index
    %c0_4 = arith.constant 0 : index
    %2 = vector.load %arg2[%c0_2, %c0_3, %c0_4] : memref<2x16x32xf32, #tpu.memory_space<vmem>>, vector<2x16x32xf32>
    %3 = vector.shape_cast %2 : vector<2x16x32xf32> to vector<32x32xf32>
    %c0_5 = arith.constant 0 : index
    %c0_6 = arith.constant 0 : index
    %c0_7 = arith.constant 0 : index
    %4 = vector.load %arg3[%c0_5, %c0_6, %c0_7] : memref<2x8x8xbf16, #tpu.memory_space<vmem>>, vector<2x8x8xbf16>
    %5 = arith.extf %4 : vector<2x8x8xbf16> to vector<2x8x8xf32>
    %c0_8 = arith.constant 0 : index
    %c0_9 = arith.constant 0 : index
    %6 = vector.load %arg4[%c0_8, %c0_9] : memref<32x32xbf16, #tpu.memory_space<vmem>>, vector<32x32xbf16>
    %c0_10 = arith.constant 0 : index
    %c0_11 = arith.constant 0 : index
    %7 = vector.load %arg5[%c0_10, %c0_11] : memref<32x32xbf16, #tpu.memory_space<vmem>>, vector<32x32xbf16>
    %c0_12 = arith.constant 0 : index
    %c0_13 = arith.constant 0 : index
    %8 = vector.load %arg6[%c0_12, %c0_13] : memref<32x32xbf16, #tpu.memory_space<vmem>>, vector<32x32xbf16>
    %c0_14 = arith.constant 0 : index
    %c0_15 = arith.constant 0 : index
    %9 = vector.load %arg7[%c0_14, %c0_15] : memref<32x32xbf16, #tpu.memory_space<vmem>>, vector<32x32xbf16>
    %c0_16 = arith.constant 0 : index
    %c0_17 = arith.constant 0 : index
    %10 = vector.load %arg8[%c0_16, %c0_17] : memref<1x32xf32, #tpu.memory_space<vmem>>, vector<1x32xf32>
    %c0_18 = arith.constant 0 : index
    %c0_19 = arith.constant 0 : index
    %11 = vector.load %arg9[%c0_18, %c0_19] : memref<1x32xf32, #tpu.memory_space<vmem>>, vector<1x32xf32>
    %12 = arith.truncf %1 : vector<16x32xf32> to vector<16x32xbf16>
    %cst = arith.constant dense<0.000000e+00> : vector<16x32xf32>
    %13 = tpu.matmul %12, %6, %cst {dimension_numbers = #tpu.dot_dimension_numbers<[1], [0], [0], [1], [0, 0, 1, 1], [], []>} : vector<16x32xbf16>, vector<32x32xbf16>, vector<16x32xf32> -> vector<16x32xf32>
    %14 = arith.truncf %13 : vector<16x32xf32> to vector<16x32xbf16>
    %15 = arith.truncf %1 : vector<16x32xf32> to vector<16x32xbf16>
    %cst_20 = arith.constant dense<0.000000e+00> : vector<16x32xf32>
    %16 = tpu.matmul %15, %7, %cst_20 {dimension_numbers = #tpu.dot_dimension_numbers<[1], [0], [0], [1], [0, 0, 1, 1], [], []>} : vector<16x32xbf16>, vector<32x32xbf16>, vector<16x32xf32> -> vector<16x32xf32>
    %17 = arith.truncf %16 : vector<16x32xf32> to vector<16x32xbf16>
    %18 = arith.truncf %1 : vector<16x32xf32> to vector<16x32xbf16>
    %cst_21 = arith.constant dense<0.000000e+00> : vector<16x32xf32>
    %19 = tpu.matmul %18, %8, %cst_21 {dimension_numbers = #tpu.dot_dimension_numbers<[1], [0], [0], [1], [0, 0, 1, 1], [], []>} : vector<16x32xbf16>, vector<32x32xbf16>, vector<16x32xf32> -> vector<16x32xf32>
    %20 = arith.truncf %19 : vector<16x32xf32> to vector<16x32xbf16>
    %21 = vector.extract_strided_slice %14 {offsets = [0, 0], sizes = [8, 32], strides = [1, 1]} : vector<16x32xbf16> to vector<8x32xbf16>
    %22 = vector.extract_strided_slice %17 {offsets = [0, 0], sizes = [8, 32], strides = [1, 1]} : vector<16x32xbf16> to vector<8x32xbf16>
    %23 = vector.extract_strided_slice %20 {offsets = [0, 0], sizes = [8, 32], strides = [1, 1]} : vector<16x32xbf16> to vector<8x32xbf16>
    %24 = vector.extract_strided_slice %21 {offsets = [0, 0], sizes = [8, 8], strides = [1, 1]} : vector<8x32xbf16> to vector<8x8xbf16>
    %25 = vector.extract_strided_slice %22 {offsets = [0, 0], sizes = [8, 8], strides = [1, 1]} : vector<8x32xbf16> to vector<8x8xbf16>
    %26 = vector.extract_strided_slice %23 {offsets = [0, 0], sizes = [8, 8], strides = [1, 1]} : vector<8x32xbf16> to vector<8x8xbf16>
    %cst_22 = arith.constant dense<0.000000e+00> : vector<8x8xf32>
    %27 = tpu.matmul %24, %25, %cst_22 {dimension_numbers = #tpu.dot_dimension_numbers<[1], [1], [0], [0], [0, 0, 1, 0], [], []>} : vector<8x8xbf16>, vector<8x8xbf16>, vector<8x8xf32> -> vector<8x8xf32>
    %cst_23 = arith.constant 0.353553385 : f32
    %28 = vector.broadcast %cst_23 : f32 to vector<8x8xf32>
    %29 = arith.mulf %27, %28 : vector<8x8xf32>
    %30 = vector.extract_strided_slice %5 {offsets = [0, 0, 0], sizes = [1, 8, 8], strides = [1, 1, 1]} : vector<2x8x8xf32> to vector<1x8x8xf32>
    %31 = vector.shape_cast %30 : vector<1x8x8xf32> to vector<8x8xf32>
    %32 = arith.addf %29, %31 : vector<8x8xf32>
    %cst_24 = arith.constant dense<0xFF800000> : vector<8xf32>
    %33 = vector.multi_reduction <maximumf>, %32, %cst_24 [1] : vector<8x8xf32> to vector<8xf32>
    %34 = vector.shape_cast %33 : vector<8xf32> to vector<8x1xf32>
    %35 = vector.broadcast %34 : vector<8x1xf32> to vector<8x8xf32>
    %36 = arith.subf %32, %35 : vector<8x8xf32>
    %37 = math.exp %36 : vector<8x8xf32>
    %cst_25 = arith.constant dense<0.000000e+00> : vector<8xf32>
    %38 = vector.multi_reduction <add>, %37, %cst_25 [1] : vector<8x8xf32> to vector<8xf32>
    %39 = vector.shape_cast %38 : vector<8xf32> to vector<8x1xf32>
    %40 = tpu.reciprocal %39 {approx = true} : vector<8x1xf32> -> vector<8x1xf32>
    %41 = vector.broadcast %40 : vector<8x1xf32> to vector<8x8xf32>
    %42 = arith.mulf %37, %41 : vector<8x8xf32>
    %c0_26 = arith.constant 0 : index
    %c0_27 = arith.constant 0 : index
    %c0_28 = arith.constant 0 : index
    %c0_29 = arith.constant 0 : index
    %43 = vector.load %arg23[%c0_26, %c0_27, %c0_28, %c0_29] : memref<2x4x8x8xf32, #tpu.memory_space<vmem>>, vector<1x1x8x8xf32>
    %44 = vector.shape_cast %43 : vector<1x1x8x8xf32> to vector<8x8xf32>
    %45 = vector.shape_cast %42 : vector<8x8xf32> to vector<1x1x8x8xf32>
    tpu.vector_store %arg23[%c0_26, %c0_27, %c0_28, %c0_29], %45 {strides = array<i32>} : memref<2x4x8x8xf32, #tpu.memory_space<vmem>>, vector<1x1x8x8xf32>,
    %46 = arith.truncf %42 : vector<8x8xf32> to vector<8x8xbf16>
    %cst_30 = arith.constant dense<0.000000e+00> : vector<8x8xf32>
    %47 = tpu.matmul %46, %26, %cst_30 {dimension_numbers = #tpu.dot_dimension_numbers<[1], [0], [0], [1], [0, 0, 1, 1], [], []>} : vector<8x8xbf16>, vector<8x8xbf16>, vector<8x8xf32> -> vector<8x8xf32>
    %48 = vector.extract_strided_slice %21 {offsets = [0, 8], sizes = [8, 8], strides = [1, 1]} : vector<8x32xbf16> to vector<8x8xbf16>
    %49 = vector.extract_strided_slice %22 {offsets = [0, 8], sizes = [8, 8], strides = [1, 1]} : vector<8x32xbf16> to vector<8x8xbf16>
    %50 = vector.extract_strided_slice %23 {offsets = [0, 8], sizes = [8, 8], strides = [1, 1]} : vector<8x32xbf16> to vector<8x8xbf16>
    %cst_31 = arith.constant dense<0.000000e+00> : vector<8x8xf32>
    %51 = tpu.matmul %48, %49, %cst_31 {dimension_numbers = #tpu.dot_dimension_numbers<[1], [1], [0], [0], [0, 0, 1, 0], [], []>} : vector<8x8xbf16>, vector<8x8xbf16>, vector<8x8xf32> -> vector<8x8xf32>
    %cst_32 = arith.constant 0.353553385 : f32
    %52 = vector.broadcast %cst_32 : f32 to vector<8x8xf32>
    %53 = arith.mulf %51, %52 : vector<8x8xf32>
    %54 = vector.extract_strided_slice %5 {offsets = [0, 0, 0], sizes = [1, 8, 8], strides = [1, 1, 1]} : vector<2x8x8xf32> to vector<1x8x8xf32>
    %55 = vector.shape_cast %54 : vector<1x8x8xf32> to vector<8x8xf32>
    %56 = arith.addf %53, %55 : vector<8x8xf32>
    %cst_33 = arith.constant dense<0xFF800000> : vector<8xf32>
    %57 = vector.multi_reduction <maximumf>, %56, %cst_33 [1] : vector<8x8xf32> to vector<8xf32>
    %58 = vector.shape_cast %57 : vector<8xf32> to vector<8x1xf32>
    %59 = vector.broadcast %58 : vector<8x1xf32> to vector<8x8xf32>
    %60 = arith.subf %56, %59 : vector<8x8xf32>
    %61 = math.exp %60 : vector<8x8xf32>
    %cst_34 = arith.constant dense<0.000000e+00> : vector<8xf32>
    %62 = vector.multi_reduction <add>, %61, %cst_34 [1] : vector<8x8xf32> to vector<8xf32>
    %63 = vector.shape_cast %62 : vector<8xf32> to vector<8x1xf32>
    %64 = tpu.reciprocal %63 {approx = true} : vector<8x1xf32> -> vector<8x1xf32>
    %65 = vector.broadcast %64 : vector<8x1xf32> to vector<8x8xf32>
    %66 = arith.mulf %61, %65 : vector<8x8xf32>
    %c0_35 = arith.constant 0 : index
    %c1 = arith.constant 1 : index
    %c0_36 = arith.constant 0 : index
    %c0_37 = arith.constant 0 : index
    %67 = vector.load %arg23[%c0_35, %c1, %c0_36, %c0_37] : memref<2x4x8x8xf32, #tpu.memory_space<vmem>>, vector<1x1x8x8xf32>
    %68 = vector.shape_cast %67 : vector<1x1x8x8xf32> to vector<8x8xf32>
    %69 = vector.shape_cast %66 : vector<8x8xf32> to vector<1x1x8x8xf32>
    tpu.vector_store %arg23[%c0_35, %c1, %c0_36, %c0_37], %69 {strides = array<i32>} : memref<2x4x8x8xf32, #tpu.memory_space<vmem>>, vector<1x1x8x8xf32>,
    %70 = arith.truncf %66 : vector<8x8xf32> to vector<8x8xbf16>
    %cst_38 = arith.constant dense<0.000000e+00> : vector<8x8xf32>
    %71 = tpu.matmul %70, %50, %cst_38 {dimension_numbers = #tpu.dot_dimension_numbers<[1], [0], [0], [1], [0, 0, 1, 1], [], []>} : vector<8x8xbf16>, vector<8x8xbf16>, vector<8x8xf32> -> vector<8x8xf32>
    %72 = vector.extract_strided_slice %21 {offsets = [0, 16], sizes = [8, 8], strides = [1, 1]} : vector<8x32xbf16> to vector<8x8xbf16>
    %73 = vector.extract_strided_slice %22 {offsets = [0, 16], sizes = [8, 8], strides = [1, 1]} : vector<8x32xbf16> to vector<8x8xbf16>
    %74 = vector.extract_strided_slice %23 {offsets = [0, 16], sizes = [8, 8], strides = [1, 1]} : vector<8x32xbf16> to vector<8x8xbf16>
    %cst_39 = arith.constant dense<0.000000e+00> : vector<8x8xf32>
    %75 = tpu.matmul %72, %73, %cst_39 {dimension_numbers = #tpu.dot_dimension_numbers<[1], [1], [0], [0], [0, 0, 1, 0], [], []>} : vector<8x8xbf16>, vector<8x8xbf16>, vector<8x8xf32> -> vector<8x8xf32>
    %cst_40 = arith.constant 0.353553385 : f32
    %76 = vector.broadcast %cst_40 : f32 to vector<8x8xf32>
    %77 = arith.mulf %75, %76 : vector<8x8xf32>
    %78 = vector.extract_strided_slice %5 {offsets = [0, 0, 0], sizes = [1, 8, 8], strides = [1, 1, 1]} : vector<2x8x8xf32> to vector<1x8x8xf32>
    %79 = vector.shape_cast %78 : vector<1x8x8xf32> to vector<8x8xf32>
    %80 = arith.addf %77, %79 : vector<8x8xf32>
    %cst_41 = arith.constant dense<0xFF800000> : vector<8xf32>
    %81 = vector.multi_reduction <maximumf>, %80, %cst_41 [1] : vector<8x8xf32> to vector<8xf32>
    %82 = vector.shape_cast %81 : vector<8xf32> to vector<8x1xf32>
    %83 = vector.broadcast %82 : vector<8x1xf32> to vector<8x8xf32>
    %84 = arith.subf %80, %83 : vector<8x8xf32>
    %85 = math.exp %84 : vector<8x8xf32>
    %cst_42 = arith.constant dense<0.000000e+00> : vector<8xf32>
    %86 = vector.multi_reduction <add>, %85, %cst_42 [1] : vector<8x8xf32> to vector<8xf32>
    %87 = vector.shape_cast %86 : vector<8xf32> to vector<8x1xf32>
    %88 = tpu.reciprocal %87 {approx = true} : vector<8x1xf32> -> vector<8x1xf32>
    %89 = vector.broadcast %88 : vector<8x1xf32> to vector<8x8xf32>
    %90 = arith.mulf %85, %89 : vector<8x8xf32>
    %c0_43 = arith.constant 0 : index
    %c2 = arith.constant 2 : index
    %c0_44 = arith.constant 0 : index
    %c0_45 = arith.constant 0 : index
    %91 = vector.load %arg23[%c0_43, %c2, %c0_44, %c0_45] : memref<2x4x8x8xf32, #tpu.memory_space<vmem>>, vector<1x1x8x8xf32>
    %92 = vector.shape_cast %91 : vector<1x1x8x8xf32> to vector<8x8xf32>
    %93 = vector.shape_cast %90 : vector<8x8xf32> to vector<1x1x8x8xf32>
    tpu.vector_store %arg23[%c0_43, %c2, %c0_44, %c0_45], %93 {strides = array<i32>} : memref<2x4x8x8xf32, #tpu.memory_space<vmem>>, vector<1x1x8x8xf32>,
    %94 = arith.truncf %90 : vector<8x8xf32> to vector<8x8xbf16>
    %cst_46 = arith.constant dense<0.000000e+00> : vector<8x8xf32>
    %95 = tpu.matmul %94, %74, %cst_46 {dimension_numbers = #tpu.dot_dimension_numbers<[1], [0], [0], [1], [0, 0, 1, 1], [], []>} : vector<8x8xbf16>, vector<8x8xbf16>, vector<8x8xf32> -> vector<8x8xf32>
    %96 = vector.extract_strided_slice %21 {offsets = [0, 24], sizes = [8, 8], strides = [1, 1]} : vector<8x32xbf16> to vector<8x8xbf16>
    %97 = vector.extract_strided_slice %22 {offsets = [0, 24], sizes = [8, 8], strides = [1, 1]} : vector<8x32xbf16> to vector<8x8xbf16>
    %98 = vector.extract_strided_slice %23 {offsets = [0, 24], sizes = [8, 8], strides = [1, 1]} : vector<8x32xbf16> to vector<8x8xbf16>
    %cst_47 = arith.constant dense<0.000000e+00> : vector<8x8xf32>
    %99 = tpu.matmul %96, %97, %cst_47 {dimension_numbers = #tpu.dot_dimension_numbers<[1], [1], [0], [0], [0, 0, 1, 0], [], []>} : vector<8x8xbf16>, vector<8x8xbf16>, vector<8x8xf32> -> vector<8x8xf32>
    %cst_48 = arith.constant 0.353553385 : f32
    %100 = vector.broadcast %cst_48 : f32 to vector<8x8xf32>
    %101 = arith.mulf %99, %100 : vector<8x8xf32>
    %102 = vector.extract_strided_slice %5 {offsets = [0, 0, 0], sizes = [1, 8, 8], strides = [1, 1, 1]} : vector<2x8x8xf32> to vector<1x8x8xf32>
    %103 = vector.shape_cast %102 : vector<1x8x8xf32> to vector<8x8xf32>
    %104 = arith.addf %101, %103 : vector<8x8xf32>
    %cst_49 = arith.constant dense<0xFF800000> : vector<8xf32>
    %105 = vector.multi_reduction <maximumf>, %104, %cst_49 [1] : vector<8x8xf32> to vector<8xf32>
    %106 = vector.shape_cast %105 : vector<8xf32> to vector<8x1xf32>
    %107 = vector.broadcast %106 : vector<8x1xf32> to vector<8x8xf32>
    %108 = arith.subf %104, %107 : vector<8x8xf32>
    %109 = math.exp %108 : vector<8x8xf32>
    %cst_50 = arith.constant dense<0.000000e+00> : vector<8xf32>
    %110 = vector.multi_reduction <add>, %109, %cst_50 [1] : vector<8x8xf32> to vector<8xf32>
    %111 = vector.shape_cast %110 : vector<8xf32> to vector<8x1xf32>
    %112 = tpu.reciprocal %111 {approx = true} : vector<8x1xf32> -> vector<8x1xf32>
    %113 = vector.broadcast %112 : vector<8x1xf32> to vector<8x8xf32>
    %114 = arith.mulf %109, %113 : vector<8x8xf32>
    %c0_51 = arith.constant 0 : index
    %c3 = arith.constant 3 : index
    %c0_52 = arith.constant 0 : index
    %c0_53 = arith.constant 0 : index
    %115 = vector.load %arg23[%c0_51, %c3, %c0_52, %c0_53] : memref<2x4x8x8xf32, #tpu.memory_space<vmem>>, vector<1x1x8x8xf32>
    %116 = vector.shape_cast %115 : vector<1x1x8x8xf32> to vector<8x8xf32>
    %117 = vector.shape_cast %114 : vector<8x8xf32> to vector<1x1x8x8xf32>
    tpu.vector_store %arg23[%c0_51, %c3, %c0_52, %c0_53], %117 {strides = array<i32>} : memref<2x4x8x8xf32, #tpu.memory_space<vmem>>, vector<1x1x8x8xf32>,
    %118 = arith.truncf %114 : vector<8x8xf32> to vector<8x8xbf16>
    %cst_54 = arith.constant dense<0.000000e+00> : vector<8x8xf32>
    %119 = tpu.matmul %118, %98, %cst_54 {dimension_numbers = #tpu.dot_dimension_numbers<[1], [0], [0], [1], [0, 0, 1, 1], [], []>} : vector<8x8xbf16>, vector<8x8xbf16>, vector<8x8xf32> -> vector<8x8xf32>
    %120 = tpu.concatenate %47, %71, %95, %119 in 1 : vector<8x8xf32>, vector<8x8xf32>, vector<8x8xf32>, vector<8x8xf32> -> vector<8x32xf32>
    %121 = arith.truncf %120 : vector<8x32xf32> to vector<8x32xbf16>
    %cst_55 = arith.constant dense<0.000000e+00> : vector<8x32xf32>
    %122 = tpu.matmul %121, %9, %cst_55 {dimension_numbers = #tpu.dot_dimension_numbers<[1], [0], [0], [1], [0, 0, 1, 1], [], []>} : vector<8x32xbf16>, vector<32x32xbf16>, vector<8x32xf32> -> vector<8x32xf32>
    %c0_56 = arith.constant 0 : index
    %c0_57 = arith.constant 0 : index
    %123 = vector.load %arg25[%c0_56, %c0_57] : memref<16x32xf32, #tpu.memory_space<vmem>>, vector<8x32xf32>
    tpu.vector_store %arg25[%c0_56, %c0_57], %122 {strides = array<i32>} : memref<16x32xf32, #tpu.memory_space<vmem>>, vector<8x32xf32>,
    %124 = vector.extract_strided_slice %14 {offsets = [8, 0], sizes = [8, 32], strides = [1, 1]} : vector<16x32xbf16> to vector<8x32xbf16>
    %125 = vector.extract_strided_slice %17 {offsets = [8, 0], sizes = [8, 32], strides = [1, 1]} : vector<16x32xbf16> to vector<8x32xbf16>
    %126 = vector.extract_strided_slice %20 {offsets = [8, 0], sizes = [8, 32], strides = [1, 1]} : vector<16x32xbf16> to vector<8x32xbf16>
    %127 = vector.extract_strided_slice %124 {offsets = [0, 0], sizes = [8, 8], strides = [1, 1]} : vector<8x32xbf16> to vector<8x8xbf16>
    %128 = vector.extract_strided_slice %125 {offsets = [0, 0], sizes = [8, 8], strides = [1, 1]} : vector<8x32xbf16> to vector<8x8xbf16>
    %129 = vector.extract_strided_slice %126 {offsets = [0, 0], sizes = [8, 8], strides = [1, 1]} : vector<8x32xbf16> to vector<8x8xbf16>
    %cst_58 = arith.constant dense<0.000000e+00> : vector<8x8xf32>
    %130 = tpu.matmul %127, %128, %cst_58 {dimension_numbers = #tpu.dot_dimension_numbers<[1], [1], [0], [0], [0, 0, 1, 0], [], []>} : vector<8x8xbf16>, vector<8x8xbf16>, vector<8x8xf32> -> vector<8x8xf32>
    %cst_59 = arith.constant 0.353553385 : f32
    %131 = vector.broadcast %cst_59 : f32 to vector<8x8xf32>
    %132 = arith.mulf %130, %131 : vector<8x8xf32>
    %133 = vector.extract_strided_slice %5 {offsets = [1, 0, 0], sizes = [1, 8, 8], strides = [1, 1, 1]} : vector<2x8x8xf32> to vector<1x8x8xf32>
    %134 = vector.shape_cast %133 : vector<1x8x8xf32> to vector<8x8xf32>
    %135 = arith.addf %132, %134 : vector<8x8xf32>
    %cst_60 = arith.constant dense<0xFF800000> : vector<8xf32>
    %136 = vector.multi_reduction <maximumf>, %135, %cst_60 [1] : vector<8x8xf32> to vector<8xf32>
    %137 = vector.shape_cast %136 : vector<8xf32> to vector<8x1xf32>
    %138 = vector.broadcast %137 : vector<8x1xf32> to vector<8x8xf32>
    %139 = arith.subf %135, %138 : vector<8x8xf32>
    %140 = math.exp %139 : vector<8x8xf32>
    %cst_61 = arith.constant dense<0.000000e+00> : vector<8xf32>
    %141 = vector.multi_reduction <add>, %140, %cst_61 [1] : vector<8x8xf32> to vector<8xf32>
    %142 = vector.shape_cast %141 : vector<8xf32> to vector<8x1xf32>
    %143 = tpu.reciprocal %142 {approx = true} : vector<8x1xf32> -> vector<8x1xf32>
    %144 = vector.broadcast %143 : vector<8x1xf32> to vector<8x8xf32>
    %145 = arith.mulf %140, %144 : vector<8x8xf32>
    %c1_62 = arith.constant 1 : index
    %c0_63 = arith.constant 0 : index
    %c0_64 = arith.constant 0 : index
    %c0_65 = arith.constant 0 : index
    %146 = vector.load %arg23[%c1_62, %c0_63, %c0_64, %c0_65] : memref<2x4x8x8xf32, #tpu.memory_space<vmem>>, vector<1x1x8x8xf32>
    %147 = vector.shape_cast %146 : vector<1x1x8x8xf32> to vector<8x8xf32>
    %148 = vector.shape_cast %145 : vector<8x8xf32> to vector<1x1x8x8xf32>
    tpu.vector_store %arg23[%c1_62, %c0_63, %c0_64, %c0_65], %148 {strides = array<i32>} : memref<2x4x8x8xf32, #tpu.memory_space<vmem>>, vector<1x1x8x8xf32>,
    %149 = arith.truncf %145 : vector<8x8xf32> to vector<8x8xbf16>
    %cst_66 = arith.constant dense<0.000000e+00> : vector<8x8xf32>
    %150 = tpu.matmul %149, %129, %cst_66 {dimension_numbers = #tpu.dot_dimension_numbers<[1], [0], [0], [1], [0, 0, 1, 1], [], []>} : vector<8x8xbf16>, vector<8x8xbf16>, vector<8x8xf32> -> vector<8x8xf32>
    %151 = vector.extract_strided_slice %124 {offsets = [0, 8], sizes = [8, 8], strides = [1, 1]} : vector<8x32xbf16> to vector<8x8xbf16>
    %152 = vector.extract_strided_slice %125 {offsets = [0, 8], sizes = [8, 8], strides = [1, 1]} : vector<8x32xbf16> to vector<8x8xbf16>
    %153 = vector.extract_strided_slice %126 {offsets = [0, 8], sizes = [8, 8], strides = [1, 1]} : vector<8x32xbf16> to vector<8x8xbf16>
    %cst_67 = arith.constant dense<0.000000e+00> : vector<8x8xf32>
    %154 = tpu.matmul %151, %152, %cst_67 {dimension_numbers = #tpu.dot_dimension_numbers<[1], [1], [0], [0], [0, 0, 1, 0], [], []>} : vector<8x8xbf16>, vector<8x8xbf16>, vector<8x8xf32> -> vector<8x8xf32>
    %cst_68 = arith.constant 0.353553385 : f32
    %155 = vector.broadcast %cst_68 : f32 to vector<8x8xf32>
    %156 = arith.mulf %154, %155 : vector<8x8xf32>
    %157 = vector.extract_strided_slice %5 {offsets = [1, 0, 0], sizes = [1, 8, 8], strides = [1, 1, 1]} : vector<2x8x8xf32> to vector<1x8x8xf32>
    %158 = vector.shape_cast %157 : vector<1x8x8xf32> to vector<8x8xf32>
    %159 = arith.addf %156, %158 : vector<8x8xf32>
    %cst_69 = arith.constant dense<0xFF800000> : vector<8xf32>
    %160 = vector.multi_reduction <maximumf>, %159, %cst_69 [1] : vector<8x8xf32> to vector<8xf32>
    %161 = vector.shape_cast %160 : vector<8xf32> to vector<8x1xf32>
    %162 = vector.broadcast %161 : vector<8x1xf32> to vector<8x8xf32>
    %163 = arith.subf %159, %162 : vector<8x8xf32>
    %164 = math.exp %163 : vector<8x8xf32>
    %cst_70 = arith.constant dense<0.000000e+00> : vector<8xf32>
    %165 = vector.multi_reduction <add>, %164, %cst_70 [1] : vector<8x8xf32> to vector<8xf32>
    %166 = vector.shape_cast %165 : vector<8xf32> to vector<8x1xf32>
    %167 = tpu.reciprocal %166 {approx = true} : vector<8x1xf32> -> vector<8x1xf32>
    %168 = vector.broadcast %167 : vector<8x1xf32> to vector<8x8xf32>
    %169 = arith.mulf %164, %168 : vector<8x8xf32>
    %c1_71 = arith.constant 1 : index
    %c1_72 = arith.constant 1 : index
    %c0_73 = arith.constant 0 : index
    %c0_74 = arith.constant 0 : index
    %170 = vector.load %arg23[%c1_71, %c1_72, %c0_73, %c0_74] : memref<2x4x8x8xf32, #tpu.memory_space<vmem>>, vector<1x1x8x8xf32>
    %171 = vector.shape_cast %170 : vector<1x1x8x8xf32> to vector<8x8xf32>
    %172 = vector.shape_cast %169 : vector<8x8xf32> to vector<1x1x8x8xf32>
    tpu.vector_store %arg23[%c1_71, %c1_72, %c0_73, %c0_74], %172 {strides = array<i32>} : memref<2x4x8x8xf32, #tpu.memory_space<vmem>>, vector<1x1x8x8xf32>,
    %173 = arith.truncf %169 : vector<8x8xf32> to vector<8x8xbf16>
    %cst_75 = arith.constant dense<0.000000e+00> : vector<8x8xf32>
    %174 = tpu.matmul %173, %153, %cst_75 {dimension_numbers = #tpu.dot_dimension_numbers<[1], [0], [0], [1], [0, 0, 1, 1], [], []>} : vector<8x8xbf16>, vector<8x8xbf16>, vector<8x8xf32> -> vector<8x8xf32>
    %175 = vector.extract_strided_slice %124 {offsets = [0, 16], sizes = [8, 8], strides = [1, 1]} : vector<8x32xbf16> to vector<8x8xbf16>
    %176 = vector.extract_strided_slice %125 {offsets = [0, 16], sizes = [8, 8], strides = [1, 1]} : vector<8x32xbf16> to vector<8x8xbf16>
    %177 = vector.extract_strided_slice %126 {offsets = [0, 16], sizes = [8, 8], strides = [1, 1]} : vector<8x32xbf16> to vector<8x8xbf16>
    %cst_76 = arith.constant dense<0.000000e+00> : vector<8x8xf32>
    %178 = tpu.matmul %175, %176, %cst_76 {dimension_numbers = #tpu.dot_dimension_numbers<[1], [1], [0], [0], [0, 0, 1, 0], [], []>} : vector<8x8xbf16>, vector<8x8xbf16>, vector<8x8xf32> -> vector<8x8xf32>
    %cst_77 = arith.constant 0.353553385 : f32
    %179 = vector.broadcast %cst_77 : f32 to vector<8x8xf32>
    %180 = arith.mulf %178, %179 : vector<8x8xf32>
    %181 = vector.extract_strided_slice %5 {offsets = [1, 0, 0], sizes = [1, 8, 8], strides = [1, 1, 1]} : vector<2x8x8xf32> to vector<1x8x8xf32>
    %182 = vector.shape_cast %181 : vector<1x8x8xf32> to vector<8x8xf32>
    %183 = arith.addf %180, %182 : vector<8x8xf32>
    %cst_78 = arith.constant dense<0xFF800000> : vector<8xf32>
    %184 = vector.multi_reduction <maximumf>, %183, %cst_78 [1] : vector<8x8xf32> to vector<8xf32>
    %185 = vector.shape_cast %184 : vector<8xf32> to vector<8x1xf32>
    %186 = vector.broadcast %185 : vector<8x1xf32> to vector<8x8xf32>
    %187 = arith.subf %183, %186 : vector<8x8xf32>
    %188 = math.exp %187 : vector<8x8xf32>
    %cst_79 = arith.constant dense<0.000000e+00> : vector<8xf32>
    %189 = vector.multi_reduction <add>, %188, %cst_79 [1] : vector<8x8xf32> to vector<8xf32>
    %190 = vector.shape_cast %189 : vector<8xf32> to vector<8x1xf32>
    %191 = tpu.reciprocal %190 {approx = true} : vector<8x1xf32> -> vector<8x1xf32>
    %192 = vector.broadcast %191 : vector<8x1xf32> to vector<8x8xf32>
    %193 = arith.mulf %188, %192 : vector<8x8xf32>
    %c1_80 = arith.constant 1 : index
    %c2_81 = arith.constant 2 : index
    %c0_82 = arith.constant 0 : index
    %c0_83 = arith.constant 0 : index
    %194 = vector.load %arg23[%c1_80, %c2_81, %c0_82, %c0_83] : memref<2x4x8x8xf32, #tpu.memory_space<vmem>>, vector<1x1x8x8xf32>
    %195 = vector.shape_cast %194 : vector<1x1x8x8xf32> to vector<8x8xf32>
    %196 = vector.shape_cast %193 : vector<8x8xf32> to vector<1x1x8x8xf32>
    tpu.vector_store %arg23[%c1_80, %c2_81, %c0_82, %c0_83], %196 {strides = array<i32>} : memref<2x4x8x8xf32, #tpu.memory_space<vmem>>, vector<1x1x8x8xf32>,
    %197 = arith.truncf %193 : vector<8x8xf32> to vector<8x8xbf16>
    %cst_84 = arith.constant dense<0.000000e+00> : vector<8x8xf32>
    %198 = tpu.matmul %197, %177, %cst_84 {dimension_numbers = #tpu.dot_dimension_numbers<[1], [0], [0], [1], [0, 0, 1, 1], [], []>} : vector<8x8xbf16>, vector<8x8xbf16>, vector<8x8xf32> -> vector<8x8xf32>
    %199 = vector.extract_strided_slice %124 {offsets = [0, 24], sizes = [8, 8], strides = [1, 1]} : vector<8x32xbf16> to vector<8x8xbf16>
    %200 = vector.extract_strided_slice %125 {offsets = [0, 24], sizes = [8, 8], strides = [1, 1]} : vector<8x32xbf16> to vector<8x8xbf16>
    %201 = vector.extract_strided_slice %126 {offsets = [0, 24], sizes = [8, 8], strides = [1, 1]} : vector<8x32xbf16> to vector<8x8xbf16>
    %cst_85 = arith.constant dense<0.000000e+00> : vector<8x8xf32>
    %202 = tpu.matmul %199, %200, %cst_85 {dimension_numbers = #tpu.dot_dimension_numbers<[1], [1], [0], [0], [0, 0, 1, 0], [], []>} : vector<8x8xbf16>, vector<8x8xbf16>, vector<8x8xf32> -> vector<8x8xf32>
    %cst_86 = arith.constant 0.353553385 : f32
    %203 = vector.broadcast %cst_86 : f32 to vector<8x8xf32>
    %204 = arith.mulf %202, %203 : vector<8x8xf32>
    %205 = vector.extract_strided_slice %5 {offsets = [1, 0, 0], sizes = [1, 8, 8], strides = [1, 1, 1]} : vector<2x8x8xf32> to vector<1x8x8xf32>
    %206 = vector.shape_cast %205 : vector<1x8x8xf32> to vector<8x8xf32>
    %207 = arith.addf %204, %206 : vector<8x8xf32>
    %cst_87 = arith.constant dense<0xFF800000> : vector<8xf32>
    %208 = vector.multi_reduction <maximumf>, %207, %cst_87 [1] : vector<8x8xf32> to vector<8xf32>
    %209 = vector.shape_cast %208 : vector<8xf32> to vector<8x1xf32>
    %210 = vector.broadcast %209 : vector<8x1xf32> to vector<8x8xf32>
    %211 = arith.subf %207, %210 : vector<8x8xf32>
    %212 = math.exp %211 : vector<8x8xf32>
    %cst_88 = arith.constant dense<0.000000e+00> : vector<8xf32>
    %213 = vector.multi_reduction <add>, %212, %cst_88 [1] : vector<8x8xf32> to vector<8xf32>
    %214 = vector.shape_cast %213 : vector<8xf32> to vector<8x1xf32>
    %215 = tpu.reciprocal %214 {approx = true} : vector<8x1xf32> -> vector<8x1xf32>
    %216 = vector.broadcast %215 : vector<8x1xf32> to vector<8x8xf32>
    %217 = arith.mulf %212, %216 : vector<8x8xf32>
    %c1_89 = arith.constant 1 : index
    %c3_90 = arith.constant 3 : index
    %c0_91 = arith.constant 0 : index
    %c0_92 = arith.constant 0 : index
    %218 = vector.load %arg23[%c1_89, %c3_90, %c0_91, %c0_92] : memref<2x4x8x8xf32, #tpu.memory_space<vmem>>, vector<1x1x8x8xf32>
    %219 = vector.shape_cast %218 : vector<1x1x8x8xf32> to vector<8x8xf32>
    %220 = vector.shape_cast %217 : vector<8x8xf32> to vector<1x1x8x8xf32>
    tpu.vector_store %arg23[%c1_89, %c3_90, %c0_91, %c0_92], %220 {strides = array<i32>} : memref<2x4x8x8xf32, #tpu.memory_space<vmem>>, vector<1x1x8x8xf32>,
    %221 = arith.truncf %217 : vector<8x8xf32> to vector<8x8xbf16>
    %cst_93 = arith.constant dense<0.000000e+00> : vector<8x8xf32>
    %222 = tpu.matmul %221, %201, %cst_93 {dimension_numbers = #tpu.dot_dimension_numbers<[1], [0], [0], [1], [0, 0, 1, 1], [], []>} : vector<8x8xbf16>, vector<8x8xbf16>, vector<8x8xf32> -> vector<8x8xf32>
    %223 = tpu.concatenate %150, %174, %198, %222 in 1 : vector<8x8xf32>, vector<8x8xf32>, vector<8x8xf32>, vector<8x8xf32> -> vector<8x32xf32>
    %224 = arith.truncf %223 : vector<8x32xf32> to vector<8x32xbf16>
    %cst_94 = arith.constant dense<0.000000e+00> : vector<8x32xf32>
    %225 = tpu.matmul %224, %9, %cst_94 {dimension_numbers = #tpu.dot_dimension_numbers<[1], [0], [0], [1], [0, 0, 1, 1], [], []>} : vector<8x32xbf16>, vector<32x32xbf16>, vector<8x32xf32> -> vector<8x32xf32>
    %c8 = arith.constant 8 : index
    %c0_95 = arith.constant 0 : index
    %226 = vector.load %arg25[%c8, %c0_95] : memref<16x32xf32, #tpu.memory_space<vmem>>, vector<8x32xf32>
    tpu.vector_store %arg25[%c8, %c0_95], %225 {strides = array<i32>} : memref<16x32xf32, #tpu.memory_space<vmem>>, vector<8x32xf32>,
    %c0_96 = arith.constant 0 : index
    %c0_97 = arith.constant 0 : index
    %227 = vector.load %arg25[%c0_96, %c0_97] : memref<16x32xf32, #tpu.memory_space<vmem>>, vector<16x32xf32>
    %228 = arith.addf %227, %1 : vector<16x32xf32>
    %cst_98 = arith.constant dense<0.000000e+00> : vector<16xf32>
    %229 = vector.multi_reduction <add>, %228, %cst_98 [1] : vector<16x32xf32> to vector<16xf32>
    %230 = vector.shape_cast %229 : vector<16xf32> to vector<16x1xf32>
    %cst_99 = arith.constant 3.200000e+01 : f32
    %231 = vector.broadcast %cst_99 : f32 to vector<16x1xf32>
    %232 = arith.divf %230, %231 : vector<16x1xf32>
    %233 = arith.mulf %228, %228 : vector<16x32xf32>
    %cst_100 = arith.constant dense<0.000000e+00> : vector<16xf32>
    %234 = vector.multi_reduction <add>, %233, %cst_100 [1] : vector<16x32xf32> to vector<16xf32>
    %235 = vector.shape_cast %234 : vector<16xf32> to vector<16x1xf32>
    %cst_101 = arith.constant 3.200000e+01 : f32
    %236 = vector.broadcast %cst_101 : f32 to vector<16x1xf32>
    %237 = arith.divf %235, %236 : vector<16x1xf32>
    %238 = arith.mulf %232, %232 : vector<16x1xf32>
    %239 = arith.subf %237, %238 : vector<16x1xf32>
    %240 = vector.broadcast %232 : vector<16x1xf32> to vector<16x32xf32>
    %241 = arith.subf %228, %240 : vector<16x32xf32>
    %cst_102 = arith.constant 9.99999997E-7 : f32
    %242 = vector.broadcast %cst_102 : f32 to vector<16x1xf32>
    %243 = arith.addf %239, %242 : vector<16x1xf32>
    %244 = math.rsqrt %243 : vector<16x1xf32>
    %245 = vector.broadcast %244 : vector<16x1xf32> to vector<16x32xf32>
    %246 = arith.mulf %241, %245 : vector<16x32xf32>
    %247 = vector.broadcast %10 : vector<1x32xf32> to vector<16x32xf32>
    %248 = arith.mulf %246, %247 : vector<16x32xf32>
    %249 = vector.broadcast %11 : vector<1x32xf32> to vector<16x32xf32>
    %250 = arith.addf %248, %249 : vector<16x32xf32>
    %c0_103 = arith.constant 0 : index
    %c0_104 = arith.constant 0 : index
    %251 = vector.load %arg10[%c0_103, %c0_104] : memref<32x32xbf16, #tpu.memory_space<vmem>>, vector<32x32xbf16>
    %c0_105 = arith.constant 0 : index
    %c0_106 = arith.constant 0 : index
    %252 = vector.load %arg11[%c0_105, %c0_106] : memref<32x32xbf16, #tpu.memory_space<vmem>>, vector<32x32xbf16>
    %c0_107 = arith.constant 0 : index
    %c0_108 = arith.constant 0 : index
    %253 = vector.load %arg12[%c0_107, %c0_108] : memref<32x32xbf16, #tpu.memory_space<vmem>>, vector<32x32xbf16>
    %c0_109 = arith.constant 0 : index
    %c0_110 = arith.constant 0 : index
    %254 = vector.load %arg13[%c0_109, %c0_110] : memref<32x32xbf16, #tpu.memory_space<vmem>>, vector<32x32xbf16>
    %c0_111 = arith.constant 0 : index
    %c0_112 = arith.constant 0 : index
    %255 = vector.load %arg14[%c0_111, %c0_112] : memref<1x32xf32, #tpu.memory_space<vmem>>, vector<1x32xf32>
    %c0_113 = arith.constant 0 : index
    %c0_114 = arith.constant 0 : index
    %256 = vector.load %arg15[%c0_113, %c0_114] : memref<1x32xf32, #tpu.memory_space<vmem>>, vector<1x32xf32>
    %257 = arith.truncf %250 : vector<16x32xf32> to vector<16x32xbf16>
    %cst_115 = arith.constant dense<0.000000e+00> : vector<16x32xf32>
    %258 = tpu.matmul %257, %251, %cst_115 {dimension_numbers = #tpu.dot_dimension_numbers<[1], [0], [0], [1], [0, 0, 1, 1], [], []>} : vector<16x32xbf16>, vector<32x32xbf16>, vector<16x32xf32> -> vector<16x32xf32>
    %259 = arith.truncf %258 : vector<16x32xf32> to vector<16x32xbf16>
    %260 = arith.truncf %3 : vector<32x32xf32> to vector<32x32xbf16>
    %cst_116 = arith.constant dense<0.000000e+00> : vector<32x32xf32>
    %261 = tpu.matmul %260, %252, %cst_116 {dimension_numbers = #tpu.dot_dimension_numbers<[1], [0], [0], [1], [0, 0, 1, 1], [], []>} : vector<32x32xbf16>, vector<32x32xbf16>, vector<32x32xf32> -> vector<32x32xf32>
    %262 = arith.truncf %261 : vector<32x32xf32> to vector<32x32xbf16>
    %263 = arith.truncf %3 : vector<32x32xf32> to vector<32x32xbf16>
    %cst_117 = arith.constant dense<0.000000e+00> : vector<32x32xf32>
    %264 = tpu.matmul %263, %253, %cst_117 {dimension_numbers = #tpu.dot_dimension_numbers<[1], [0], [0], [1], [0, 0, 1, 1], [], []>} : vector<32x32xbf16>, vector<32x32xbf16>, vector<32x32xf32> -> vector<32x32xf32>
    %265 = arith.truncf %264 : vector<32x32xf32> to vector<32x32xbf16>
    %266 = vector.extract_strided_slice %259 {offsets = [0, 0], sizes = [8, 32], strides = [1, 1]} : vector<16x32xbf16> to vector<8x32xbf16>
    %267 = vector.extract_strided_slice %262 {offsets = [0, 0], sizes = [16, 32], strides = [1, 1]} : vector<32x32xbf16> to vector<16x32xbf16>
    %268 = vector.extract_strided_slice %265 {offsets = [0, 0], sizes = [16, 32], strides = [1, 1]} : vector<32x32xbf16> to vector<16x32xbf16>
    %269 = vector.extract_strided_slice %266 {offsets = [0, 0], sizes = [8, 8], strides = [1, 1]} : vector<8x32xbf16> to vector<8x8xbf16>
    %270 = vector.extract_strided_slice %267 {offsets = [0, 0], sizes = [16, 8], strides = [1, 1]} : vector<16x32xbf16> to vector<16x8xbf16>
    %271 = vector.extract_strided_slice %268 {offsets = [0, 0], sizes = [16, 8], strides = [1, 1]} : vector<16x32xbf16> to vector<16x8xbf16>
    %cst_118 = arith.constant dense<0.000000e+00> : vector<8x16xf32>
    %272 = tpu.matmul %269, %270, %cst_118 {dimension_numbers = #tpu.dot_dimension_numbers<[1], [1], [0], [0], [0, 0, 1, 0], [], []>} : vector<8x8xbf16>, vector<16x8xbf16>, vector<8x16xf32> -> vector<8x16xf32>
    %cst_119 = arith.constant 0.353553385 : f32
    %273 = vector.broadcast %cst_119 : f32 to vector<8x16xf32>
    %274 = arith.mulf %272, %273 : vector<8x16xf32>
    %cst_120 = arith.constant dense<0xFF800000> : vector<8xf32>
    %275 = vector.multi_reduction <maximumf>, %274, %cst_120 [1] : vector<8x16xf32> to vector<8xf32>
    %276 = vector.shape_cast %275 : vector<8xf32> to vector<8x1xf32>
    %277 = vector.broadcast %276 : vector<8x1xf32> to vector<8x16xf32>
    %278 = arith.subf %274, %277 : vector<8x16xf32>
    %279 = math.exp %278 : vector<8x16xf32>
    %cst_121 = arith.constant dense<0.000000e+00> : vector<8xf32>
    %280 = vector.multi_reduction <add>, %279, %cst_121 [1] : vector<8x16xf32> to vector<8xf32>
    %281 = vector.shape_cast %280 : vector<8xf32> to vector<8x1xf32>
    %282 = tpu.reciprocal %281 {approx = true} : vector<8x1xf32> -> vector<8x1xf32>
    %283 = vector.broadcast %282 : vector<8x1xf32> to vector<8x16xf32>
    %284 = arith.mulf %279, %283 : vector<8x16xf32>
    %c0_122 = arith.constant 0 : index
    %c0_123 = arith.constant 0 : index
    %c0_124 = arith.constant 0 : index
    %c0_125 = arith.constant 0 : index
    %285 = vector.load %arg24[%c0_122, %c0_123, %c0_124, %c0_125] : memref<2x4x8x16xf32, #tpu.memory_space<vmem>>, vector<1x1x8x16xf32>
    %286 = vector.shape_cast %285 : vector<1x1x8x16xf32> to vector<8x16xf32>
    %287 = vector.shape_cast %284 : vector<8x16xf32> to vector<1x1x8x16xf32>
    tpu.vector_store %arg24[%c0_122, %c0_123, %c0_124, %c0_125], %287 {strides = array<i32>} : memref<2x4x8x16xf32, #tpu.memory_space<vmem>>, vector<1x1x8x16xf32>,
    %288 = arith.truncf %284 : vector<8x16xf32> to vector<8x16xbf16>
    %cst_126 = arith.constant dense<0.000000e+00> : vector<8x8xf32>
    %289 = tpu.matmul %288, %271, %cst_126 {dimension_numbers = #tpu.dot_dimension_numbers<[1], [0], [0], [1], [0, 0, 1, 1], [], []>} : vector<8x16xbf16>, vector<16x8xbf16>, vector<8x8xf32> -> vector<8x8xf32>
    %290 = vector.extract_strided_slice %266 {offsets = [0, 8], sizes = [8, 8], strides = [1, 1]} : vector<8x32xbf16> to vector<8x8xbf16>
    %291 = vector.extract_strided_slice %267 {offsets = [0, 8], sizes = [16, 8], strides = [1, 1]} : vector<16x32xbf16> to vector<16x8xbf16>
    %292 = vector.extract_strided_slice %268 {offsets = [0, 8], sizes = [16, 8], strides = [1, 1]} : vector<16x32xbf16> to vector<16x8xbf16>
    %cst_127 = arith.constant dense<0.000000e+00> : vector<8x16xf32>
    %293 = tpu.matmul %290, %291, %cst_127 {dimension_numbers = #tpu.dot_dimension_numbers<[1], [1], [0], [0], [0, 0, 1, 0], [], []>} : vector<8x8xbf16>, vector<16x8xbf16>, vector<8x16xf32> -> vector<8x16xf32>
    %cst_128 = arith.constant 0.353553385 : f32
    %294 = vector.broadcast %cst_128 : f32 to vector<8x16xf32>
    %295 = arith.mulf %293, %294 : vector<8x16xf32>
    %cst_129 = arith.constant dense<0xFF800000> : vector<8xf32>
    %296 = vector.multi_reduction <maximumf>, %295, %cst_129 [1] : vector<8x16xf32> to vector<8xf32>
    %297 = vector.shape_cast %296 : vector<8xf32> to vector<8x1xf32>
    %298 = vector.broadcast %297 : vector<8x1xf32> to vector<8x16xf32>
    %299 = arith.subf %295, %298 : vector<8x16xf32>
    %300 = math.exp %299 : vector<8x16xf32>
    %cst_130 = arith.constant dense<0.000000e+00> : vector<8xf32>
    %301 = vector.multi_reduction <add>, %300, %cst_130 [1] : vector<8x16xf32> to vector<8xf32>
    %302 = vector.shape_cast %301 : vector<8xf32> to vector<8x1xf32>
    %303 = tpu.reciprocal %302 {approx = true} : vector<8x1xf32> -> vector<8x1xf32>
    %304 = vector.broadcast %303 : vector<8x1xf32> to vector<8x16xf32>
    %305 = arith.mulf %300, %304 : vector<8x16xf32>
    %c0_131 = arith.constant 0 : index
    %c1_132 = arith.constant 1 : index
    %c0_133 = arith.constant 0 : index
    %c0_134 = arith.constant 0 : index
    %306 = vector.load %arg24[%c0_131, %c1_132, %c0_133, %c0_134] : memref<2x4x8x16xf32, #tpu.memory_space<vmem>>, vector<1x1x8x16xf32>
    %307 = vector.shape_cast %306 : vector<1x1x8x16xf32> to vector<8x16xf32>
    %308 = vector.shape_cast %305 : vector<8x16xf32> to vector<1x1x8x16xf32>
    tpu.vector_store %arg24[%c0_131, %c1_132, %c0_133, %c0_134], %308 {strides = array<i32>} : memref<2x4x8x16xf32, #tpu.memory_space<vmem>>, vector<1x1x8x16xf32>,
    %309 = arith.truncf %305 : vector<8x16xf32> to vector<8x16xbf16>
    %cst_135 = arith.constant dense<0.000000e+00> : vector<8x8xf32>
    %310 = tpu.matmul %309, %292, %cst_135 {dimension_numbers = #tpu.dot_dimension_numbers<[1], [0], [0], [1], [0, 0, 1, 1], [], []>} : vector<8x16xbf16>, vector<16x8xbf16>, vector<8x8xf32> -> vector<8x8xf32>
    %311 = vector.extract_strided_slice %266 {offsets = [0, 16], sizes = [8, 8], strides = [1, 1]} : vector<8x32xbf16> to vector<8x8xbf16>
    %312 = vector.extract_strided_slice %267 {offsets = [0, 16], sizes = [16, 8], strides = [1, 1]} : vector<16x32xbf16> to vector<16x8xbf16>
    %313 = vector.extract_strided_slice %268 {offsets = [0, 16], sizes = [16, 8], strides = [1, 1]} : vector<16x32xbf16> to vector<16x8xbf16>
    %cst_136 = arith.constant dense<0.000000e+00> : vector<8x16xf32>
    %314 = tpu.matmul %311, %312, %cst_136 {dimension_numbers = #tpu.dot_dimension_numbers<[1], [1], [0], [0], [0, 0, 1, 0], [], []>} : vector<8x8xbf16>, vector<16x8xbf16>, vector<8x16xf32> -> vector<8x16xf32>
    %cst_137 = arith.constant 0.353553385 : f32
    %315 = vector.broadcast %cst_137 : f32 to vector<8x16xf32>
    %316 = arith.mulf %314, %315 : vector<8x16xf32>
    %cst_138 = arith.constant dense<0xFF800000> : vector<8xf32>
    %317 = vector.multi_reduction <maximumf>, %316, %cst_138 [1] : vector<8x16xf32> to vector<8xf32>
    %318 = vector.shape_cast %317 : vector<8xf32> to vector<8x1xf32>
    %319 = vector.broadcast %318 : vector<8x1xf32> to vector<8x16xf32>
    %320 = arith.subf %316, %319 : vector<8x16xf32>
    %321 = math.exp %320 : vector<8x16xf32>
    %cst_139 = arith.constant dense<0.000000e+00> : vector<8xf32>
    %322 = vector.multi_reduction <add>, %321, %cst_139 [1] : vector<8x16xf32> to vector<8xf32>
    %323 = vector.shape_cast %322 : vector<8xf32> to vector<8x1xf32>
    %324 = tpu.reciprocal %323 {approx = true} : vector<8x1xf32> -> vector<8x1xf32>
    %325 = vector.broadcast %324 : vector<8x1xf32> to vector<8x16xf32>
    %326 = arith.mulf %321, %325 : vector<8x16xf32>
    %c0_140 = arith.constant 0 : index
    %c2_141 = arith.constant 2 : index
    %c0_142 = arith.constant 0 : index
    %c0_143 = arith.constant 0 : index
    %327 = vector.load %arg24[%c0_140, %c2_141, %c0_142, %c0_143] : memref<2x4x8x16xf32, #tpu.memory_space<vmem>>, vector<1x1x8x16xf32>
    %328 = vector.shape_cast %327 : vector<1x1x8x16xf32> to vector<8x16xf32>
    %329 = vector.shape_cast %326 : vector<8x16xf32> to vector<1x1x8x16xf32>
    tpu.vector_store %arg24[%c0_140, %c2_141, %c0_142, %c0_143], %329 {strides = array<i32>} : memref<2x4x8x16xf32, #tpu.memory_space<vmem>>, vector<1x1x8x16xf32>,
    %330 = arith.truncf %326 : vector<8x16xf32> to vector<8x16xbf16>
    %cst_144 = arith.constant dense<0.000000e+00> : vector<8x8xf32>
    %331 = tpu.matmul %330, %313, %cst_144 {dimension_numbers = #tpu.dot_dimension_numbers<[1], [0], [0], [1], [0, 0, 1, 1], [], []>} : vector<8x16xbf16>, vector<16x8xbf16>, vector<8x8xf32> -> vector<8x8xf32>
    %332 = vector.extract_strided_slice %266 {offsets = [0, 24], sizes = [8, 8], strides = [1, 1]} : vector<8x32xbf16> to vector<8x8xbf16>
    %333 = vector.extract_strided_slice %267 {offsets = [0, 24], sizes = [16, 8], strides = [1, 1]} : vector<16x32xbf16> to vector<16x8xbf16>
    %334 = vector.extract_strided_slice %268 {offsets = [0, 24], sizes = [16, 8], strides = [1, 1]} : vector<16x32xbf16> to vector<16x8xbf16>
    %cst_145 = arith.constant dense<0.000000e+00> : vector<8x16xf32>
    %335 = tpu.matmul %332, %333, %cst_145 {dimension_numbers = #tpu.dot_dimension_numbers<[1], [1], [0], [0], [0, 0, 1, 0], [], []>} : vector<8x8xbf16>, vector<16x8xbf16>, vector<8x16xf32> -> vector<8x16xf32>
    %cst_146 = arith.constant 0.353553385 : f32
    %336 = vector.broadcast %cst_146 : f32 to vector<8x16xf32>
    %337 = arith.mulf %335, %336 : vector<8x16xf32>
    %cst_147 = arith.constant dense<0xFF800000> : vector<8xf32>
    %338 = vector.multi_reduction <maximumf>, %337, %cst_147 [1] : vector<8x16xf32> to vector<8xf32>
    %339 = vector.shape_cast %338 : vector<8xf32> to vector<8x1xf32>
    %340 = vector.broadcast %339 : vector<8x1xf32> to vector<8x16xf32>
    %341 = arith.subf %337, %340 : vector<8x16xf32>
    %342 = math.exp %341 : vector<8x16xf32>
    %cst_148 = arith.constant dense<0.000000e+00> : vector<8xf32>
    %343 = vector.multi_reduction <add>, %342, %cst_148 [1] : vector<8x16xf32> to vector<8xf32>
    %344 = vector.shape_cast %343 : vector<8xf32> to vector<8x1xf32>
    %345 = tpu.reciprocal %344 {approx = true} : vector<8x1xf32> -> vector<8x1xf32>
    %346 = vector.broadcast %345 : vector<8x1xf32> to vector<8x16xf32>
    %347 = arith.mulf %342, %346 : vector<8x16xf32>
    %c0_149 = arith.constant 0 : index
    %c3_150 = arith.constant 3 : index
    %c0_151 = arith.constant 0 : index
    %c0_152 = arith.constant 0 : index
    %348 = vector.load %arg24[%c0_149, %c3_150, %c0_151, %c0_152] : memref<2x4x8x16xf32, #tpu.memory_space<vmem>>, vector<1x1x8x16xf32>
    %349 = vector.shape_cast %348 : vector<1x1x8x16xf32> to vector<8x16xf32>
    %350 = vector.shape_cast %347 : vector<8x16xf32> to vector<1x1x8x16xf32>
    tpu.vector_store %arg24[%c0_149, %c3_150, %c0_151, %c0_152], %350 {strides = array<i32>} : memref<2x4x8x16xf32, #tpu.memory_space<vmem>>, vector<1x1x8x16xf32>,
    %351 = arith.truncf %347 : vector<8x16xf32> to vector<8x16xbf16>
    %cst_153 = arith.constant dense<0.000000e+00> : vector<8x8xf32>
    %352 = tpu.matmul %351, %334, %cst_153 {dimension_numbers = #tpu.dot_dimension_numbers<[1], [0], [0], [1], [0, 0, 1, 1], [], []>} : vector<8x16xbf16>, vector<16x8xbf16>, vector<8x8xf32> -> vector<8x8xf32>
    %353 = tpu.concatenate %289, %310, %331, %352 in 1 : vector<8x8xf32>, vector<8x8xf32>, vector<8x8xf32>, vector<8x8xf32> -> vector<8x32xf32>
    %354 = arith.truncf %353 : vector<8x32xf32> to vector<8x32xbf16>
    %cst_154 = arith.constant dense<0.000000e+00> : vector<8x32xf32>
    %355 = tpu.matmul %354, %254, %cst_154 {dimension_numbers = #tpu.dot_dimension_numbers<[1], [0], [0], [1], [0, 0, 1, 1], [], []>} : vector<8x32xbf16>, vector<32x32xbf16>, vector<8x32xf32> -> vector<8x32xf32>
    %c0_155 = arith.constant 0 : index
    %c0_156 = arith.constant 0 : index
    %356 = vector.load %arg25[%c0_155, %c0_156] : memref<16x32xf32, #tpu.memory_space<vmem>>, vector<8x32xf32>
    tpu.vector_store %arg25[%c0_155, %c0_156], %355 {strides = array<i32>} : memref<16x32xf32, #tpu.memory_space<vmem>>, vector<8x32xf32>,
    %357 = vector.extract_strided_slice %259 {offsets = [8, 0], sizes = [8, 32], strides = [1, 1]} : vector<16x32xbf16> to vector<8x32xbf16>
    %358 = vector.extract_strided_slice %262 {offsets = [16, 0], sizes = [16, 32], strides = [1, 1]} : vector<32x32xbf16> to vector<16x32xbf16>
    %359 = vector.extract_strided_slice %265 {offsets = [16, 0], sizes = [16, 32], strides = [1, 1]} : vector<32x32xbf16> to vector<16x32xbf16>
    %360 = vector.extract_strided_slice %357 {offsets = [0, 0], sizes = [8, 8], strides = [1, 1]} : vector<8x32xbf16> to vector<8x8xbf16>
    %361 = vector.extract_strided_slice %358 {offsets = [0, 0], sizes = [16, 8], strides = [1, 1]} : vector<16x32xbf16> to vector<16x8xbf16>
    %362 = vector.extract_strided_slice %359 {offsets = [0, 0], sizes = [16, 8], strides = [1, 1]} : vector<16x32xbf16> to vector<16x8xbf16>
    %cst_157 = arith.constant dense<0.000000e+00> : vector<8x16xf32>
    %363 = tpu.matmul %360, %361, %cst_157 {dimension_numbers = #tpu.dot_dimension_numbers<[1], [1], [0], [0], [0, 0, 1, 0], [], []>} : vector<8x8xbf16>, vector<16x8xbf16>, vector<8x16xf32> -> vector<8x16xf32>
    %cst_158 = arith.constant 0.353553385 : f32
    %364 = vector.broadcast %cst_158 : f32 to vector<8x16xf32>
    %365 = arith.mulf %363, %364 : vector<8x16xf32>
    %cst_159 = arith.constant dense<0xFF800000> : vector<8xf32>
    %366 = vector.multi_reduction <maximumf>, %365, %cst_159 [1] : vector<8x16xf32> to vector<8xf32>
    %367 = vector.shape_cast %366 : vector<8xf32> to vector<8x1xf32>
    %368 = vector.broadcast %367 : vector<8x1xf32> to vector<8x16xf32>
    %369 = arith.subf %365, %368 : vector<8x16xf32>
    %370 = math.exp %369 : vector<8x16xf32>
    %cst_160 = arith.constant dense<0.000000e+00> : vector<8xf32>
    %371 = vector.multi_reduction <add>, %370, %cst_160 [1] : vector<8x16xf32> to vector<8xf32>
    %372 = vector.shape_cast %371 : vector<8xf32> to vector<8x1xf32>
    %373 = tpu.reciprocal %372 {approx = true} : vector<8x1xf32> -> vector<8x1xf32>
    %374 = vector.broadcast %373 : vector<8x1xf32> to vector<8x16xf32>
    %375 = arith.mulf %370, %374 : vector<8x16xf32>
    %c1_161 = arith.constant 1 : index
    %c0_162 = arith.constant 0 : index
    %c0_163 = arith.constant 0 : index
    %c0_164 = arith.constant 0 : index
    %376 = vector.load %arg24[%c1_161, %c0_162, %c0_163, %c0_164] : memref<2x4x8x16xf32, #tpu.memory_space<vmem>>, vector<1x1x8x16xf32>
    %377 = vector.shape_cast %376 : vector<1x1x8x16xf32> to vector<8x16xf32>
    %378 = vector.shape_cast %375 : vector<8x16xf32> to vector<1x1x8x16xf32>
    tpu.vector_store %arg24[%c1_161, %c0_162, %c0_163, %c0_164], %378 {strides = array<i32>} : memref<2x4x8x16xf32, #tpu.memory_space<vmem>>, vector<1x1x8x16xf32>,
    %379 = arith.truncf %375 : vector<8x16xf32> to vector<8x16xbf16>
    %cst_165 = arith.constant dense<0.000000e+00> : vector<8x8xf32>
    %380 = tpu.matmul %379, %362, %cst_165 {dimension_numbers = #tpu.dot_dimension_numbers<[1], [0], [0], [1], [0, 0, 1, 1], [], []>} : vector<8x16xbf16>, vector<16x8xbf16>, vector<8x8xf32> -> vector<8x8xf32>
    %381 = vector.extract_strided_slice %357 {offsets = [0, 8], sizes = [8, 8], strides = [1, 1]} : vector<8x32xbf16> to vector<8x8xbf16>
    %382 = vector.extract_strided_slice %358 {offsets = [0, 8], sizes = [16, 8], strides = [1, 1]} : vector<16x32xbf16> to vector<16x8xbf16>
    %383 = vector.extract_strided_slice %359 {offsets = [0, 8], sizes = [16, 8], strides = [1, 1]} : vector<16x32xbf16> to vector<16x8xbf16>
    %cst_166 = arith.constant dense<0.000000e+00> : vector<8x16xf32>
    %384 = tpu.matmul %381, %382, %cst_166 {dimension_numbers = #tpu.dot_dimension_numbers<[1], [1], [0], [0], [0, 0, 1, 0], [], []>} : vector<8x8xbf16>, vector<16x8xbf16>, vector<8x16xf32> -> vector<8x16xf32>
    %cst_167 = arith.constant 0.353553385 : f32
    %385 = vector.broadcast %cst_167 : f32 to vector<8x16xf32>
    %386 = arith.mulf %384, %385 : vector<8x16xf32>
    %cst_168 = arith.constant dense<0xFF800000> : vector<8xf32>
    %387 = vector.multi_reduction <maximumf>, %386, %cst_168 [1] : vector<8x16xf32> to vector<8xf32>
    %388 = vector.shape_cast %387 : vector<8xf32> to vector<8x1xf32>
    %389 = vector.broadcast %388 : vector<8x1xf32> to vector<8x16xf32>
    %390 = arith.subf %386, %389 : vector<8x16xf32>
    %391 = math.exp %390 : vector<8x16xf32>
    %cst_169 = arith.constant dense<0.000000e+00> : vector<8xf32>
    %392 = vector.multi_reduction <add>, %391, %cst_169 [1] : vector<8x16xf32> to vector<8xf32>
    %393 = vector.shape_cast %392 : vector<8xf32> to vector<8x1xf32>
    %394 = tpu.reciprocal %393 {approx = true} : vector<8x1xf32> -> vector<8x1xf32>
    %395 = vector.broadcast %394 : vector<8x1xf32> to vector<8x16xf32>
    %396 = arith.mulf %391, %395 : vector<8x16xf32>
    %c1_170 = arith.constant 1 : index
    %c1_171 = arith.constant 1 : index
    %c0_172 = arith.constant 0 : index
    %c0_173 = arith.constant 0 : index
    %397 = vector.load %arg24[%c1_170, %c1_171, %c0_172, %c0_173] : memref<2x4x8x16xf32, #tpu.memory_space<vmem>>, vector<1x1x8x16xf32>
    %398 = vector.shape_cast %397 : vector<1x1x8x16xf32> to vector<8x16xf32>
    %399 = vector.shape_cast %396 : vector<8x16xf32> to vector<1x1x8x16xf32>
    tpu.vector_store %arg24[%c1_170, %c1_171, %c0_172, %c0_173], %399 {strides = array<i32>} : memref<2x4x8x16xf32, #tpu.memory_space<vmem>>, vector<1x1x8x16xf32>,
    %400 = arith.truncf %396 : vector<8x16xf32> to vector<8x16xbf16>
    %cst_174 = arith.constant dense<0.000000e+00> : vector<8x8xf32>
    %401 = tpu.matmul %400, %383, %cst_174 {dimension_numbers = #tpu.dot_dimension_numbers<[1], [0], [0], [1], [0, 0, 1, 1], [], []>} : vector<8x16xbf16>, vector<16x8xbf16>, vector<8x8xf32> -> vector<8x8xf32>
    %402 = vector.extract_strided_slice %357 {offsets = [0, 16], sizes = [8, 8], strides = [1, 1]} : vector<8x32xbf16> to vector<8x8xbf16>
    %403 = vector.extract_strided_slice %358 {offsets = [0, 16], sizes = [16, 8], strides = [1, 1]} : vector<16x32xbf16> to vector<16x8xbf16>
    %404 = vector.extract_strided_slice %359 {offsets = [0, 16], sizes = [16, 8], strides = [1, 1]} : vector<16x32xbf16> to vector<16x8xbf16>
    %cst_175 = arith.constant dense<0.000000e+00> : vector<8x16xf32>
    %405 = tpu.matmul %402, %403, %cst_175 {dimension_numbers = #tpu.dot_dimension_numbers<[1], [1], [0], [0], [0, 0, 1, 0], [], []>} : vector<8x8xbf16>, vector<16x8xbf16>, vector<8x16xf32> -> vector<8x16xf32>
    %cst_176 = arith.constant 0.353553385 : f32
    %406 = vector.broadcast %cst_176 : f32 to vector<8x16xf32>
    %407 = arith.mulf %405, %406 : vector<8x16xf32>
    %cst_177 = arith.constant dense<0xFF800000> : vector<8xf32>
    %408 = vector.multi_reduction <maximumf>, %407, %cst_177 [1] : vector<8x16xf32> to vector<8xf32>
    %409 = vector.shape_cast %408 : vector<8xf32> to vector<8x1xf32>
    %410 = vector.broadcast %409 : vector<8x1xf32> to vector<8x16xf32>
    %411 = arith.subf %407, %410 : vector<8x16xf32>
    %412 = math.exp %411 : vector<8x16xf32>
    %cst_178 = arith.constant dense<0.000000e+00> : vector<8xf32>
    %413 = vector.multi_reduction <add>, %412, %cst_178 [1] : vector<8x16xf32> to vector<8xf32>
    %414 = vector.shape_cast %413 : vector<8xf32> to vector<8x1xf32>
    %415 = tpu.reciprocal %414 {approx = true} : vector<8x1xf32> -> vector<8x1xf32>
    %416 = vector.broadcast %415 : vector<8x1xf32> to vector<8x16xf32>
    %417 = arith.mulf %412, %416 : vector<8x16xf32>
    %c1_179 = arith.constant 1 : index
    %c2_180 = arith.constant 2 : index
    %c0_181 = arith.constant 0 : index
    %c0_182 = arith.constant 0 : index
    %418 = vector.load %arg24[%c1_179, %c2_180, %c0_181, %c0_182] : memref<2x4x8x16xf32, #tpu.memory_space<vmem>>, vector<1x1x8x16xf32>
    %419 = vector.shape_cast %418 : vector<1x1x8x16xf32> to vector<8x16xf32>
    %420 = vector.shape_cast %417 : vector<8x16xf32> to vector<1x1x8x16xf32>
    tpu.vector_store %arg24[%c1_179, %c2_180, %c0_181, %c0_182], %420 {strides = array<i32>} : memref<2x4x8x16xf32, #tpu.memory_space<vmem>>, vector<1x1x8x16xf32>,
    %421 = arith.truncf %417 : vector<8x16xf32> to vector<8x16xbf16>
    %cst_183 = arith.constant dense<0.000000e+00> : vector<8x8xf32>
    %422 = tpu.matmul %421, %404, %cst_183 {dimension_numbers = #tpu.dot_dimension_numbers<[1], [0], [0], [1], [0, 0, 1, 1], [], []>} : vector<8x16xbf16>, vector<16x8xbf16>, vector<8x8xf32> -> vector<8x8xf32>
    %423 = vector.extract_strided_slice %357 {offsets = [0, 24], sizes = [8, 8], strides = [1, 1]} : vector<8x32xbf16> to vector<8x8xbf16>
    %424 = vector.extract_strided_slice %358 {offsets = [0, 24], sizes = [16, 8], strides = [1, 1]} : vector<16x32xbf16> to vector<16x8xbf16>
    %425 = vector.extract_strided_slice %359 {offsets = [0, 24], sizes = [16, 8], strides = [1, 1]} : vector<16x32xbf16> to vector<16x8xbf16>
    %cst_184 = arith.constant dense<0.000000e+00> : vector<8x16xf32>
    %426 = tpu.matmul %423, %424, %cst_184 {dimension_numbers = #tpu.dot_dimension_numbers<[1], [1], [0], [0], [0, 0, 1, 0], [], []>} : vector<8x8xbf16>, vector<16x8xbf16>, vector<8x16xf32> -> vector<8x16xf32>
    %cst_185 = arith.constant 0.353553385 : f32
    %427 = vector.broadcast %cst_185 : f32 to vector<8x16xf32>
    %428 = arith.mulf %426, %427 : vector<8x16xf32>
    %cst_186 = arith.constant dense<0xFF800000> : vector<8xf32>
    %429 = vector.multi_reduction <maximumf>, %428, %cst_186 [1] : vector<8x16xf32> to vector<8xf32>
    %430 = vector.shape_cast %429 : vector<8xf32> to vector<8x1xf32>
    %431 = vector.broadcast %430 : vector<8x1xf32> to vector<8x16xf32>
    %432 = arith.subf %428, %431 : vector<8x16xf32>
    %433 = math.exp %432 : vector<8x16xf32>
    %cst_187 = arith.constant dense<0.000000e+00> : vector<8xf32>
    %434 = vector.multi_reduction <add>, %433, %cst_187 [1] : vector<8x16xf32> to vector<8xf32>
    %435 = vector.shape_cast %434 : vector<8xf32> to vector<8x1xf32>
    %436 = tpu.reciprocal %435 {approx = true} : vector<8x1xf32> -> vector<8x1xf32>
    %437 = vector.broadcast %436 : vector<8x1xf32> to vector<8x16xf32>
    %438 = arith.mulf %433, %437 : vector<8x16xf32>
    %c1_188 = arith.constant 1 : index
    %c3_189 = arith.constant 3 : index
    %c0_190 = arith.constant 0 : index
    %c0_191 = arith.constant 0 : index
    %439 = vector.load %arg24[%c1_188, %c3_189, %c0_190, %c0_191] : memref<2x4x8x16xf32, #tpu.memory_space<vmem>>, vector<1x1x8x16xf32>
    %440 = vector.shape_cast %439 : vector<1x1x8x16xf32> to vector<8x16xf32>
    %441 = vector.shape_cast %438 : vector<8x16xf32> to vector<1x1x8x16xf32>
    tpu.vector_store %arg24[%c1_188, %c3_189, %c0_190, %c0_191], %441 {strides = array<i32>} : memref<2x4x8x16xf32, #tpu.memory_space<vmem>>, vector<1x1x8x16xf32>,
    %442 = arith.truncf %438 : vector<8x16xf32> to vector<8x16xbf16>
    %cst_192 = arith.constant dense<0.000000e+00> : vector<8x8xf32>
    %443 = tpu.matmul %442, %425, %cst_192 {dimension_numbers = #tpu.dot_dimension_numbers<[1], [0], [0], [1], [0, 0, 1, 1], [], []>} : vector<8x16xbf16>, vector<16x8xbf16>, vector<8x8xf32> -> vector<8x8xf32>
    %444 = tpu.concatenate %380, %401, %422, %443 in 1 : vector<8x8xf32>, vector<8x8xf32>, vector<8x8xf32>, vector<8x8xf32> -> vector<8x32xf32>
    %445 = arith.truncf %444 : vector<8x32xf32> to vector<8x32xbf16>
    %cst_193 = arith.constant dense<0.000000e+00> : vector<8x32xf32>
    %446 = tpu.matmul %445, %254, %cst_193 {dimension_numbers = #tpu.dot_dimension_numbers<[1], [0], [0], [1], [0, 0, 1, 1], [], []>} : vector<8x32xbf16>, vector<32x32xbf16>, vector<8x32xf32> -> vector<8x32xf32>
    %c8_194 = arith.constant 8 : index
    %c0_195 = arith.constant 0 : index
    %447 = vector.load %arg25[%c8_194, %c0_195] : memref<16x32xf32, #tpu.memory_space<vmem>>, vector<8x32xf32>
    tpu.vector_store %arg25[%c8_194, %c0_195], %446 {strides = array<i32>} : memref<16x32xf32, #tpu.memory_space<vmem>>, vector<8x32xf32>,
    %c0_196 = arith.constant 0 : index
    %c0_197 = arith.constant 0 : index
    %448 = vector.load %arg25[%c0_196, %c0_197] : memref<16x32xf32, #tpu.memory_space<vmem>>, vector<16x32xf32>
    %449 = arith.addf %448, %250 : vector<16x32xf32>
    %cst_198 = arith.constant dense<0.000000e+00> : vector<16xf32>
    %450 = vector.multi_reduction <add>, %449, %cst_198 [1] : vector<16x32xf32> to vector<16xf32>
    %451 = vector.shape_cast %450 : vector<16xf32> to vector<16x1xf32>
    %cst_199 = arith.constant 3.200000e+01 : f32
    %452 = vector.broadcast %cst_199 : f32 to vector<16x1xf32>
    %453 = arith.divf %451, %452 : vector<16x1xf32>
    %454 = arith.mulf %449, %449 : vector<16x32xf32>
    %cst_200 = arith.constant dense<0.000000e+00> : vector<16xf32>
    %455 = vector.multi_reduction <add>, %454, %cst_200 [1] : vector<16x32xf32> to vector<16xf32>
    %456 = vector.shape_cast %455 : vector<16xf32> to vector<16x1xf32>
    %cst_201 = arith.constant 3.200000e+01 : f32
    %457 = vector.broadcast %cst_201 : f32 to vector<16x1xf32>
    %458 = arith.divf %456, %457 : vector<16x1xf32>
    %459 = arith.mulf %453, %453 : vector<16x1xf32>
    %460 = arith.subf %458, %459 : vector<16x1xf32>
    %461 = vector.broadcast %453 : vector<16x1xf32> to vector<16x32xf32>
    %462 = arith.subf %449, %461 : vector<16x32xf32>
    %cst_202 = arith.constant 9.99999997E-7 : f32
    %463 = vector.broadcast %cst_202 : f32 to vector<16x1xf32>
    %464 = arith.addf %460, %463 : vector<16x1xf32>
    %465 = math.rsqrt %464 : vector<16x1xf32>
    %466 = vector.broadcast %465 : vector<16x1xf32> to vector<16x32xf32>
    %467 = arith.mulf %462, %466 : vector<16x32xf32>
    %468 = vector.broadcast %255 : vector<1x32xf32> to vector<16x32xf32>
    %469 = arith.mulf %467, %468 : vector<16x32xf32>
    %470 = vector.broadcast %256 : vector<1x32xf32> to vector<16x32xf32>
    %471 = arith.addf %469, %470 : vector<16x32xf32>
    %472 = arith.truncf %471 : vector<16x32xf32> to vector<16x32xbf16>
    %c0_203 = arith.constant 0 : index
    %c0_204 = arith.constant 0 : index
    %473 = vector.load %arg16[%c0_203, %c0_204] : memref<32x64xbf16, #tpu.memory_space<vmem>>, vector<32x64xbf16>
    %cst_205 = arith.constant dense<0.000000e+00> : vector<16x64xf32>
    %474 = tpu.matmul %472, %473, %cst_205 {dimension_numbers = #tpu.dot_dimension_numbers<[1], [0], [0], [1], [0, 0, 1, 1], [], []>} : vector<16x32xbf16>, vector<32x64xbf16>, vector<16x64xf32> -> vector<16x64xf32>
    %c0_206 = arith.constant 0 : index
    %c0_207 = arith.constant 0 : index
    %475 = vector.load %arg17[%c0_206, %c0_207] : memref<1x64xf32, #tpu.memory_space<vmem>>, vector<1x64xf32>
    %476 = vector.broadcast %475 : vector<1x64xf32> to vector<16x64xf32>
    %477 = arith.addf %474, %476 : vector<16x64xf32>
    %cst_208 = arith.constant 0.000000e+00 : f32
    %478 = vector.broadcast %cst_208 : f32 to vector<16x64xf32>
    %479 = arith.maximumf %477, %478 : vector<16x64xf32>
    %480 = arith.truncf %479 : vector<16x64xf32> to vector<16x64xbf16>
    %c0_209 = arith.constant 0 : index
    %c0_210 = arith.constant 0 : index
    %481 = vector.load %arg18[%c0_209, %c0_210] : memref<64x32xbf16, #tpu.memory_space<vmem>>, vector<64x32xbf16>
    %cst_211 = arith.constant dense<0.000000e+00> : vector<16x32xf32>
    %482 = tpu.matmul %480, %481, %cst_211 {dimension_numbers = #tpu.dot_dimension_numbers<[1], [0], [0], [1], [0, 0, 1, 1], [], []>} : vector<16x64xbf16>, vector<64x32xbf16>, vector<16x32xf32> -> vector<16x32xf32>
    %c0_212 = arith.constant 0 : index
    %c0_213 = arith.constant 0 : index
    %483 = vector.load %arg19[%c0_212, %c0_213] : memref<1x32xf32, #tpu.memory_space<vmem>>, vector<1x32xf32>
    %484 = vector.broadcast %483 : vector<1x32xf32> to vector<16x32xf32>
    %485 = arith.addf %482, %484 : vector<16x32xf32>
    %486 = arith.addf %485, %471 : vector<16x32xf32>
    %c0_214 = arith.constant 0 : index
    %c0_215 = arith.constant 0 : index
    %487 = vector.load %arg20[%c0_214, %c0_215] : memref<1x32xf32, #tpu.memory_space<vmem>>, vector<1x32xf32>
    %c0_216 = arith.constant 0 : index
    %c0_217 = arith.constant 0 : index
    %488 = vector.load %arg21[%c0_216, %c0_217] : memref<1x32xf32, #tpu.memory_space<vmem>>, vector<1x32xf32>
    %cst_218 = arith.constant dense<0.000000e+00> : vector<16xf32>
    %489 = vector.multi_reduction <add>, %486, %cst_218 [1] : vector<16x32xf32> to vector<16xf32>
    %490 = vector.shape_cast %489 : vector<16xf32> to vector<16x1xf32>
    %cst_219 = arith.constant 3.200000e+01 : f32
    %491 = vector.broadcast %cst_219 : f32 to vector<16x1xf32>
    %492 = arith.divf %490, %491 : vector<16x1xf32>
    %493 = arith.mulf %486, %486 : vector<16x32xf32>
    %cst_220 = arith.constant dense<0.000000e+00> : vector<16xf32>
    %494 = vector.multi_reduction <add>, %493, %cst_220 [1] : vector<16x32xf32> to vector<16xf32>
    %495 = vector.shape_cast %494 : vector<16xf32> to vector<16x1xf32>
    %cst_221 = arith.constant 3.200000e+01 : f32
    %496 = vector.broadcast %cst_221 : f32 to vector<16x1xf32>
    %497 = arith.divf %495, %496 : vector<16x1xf32>
    %498 = arith.mulf %492, %492 : vector<16x1xf32>
    %499 = arith.subf %497, %498 : vector<16x1xf32>
    %500 = vector.broadcast %492 : vector<16x1xf32> to vector<16x32xf32>
    %501 = arith.subf %486, %500 : vector<16x32xf32>
    %cst_222 = arith.constant 9.99999997E-7 : f32
    %502 = vector.broadcast %cst_222 : f32 to vector<16x1xf32>
    %503 = arith.addf %499, %502 : vector<16x1xf32>
    %504 = math.rsqrt %503 : vector<16x1xf32>
    %505 = vector.broadcast %504 : vector<16x1xf32> to vector<16x32xf32>
    %506 = arith.mulf %501, %505 : vector<16x32xf32>
    %507 = vector.broadcast %487 : vector<1x32xf32> to vector<16x32xf32>
    %508 = arith.mulf %506, %507 : vector<16x32xf32>
    %509 = vector.broadcast %488 : vector<1x32xf32> to vector<16x32xf32>
    %510 = arith.addf %508, %509 : vector<16x32xf32>
    %511 = vector.shape_cast %510 : vector<16x32xf32> to vector<2x8x32xf32>
    %c0_223 = arith.constant 0 : index
    %c0_224 = arith.constant 0 : index
    %c0_225 = arith.constant 0 : index
    %512 = vector.load %arg22[%c0_223, %c0_224, %c0_225] : memref<2x8x32xf32, #tpu.memory_space<vmem>>, vector<2x8x32xf32>
    tpu.vector_store %arg22[%c0_223, %c0_224, %c0_225], %511 {strides = array<i32>} : memref<2x8x32xf32, #tpu.memory_space<vmem>>, vector<2x8x32xf32>,
    return
  }
  func.func @transform_0(%arg0: i32) -> (i32, i32, i32) {
    %c0_i32 = arith.constant 0 : i32
    %c0_i32_0 = arith.constant 0 : i32
    %c0_i32_1 = arith.constant 0 : i32
    return %arg0, %c0_i32, %c0_i32_0 : i32, i32, i32
  }
  func.func @transform_1(%arg0: i32) -> (i32, i32, i32) {
    %c0_i32 = arith.constant 0 : i32
    %c0_i32_0 = arith.constant 0 : i32
    %c0_i32_1 = arith.constant 0 : i32
    return %arg0, %c0_i32, %c0_i32_0 : i32, i32, i32
  }
  func.func @transform_2(%arg0: i32) -> (i32, i32, i32) {
    %c0_i32 = arith.constant 0 : i32
    %c0_i32_0 = arith.constant 0 : i32
    %c0_i32_1 = arith.constant 0 : i32
    return %arg0, %c0_i32, %c0_i32_0 : i32, i32, i32
  }
  func.func @transform_3(%arg0: i32) -> (i32, i32) {
    %c0_i32 = arith.constant 0 : i32
    %c0_i32_0 = arith.constant 0 : i32
    %c0_i32_1 = arith.constant 0 : i32
    return %c0_i32, %c0_i32_0 : i32, i32
  }
  func.func @transform_4(%arg0: i32) -> (i32, i32) {
    %c0_i32 = arith.constant 0 : i32
    %c0_i32_0 = arith.constant 0 : i32
    %c0_i32_1 = arith.constant 0 : i32
    return %c0_i32, %c0_i32_0 : i32, i32
  }
  func.func @transform_5(%arg0: i32) -> (i32, i32) {
    %c0_i32 = arith.constant 0 : i32
    %c0_i32_0 = arith.constant 0 : i32
    %c0_i32_1 = arith.constant 0 : i32
    return %c0_i32, %c0_i32_0 : i32, i32
  }
  func.func @transform_6(%arg0: i32) -> (i32, i32) {
    %c0_i32 = arith.constant 0 : i32
    %c0_i32_0 = arith.constant 0 : i32
    %c0_i32_1 = arith.constant 0 : i32
    return %c0_i32, %c0_i32_0 : i32, i32
  }
  func.func @transform_7(%arg0: i32) -> (i32, i32) {
    %c0_i32 = arith.constant 0 : i32
    %c0_i32_0 = arith.constant 0 : i32
    %c0_i32_1 = arith.constant 0 : i32
    return %c0_i32, %c0_i32_0 : i32, i32
  }
  func.func @transform_8(%arg0: i32) -> (i32, i32) {
    %c0_i32 = arith.constant 0 : i32
    %c0_i32_0 = arith.constant 0 : i32
    %c0_i32_1 = arith.constant 0 : i32
    return %c0_i32, %c0_i32_0 : i32, i32
  }
  func.func @transform_9(%arg0: i32) -> (i32, i32) {
    %c0_i32 = arith.constant 0 : i32
    %c0_i32_0 = arith.constant 0 : i32
    %c0_i32_1 = arith.constant 0 : i32
    return %c0_i32, %c0_i32_0 : i32, i32
  }
  func.func @transform_10(%arg0: i32) -> (i32, i32) {
    %c0_i32 = arith.constant 0 : i32
    %c0_i32_0 = arith.constant 0 : i32
    %c0_i32_1 = arith.constant 0 : i32
    return %c0_i32, %c0_i32_0 : i32, i32
  }
  func.func @transform_11(%arg0: i32) -> (i32, i32) {
    %c0_i32 = arith.constant 0 : i32
    %c0_i32_0 = arith.constant 0 : i32
    %c0_i32_1 = arith.constant 0 : i32
    return %c0_i32, %c0_i32_0 : i32, i32
  }
  func.func @transform_12(%arg0: i32) -> (i32, i32) {
    %c0_i32 = arith.constant 0 : i32
    %c0_i32_0 = arith.constant 0 : i32
    %c0_i32_1 = arith.constant 0 : i32
    return %c0_i32, %c0_i32_0 : i32, i32
  }
  func.func @transform_13(%arg0: i32) -> (i32, i32) {
    %c0_i32 = arith.constant 0 : i32
    %c0_i32_0 = arith.constant 0 : i32
    %c0_i32_1 = arith.constant 0 : i32
    return %c0_i32, %c0_i32_0 : i32, i32
  }
  func.func @transform_14(%arg0: i32) -> (i32, i32) {
    %c0_i32 = arith.constant 0 : i32
    %c0_i32_0 = arith.constant 0 : i32
    %c0_i32_1 = arith.constant 0 : i32
    return %c0_i32, %c0_i32_0 : i32, i32
  }
  func.func @transform_15(%arg0: i32) -> (i32, i32) {
    %c0_i32 = arith.constant 0 : i32
    %c0_i32_0 = arith.constant 0 : i32
    %c0_i32_1 = arith.constant 0 : i32
    return %c0_i32, %c0_i32_0 : i32, i32
  }
  func.func @transform_16(%arg0: i32) -> (i32, i32) {
    %c0_i32 = arith.constant 0 : i32
    %c0_i32_0 = arith.constant 0 : i32
    %c0_i32_1 = arith.constant 0 : i32
    return %c0_i32, %c0_i32_0 : i32, i32
  }
  func.func @transform_17(%arg0: i32) -> (i32, i32) {
    %c0_i32 = arith.constant 0 : i32
    %c0_i32_0 = arith.constant 0 : i32
    %c0_i32_1 = arith.constant 0 : i32
    return %c0_i32, %c0_i32_0 : i32, i32
  }
  func.func @transform_18(%arg0: i32) -> (i32, i32) {
    %c0_i32 = arith.constant 0 : i32
    %c0_i32_0 = arith.constant 0 : i32
    %c0_i32_1 = arith.constant 0 : i32
    return %c0_i32, %c0_i32_0 : i32, i32
  }
  func.func @transform_19(%arg0: i32) -> (i32, i32) {
    %c0_i32 = arith.constant 0 : i32
    %c0_i32_0 = arith.constant 0 : i32
    %c0_i32_1 = arith.constant 0 : i32
    return %c0_i32, %c0_i32_0 : i32, i32
  }
  func.func @transform_20(%arg0: i32) -> (i32, i32) {
    %c0_i32 = arith.constant 0 : i32
    %c0_i32_0 = arith.constant 0 : i32
    %c0_i32_1 = arith.constant 0 : i32
    return %c0_i32, %c0_i32_0 : i32, i32
  }
  func.func @transform_21(%arg0: i32) -> (i32, i32, i32) {
    %c0_i32 = arith.constant 0 : i32
    %c0_i32_0 = arith.constant 0 : i32
    %c0_i32_1 = arith.constant 0 : i32
    return %arg0, %c0_i32, %c0_i32_0 : i32, i32, i32
  }
  func.func @transform_22(%arg0: i32) -> (i32, i32, i32, i32) {
    %c0_i32 = arith.constant 0 : i32
    %c0_i32_0 = arith.constant 0 : i32
    %c0_i32_1 = arith.constant 0 : i32
    %c0_i32_2 = arith.constant 0 : i32
    return %arg0, %c0_i32, %c0_i32_0, %c0_i32_1 : i32, i32, i32, i32
  }
  func.func @transform_23(%arg0: i32) -> (i32, i32, i32, i32) {
    %c0_i32 = arith.constant 0 : i32
    %c0_i32_0 = arith.constant 0 : i32
    %c0_i32_1 = arith.constant 0 : i32
    %c0_i32_2 = arith.constant 0 : i32
    return %arg0, %c0_i32, %c0_i32_0, %c0_i32_1 : i32, i32, i32, i32
  }
}

</mosaic_0001>

<llo_original>
// kernel: tpu_custom_call.1
$region0: #{tpu_custom_call.1}
  #allocation0 [shape = 'u32[]', space=smem, size = 0x4, offset = 0x4, fixed_abs, tag = 'smem constant byte address 0x4 - core index']
  #allocation1 [shape = 'u32[144,128]{1,0:T(1,128)}', space=vmem, size = 0x12000, scoped, tag = 'internal scratch']
  #allocation2 [shape = 'f32[16,32]{1,0:T(8,128)}', space=vmem, size = 0x2000, scoped, tag = 'scratch operand']
  %s0 = inlined_call_operand.vmem [shape: f32[2,8,32], index: 0, kind: input, shape index: {}]
  %s1 = inlined_call_operand.vmem [shape: f32[2,16,32], index: 1, kind: input, shape index: {}]
  %s2 = inlined_call_operand.hbm [shape: bf16[2,8,8], index: 2, kind: input, shape index: {}]
  %s3 = inlined_call_operand.hbm [shape: bf16[32,32], index: 3, kind: input, shape index: {}]
  %s4 = inlined_call_operand.hbm [shape: bf16[32,32], index: 4, kind: input, shape index: {}]
  %s5 = inlined_call_operand.hbm [shape: bf16[32,32], index: 5, kind: input, shape index: {}]
  %s6 = inlined_call_operand.hbm [shape: bf16[32,32], index: 6, kind: input, shape index: {}]
  %s7 = inlined_call_operand.vmem [shape: f32[1,32], index: 7, kind: input, shape index: {}]
  %s8 = inlined_call_operand.vmem [shape: f32[1,32], index: 8, kind: input, shape index: {}]
  %s9 = inlined_call_operand.hbm [shape: bf16[32,32], index: 9, kind: input, shape index: {}]
  %s10 = inlined_call_operand.hbm [shape: bf16[32,32], index: 10, kind: input, shape index: {}]
  %s11 = inlined_call_operand.hbm [shape: bf16[32,32], index: 11, kind: input, shape index: {}]
  %s12 = inlined_call_operand.hbm [shape: bf16[32,32], index: 12, kind: input, shape index: {}]
  %s13 = inlined_call_operand.vmem [shape: f32[1,32], index: 13, kind: input, shape index: {}]
  %s14 = inlined_call_operand.vmem [shape: f32[1,32], index: 14, kind: input, shape index: {}]
  %s15 = inlined_call_operand.hbm [shape: bf16[32,64], index: 15, kind: input, shape index: {}]
  %s16 = inlined_call_operand.vmem [shape: f32[1,64], index: 16, kind: input, shape index: {}]
  %s17 = inlined_call_operand.vmem [shape: bf16[64,32], index: 17, kind: input, shape index: {}]
  %s18 = inlined_call_operand.vmem [shape: f32[1,32], index: 18, kind: input, shape index: {}]
  %s19 = inlined_call_operand.vmem [shape: f32[1,32], index: 19, kind: input, shape index: {}]
  %s20 = inlined_call_operand.vmem [shape: f32[1,32], index: 20, kind: input, shape index: {}]
  %s21 = inlined_call_operand.hbm [shape: f32[2,8,32], index: 21, kind: output, shape index: {0}]
  %s22 = inlined_call_operand.hbm [shape: f32[2,4,8,8], index: 22, kind: output, shape index: {1}]
  %s23 = inlined_call_operand.hbm [shape: f32[2,4,8,16], index: 23, kind: output, shape index: {2}]
  %24 = xla_tuple %s21, %s22, %s23
  %s25 = sld [smem:[#allocation0]]
  $region150: #{tpu_custom_call.1} parent=0
    _
  %s27 = ssub.s32 1, %s25
  %s28 = scalar_select 0, %s27, %s25
  $region1: #{tpu_custom_call.1} parent=0
    #allocation3 [shape = 'u8[4096]{0}', space=vmem, size = 0x1000, scoped, tag = 'input window, operand 2, single buffered']
    #allocation4 [shape = 's32[1]{0}', space=sflag, size = 0x4, scoped, tag = 'scoped memory for tpu_custom_call.1']
    #allocation5 [shape = 's32[1]{0}', space=sflag, size = 0x4, scoped, tag = 'scoped memory for tpu_custom_call.1']
    #allocation6 [shape = 'u8[8192]{0}', space=vmem, size = 0x2000, scoped, tag = 'input window, operand 3, single buffered']
    #allocation7 [shape = 's32[1]{0}', space=sflag, size = 0x4, scoped, tag = 'scoped memory for tpu_custom_call.1']
    #allocation8 [shape = 'u8[8192]{0}', space=vmem, size = 0x2000, scoped, tag = 'input window, operand 4, single buffered']
    #allocation9 [shape = 'u8[8192]{0}', space=vmem, size = 0x2000, scoped, tag = 'input window, operand 5, single buffered']
    #allocation10 [shape = 's32[1]{0}', space=sflag, size = 0x4, scoped, tag = 'scoped memory for tpu_custom_call.1']
    #allocation11 [shape = 'u8[8192]{0}', space=vmem, size = 0x2000, scoped, tag = 'input window, operand 6, single buffered']
    #allocation12 [shape = 'u8[8192]{0}', space=vmem, size = 0x2000, scoped, tag = 'input window, operand 9, single buffered']
    #allocation13 [shape = 's32[1]{0}', space=sflag, size = 0x4, scoped, tag = 'scoped memory for tpu_custom_call.1']
    #allocation14 [shape = 'u8[8192]{0}', space=vmem, size = 0x2000, scoped, tag = 'input window, operand 10, single buffered']
    #allocation15 [shape = 'u8[8192]{0}', space=vmem, size = 0x2000, scoped, tag = 'input window, operand 11, single buffered']
    #allocation16 [shape = 's32[1]{0}', space=sflag, size = 0x4, scoped, tag = 'scoped memory for tpu_custom_call.1']
    #allocation17 [shape = 'u8[8192]{0}', space=vmem, size = 0x2000, scoped, tag = 'input window, operand 12, single buffered']
    #allocation18 [shape = 'u8[8192]{0}', space=vmem, size = 0x2000, scoped, tag = 'input window, operand 15, single buffered']
    #allocation19 [shape = 's32[1]{0}', space=sflag, size = 0x4, scoped, tag = 'scoped memory for tpu_custom_call.1']
    #allocation20 [shape = 'u8[8192]{0}', space=vmem, size = 0x2000, scoped, tag = 'output window, operand 0, single buffered']
    #allocation21 [shape = 'u8[32768]{0}', space=vmem, size = 0x8000, scoped, tag = 'output window, operand 1, single buffered']
    #allocation22 [shape = 's32[1]{0}', space=sflag, size = 0x4, scoped, tag = 'scoped memory for tpu_custom_call.1']
    #allocation23 [shape = 'u8[32768]{0}', space=vmem, size = 0x8000, scoped, tag = 'output window, operand 2, single buffered']
    %29 = vsyncpa [#allocation4], 0
    %30 = vsyncpa [#allocation7], 0
    %31 = vsyncpa [#allocation10], 0
    %32 = vsyncpa [#allocation13], 0
    %33 = vsyncpa [#allocation16], 0
    %34 = vsyncpa [#allocation19], 0
    %35 = vsyncpa [#allocation5], 0
    %36 = vsyncpa [#allocation22], 0
    // Predicated region
    $region2: #{tpu_custom_call.1} parent=1 // pred_check
      _
    $region3: #{tpu_custom_call.1} parent=1 // pred_check_branch
      %38 = sbr.rel (0) target = $region5
    $region4: #{tpu_custom_call.1} parent=1 // pred_region
      _
    $region5: #{tpu_custom_call.1} parent=1 // pred_fallthru
      _
    // Predicated region
    $region6: #{tpu_custom_call.1} parent=1 // pred_check
      _
    $region7: #{tpu_custom_call.1} parent=1 // pred_check_branch
      %40 = sbr.rel (0) target = $region9
    $region8: #{tpu_custom_call.1} parent=1 // pred_region
      _
    $region9: #{tpu_custom_call.1} parent=1 // pred_fallthru
      _
    // Predicated region
    $region10: #{tpu_custom_call.1} parent=1 // pred_check
      _
    $region11: #{tpu_custom_call.1} parent=1 // pred_check_branch
      %42 = sbr.rel (0) target = $region13
    $region12: #{tpu_custom_call.1} parent=1 // pred_region
      %s44 = ssub.s32 128, 128
      %45 = vsyncadd [#allocation4], %s44
      %s46 = sshll.u32 [#allocation3], 4
      %s47 = int_to_ptr.vmem [resolvable:$true] %s46
      %52 = dma.hbm_to_vmem [thread:$0]  %s2, 128, %s47, [#allocation4], 64, 64, 4
    $region13: #{tpu_custom_call.1} parent=1 // pred_fallthru
      _
    // Predicated region
    $region14: #{tpu_custom_call.1} parent=1 // pred_check
      _
    $region15: #{tpu_custom_call.1} parent=1 // pred_check_branch
      %54 = sbr.rel (0) target = $region17
    $region16: #{tpu_custom_call.1} parent=1 // pred_region
      %s56 = ssub.s32 256, 256
      %57 = vsyncadd [#allocation7], %s56
      %s58 = sshll.u32 [#allocation6], 4
      %s59 = int_to_ptr.vmem [resolvable:$true] %s58
      %64 = dma.hbm_to_vmem [thread:$0]  %s3, 256, %s59, [#allocation7], 64, 64, 4
    $region17: #{tpu_custom_call.1} parent=1 // pred_fallthru
      _
    // Predicated region
    $region18: #{tpu_custom_call.1} parent=1 // pred_check
      _
    $region19: #{tpu_custom_call.1} parent=1 // pred_check_branch
      %66 = sbr.rel (0) target = $region21
    $region20: #{tpu_custom_call.1} parent=1 // pred_region
      %s68 = ssub.s32 256, 256
      %69 = vsyncadd [#allocation7], %s68
      %s70 = sshll.u32 [#allocation8], 4
      %s71 = int_to_ptr.vmem [resolvable:$true] %s70
      %76 = dma.hbm_to_vmem [thread:$0]  %s4, 256, %s71, [#allocation7], 64, 64, 4
    $region21: #{tpu_custom_call.1} parent=1 // pred_fallthru
      _
    // Predicated region
    $region22: #{tpu_custom_call.1} parent=1 // pred_check
      _
    $region23: #{tpu_custom_call.1} parent=1 // pred_check_branch
      %78 = sbr.rel (0) target = $region25
    $region24: #{tpu_custom_call.1} parent=1 // pred_region
      %s80 = ssub.s32 256, 256
      %81 = vsyncadd [#allocation10], %s80
      %s82 = sshll.u32 [#allocation9], 4
      %s83 = int_to_ptr.vmem [resolvable:$true] %s82
      %88 = dma.hbm_to_vmem [thread:$0]  %s5, 256, %s83, [#allocation10], 64, 64, 4
    $region25: #{tpu_custom_call.1} parent=1 // pred_fallthru
      _
    // Predicated region
    $region26: #{tpu_custom_call.1} parent=1 // pred_check
      _
    $region27: #{tpu_custom_call.1} parent=1 // pred_check_branch
      %90 = sbr.rel (0) target = $region29
    $region28: #{tpu_custom_call.1} parent=1 // pred_region
      %s92 = ssub.s32 256, 256
      %93 = vsyncadd [#allocation10], %s92
      %s94 = sshll.u32 [#allocation11], 4
      %s95 = int_to_ptr.vmem [resolvable:$true] %s94
      %100 = dma.hbm_to_vmem [thread:$0]  %s6, 256, %s95, [#allocation10], 64, 64, 4
    $region29: #{tpu_custom_call.1} parent=1 // pred_fallthru
      _
    // Predicated region
    $region30: #{tpu_custom_call.1} parent=1 // pred_check
      _
    $region31: #{tpu_custom_call.1} parent=1 // pred_check_branch
      %102 = sbr.rel (0) target = $region33
    $region32: #{tpu_custom_call.1} parent=1 // pred_region
      _
    $region33: #{tpu_custom_call.1} parent=1 // pred_fallthru
      _
    // Predicated region
    $region34: #{tpu_custom_call.1} parent=1 // pred_check
      _
    $region35: #{tpu_custom_call.1} parent=1 // pred_check_branch
      %104 = sbr.rel (0) target = $region37
    $region36: #{tpu_custom_call.1} parent=1 // pred_region
      _
    $region37: #{tpu_custom_call.1} parent=1 // pred_fallthru
      _
    // Predicated region
    $region38: #{tpu_custom_call.1} parent=1 // pred_check
      _
    $region39: #{tpu_custom_call.1} parent=1 // pred_check_branch
      %106 = sbr.rel (0) target = $region41
    $region40: #{tpu_custom_call.1} parent=1 // pred_region
      %s108 = ssub.s32 256, 256
      %109 = vsyncadd [#allocation13], %s108
      %s110 = sshll.u32 [#allocation12], 4
      %s111 = int_to_ptr.vmem [resolvable:$true] %s110
      %116 = dma.hbm_to_vmem [thread:$0]  %s9, 256, %s111, [#allocation13], 64, 64, 4
    $region41: #{tpu_custom_call.1} parent=1 // pred_fallthru
      _
    // Predicated region
    $region42: #{tpu_custom_call.1} parent=1 // pred_check
      _
    $region43: #{tpu_custom_call.1} parent=1 // pred_check_branch
      %118 = sbr.rel (0) target = $region45
    $region44: #{tpu_custom_call.1} parent=1 // pred_region
      %s120 = ssub.s32 256, 256
      %121 = vsyncadd [#allocation13], %s120
      %s122 = sshll.u32 [#allocation14], 4
      %s123 = int_to_ptr.vmem [resolvable:$true] %s122
      %128 = dma.hbm_to_vmem [thread:$0]  %s10, 256, %s123, [#allocation13], 64, 64, 4
    $region45: #{tpu_custom_call.1} parent=1 // pred_fallthru
      _
    // Predicated region
    $region46: #{tpu_custom_call.1} parent=1 // pred_check
      _
    $region47: #{tpu_custom_call.1} parent=1 // pred_check_branch
      %130 = sbr.rel (0) target = $region49
    $region48: #{tpu_custom_call.1} parent=1 // pred_region
      %s132 = ssub.s32 256, 256
      %133 = vsyncadd [#allocation16], %s132
      %s134 = sshll.u32 [#allocation15], 4
      %s135 = int_to_ptr.vmem [resolvable:$true] %s134
      %140 = dma.hbm_to_vmem [thread:$0]  %s11, 256, %s135, [#allocation16], 64, 64, 4
    $region49: #{tpu_custom_call.1} parent=1 // pred_fallthru
      _
    // Predicated region
    $region50: #{tpu_custom_call.1} parent=1 // pred_check
      _
    $region51: #{tpu_custom_call.1} parent=1 // pred_check_branch
      %142 = sbr.rel (0) target = $region53
    $region52: #{tpu_custom_call.1} parent=1 // pred_region
      %s144 = ssub.s32 256, 256
      %145 = vsyncadd [#allocation16], %s144
      %s146 = sshll.u32 [#allocation17], 4
      %s147 = int_to_ptr.vmem [resolvable:$true] %s146
      %152 = dma.hbm_to_vmem [thread:$0]  %s12, 256, %s147, [#allocation16], 64, 64, 4
    $region53: #{tpu_custom_call.1} parent=1 // pred_fallthru
      _
    // Predicated region
    $region54: #{tpu_custom_call.1} parent=1 // pred_check
      _
    $region55: #{tpu_custom_call.1} parent=1 // pred_check_branch
      %154 = sbr.rel (0) target = $region57
    $region56: #{tpu_custom_call.1} parent=1 // pred_region
      _
    $region57: #{tpu_custom_call.1} parent=1 // pred_fallthru
      _
    // Predicated region
    $region58: #{tpu_custom_call.1} parent=1 // pred_check
      _
    $region59: #{tpu_custom_call.1} parent=1 // pred_check_branch
      %156 = sbr.rel (0) target = $region61
    $region60: #{tpu_custom_call.1} parent=1 // pred_region
      _
    $region61: #{tpu_custom_call.1} parent=1 // pred_fallthru
      _
    // Predicated region
    $region62: #{tpu_custom_call.1} parent=1 // pred_check
      _
    $region63: #{tpu_custom_call.1} parent=1 // pred_check_branch
      %158 = sbr.rel (0) target = $region65
    $region64: #{tpu_custom_call.1} parent=1 // pred_region
      %s160 = ssub.s32 256, 256
      %161 = vsyncadd [#allocation19], %s160
      %s162 = sshll.u32 [#allocation18], 4
      %s163 = int_to_ptr.vmem [resolvable:$true] %s162
      %168 = dma.hbm_to_vmem [thread:$0]  %s15, 256, %s163, [#allocation19], 64, 64, 4
    $region65: #{tpu_custom_call.1} parent=1 // pred_fallthru
      _
    // Predicated region
    $region66: #{tpu_custom_call.1} parent=1 // pred_check
      _
    $region67: #{tpu_custom_call.1} parent=1 // pred_check_branch
      %170 = sbr.rel (0) target = $region69
    $region68: #{tpu_custom_call.1} parent=1 // pred_region
      _
    $region69: #{tpu_custom_call.1} parent=1 // pred_fallthru
      _
    // Predicated region
    $region70: #{tpu_custom_call.1} parent=1 // pred_check
      _
    $region71: #{tpu_custom_call.1} parent=1 // pred_check_branch
      %172 = sbr.rel (0) target = $region73
    $region72: #{tpu_custom_call.1} parent=1 // pred_region
      _
    $region73: #{tpu_custom_call.1} parent=1 // pred_fallthru
      _
    // Predicated region
    $region74: #{tpu_custom_call.1} parent=1 // pred_check
      _
    $region75: #{tpu_custom_call.1} parent=1 // pred_check_branch
      %174 = sbr.rel (0) target = $region77
    $region76: #{tpu_custom_call.1} parent=1 // pred_region
      _
    $region77: #{tpu_custom_call.1} parent=1 // pred_fallthru
      _
    // Predicated region
    $region78: #{tpu_custom_call.1} parent=1 // pred_check
      _
    $region79: #{tpu_custom_call.1} parent=1 // pred_check_branch
      %176 = sbr.rel (0) target = $region81
    $region80: #{tpu_custom_call.1} parent=1 // pred_region
      _
    $region81: #{tpu_custom_call.1} parent=1 // pred_fallthru
      _
    // Predicated region
    $region82: #{tpu_custom_call.1} parent=1 // pred_check
      _
    $region83: #{tpu_custom_call.1} parent=1 // pred_check_branch
      %178 = sbr.rel (0) target = $region85
    $region84: #{tpu_custom_call.1} parent=1 // pred_region
      _
    $region85: #{tpu_custom_call.1} parent=1 // pred_fallthru
      _
    // Predicated region
    $region86: #{tpu_custom_call.1} parent=1 // pred_check
      _
    $region87: #{tpu_custom_call.1} parent=1 // pred_check_branch
      %180 = sbr.rel (0) target = $region89
    $region88: #{tpu_custom_call.1} parent=1 // pred_region
      %181 = dma.done [#allocation4], 128
    $region89: #{tpu_custom_call.1} parent=1 // pred_fallthru
      _
    // Predicated region
    $region90: #{tpu_custom_call.1} parent=1 // pred_check
      _
    $region91: #{tpu_custom_call.1} parent=1 // pred_check_branch
      %183 = sbr.rel (0) target = $region93
    $region92: #{tpu_custom_call.1} parent=1 // pred_region
      %184 = dma.done [#allocation7], 256
    $region93: #{tpu_custom_call.1} parent=1 // pred_fallthru
      _
    // Predicated region
    $region94: #{tpu_custom_call.1} parent=1 // pred_check
      _
    $region95: #{tpu_custom_call.1} parent=1 // pred_check_branch
      %186 = sbr.rel (0) target = $region97
    $region96: #{tpu_custom_call.1} parent=1 // pred_region
      %187 = dma.done [#allocation7], 256
    $region97: #{tpu_custom_call.1} parent=1 // pred_fallthru
      _
    // Predicated region
    $region98: #{tpu_custom_call.1} parent=1 // pred_check
      _
    $region99: #{tpu_custom_call.1} parent=1 // pred_check_branch
      %189 = sbr.rel (0) target = $region101
    $region100: #{tpu_custom_call.1} parent=1 // pred_region
      %190 = dma.done [#allocation10], 256
    $region101: #{tpu_custom_call.1} parent=1 // pred_fallthru
      _
    // Predicated region
    $region102: #{tpu_custom_call.1} parent=1 // pred_check
      _
    $region103: #{tpu_custom_call.1} parent=1 // pred_check_branch
      %192 = sbr.rel (0) target = $region105
    $region104: #{tpu_custom_call.1} parent=1 // pred_region
      %193 = dma.done [#allocation10], 256
    $region105: #{tpu_custom_call.1} parent=1 // pred_fallthru
      _
    // Predicated region
    $region106: #{tpu_custom_call.1} parent=1 // pred_check
      _
    $region107: #{tpu_custom_call.1} parent=1 // pred_check_branch
      %195 = sbr.rel (0) target = $region109
    $region108: #{tpu_custom_call.1} parent=1 // pred_region
      %196 = dma.done [#allocation13], 256
    $region109: #{tpu_custom_call.1} parent=1 // pred_fallthru
      _
    // Predicated region
    $region110: #{tpu_custom_call.1} parent=1 // pred_check
      _
    $region111: #{tpu_custom_call.1} parent=1 // pred_check_branch
      %198 = sbr.rel (0) target = $region113
    $region112: #{tpu_custom_call.1} parent=1 // pred_region
      %199 = dma.done [#allocation13], 256
    $region113: #{tpu_custom_call.1} parent=1 // pred_fallthru
      _
    // Predicated region
    $region114: #{tpu_custom_call.1} parent=1 // pred_check
      _
    $region115: #{tpu_custom_call.1} parent=1 // pred_check_branch
      %201 = sbr.rel (0) target = $region117
    $region116: #{tpu_custom_call.1} parent=1 // pred_region
      %202 = dma.done [#allocation16], 256
    $region117: #{tpu_custom_call.1} parent=1 // pred_fallthru
      _
    // Predicated region
    $region118: #{tpu_custom_call.1} parent=1 // pred_check
      _
    $region119: #{tpu_custom_call.1} parent=1 // pred_check_branch
      %204 = sbr.rel (0) target = $region121
    $region120: #{tpu_custom_call.1} parent=1 // pred_region
      %205 = dma.done [#allocation16], 256
    $region121: #{tpu_custom_call.1} parent=1 // pred_fallthru
      _
    // Predicated region
    $region122: #{tpu_custom_call.1} parent=1 // pred_check
      _
    $region123: #{tpu_custom_call.1} parent=1 // pred_check_branch
      %207 = sbr.rel (0) target = $region125
    $region124: #{tpu_custom_call.1} parent=1 // pred_region
      %208 = dma.done [#allocation19], 256
    $region125: #{tpu_custom_call.1} parent=1 // pred_fallthru
      _
    %v210 = vld [vmem:[%s0] sm:$0xff]
    %v211 = vld [vmem:[%s0 + $0x8] sm:$0xff]
    %v212 = vld [vmem:[%s1] sm:$0xff]
    %v213 = vld [vmem:[%s1 + $0x8] sm:$0xff]
    %v214 = vld [vmem:[%s1 + $0x10] sm:$0xff]
    %v215 = vld [vmem:[%s1 + $0x18] sm:$0xff]
    %v216 = vld [vmem:[#allocation3] sm:$0xf]
    %v217 = vld [vmem:[#allocation3 + $0x4] sm:$0xf]
    %v218 = vunpack.c.l.bf16 %v216
    %v219 = vunpack.c.l.bf16 %v217
    %v220 = vld [vmem:[#allocation6] sm:$0xf]
    %v221 = vld [vmem:[#allocation6 + $0x4] sm:$0xf]
    %v222 = vld [vmem:[#allocation6 + $0x8] sm:$0xf]
    %v223 = vld [vmem:[#allocation6 + $0xc] sm:$0xf]
    %v224 = vld [vmem:[#allocation8] sm:$0xf]
    %v225 = vld [vmem:[#allocation8 + $0x4] sm:$0xf]
    %v226 = vld [vmem:[#allocation8 + $0x8] sm:$0xf]
    %v227 = vld [vmem:[#allocation8 + $0xc] sm:$0xf]
    %v228 = vld [vmem:[#allocation9] sm:$0xf]
    %v229 = vld [vmem:[#allocation9 + $0x4] sm:$0xf]
    %v230 = vld [vmem:[#allocation9 + $0x8] sm:$0xf]
    %v231 = vld [vmem:[#allocation9 + $0xc] sm:$0xf]
    %v232 = vld [vmem:[#allocation11] sm:$0xf]
    %v233 = vld [vmem:[#allocation11 + $0x4] sm:$0xf]
    %v234 = vld [vmem:[#allocation11 + $0x8] sm:$0xf]
    %v235 = vld [vmem:[#allocation11 + $0xc] sm:$0xf]
    %v236 = vld [vmem:[%s7] sm:$0x1]
    %v237 = vld [vmem:[%s8] sm:$0x1]
    %v238 = vpack.c.bf16 %v211, %v210
    %v243 = vunpack.c.l.b16 %v220
    %v244 = vunpack.c.l.b16 %v221
    %v245 = vunpack.c.l.b16 %v222
    %v246 = vunpack.c.l.b16 %v223
    %v247 = vpack.c.b16 %v244, %v243
    %v248 = vpack.c.b16 %v246, %v245
    %vm251 = vcmask 261120
    %v253 = vsel %vm251, %v238, 0
    %255 = vmatprep.subr.bf16.mxu0 0
    %256 = vmatpush1.bf16.msra.mxu0 0
    %257 = vmatprep.subr.bf16.mxu0 0
    %258 = vmatpush1.bf16.msra.mxu0 0
    %259 = vmatprep.subr.bf16.mxu0 0
    %260 = vmatpush1.bf16.msra.mxu0 0
    %261 = vmatprep.subr.bf16.mxu0 0
    %262 = vmatpush1.bf16.msra.mxu0 0
    %263 = vmatprep.subr.bf16.mxu0 0
    %264 = vmatpush1.bf16.msra.mxu0 0
    %265 = vmatprep.subr.bf16.mxu0 0
    %266 = vmatpush1.bf16.msra.mxu0 0
    %267 = vmatprep.subr.bf16.mxu0 0
    %268 = vmatpush1.bf16.msra.mxu0 %v248
    %269 = vmatprep.subr.bf16.mxu0 0
    %270 = vmatpush1.bf16.msra.mxu0 %v247
    %271 = vmatprep.subr.bf16.mxu0 0
    %272 = vmatpush2.bf16.msra.mxu0 0
    %273 = vmatprep.subr.bf16.mxu0 0
    %274 = vmatpush2.bf16.msra.mxu0 0
    %275 = vmatprep.subr.bf16.mxu0 0
    %276 = vmatpush2.bf16.msra.mxu0 0
    %277 = vmatprep.subr.bf16.mxu0 0
    %278 = vmatpush2.bf16.msra.mxu0 0
    %279 = vmatprep.subr.bf16.mxu0 0
    %280 = vmatpush2.bf16.msra.mxu0 0
    %281 = vmatprep.subr.bf16.mxu0 0
    %282 = vmatpush2.bf16.msra.mxu0 0
    %283 = vmatprep.subr.bf16.mxu0 0
    %284 = vmatpush2.bf16.msra.mxu0 0
    %285 = vmatprep.subr.bf16.mxu0 0
    %286 = vmatpush2.bf16.msra.mxu0 0
    %287 = vmatprep.mubr.bf16.mxu0 0
    %288 = vmatmul.mubr.bf16.gmra.mxu0 %v253
    %v289 = vpop.f32.mrf.mxu0
    %v290 = vadd.f32 0.0, %v289
    %v291 = vpop.f32.mrf.mxu0
    %v292 = vpop.f32.mrf.mxu0
    %v293 = vadd.f32 0.0, %v292
    %v294 = vpop.f32.mrf.mxu0
    %295 = vdwg.mxu0
    %v296 = vpack.c.bf16 %v293, %v290
    %v301 = vunpack.c.l.b16 %v224
    %v302 = vunpack.c.l.b16 %v225
    %v303 = vunpack.c.l.b16 %v226
    %v304 = vunpack.c.l.b16 %v227
    %v305 = vpack.c.b16 %v302, %v301
    %v306 = vpack.c.b16 %v304, %v303
    %309 = vmatprep.subr.bf16.mxu0 0
    %310 = vmatpush1.bf16.msra.mxu0 0
    %311 = vmatprep.subr.bf16.mxu0 0
    %312 = vmatpush1.bf16.msra.mxu0 0
    %313 = vmatprep.subr.bf16.mxu0 0
    %314 = vmatpush1.bf16.msra.mxu0 0
    %315 = vmatprep.subr.bf16.mxu0 0
    %316 = vmatpush1.bf16.msra.mxu0 0
    %317 = vmatprep.subr.bf16.mxu0 0
    %318 = vmatpush1.bf16.msra.mxu0 0
    %319 = vmatprep.subr.bf16.mxu0 0
    %320 = vmatpush1.bf16.msra.mxu0 0
    %321 = vmatprep.subr.bf16.mxu0 0
    %322 = vmatpush1.bf16.msra.mxu0 %v306
    %323 = vmatprep.subr.bf16.mxu0 0
    %324 = vmatpush1.bf16.msra.mxu0 %v305
    %325 = vmatprep.subr.bf16.mxu0 0
    %326 = vmatpush2.bf16.msra.mxu0 0
    %327 = vmatprep.subr.bf16.mxu0 0
    %328 = vmatpush2.bf16.msra.mxu0 0
    %329 = vmatprep.subr.bf16.mxu0 0
    %330 = vmatpush2.bf16.msra.mxu0 0
    %331 = vmatprep.subr.bf16.mxu0 0
    %332 = vmatpush2.bf16.msra.mxu0 0
    %333 = vmatprep.subr.bf16.mxu0 0
    %334 = vmatpush2.bf16.msra.mxu0 0
    %335 = vmatprep.subr.bf16.mxu0 0
    %336 = vmatpush2.bf16.msra.mxu0 0
    %337 = vmatprep.subr.bf16.mxu0 0
    %338 = vmatpush2.bf16.msra.mxu0 0
    %339 = vmatprep.subr.bf16.mxu0 0
    %340 = vmatpush2.bf16.msra.mxu0 0
    %341 = vmatprep.mubr.bf16.mxu0 0
    %342 = vmatmul.mubr.bf16.gmra.mxu0 %v253
    %v343 = vpop.f32.mrf.mxu0
    %v344 = vadd.f32 0.0, %v343
    %v345 = vpop.f32.mrf.mxu0
    %v346 = vpop.f32.mrf.mxu0
    %v347 = vadd.f32 0.0, %v346
    %v348 = vpop.f32.mrf.mxu0
    %349 = vdwg.mxu0
    %v350 = vpack.c.bf16 %v347, %v344
    %v355 = vunpack.c.l.b16 %v228
    %v356 = vunpack.c.l.b16 %v229
    %v357 = vunpack.c.l.b16 %v230
    %v358 = vunpack.c.l.b16 %v231
    %v359 = vpack.c.b16 %v356, %v355
    %v360 = vpack.c.b16 %v358, %v357
    %363 = vmatprep.subr.bf16.mxu0 0
    %364 = vmatpush1.bf16.msra.mxu0 0
    %365 = vmatprep.subr.bf16.mxu0 0
    %366 = vmatpush1.bf16.msra.mxu0 0
    %367 = vmatprep.subr.bf16.mxu0 0
    %368 = vmatpush1.bf16.msra.mxu0 0
    %369 = vmatprep.subr.bf16.mxu0 0
    %370 = vmatpush1.bf16.msra.mxu0 0
    %371 = vmatprep.subr.bf16.mxu0 0
    %372 = vmatpush1.bf16.msra.mxu0 0
    %373 = vmatprep.subr.bf16.mxu0 0
    %374 = vmatpush1.bf16.msra.mxu0 0
    %375 = vmatprep.subr.bf16.mxu0 0
    %376 = vmatpush1.bf16.msra.mxu0 %v360
    %377 = vmatprep.subr.bf16.mxu0 0
    %378 = vmatpush1.bf16.msra.mxu0 %v359
    %379 = vmatprep.subr.bf16.mxu0 0
    %380 = vmatpush2.bf16.msra.mxu0 0
    %381 = vmatprep.subr.bf16.mxu0 0
    %382 = vmatpush2.bf16.msra.mxu0 0
    %383 = vmatprep.subr.bf16.mxu0 0
    %384 = vmatpush2.bf16.msra.mxu0 0
    %385 = vmatprep.subr.bf16.mxu0 0
    %386 = vmatpush2.bf16.msra.mxu0 0
    %387 = vmatprep.subr.bf16.mxu0 0
    %388 = vmatpush2.bf16.msra.mxu0 0
    %389 = vmatprep.subr.bf16.mxu0 0
    %390 = vmatpush2.bf16.msra.mxu0 0
    %391 = vmatprep.subr.bf16.mxu0 0
    %392 = vmatpush2.bf16.msra.mxu0 0
    %393 = vmatprep.subr.bf16.mxu0 0
    %394 = vmatpush2.bf16.msra.mxu0 0
    %395 = vmatprep.mubr.bf16.mxu0 0
    %396 = vmatmul.mubr.bf16.gmra.mxu0 %v253
    %v397 = vpop.f32.mrf.mxu0
    %v398 = vadd.f32 0.0, %v397
    %v399 = vpop.f32.mrf.mxu0
    %v400 = vpop.f32.mrf.mxu0
    %v401 = vadd.f32 0.0, %v400
    %v402 = vpop.f32.mrf.mxu0
    %403 = vdwg.mxu0
    %v404 = vpack.c.bf16 %v401, %v398
    %vm405 = vcmask 64512
    %v407 = vsel %vm405, %v296, 0
    %v410 = vsel %vm405, %v350, 0
    %412 = vmatprep.subr.bf16.mxu0 0
    %413 = vmatpush1.bf16.xpose.msra.mxu0 0
    %414 = vmatprep.subr.bf16.mxu0 0
    %415 = vmatpush1.bf16.xpose.msra.mxu0 0
    %416 = vmatprep.subr.bf16.mxu0 0
    %417 = vmatpush1.bf16.xpose.msra.mxu0 0
    %418 = vmatprep.subr.bf16.mxu0 0
    %419 = vmatpush1.bf16.xpose.msra.mxu0 0
    %420 = vmatprep.subr.bf16.mxu0 0
    %421 = vmatpush1.bf16.xpose.msra.mxu0 0
    %422 = vmatprep.subr.bf16.mxu0 0
    %423 = vmatpush1.bf16.xpose.msra.mxu0 0
    %424 = vmatprep.subr.bf16.mxu0 0
    %425 = vmatpush1.bf16.xpose.msra.mxu0 0
    %426 = vmatprep.subr.bf16.mxu0 0
    %427 = vmatpush1.bf16.xpose.msra.mxu0 %v410
    %428 = vmatprep.subr.bf16.mxu0 0
    %429 = vmatpush2.bf16.xpose.msra.mxu0 0
    %430 = vmatprep.subr.bf16.mxu0 0
    %431 = vmatpush2.bf16.xpose.msra.mxu0 0
    %432 = vmatprep.subr.bf16.mxu0 0
    %433 = vmatpush2.bf16.xpose.msra.mxu0 0
    %434 = vmatprep.subr.bf16.mxu0 0
    %435 = vmatpush2.bf16.xpose.msra.mxu0 0
    %436 = vmatprep.subr.bf16.mxu0 0
    %437 = vmatpush2.bf16.xpose.msra.mxu0 0
    %438 = vmatprep.subr.bf16.mxu0 0
    %439 = vmatpush2.bf16.xpose.msra.mxu0 0
    %440 = vmatprep.subr.bf16.mxu0 0
    %441 = vmatpush2.bf16.xpose.msra.mxu0 0
    %442 = vmatprep.subr.bf16.mxu0 0
    %443 = vmatpush2.bf16.xpose.msra.mxu0 0
    %444 = vmatprep.mubr.bf16.mxu0 0
    %445 = vmatmul.mubr.bf16.gmra.mxu0 %v407
    %v446 = vpop.f32.mrf.mxu0
    %v447 = vadd.f32 0.0, %v446
    %v448 = vpop.f32.mrf.mxu0
    %v449 = vpop.f32.mrf.mxu0
    %v450 = vpop.f32.mrf.mxu0
    %451 = vdwg.mxu0
    %v452 = vmul.f32 %v447, 0.35355338
    %v453 = vadd.f32 %v452, %v218
    %v454 = vsel %vm405, %v453, -inf
    %455 = vmax.xlane.f32.xlu0 %v454
    %v456 = vpop.xlane.xlu0 %455
    %v457 = vsub.f32 %v453, %v456
    %v458 = vmul.f32 %v457, 1.442695
    %v459 = vpow.pop %v458
    %v460 = vsel %vm405, %v459, 0.0
    %461 = vadd.xlane.f32.xlu0 %v460
    %v462 = vpop.xlane.xlu0 %461
    %v463 = vrcp.pop %v462
    %v464 = vmul.f32 %v459, %v463
    %465 = vst.msk [vmem:[#allocation21] sm:$0xff] %vm405, %v464
    %v466 = vpack.c.bf16 %v464, %v464
    %v468 = vsel %vm405, %v466, 0
    %vm470 = vcmask 1043456
    %v472 = vsel %vm470, %v404, 0
    %474 = vmatprep.subr.bf16.mxu0 0
    %475 = vmatpush1.bf16.msra.mxu0 0
    %476 = vmatprep.subr.bf16.mxu0 0
    %477 = vmatpush1.bf16.msra.mxu0 0
    %478 = vmatprep.subr.bf16.mxu0 0
    %479 = vmatpush1.bf16.msra.mxu0 0
    %480 = vmatprep.subr.bf16.mxu0 0
    %481 = vmatpush1.bf16.msra.mxu0 0
    %482 = vmatprep.subr.bf16.mxu0 0
    %483 = vmatpush1.bf16.msra.mxu0 0
    %484 = vmatprep.subr.bf16.mxu0 0
    %485 = vmatpush1.bf16.msra.mxu0 0
    %486 = vmatprep.subr.bf16.mxu0 0
    %487 = vmatpush1.bf16.msra.mxu0 0
    %488 = vmatprep.subr.bf16.mxu0 0
    %489 = vmatpush1.bf16.msra.mxu0 %v472
    %490 = vmatprep.subr.bf16.mxu0 0
    %491 = vmatpush2.bf16.msra.mxu0 0
    %492 = vmatprep.subr.bf16.mxu0 0
    %493 = vmatpush2.bf16.msra.mxu0 0
    %494 = vmatprep.subr.bf16.mxu0 0
    %495 = vmatpush2.bf16.msra.mxu0 0
    %496 = vmatprep.subr.bf16.mxu0 0
    %497 = vmatpush2.bf16.msra.mxu0 0
    %498 = vmatprep.subr.bf16.mxu0 0
    %499 = vmatpush2.bf16.msra.mxu0 0
    %500 = vmatprep.subr.bf16.mxu0 0
    %501 = vmatpush2.bf16.msra.mxu0 0
    %502 = vmatprep.subr.bf16.mxu0 0
    %503 = vmatpush2.bf16.msra.mxu0 0
    %504 = vmatprep.subr.bf16.mxu0 0
    %505 = vmatpush2.bf16.msra.mxu0 0
    %506 = vmatprep.mubr.bf16.mxu0 0
    %507 = vmatmul.mubr.bf16.gmra.mxu0 %v468
    %v508 = vpop.f32.mrf.mxu0
    %v509 = vadd.f32 0.0, %v508
    %v510 = vpop.f32.mrf.mxu0
    %v511 = vpop.f32.mrf.mxu0
    %v512 = vpop.f32.mrf.mxu0
    %513 = vdwg.mxu0
    %515 = vrot.lane.b32.xlu0 %v296, 120
    %v516 = vpop.permute.xlu0 %515
    %518 = vrot.lane.b32.xlu0 %v350, 120
    %v519 = vpop.permute.xlu0 %518
    %v521 = vsel %vm405, %v516, 0
    %v524 = vsel %vm405, %v519, 0
    %526 = vmatprep.subr.bf16.mxu0 0
    %527 = vmatpush1.bf16.xpose.msra.mxu0 0
    %528 = vmatprep.subr.bf16.mxu0 0
    %529 = vmatpush1.bf16.xpose.msra.mxu0 0
    %530 = vmatprep.subr.bf16.mxu0 0
    %531 = vmatpush1.bf16.xpose.msra.mxu0 0
    %532 = vmatprep.subr.bf16.mxu0 0
    %533 = vmatpush1.bf16.xpose.msra.mxu0 0
    %534 = vmatprep.subr.bf16.mxu0 0
    %535 = vmatpush1.bf16.xpose.msra.mxu0 0
    %536 = vmatprep.subr.bf16.mxu0 0
    %537 = vmatpush1.bf16.xpose.msra.mxu0 0
    %538 = vmatprep.subr.bf16.mxu0 0
    %539 = vmatpush1.bf16.xpose.msra.mxu0 0
    %540 = vmatprep.subr.bf16.mxu0 0
    %541 = vmatpush1.bf16.xpose.msra.mxu0 %v524
    %542 = vmatprep.subr.bf16.mxu0 0
    %543 = vmatpush2.bf16.xpose.msra.mxu0 0
    %544 = vmatprep.subr.bf16.mxu0 0
    %545 = vmatpush2.bf16.xpose.msra.mxu0 0
    %546 = vmatprep.subr.bf16.mxu0 0
    %547 = vmatpush2.bf16.xpose.msra.mxu0 0
    %548 = vmatprep.subr.bf16.mxu0 0
    %549 = vmatpush2.bf16.xpose.msra.mxu0 0
    %550 = vmatprep.subr.bf16.mxu0 0
    %551 = vmatpush2.bf16.xpose.msra.mxu0 0
    %552 = vmatprep.subr.bf16.mxu0 0
    %553 = vmatpush2.bf16.xpose.msra.mxu0 0
    %554 = vmatprep.subr.bf16.mxu0 0
    %555 = vmatpush2.bf16.xpose.msra.mxu0 0
    %556 = vmatprep.subr.bf16.mxu0 0
    %557 = vmatpush2.bf16.xpose.msra.mxu0 0
    %558 = vmatprep.mubr.bf16.mxu0 0
    %559 = vmatmul.mubr.bf16.gmra.mxu0 %v521
    %v560 = vpop.f32.mrf.mxu0
    %v561 = vadd.f32 0.0, %v560
    %v562 = vpop.f32.mrf.mxu0
    %v563 = vpop.f32.mrf.mxu0
    %v564 = vpop.f32.mrf.mxu0
    %565 = vdwg.mxu0
    %v566 = vmul.f32 %v561, 0.35355338
    %v567 = vadd.f32 %v566, %v218
    %v568 = vsel %vm405, %v567, -inf
    %569 = vmax.xlane.f32.xlu0 %v568
    %v570 = vpop.xlane.xlu0 %569
    %v571 = vsub.f32 %v567, %v570
    %v572 = vmul.f32 %v571, 1.442695
    %v573 = vpow.pop %v572
    %v574 = vsel %vm405, %v573, 0.0
    %575 = vadd.xlane.f32.xlu0 %v574
    %v576 = vpop.xlane.xlu0 %575
    %v577 = vrcp.pop %v576
    %v578 = vmul.f32 %v573, %v577
    %s579 = scalar_lea.vmem [#allocation21], 8
    %580 = vst.msk [vmem:[%s579] sm:$0xff] %vm405, %v578
    %v581 = vpack.c.bf16 %v578, %v578
    %583 = vrot.lane.b32.xlu0 %v404, 120
    %v584 = vpop.permute.xlu0 %583
    %v586 = vsel %vm405, %v581, 0
    %v589 = vsel %vm470, %v584, 0
    %591 = vmatprep.subr.bf16.mxu0 0
    %592 = vmatpush1.bf16.msra.mxu0 0
    %593 = vmatprep.subr.bf16.mxu0 0
    %594 = vmatpush1.bf16.msra.mxu0 0
    %595 = vmatprep.subr.bf16.mxu0 0
    %596 = vmatpush1.bf16.msra.mxu0 0
    %597 = vmatprep.subr.bf16.mxu0 0
    %598 = vmatpush1.bf16.msra.mxu0 0
    %599 = vmatprep.subr.bf16.mxu0 0
    %600 = vmatpush1.bf16.msra.mxu0 0
    %601 = vmatprep.subr.bf16.mxu0 0
    %602 = vmatpush1.bf16.msra.mxu0 0
    %603 = vmatprep.subr.bf16.mxu0 0
    %604 = vmatpush1.bf16.msra.mxu0 0
    %605 = vmatprep.subr.bf16.mxu0 0
    %606 = vmatpush1.bf16.msra.mxu0 %v589
    %607 = vmatprep.subr.bf16.mxu0 0
    %608 = vmatpush2.bf16.msra.mxu0 0
    %609 = vmatprep.subr.bf16.mxu0 0
    %610 = vmatpush2.bf16.msra.mxu0 0
    %611 = vmatprep.subr.bf16.mxu0 0
    %612 = vmatpush2.bf16.msra.mxu0 0
    %613 = vmatprep.subr.bf16.mxu0 0
    %614 = vmatpush2.bf16.msra.mxu0 0
    %615 = vmatprep.subr.bf16.mxu0 0
    %616 = vmatpush2.bf16.msra.mxu0 0
    %617 = vmatprep.subr.bf16.mxu0 0
    %618 = vmatpush2.bf16.msra.mxu0 0
    %619 = vmatprep.subr.bf16.mxu0 0
    %620 = vmatpush2.bf16.msra.mxu0 0
    %621 = vmatprep.subr.bf16.mxu0 0
    %622 = vmatpush2.bf16.msra.mxu0 0
    %623 = vmatprep.mubr.bf16.mxu0 0
    %624 = vmatmul.mubr.bf16.gmra.mxu0 %v586
    %v625 = vpop.f32.mrf.mxu0
    %v626 = vadd.f32 0.0, %v625
    %v627 = vpop.f32.mrf.mxu0
    %v628 = vpop.f32.mrf.mxu0
    %v629 = vpop.f32.mrf.mxu0
    %630 = vdwg.mxu0
    %631 = vrot.lane.b32.xlu0 %v296, 112
    %v632 = vpop.permute.xlu0 %631
    %633 = vrot.lane.b32.xlu0 %v350, 112
    %v634 = vpop.permute.xlu0 %633
    %v636 = vsel %vm405, %v632, 0
    %v639 = vsel %vm405, %v634, 0
    %641 = vmatprep.subr.bf16.mxu0 0
    %642 = vmatpush1.bf16.xpose.msra.mxu0 0
    %643 = vmatprep.subr.bf16.mxu0 0
    %644 = vmatpush1.bf16.xpose.msra.mxu0 0
    %645 = vmatprep.subr.bf16.mxu0 0
    %646 = vmatpush1.bf16.xpose.msra.mxu0 0
    %647 = vmatprep.subr.bf16.mxu0 0
    %648 = vmatpush1.bf16.xpose.msra.mxu0 0
    %649 = vmatprep.subr.bf16.mxu0 0
    %650 = vmatpush1.bf16.xpose.msra.mxu0 0
    %651 = vmatprep.subr.bf16.mxu0 0
    %652 = vmatpush1.bf16.xpose.msra.mxu0 0
    %653 = vmatprep.subr.bf16.mxu0 0
    %654 = vmatpush1.bf16.xpose.msra.mxu0 0
    %655 = vmatprep.subr.bf16.mxu0 0
    %656 = vmatpush1.bf16.xpose.msra.mxu0 %v639
    %657 = vmatprep.subr.bf16.mxu0 0
    %658 = vmatpush2.bf16.xpose.msra.mxu0 0
    %659 = vmatprep.subr.bf16.mxu0 0
    %660 = vmatpush2.bf16.xpose.msra.mxu0 0
    %661 = vmatprep.subr.bf16.mxu0 0
    %662 = vmatpush2.bf16.xpose.msra.mxu0 0
    %663 = vmatprep.subr.bf16.mxu0 0
    %664 = vmatpush2.bf16.xpose.msra.mxu0 0
    %665 = vmatprep.subr.bf16.mxu0 0
    %666 = vmatpush2.bf16.xpose.msra.mxu0 0
    %667 = vmatprep.subr.bf16.mxu0 0
    %668 = vmatpush2.bf16.xpose.msra.mxu0 0
    %669 = vmatprep.subr.bf16.mxu0 0
    %670 = vmatpush2.bf16.xpose.msra.mxu0 0
    %671 = vmatprep.subr.bf16.mxu0 0
    %672 = vmatpush2.bf16.xpose.msra.mxu0 0
    %673 = vmatprep.mubr.bf16.mxu0 0
    %674 = vmatmul.mubr.bf16.gmra.mxu0 %v636
    %v675 = vpop.f32.mrf.mxu0
    %v676 = vadd.f32 0.0, %v675
    %v677 = vpop.f32.mrf.mxu0
    %v678 = vpop.f32.mrf.mxu0
    %v679 = vpop.f32.mrf.mxu0
    %680 = vdwg.mxu0
    %v681 = vmul.f32 %v676, 0.35355338
    %v682 = vadd.f32 %v681, %v218
    %v683 = vsel %vm405, %v682, -inf
    %684 = vmax.xlane.f32.xlu0 %v683
    %v685 = vpop.xlane.xlu0 %684
    %v686 = vsub.f32 %v682, %v685
    %v687 = vmul.f32 %v686, 1.442695
    %v688 = vpow.pop %v687
    %v689 = vsel %vm405, %v688, 0.0
    %690 = vadd.xlane.f32.xlu0 %v689
    %v691 = vpop.xlane.xlu0 %690
    %v692 = vrcp.pop %v691
    %v693 = vmul.f32 %v688, %v692
    %s694 = scalar_lea.vmem [#allocation21], 16
    %695 = vst.msk [vmem:[%s694] sm:$0xff] %vm405, %v693
    %v696 = vpack.c.bf16 %v693, %v693
    %697 = vrot.lane.b32.xlu0 %v404, 112
    %v698 = vpop.permute.xlu0 %697
    %v700 = vsel %vm405, %v696, 0
    %v703 = vsel %vm470, %v698, 0
    %705 = vmatprep.subr.bf16.mxu0 0
    %706 = vmatpush1.bf16.msra.mxu0 0
    %707 = vmatprep.subr.bf16.mxu0 0
    %708 = vmatpush1.bf16.msra.mxu0 0
    %709 = vmatprep.subr.bf16.mxu0 0
    %710 = vmatpush1.bf16.msra.mxu0 0
    %711 = vmatprep.subr.bf16.mxu0 0
    %712 = vmatpush1.bf16.msra.mxu0 0
    %713 = vmatprep.subr.bf16.mxu0 0
    %714 = vmatpush1.bf16.msra.mxu0 0
    %715 = vmatprep.subr.bf16.mxu0 0
    %716 = vmatpush1.bf16.msra.mxu0 0
    %717 = vmatprep.subr.bf16.mxu0 0
    %718 = vmatpush1.bf16.msra.mxu0 0
    %719 = vmatprep.subr.bf16.mxu0 0
    %720 = vmatpush1.bf16.msra.mxu0 %v703
    %721 = vmatprep.subr.bf16.mxu0 0
    %722 = vmatpush2.bf16.msra.mxu0 0
    %723 = vmatprep.subr.bf16.mxu0 0
    %724 = vmatpush2.bf16.msra.mxu0 0
    %725 = vmatprep.subr.bf16.mxu0 0
    %726 = vmatpush2.bf16.msra.mxu0 0
    %727 = vmatprep.subr.bf16.mxu0 0
    %728 = vmatpush2.bf16.msra.mxu0 0
    %729 = vmatprep.subr.bf16.mxu0 0
    %730 = vmatpush2.bf16.msra.mxu0 0
    %731 = vmatprep.subr.bf16.mxu0 0
    %732 = vmatpush2.bf16.msra.mxu0 0
    %733 = vmatprep.subr.bf16.mxu0 0
    %734 = vmatpush2.bf16.msra.mxu0 0
    %735 = vmatprep.subr.bf16.mxu0 0
    %736 = vmatpush2.bf16.msra.mxu0 0
    %737 = vmatprep.mubr.bf16.mxu0 0
    %738 = vmatmul.mubr.bf16.gmra.mxu0 %v700
    %v739 = vpop.f32.mrf.mxu0
    %v740 = vadd.f32 0.0, %v739
    %v741 = vpop.f32.mrf.mxu0
    %v742 = vpop.f32.mrf.mxu0
    %v743 = vpop.f32.mrf.mxu0
    %744 = vdwg.mxu0
    %745 = vrot.lane.b32.xlu0 %v296, 104
    %v746 = vpop.permute.xlu0 %745
    %747 = vrot.lane.b32.xlu0 %v350, 104
    %v748 = vpop.permute.xlu0 %747
    %v750 = vsel %vm405, %v746, 0
    %v753 = vsel %vm405, %v748, 0
    %755 = vmatprep.subr.bf16.mxu0 0
    %756 = vmatpush1.bf16.xpose.msra.mxu0 0
    %757 = vmatprep.subr.bf16.mxu0 0
    %758 = vmatpush1.bf16.xpose.msra.mxu0 0
    %759 = vmatprep.subr.bf16.mxu0 0
    %760 = vmatpush1.bf16.xpose.msra.mxu0 0
    %761 = vmatprep.subr.bf16.mxu0 0
    %762 = vmatpush1.bf16.xpose.msra.mxu0 0
    %763 = vmatprep.subr.bf16.mxu0 0
    %764 = vmatpush1.bf16.xpose.msra.mxu0 0
    %765 = vmatprep.subr.bf16.mxu0 0
    %766 = vmatpush1.bf16.xpose.msra.mxu0 0
    %767 = vmatprep.subr.bf16.mxu0 0
    %768 = vmatpush1.bf16.xpose.msra.mxu0 0
    %769 = vmatprep.subr.bf16.mxu0 0
    %770 = vmatpush1.bf16.xpose.msra.mxu0 %v753
    %771 = vmatprep.subr.bf16.mxu0 0
    %772 = vmatpush2.bf16.xpose.msra.mxu0 0
    %773 = vmatprep.subr.bf16.mxu0 0
    %774 = vmatpush2.bf16.xpose.msra.mxu0 0
    %775 = vmatprep.subr.bf16.mxu0 0
    %776 = vmatpush2.bf16.xpose.msra.mxu0 0
    %777 = vmatprep.subr.bf16.mxu0 0
    %778 = vmatpush2.bf16.xpose.msra.mxu0 0
    %779 = vmatprep.subr.bf16.mxu0 0
    %780 = vmatpush2.bf16.xpose.msra.mxu0 0
    %781 = vmatprep.subr.bf16.mxu0 0
    %782 = vmatpush2.bf16.xpose.msra.mxu0 0
    %783 = vmatprep.subr.bf16.mxu0 0
    %784 = vmatpush2.bf16.xpose.msra.mxu0 0
    %785 = vmatprep.subr.bf16.mxu0 0
    %786 = vmatpush2.bf16.xpose.msra.mxu0 0
    %787 = vmatprep.mubr.bf16.mxu0 0
    %788 = vmatmul.mubr.bf16.gmra.mxu0 %v750
    %v789 = vpop.f32.mrf.mxu0
    %v790 = vadd.f32 0.0, %v789
    %v791 = vpop.f32.mrf.mxu0
    %v792 = vpop.f32.mrf.mxu0
    %v793 = vpop.f32.mrf.mxu0
    %794 = vdwg.mxu0
    %v795 = vmul.f32 %v790, 0.35355338
    %v796 = vadd.f32 %v795, %v218
    %v797 = vsel %vm405, %v796, -inf
    %798 = vmax.xlane.f32.xlu0 %v797
    %v799 = vpop.xlane.xlu0 %798
    %v800 = vsub.f32 %v796, %v799
    %v801 = vmul.f32 %v800, 1.442695
    %v802 = vpow.pop %v801
    %v803 = vsel %vm405, %v802, 0.0
    %804 = vadd.xlane.f32.xlu0 %v803
    %v805 = vpop.xlane.xlu0 %804
    %v806 = vrcp.pop %v805
    %v807 = vmul.f32 %v802, %v806
    %s808 = scalar_lea.vmem [#allocation21], 24
    %809 = vst.msk [vmem:[%s808] sm:$0xff] %vm405, %v807
    %v810 = vpack.c.bf16 %v807, %v807
    %811 = vrot.lane.b32.xlu0 %v404, 104
    %v812 = vpop.permute.xlu0 %811
    %v814 = vsel %vm405, %v810, 0
    %v817 = vsel %vm470, %v812, 0
    %819 = vmatprep.subr.bf16.mxu0 0
    %820 = vmatpush1.bf16.msra.mxu0 0
    %821 = vmatprep.subr.bf16.mxu0 0
    %822 = vmatpush1.bf16.msra.mxu0 0
    %823 = vmatprep.subr.bf16.mxu0 0
    %824 = vmatpush1.bf16.msra.mxu0 0
    %825 = vmatprep.subr.bf16.mxu0 0
    %826 = vmatpush1.bf16.msra.mxu0 0
    %827 = vmatprep.subr.bf16.mxu0 0
    %828 = vmatpush1.bf16.msra.mxu0 0
    %829 = vmatprep.subr.bf16.mxu0 0
    %830 = vmatpush1.bf16.msra.mxu0 0
    %831 = vmatprep.subr.bf16.mxu0 0
    %832 = vmatpush1.bf16.msra.mxu0 0
    %833 = vmatprep.subr.bf16.mxu0 0
    %834 = vmatpush1.bf16.msra.mxu0 %v817
    %835 = vmatprep.subr.bf16.mxu0 0
    %836 = vmatpush2.bf16.msra.mxu0 0
    %837 = vmatprep.subr.bf16.mxu0 0
    %838 = vmatpush2.bf16.msra.mxu0 0
    %839 = vmatprep.subr.bf16.mxu0 0
    %840 = vmatpush2.bf16.msra.mxu0 0
    %841 = vmatprep.subr.bf16.mxu0 0
    %842 = vmatpush2.bf16.msra.mxu0 0
    %843 = vmatprep.subr.bf16.mxu0 0
    %844 = vmatpush2.bf16.msra.mxu0 0
    %845 = vmatprep.subr.bf16.mxu0 0
    %846 = vmatpush2.bf16.msra.mxu0 0
    %847 = vmatprep.subr.bf16.mxu0 0
    %848 = vmatpush2.bf16.msra.mxu0 0
    %849 = vmatprep.subr.bf16.mxu0 0
    %850 = vmatpush2.bf16.msra.mxu0 0
    %851 = vmatprep.mubr.bf16.mxu0 0
    %852 = vmatmul.mubr.bf16.gmra.mxu0 %v814
    %v853 = vpop.f32.mrf.mxu0
    %v854 = vadd.f32 0.0, %v853
    %v855 = vpop.f32.mrf.mxu0
    %v856 = vpop.f32.mrf.mxu0
    %v857 = vpop.f32.mrf.mxu0
    %858 = vdwg.mxu0
    %860 = vrot.lane.b32.xlu0 %v626, 8
    %v861 = vpop.permute.xlu0 %860
    %864 = vrot.lane.b32.xlu0 %v740, 16
    %v865 = vpop.permute.xlu0 %864
    %868 = vrot.lane.b32.xlu0 %v854, 24
    %v869 = vpop.permute.xlu0 %868
    %v871 = vsel %vm405, %v509, %v861
    %vm872 = vcmask 130048
    %v873 = vsel %vm872, %v871, %v865
    %vm874 = vcmask 195584
    %v875 = vsel %vm874, %v873, %v869
    %v876 = vpack.c.bf16 %v875, %v875
    %v881 = vunpack.c.l.b16 %v232
    %v882 = vunpack.c.l.b16 %v233
    %v883 = vunpack.c.l.b16 %v234
    %v884 = vunpack.c.l.b16 %v235
    %v885 = vpack.c.b16 %v882, %v881
    %v886 = vpack.c.b16 %v884, %v883
    %v890 = vsel %vm251, %v876, 0
    %892 = vmatprep.subr.bf16.mxu0 0
    %893 = vmatpush1.bf16.msra.mxu0 0
    %894 = vmatprep.subr.bf16.mxu0 0
    %895 = vmatpush1.bf16.msra.mxu0 0
    %896 = vmatprep.subr.bf16.mxu0 0
    %897 = vmatpush1.bf16.msra.mxu0 0
    %898 = vmatprep.subr.bf16.mxu0 0
    %899 = vmatpush1.bf16.msra.mxu0 0
    %900 = vmatprep.subr.bf16.mxu0 0
    %901 = vmatpush1.bf16.msra.mxu0 0
    %902 = vmatprep.subr.bf16.mxu0 0
    %903 = vmatpush1.bf16.msra.mxu0 0
    %904 = vmatprep.subr.bf16.mxu0 0
    %905 = vmatpush1.bf16.msra.mxu0 %v886
    %906 = vmatprep.subr.bf16.mxu0 0
    %907 = vmatpush1.bf16.msra.mxu0 %v885
    %908 = vmatprep.subr.bf16.mxu0 0
    %909 = vmatpush2.bf16.msra.mxu0 0
    %910 = vmatprep.subr.bf16.mxu0 0
    %911 = vmatpush2.bf16.msra.mxu0 0
    %912 = vmatprep.subr.bf16.mxu0 0
    %913 = vmatpush2.bf16.msra.mxu0 0
    %914 = vmatprep.subr.bf16.mxu0 0
    %915 = vmatpush2.bf16.msra.mxu0 0
    %916 = vmatprep.subr.bf16.mxu0 0
    %917 = vmatpush2.bf16.msra.mxu0 0
    %918 = vmatprep.subr.bf16.mxu0 0
    %919 = vmatpush2.bf16.msra.mxu0 0
    %920 = vmatprep.subr.bf16.mxu0 0
    %921 = vmatpush2.bf16.msra.mxu0 0
    %922 = vmatprep.subr.bf16.mxu0 0
    %923 = vmatpush2.bf16.msra.mxu0 0
    %924 = vmatprep.mubr.bf16.mxu0 0
    %925 = vmatmul.mubr.bf16.gmra.mxu0 %v890
    %v926 = vpop.f32.mrf.mxu0
    %v927 = vadd.f32 0.0, %v926
    %v928 = vpop.f32.mrf.mxu0
    %v929 = vpop.f32.mrf.mxu0
    %v930 = vpop.f32.mrf.mxu0
    %931 = vdwg.mxu0
    %932 = vst.msk [vmem:[#allocation2] sm:$0xff] %vm251, %v927
    %v933 = vrot.slane %v296, 4
    %v934 = vrot.slane %v350, 4
    %v936 = vsel %vm405, %v933, 0
    %v939 = vsel %vm405, %v934, 0
    %941 = vmatprep.subr.bf16.mxu0 0
    %942 = vmatpush1.bf16.xpose.msra.mxu0 0
    %943 = vmatprep.subr.bf16.mxu0 0
    %944 = vmatpush1.bf16.xpose.msra.mxu0 0
    %945 = vmatprep.subr.bf16.mxu0 0
    %946 = vmatpush1.bf16.xpose.msra.mxu0 0
    %947 = vmatprep.subr.bf16.mxu0 0
    %948 = vmatpush1.bf16.xpose.msra.mxu0 0
    %949 = vmatprep.subr.bf16.mxu0 0
    %950 = vmatpush1.bf16.xpose.msra.mxu0 0
    %951 = vmatprep.subr.bf16.mxu0 0
    %952 = vmatpush1.bf16.xpose.msra.mxu0 0
    %953 = vmatprep.subr.bf16.mxu0 0
    %954 = vmatpush1.bf16.xpose.msra.mxu0 0
    %955 = vmatprep.subr.bf16.mxu0 0
    %956 = vmatpush1.bf16.xpose.msra.mxu0 %v939
    %957 = vmatprep.subr.bf16.mxu0 0
    %958 = vmatpush2.bf16.xpose.msra.mxu0 0
    %959 = vmatprep.subr.bf16.mxu0 0
    %960 = vmatpush2.bf16.xpose.msra.mxu0 0
    %961 = vmatprep.subr.bf16.mxu0 0
    %962 = vmatpush2.bf16.xpose.msra.mxu0 0
    %963 = vmatprep.subr.bf16.mxu0 0
    %964 = vmatpush2.bf16.xpose.msra.mxu0 0
    %965 = vmatprep.subr.bf16.mxu0 0
    %966 = vmatpush2.bf16.xpose.msra.mxu0 0
    %967 = vmatprep.subr.bf16.mxu0 0
    %968 = vmatpush2.bf16.xpose.msra.mxu0 0
    %969 = vmatprep.subr.bf16.mxu0 0
    %970 = vmatpush2.bf16.xpose.msra.mxu0 0
    %971 = vmatprep.subr.bf16.mxu0 0
    %972 = vmatpush2.bf16.xpose.msra.mxu0 0
    %973 = vmatprep.mubr.bf16.mxu0 0
    %974 = vmatmul.mubr.bf16.gmra.mxu0 %v936
    %v975 = vpop.f32.mrf.mxu0
    %v976 = vadd.f32 0.0, %v975
    %v977 = vpop.f32.mrf.mxu0
    %v978 = vpop.f32.mrf.mxu0
    %v979 = vpop.f32.mrf.mxu0
    %980 = vdwg.mxu0
    %v981 = vmul.f32 %v976, 0.35355338
    %v982 = vadd.f32 %v981, %v219
    %v983 = vsel %vm405, %v982, -inf
    %984 = vmax.xlane.f32.xlu0 %v983
    %v985 = vpop.xlane.xlu0 %984
    %v986 = vsub.f32 %v982, %v985
    %v987 = vmul.f32 %v986, 1.442695
    %v988 = vpow.pop %v987
    %v989 = vsel %vm405, %v988, 0.0
    %990 = vadd.xlane.f32.xlu0 %v989
    %v991 = vpop.xlane.xlu0 %990
    %v992 = vrcp.pop %v991
    %v993 = vmul.f32 %v988, %v992
    %s994 = scalar_lea.vmem [#allocation21], 32
    %995 = vst.msk [vmem:[%s994] sm:$0xff] %vm405, %v993
    %v996 = vpack.c.bf16 %v993, %v993
    %v997 = vrot.slane %v404, 4
    %v999 = vsel %vm405, %v996, 0
    %v1002 = vsel %vm470, %v997, 0
    %1004 = vmatprep.subr.bf16.mxu0 0
    %1005 = vmatpush1.bf16.msra.mxu0 0
    %1006 = vmatprep.subr.bf16.mxu0 0
    %1007 = vmatpush1.bf16.msra.mxu0 0
    %1008 = vmatprep.subr.bf16.mxu0 0
    %1009 = vmatpush1.bf16.msra.mxu0 0
    %1010 = vmatprep.subr.bf16.mxu0 0
    %1011 = vmatpush1.bf16.msra.mxu0 0
    %1012 = vmatprep.subr.bf16.mxu0 0
    %1013 = vmatpush1.bf16.msra.mxu0 0
    %1014 = vmatprep.subr.bf16.mxu0 0
    %1015 = vmatpush1.bf16.msra.mxu0 0
    %1016 = vmatprep.subr.bf16.mxu0 0
    %1017 = vmatpush1.bf16.msra.mxu0 0
    %1018 = vmatprep.subr.bf16.mxu0 0
    %1019 = vmatpush1.bf16.msra.mxu0 %v1002
    %1020 = vmatprep.subr.bf16.mxu0 0
    %1021 = vmatpush2.bf16.msra.mxu0 0
    %1022 = vmatprep.subr.bf16.mxu0 0
    %1023 = vmatpush2.bf16.msra.mxu0 0
    %1024 = vmatprep.subr.bf16.mxu0 0
    %1025 = vmatpush2.bf16.msra.mxu0 0
    %1026 = vmatprep.subr.bf16.mxu0 0
    %1027 = vmatpush2.bf16.msra.mxu0 0
    %1028 = vmatprep.subr.bf16.mxu0 0
    %1029 = vmatpush2.bf16.msra.mxu0 0
    %1030 = vmatprep.subr.bf16.mxu0 0
    %1031 = vmatpush2.bf16.msra.mxu0 0
    %1032 = vmatprep.subr.bf16.mxu0 0
    %1033 = vmatpush2.bf16.msra.mxu0 0
    %1034 = vmatprep.subr.bf16.mxu0 0
    %1035 = vmatpush2.bf16.msra.mxu0 0
    %1036 = vmatprep.mubr.bf16.mxu0 0
    %1037 = vmatmul.mubr.bf16.gmra.mxu0 %v999
    %v1038 = vpop.f32.mrf.mxu0
    %v1039 = vadd.f32 0.0, %v1038
    %v1040 = vpop.f32.mrf.mxu0
    %v1041 = vpop.f32.mrf.mxu0
    %v1042 = vpop.f32.mrf.mxu0
    %1043 = vdwg.mxu0
    %1044 = vrot.lane.b32.xlu0 %v933, 120
    %v1045 = vpop.permute.xlu0 %1044
    %1046 = vrot.lane.b32.xlu0 %v934, 120
    %v1047 = vpop.permute.xlu0 %1046
    %v1049 = vsel %vm405, %v1045, 0
    %v1052 = vsel %vm405, %v1047, 0
    %1054 = vmatprep.subr.bf16.mxu0 0
    %1055 = vmatpush1.bf16.xpose.msra.mxu0 0
    %1056 = vmatprep.subr.bf16.mxu0 0
    %1057 = vmatpush1.bf16.xpose.msra.mxu0 0
    %1058 = vmatprep.subr.bf16.mxu0 0
    %1059 = vmatpush1.bf16.xpose.msra.mxu0 0
    %1060 = vmatprep.subr.bf16.mxu0 0
    %1061 = vmatpush1.bf16.xpose.msra.mxu0 0
    %1062 = vmatprep.subr.bf16.mxu0 0
    %1063 = vmatpush1.bf16.xpose.msra.mxu0 0
    %1064 = vmatprep.subr.bf16.mxu0 0
    %1065 = vmatpush1.bf16.xpose.msra.mxu0 0
    %1066 = vmatprep.subr.bf16.mxu0 0
    %1067 = vmatpush1.bf16.xpose.msra.mxu0 0
    %1068 = vmatprep.subr.bf16.mxu0 0
    %1069 = vmatpush1.bf16.xpose.msra.mxu0 %v1052
    %1070 = vmatprep.subr.bf16.mxu0 0
    %1071 = vmatpush2.bf16.xpose.msra.mxu0 0
    %1072 = vmatprep.subr.bf16.mxu0 0
    %1073 = vmatpush2.bf16.xpose.msra.mxu0 0
    %1074 = vmatprep.subr.bf16.mxu0 0
    %1075 = vmatpush2.bf16.xpose.msra.mxu0 0
    %1076 = vmatprep.subr.bf16.mxu0 0
    %1077 = vmatpush2.bf16.xpose.msra.mxu0 0
    %1078 = vmatprep.subr.bf16.mxu0 0
    %1079 = vmatpush2.bf16.xpose.msra.mxu0 0
    %1080 = vmatprep.subr.bf16.mxu0 0
    %1081 = vmatpush2.bf16.xpose.msra.mxu0 0
    %1082 = vmatprep.subr.bf16.mxu0 0
    %1083 = vmatpush2.bf16.xpose.msra.mxu0 0
    %1084 = vmatprep.subr.bf16.mxu0 0
    %1085 = vmatpush2.bf16.xpose.msra.mxu0 0
    %1086 = vmatprep.mubr.bf16.mxu0 0
    %1087 = vmatmul.mubr.bf16.gmra.mxu0 %v1049
    %v1088 = vpop.f32.mrf.mxu0
    %v1089 = vadd.f32 0.0, %v1088
    %v1090 = vpop.f32.mrf.mxu0
    %v1091 = vpop.f32.mrf.mxu0
    %v1092 = vpop.f32.mrf.mxu0
    %1093 = vdwg.mxu0
    %v1094 = vmul.f32 %v1089, 0.35355338
    %v1095 = vadd.f32 %v1094, %v219
    %v1096 = vsel %vm405, %v1095, -inf
    %1097 = vmax.xlane.f32.xlu0 %v1096
    %v1098 = vpop.xlane.xlu0 %1097
    %v1099 = vsub.f32 %v1095, %v1098
    %v1100 = vmul.f32 %v1099, 1.442695
    %v1101 = vpow.pop %v1100
    %v1102 = vsel %vm405, %v1101, 0.0
    %1103 = vadd.xlane.f32.xlu0 %v1102
    %v1104 = vpop.xlane.xlu0 %1103
    %v1105 = vrcp.pop %v1104
    %v1106 = vmul.f32 %v1101, %v1105
    %s1107 = scalar_lea.vmem [#allocation21], 40
    %1108 = vst.msk [vmem:[%s1107] sm:$0xff] %vm405, %v1106
    %v1109 = vpack.c.bf16 %v1106, %v1106
    %1110 = vrot.lane.b32.xlu0 %v997, 120
    %v1111 = vpop.permute.xlu0 %1110
    %v1113 = vsel %vm405, %v1109, 0
    %v1116 = vsel %vm470, %v1111, 0
    %1118 = vmatprep.subr.bf16.mxu0 0
    %1119 = vmatpush1.bf16.msra.mxu0 0
    %1120 = vmatprep.subr.bf16.mxu0 0
    %1121 = vmatpush1.bf16.msra.mxu0 0
    %1122 = vmatprep.subr.bf16.mxu0 0
    %1123 = vmatpush1.bf16.msra.mxu0 0
    %1124 = vmatprep.subr.bf16.mxu0 0
    %1125 = vmatpush1.bf16.msra.mxu0 0
    %1126 = vmatprep.subr.bf16.mxu0 0
    %1127 = vmatpush1.bf16.msra.mxu0 0
    %1128 = vmatprep.subr.bf16.mxu0 0
    %1129 = vmatpush1.bf16.msra.mxu0 0
    %1130 = vmatprep.subr.bf16.mxu0 0
    %1131 = vmatpush1.bf16.msra.mxu0 0
    %1132 = vmatprep.subr.bf16.mxu0 0
    %1133 = vmatpush1.bf16.msra.mxu0 %v1116
    %1134 = vmatprep.subr.bf16.mxu0 0
    %1135 = vmatpush2.bf16.msra.mxu0 0
    %1136 = vmatprep.subr.bf16.mxu0 0
    %1137 = vmatpush2.bf16.msra.mxu0 0
    %1138 = vmatprep.subr.bf16.mxu0 0
    %1139 = vmatpush2.bf16.msra.mxu0 0
    %1140 = vmatprep.subr.bf16.mxu0 0
    %1141 = vmatpush2.bf16.msra.mxu0 0
    %1142 = vmatprep.subr.bf16.mxu0 0
    %1143 = vmatpush2.bf16.msra.mxu0 0
    %1144 = vmatprep.subr.bf16.mxu0 0
    %1145 = vmatpush2.bf16.msra.mxu0 0
    %1146 = vmatprep.subr.bf16.mxu0 0
    %1147 = vmatpush2.bf16.msra.mxu0 0
    %1148 = vmatprep.subr.bf16.mxu0 0
    %1149 = vmatpush2.bf16.msra.mxu0 0
    %1150 = vmatprep.mubr.bf16.mxu0 0
    %1151 = vmatmul.mubr.bf16.gmra.mxu0 %v1113
    %v1152 = vpop.f32.mrf.mxu0
    %v1153 = vadd.f32 0.0, %v1152
    %v1154 = vpop.f32.mrf.mxu0
    %v1155 = vpop.f32.mrf.mxu0
    %v1156 = vpop.f32.mrf.mxu0
    %1157 = vdwg.mxu0
    %1158 = vrot.lane.b32.xlu0 %v933, 112
    %v1159 = vpop.permute.xlu0 %1158
    %1160 = vrot.lane.b32.xlu0 %v934, 112
    %v1161 = vpop.permute.xlu0 %1160
    %v1163 = vsel %vm405, %v1159, 0
    %v1166 = vsel %vm405, %v1161, 0
    %1168 = vmatprep.subr.bf16.mxu0 0
    %1169 = vmatpush1.bf16.xpose.msra.mxu0 0
    %1170 = vmatprep.subr.bf16.mxu0 0
    %1171 = vmatpush1.bf16.xpose.msra.mxu0 0
    %1172 = vmatprep.subr.bf16.mxu0 0
    %1173 = vmatpush1.bf16.xpose.msra.mxu0 0
    %1174 = vmatprep.subr.bf16.mxu0 0
    %1175 = vmatpush1.bf16.xpose.msra.mxu0 0
    %1176 = vmatprep.subr.bf16.mxu0 0
    %1177 = vmatpush1.bf16.xpose.msra.mxu0 0
    %1178 = vmatprep.subr.bf16.mxu0 0
    %1179 = vmatpush1.bf16.xpose.msra.mxu0 0
    %1180 = vmatprep.subr.bf16.mxu0 0
    %1181 = vmatpush1.bf16.xpose.msra.mxu0 0
    %1182 = vmatprep.subr.bf16.mxu0 0
    %1183 = vmatpush1.bf16.xpose.msra.mxu0 %v1166
    %1184 = vmatprep.subr.bf16.mxu0 0
    %1185 = vmatpush2.bf16.xpose.msra.mxu0 0
    %1186 = vmatprep.subr.bf16.mxu0 0
    %1187 = vmatpush2.bf16.xpose.msra.mxu0 0
    %1188 = vmatprep.subr.bf16.mxu0 0
    %1189 = vmatpush2.bf16.xpose.msra.mxu0 0
    %1190 = vmatprep.subr.bf16.mxu0 0
    %1191 = vmatpush2.bf16.xpose.msra.mxu0 0
    %1192 = vmatprep.subr.bf16.mxu0 0
    %1193 = vmatpush2.bf16.xpose.msra.mxu0 0
    %1194 = vmatprep.subr.bf16.mxu0 0
    %1195 = vmatpush2.bf16.xpose.msra.mxu0 0
    %1196 = vmatprep.subr.bf16.mxu0 0
    %1197 = vmatpush2.bf16.xpose.msra.mxu0 0
    %1198 = vmatprep.subr.bf16.mxu0 0
    %1199 = vmatpush2.bf16.xpose.msra.mxu0 0
    %1200 = vmatprep.mubr.bf16.mxu0 0
    %1201 = vmatmul.mubr.bf16.gmra.mxu0 %v1163
    %v1202 = vpop.f32.mrf.mxu0
    %v1203 = vadd.f32 0.0, %v1202
    %v1204 = vpop.f32.mrf.mxu0
    %v1205 = vpop.f32.mrf.mxu0
    %v1206 = vpop.f32.mrf.mxu0
    %1207 = vdwg.mxu0
    %v1208 = vmul.f32 %v1203, 0.35355338
    %v1209 = vadd.f32 %v1208, %v219
    %v1210 = vsel %vm405, %v1209, -inf
    %1211 = vmax.xlane.f32.xlu0 %v1210
    %v1212 = vpop.xlane.xlu0 %1211
    %v1213 = vsub.f32 %v1209, %v1212
    %v1214 = vmul.f32 %v1213, 1.442695
    %v1215 = vpow.pop %v1214
    %v1216 = vsel %vm405, %v1215, 0.0
    %1217 = vadd.xlane.f32.xlu0 %v1216
    %v1218 = vpop.xlane.xlu0 %1217
    %v1219 = vrcp.pop %v1218
    %v1220 = vmul.f32 %v1215, %v1219
    %s1221 = scalar_lea.vmem [#allocation21], 48
    %1222 = vst.msk [vmem:[%s1221] sm:$0xff] %vm405, %v1220
    %v1223 = vpack.c.bf16 %v1220, %v1220
    %1224 = vrot.lane.b32.xlu0 %v997, 112
    %v1225 = vpop.permute.xlu0 %1224
    %v1227 = vsel %vm405, %v1223, 0
    %v1230 = vsel %vm470, %v1225, 0
    %1232 = vmatprep.subr.bf16.mxu0 0
    %1233 = vmatpush1.bf16.msra.mxu0 0
    %1234 = vmatprep.subr.bf16.mxu0 0
    %1235 = vmatpush1.bf16.msra.mxu0 0
    %1236 = vmatprep.subr.bf16.mxu0 0
    %1237 = vmatpush1.bf16.msra.mxu0 0
    %1238 = vmatprep.subr.bf16.mxu0 0
    %1239 = vmatpush1.bf16.msra.mxu0 0
    %1240 = vmatprep.subr.bf16.mxu0 0
    %1241 = vmatpush1.bf16.msra.mxu0 0
    %1242 = vmatprep.subr.bf16.mxu0 0
    %1243 = vmatpush1.bf16.msra.mxu0 0
    %1244 = vmatprep.subr.bf16.mxu0 0
    %1245 = vmatpush1.bf16.msra.mxu0 0
    %1246 = vmatprep.subr.bf16.mxu0 0
    %1247 = vmatpush1.bf16.msra.mxu0 %v1230
    %1248 = vmatprep.subr.bf16.mxu0 0
    %1249 = vmatpush2.bf16.msra.mxu0 0
    %1250 = vmatprep.subr.bf16.mxu0 0
    %1251 = vmatpush2.bf16.msra.mxu0 0
    %1252 = vmatprep.subr.bf16.mxu0 0
    %1253 = vmatpush2.bf16.msra.mxu0 0
    %1254 = vmatprep.subr.bf16.mxu0 0
    %1255 = vmatpush2.bf16.msra.mxu0 0
    %1256 = vmatprep.subr.bf16.mxu0 0
    %1257 = vmatpush2.bf16.msra.mxu0 0
    %1258 = vmatprep.subr.bf16.mxu0 0
    %1259 = vmatpush2.bf16.msra.mxu0 0
    %1260 = vmatprep.subr.bf16.mxu0 0
    %1261 = vmatpush2.bf16.msra.mxu0 0
    %1262 = vmatprep.subr.bf16.mxu0 0
    %1263 = vmatpush2.bf16.msra.mxu0 0
    %1264 = vmatprep.mubr.bf16.mxu0 0
    %1265 = vmatmul.mubr.bf16.gmra.mxu0 %v1227
    %v1266 = vpop.f32.mrf.mxu0
    %v1267 = vadd.f32 0.0, %v1266
    %v1268 = vpop.f32.mrf.mxu0
    %v1269 = vpop.f32.mrf.mxu0
    %v1270 = vpop.f32.mrf.mxu0
    %1271 = vdwg.mxu0
    %1272 = vrot.lane.b32.xlu0 %v933, 104
    %v1273 = vpop.permute.xlu0 %1272
    %1274 = vrot.lane.b32.xlu0 %v934, 104
    %v1275 = vpop.permute.xlu0 %1274
    %v1277 = vsel %vm405, %v1273, 0
    %v1280 = vsel %vm405, %v1275, 0
    %1282 = vmatprep.subr.bf16.mxu0 0
    %1283 = vmatpush1.bf16.xpose.msra.mxu0 0
    %1284 = vmatprep.subr.bf16.mxu0 0
    %1285 = vmatpush1.bf16.xpose.msra.mxu0 0
    %1286 = vmatprep.subr.bf16.mxu0 0
    %1287 = vmatpush1.bf16.xpose.msra.mxu0 0
    %1288 = vmatprep.subr.bf16.mxu0 0
    %1289 = vmatpush1.bf16.xpose.msra.mxu0 0
    %1290 = vmatprep.subr.bf16.mxu0 0
    %1291 = vmatpush1.bf16.xpose.msra.mxu0 0
    %1292 = vmatprep.subr.bf16.mxu0 0
    %1293 = vmatpush1.bf16.xpose.msra.mxu0 0
    %1294 = vmatprep.subr.bf16.mxu0 0
    %1295 = vmatpush1.bf16.xpose.msra.mxu0 0
    %1296 = vmatprep.subr.bf16.mxu0 0
    %1297 = vmatpush1.bf16.xpose.msra.mxu0 %v1280
    %1298 = vmatprep.subr.bf16.mxu0 0
    %1299 = vmatpush2.bf16.xpose.msra.mxu0 0
    %1300 = vmatprep.subr.bf16.mxu0 0
    %1301 = vmatpush2.bf16.xpose.msra.mxu0 0
    %1302 = vmatprep.subr.bf16.mxu0 0
    %1303 = vmatpush2.bf16.xpose.msra.mxu0 0
    %1304 = vmatprep.subr.bf16.mxu0 0
    %1305 = vmatpush2.bf16.xpose.msra.mxu0 0
    %1306 = vmatprep.subr.bf16.mxu0 0
    %1307 = vmatpush2.bf16.xpose.msra.mxu0 0
    %1308 = vmatprep.subr.bf16.mxu0 0
    %1309 = vmatpush2.bf16.xpose.msra.mxu0 0
    %1310 = vmatprep.subr.bf16.mxu0 0
    %1311 = vmatpush2.bf16.xpose.msra.mxu0 0
    %1312 = vmatprep.subr.bf16.mxu0 0
    %1313 = vmatpush2.bf16.xpose.msra.mxu0 0
    %1314 = vmatprep.mubr.bf16.mxu0 0
    %1315 = vmatmul.mubr.bf16.gmra.mxu0 %v1277
    %v1316 = vpop.f32.mrf.mxu0
    %v1317 = vadd.f32 0.0, %v1316
    %v1318 = vpop.f32.mrf.mxu0
    %v1319 = vpop.f32.mrf.mxu0
    %v1320 = vpop.f32.mrf.mxu0
    %1321 = vdwg.mxu0
    %v1322 = vmul.f32 %v1317, 0.35355338
    %v1323 = vadd.f32 %v1322, %v219
    %v1324 = vsel %vm405, %v1323, -inf
    %1325 = vmax.xlane.f32.xlu0 %v1324
    %v1326 = vpop.xlane.xlu0 %1325
    %v1327 = vsub.f32 %v1323, %v1326
    %v1328 = vmul.f32 %v1327, 1.442695
    %v1329 = vpow.pop %v1328
    %v1330 = vsel %vm405, %v1329, 0.0
    %1331 = vadd.xlane.f32.xlu0 %v1330
    %v1332 = vpop.xlane.xlu0 %1331
    %v1333 = vrcp.pop %v1332
    %v1334 = vmul.f32 %v1329, %v1333
    %s1335 = scalar_lea.vmem [#allocation21], 56
    %1336 = vst.msk [vmem:[%s1335] sm:$0xff] %vm405, %v1334
    %v1337 = vpack.c.bf16 %v1334, %v1334
    %1338 = vrot.lane.b32.xlu0 %v997, 104
    %v1339 = vpop.permute.xlu0 %1338
    %v1341 = vsel %vm405, %v1337, 0
    %v1344 = vsel %vm470, %v1339, 0
    %1346 = vmatprep.subr.bf16.mxu0 0
    %1347 = vmatpush1.bf16.msra.mxu0 0
    %1348 = vmatprep.subr.bf16.mxu0 0
    %1349 = vmatpush1.bf16.msra.mxu0 0
    %1350 = vmatprep.subr.bf16.mxu0 0
    %1351 = vmatpush1.bf16.msra.mxu0 0
    %1352 = vmatprep.subr.bf16.mxu0 0
    %1353 = vmatpush1.bf16.msra.mxu0 0
    %1354 = vmatprep.subr.bf16.mxu0 0
    %1355 = vmatpush1.bf16.msra.mxu0 0
    %1356 = vmatprep.subr.bf16.mxu0 0
    %1357 = vmatpush1.bf16.msra.mxu0 0
    %1358 = vmatprep.subr.bf16.mxu0 0
    %1359 = vmatpush1.bf16.msra.mxu0 0
    %1360 = vmatprep.subr.bf16.mxu0 0
    %1361 = vmatpush1.bf16.msra.mxu0 %v1344
    %1362 = vmatprep.subr.bf16.mxu0 0
    %1363 = vmatpush2.bf16.msra.mxu0 0
    %1364 = vmatprep.subr.bf16.mxu0 0
    %1365 = vmatpush2.bf16.msra.mxu0 0
    %1366 = vmatprep.subr.bf16.mxu0 0
    %1367 = vmatpush2.bf16.msra.mxu0 0
    %1368 = vmatprep.subr.bf16.mxu0 0
    %1369 = vmatpush2.bf16.msra.mxu0 0
    %1370 = vmatprep.subr.bf16.mxu0 0
    %1371 = vmatpush2.bf16.msra.mxu0 0
    %1372 = vmatprep.subr.bf16.mxu0 0
    %1373 = vmatpush2.bf16.msra.mxu0 0
    %1374 = vmatprep.subr.bf16.mxu0 0
    %1375 = vmatpush2.bf16.msra.mxu0 0
    %1376 = vmatprep.subr.bf16.mxu0 0
    %1377 = vmatpush2.bf16.msra.mxu0 0
    %1378 = vmatprep.mubr.bf16.mxu0 0
    %1379 = vmatmul.mubr.bf16.gmra.mxu0 %v1341
    %v1380 = vpop.f32.mrf.mxu0
    %v1381 = vadd.f32 0.0, %v1380
    %v1382 = vpop.f32.mrf.mxu0
    %v1383 = vpop.f32.mrf.mxu0
    %v1384 = vpop.f32.mrf.mxu0
    %1385 = vdwg.mxu0
    %1387 = vrot.lane.b32.xlu0 %v1153, 8
    %v1388 = vpop.permute.xlu0 %1387
    %1391 = vrot.lane.b32.xlu0 %v1267, 16
    %v1392 = vpop.permute.xlu0 %1391
    %1395 = vrot.lane.b32.xlu0 %v1381, 24
    %v1396 = vpop.permute.xlu0 %1395
    %v1398 = vsel %vm405, %v1039, %v1388
    %v1399 = vsel %vm872, %v1398, %v1392
    %v1400 = vsel %vm874, %v1399, %v1396
    %v1401 = vpack.c.bf16 %v1400, %v1400
    %v1403 = vsel %vm251, %v1401, 0
    %1405 = vmatprep.subr.bf16.mxu0 0
    %1406 = vmatpush1.bf16.msra.mxu0 0
    %1407 = vmatprep.subr.bf16.mxu0 0
    %1408 = vmatpush1.bf16.msra.mxu0 0
    %1409 = vmatprep.subr.bf16.mxu0 0
    %1410 = vmatpush1.bf16.msra.mxu0 0
    %1411 = vmatprep.subr.bf16.mxu0 0
    %1412 = vmatpush1.bf16.msra.mxu0 0
    %1413 = vmatprep.subr.bf16.mxu0 0
    %1414 = vmatpush1.bf16.msra.mxu0 0
    %1415 = vmatprep.subr.bf16.mxu0 0
    %1416 = vmatpush1.bf16.msra.mxu0 0
    %1417 = vmatprep.subr.bf16.mxu0 0
    %1418 = vmatpush1.bf16.msra.mxu0 %v886
    %1419 = vmatprep.subr.bf16.mxu0 0
    %1420 = vmatpush1.bf16.msra.mxu0 %v885
    %1421 = vmatprep.subr.bf16.mxu0 0
    %1422 = vmatpush2.bf16.msra.mxu0 0
    %1423 = vmatprep.subr.bf16.mxu0 0
    %1424 = vmatpush2.bf16.msra.mxu0 0
    %1425 = vmatprep.subr.bf16.mxu0 0
    %1426 = vmatpush2.bf16.msra.mxu0 0
    %1427 = vmatprep.subr.bf16.mxu0 0
    %1428 = vmatpush2.bf16.msra.mxu0 0
    %1429 = vmatprep.subr.bf16.mxu0 0
    %1430 = vmatpush2.bf16.msra.mxu0 0
    %1431 = vmatprep.subr.bf16.mxu0 0
    %1432 = vmatpush2.bf16.msra.mxu0 0
    %1433 = vmatprep.subr.bf16.mxu0 0
    %1434 = vmatpush2.bf16.msra.mxu0 0
    %1435 = vmatprep.subr.bf16.mxu0 0
    %1436 = vmatpush2.bf16.msra.mxu0 0
    %1437 = vmatprep.mubr.bf16.mxu0 0
    %1438 = vmatmul.mubr.bf16.gmra.mxu0 %v1403
    %v1439 = vpop.f32.mrf.mxu0
    %v1440 = vadd.f32 0.0, %v1439
    %v1441 = vpop.f32.mrf.mxu0
    %v1442 = vpop.f32.mrf.mxu0
    %v1443 = vpop.f32.mrf.mxu0
    %1444 = vdwg.mxu0
    %1445 = vst.msk [vmem:[#allocation2 + $0x8] sm:$0xff] %vm251, %v1440
    %v1446 = vld [vmem:[#allocation2] sm:$0xff]
    %v1447 = vld [vmem:[#allocation2 + $0x8] sm:$0xff]
    %v1448 = vadd.f32 %v1446, %v210
    %v1449 = vadd.f32 %v1447, %v211
    %v1450 = vsel %vm251, %v1448, 0.0
    %1451 = vadd.xlane.f32.xlu0 %v1450
    %v1452 = vpop.xlane.xlu0 %1451
    %v1453 = vsel %vm251, %v1449, 0.0
    %1454 = vadd.xlane.f32.xlu0 %v1453
    %v1455 = vpop.xlane.xlu0 %1454
    %v1456 = vrcp.pop 32.0
    %v1457 = vmul.f32 %v1452, %v1456
    %v1458 = vmul.f32 %v1455, %v1456
    %v1459 = vmul.f32 %v1448, %v1448
    %v1460 = vmul.f32 %v1449, %v1449
    %v1461 = vsel %vm251, %v1459, 0.0
    %1462 = vadd.xlane.f32.xlu0 %v1461
    %v1463 = vpop.xlane.xlu0 %1462
    %v1464 = vsel %vm251, %v1460, 0.0
    %1465 = vadd.xlane.f32.xlu0 %v1464
    %v1466 = vpop.xlane.xlu0 %1465
    %v1467 = vmul.f32 %v1463, %v1456
    %v1468 = vmul.f32 %v1466, %v1456
    %v1469 = vmul.f32 %v1457, %v1457
    %v1470 = vmul.f32 %v1458, %v1458
    %v1471 = vsub.f32 %v1467, %v1469
    %v1472 = vsub.f32 %v1468, %v1470
    %v1473 = vsub.f32 %v1448, %v1457
    %v1474 = vsub.f32 %v1449, %v1458
    %v1475 = vadd.f32 %v1471, 1e-06
    %v1476 = vadd.f32 %v1472, 1e-06
    %v1477 = vrsqrt.pop %v1475
    %v1478 = vrsqrt.pop %v1476
    %v1479 = vmul.f32 %v1473, %v1477
    %v1480 = vmul.f32 %v1474, %v1478
    %v1482 = vlaneseq
    %v1483 = vshrl.u32 %v1482, 7
    %v1484 = vsub.s32 0, %v1483
    %v1485 = vrot.slane %v236, %v1484
    %v1487 = vmul.f32 %v1479, %v1485
    %v1488 = vmul.f32 %v1480, %v1485
    %v1490 = vlaneseq
    %v1491 = vshrl.u32 %v1490, 7
    %v1492 = vsub.s32 0, %v1491
    %v1493 = vrot.slane %v237, %v1492
    %v1495 = vadd.f32 %v1487, %v1493
    %v1496 = vadd.f32 %v1488, %v1493
    %v1497 = vld [vmem:[#allocation12] sm:$0xf]
    %v1498 = vld [vmem:[#allocation12 + $0x4] sm:$0xf]
    %v1499 = vld [vmem:[#allocation12 + $0x8] sm:$0xf]
    %v1500 = vld [vmem:[#allocation12 + $0xc] sm:$0xf]
    %v1501 = vld [vmem:[#allocation14] sm:$0xf]
    %v1502 = vld [vmem:[#allocation14 + $0x4] sm:$0xf]
    %v1503 = vld [vmem:[#allocation14 + $0x8] sm:$0xf]
    %v1504 = vld [vmem:[#allocation14 + $0xc] sm:$0xf]
    %v1505 = vld [vmem:[#allocation15] sm:$0xf]
    %v1506 = vld [vmem:[#allocation15 + $0x4] sm:$0xf]
    %v1507 = vld [vmem:[#allocation15 + $0x8] sm:$0xf]
    %v1508 = vld [vmem:[#allocation15 + $0xc] sm:$0xf]
    %v1509 = vld [vmem:[#allocation17] sm:$0xf]
    %v1510 = vld [vmem:[#allocation17 + $0x4] sm:$0xf]
    %v1511 = vld [vmem:[#allocation17 + $0x8] sm:$0xf]
    %v1512 = vld [vmem:[#allocation17 + $0xc] sm:$0xf]
    %v1513 = vld [vmem:[%s13] sm:$0x1]
    %v1514 = vld [vmem:[%s14] sm:$0x1]
    %v1515 = vpack.c.bf16 %v1496, %v1495
    %v1520 = vunpack.c.l.b16 %v1497
    %v1521 = vunpack.c.l.b16 %v1498
    %v1522 = vunpack.c.l.b16 %v1499
    %v1523 = vunpack.c.l.b16 %v1500
    %v1524 = vpack.c.b16 %v1521, %v1520
    %v1525 = vpack.c.b16 %v1523, %v1522
    %v1529 = vsel %vm251, %v1515, 0
    %1531 = vmatprep.subr.bf16.mxu0 0
    %1532 = vmatpush1.bf16.msra.mxu0 0
    %1533 = vmatprep.subr.bf16.mxu0 0
    %1534 = vmatpush1.bf16.msra.mxu0 0
    %1535 = vmatprep.subr.bf16.mxu0 0
    %1536 = vmatpush1.bf16.msra.mxu0 0
    %1537 = vmatprep.subr.bf16.mxu0 0
    %1538 = vmatpush1.bf16.msra.mxu0 0
    %1539 = vmatprep.subr.bf16.mxu0 0
    %1540 = vmatpush1.bf16.msra.mxu0 0
    %1541 = vmatprep.subr.bf16.mxu0 0
    %1542 = vmatpush1.bf16.msra.mxu0 0
    %1543 = vmatprep.subr.bf16.mxu0 0
    %1544 = vmatpush1.bf16.msra.mxu0 %v1525
    %1545 = vmatprep.subr.bf16.mxu0 0
    %1546 = vmatpush1.bf16.msra.mxu0 %v1524
    %1547 = vmatprep.subr.bf16.mxu0 0
    %1548 = vmatpush2.bf16.msra.mxu0 0
    %1549 = vmatprep.subr.bf16.mxu0 0
    %1550 = vmatpush2.bf16.msra.mxu0 0
    %1551 = vmatprep.subr.bf16.mxu0 0
    %1552 = vmatpush2.bf16.msra.mxu0 0
    %1553 = vmatprep.subr.bf16.mxu0 0
    %1554 = vmatpush2.bf16.msra.mxu0 0
    %1555 = vmatprep.subr.bf16.mxu0 0
    %1556 = vmatpush2.bf16.msra.mxu0 0
    %1557 = vmatprep.subr.bf16.mxu0 0
    %1558 = vmatpush2.bf16.msra.mxu0 0
    %1559 = vmatprep.subr.bf16.mxu0 0
    %1560 = vmatpush2.bf16.msra.mxu0 0
    %1561 = vmatprep.subr.bf16.mxu0 0
    %1562 = vmatpush2.bf16.msra.mxu0 0
    %1563 = vmatprep.mubr.bf16.mxu0 0
    %1564 = vmatmul.mubr.bf16.gmra.mxu0 %v1529
    %v1565 = vpop.f32.mrf.mxu0
    %v1566 = vadd.f32 0.0, %v1565
    %v1567 = vpop.f32.mrf.mxu0
    %v1568 = vpop.f32.mrf.mxu0
    %v1569 = vadd.f32 0.0, %v1568
    %v1570 = vpop.f32.mrf.mxu0
    %1571 = vdwg.mxu0
    %v1572 = vpack.c.bf16 %v1569, %v1566
    %v1573 = vpack.c.bf16 %v213, %v212
    %v1574 = vpack.c.bf16 %v215, %v214
    %v1579 = vunpack.c.l.b16 %v1501
    %v1580 = vunpack.c.l.b16 %v1502
    %v1581 = vunpack.c.l.b16 %v1503
    %v1582 = vunpack.c.l.b16 %v1504
    %v1583 = vpack.c.b16 %v1580, %v1579
    %v1584 = vpack.c.b16 %v1582, %v1581
    %v1588 = vsel %vm251, %v1573, 0
    %v1591 = vsel %vm251, %v1574, 0
    %1593 = vmatprep.subr.bf16.mxu0 0
    %1594 = vmatpush1.bf16.msra.mxu0 0
    %1595 = vmatprep.subr.bf16.mxu0 0
    %1596 = vmatpush1.bf16.msra.mxu0 0
    %1597 = vmatprep.subr.bf16.mxu0 0
    %1598 = vmatpush1.bf16.msra.mxu0 0
    %1599 = vmatprep.subr.bf16.mxu0 0
    %1600 = vmatpush1.bf16.msra.mxu0 0
    %1601 = vmatprep.subr.bf16.mxu0 0
    %1602 = vmatpush1.bf16.msra.mxu0 0
    %1603 = vmatprep.subr.bf16.mxu0 0
    %1604 = vmatpush1.bf16.msra.mxu0 0
    %1605 = vmatprep.subr.bf16.mxu0 0
    %1606 = vmatpush1.bf16.msra.mxu0 %v1584
    %1607 = vmatprep.subr.bf16.mxu0 0
    %1608 = vmatpush1.bf16.msra.mxu0 %v1583
    %1609 = vmatprep.subr.bf16.mxu0 0
    %1610 = vmatpush2.bf16.msra.mxu0 0
    %1611 = vmatprep.subr.bf16.mxu0 0
    %1612 = vmatpush2.bf16.msra.mxu0 0
    %1613 = vmatprep.subr.bf16.mxu0 0
    %1614 = vmatpush2.bf16.msra.mxu0 0
    %1615 = vmatprep.subr.bf16.mxu0 0
    %1616 = vmatpush2.bf16.msra.mxu0 0
    %1617 = vmatprep.subr.bf16.mxu0 0
    %1618 = vmatpush2.bf16.msra.mxu0 0
    %1619 = vmatprep.subr.bf16.mxu0 0
    %1620 = vmatpush2.bf16.msra.mxu0 0
    %1621 = vmatprep.subr.bf16.mxu0 0
    %1622 = vmatpush2.bf16.msra.mxu0 0
    %1623 = vmatprep.subr.bf16.mxu0 0
    %1624 = vmatpush2.bf16.msra.mxu0 0
    %1625 = vmatprep.mubr.bf16.mxu0 0
    %1626 = vmatmul.mubr.bf16.gmra.mxu0 %v1588
    %v1627 = vpop.f32.mrf.mxu0
    %v1628 = vadd.f32 0.0, %v1627
    %v1629 = vpop.f32.mrf.mxu0
    %v1630 = vpop.f32.mrf.mxu0
    %v1631 = vadd.f32 0.0, %v1630
    %v1632 = vpop.f32.mrf.mxu0
    %1633 = vmatprep.mubr.bf16.mxu0 0
    %1634 = vmatmul.mubr.bf16.gmra.mxu0 %v1591
    %v1635 = vpop.f32.mrf.mxu0
    %v1636 = vadd.f32 0.0, %v1635
    %v1637 = vpop.f32.mrf.mxu0
    %v1638 = vpop.f32.mrf.mxu0
    %v1639 = vadd.f32 0.0, %v1638
    %v1640 = vpop.f32.mrf.mxu0
    %1641 = vdwg.mxu0
    %v1642 = vpack.c.bf16 %v1631, %v1628
    %v1643 = vpack.c.bf16 %v1639, %v1636
    %v1648 = vunpack.c.l.b16 %v1505
    %v1649 = vunpack.c.l.b16 %v1506
    %v1650 = vunpack.c.l.b16 %v1507
    %v1651 = vunpack.c.l.b16 %v1508
    %v1652 = vpack.c.b16 %v1649, %v1648
    %v1653 = vpack.c.b16 %v1651, %v1650
    %1656 = vmatprep.subr.bf16.mxu0 0
    %1657 = vmatpush1.bf16.msra.mxu0 0
    %1658 = vmatprep.subr.bf16.mxu0 0
    %1659 = vmatpush1.bf16.msra.mxu0 0
    %1660 = vmatprep.subr.bf16.mxu0 0
    %1661 = vmatpush1.bf16.msra.mxu0 0
    %1662 = vmatprep.subr.bf16.mxu0 0
    %1663 = vmatpush1.bf16.msra.mxu0 0
    %1664 = vmatprep.subr.bf16.mxu0 0
    %1665 = vmatpush1.bf16.msra.mxu0 0
    %1666 = vmatprep.subr.bf16.mxu0 0
    %1667 = vmatpush1.bf16.msra.mxu0 0
    %1668 = vmatprep.subr.bf16.mxu0 0
    %1669 = vmatpush1.bf16.msra.mxu0 %v1653
    %1670 = vmatprep.subr.bf16.mxu0 0
    %1671 = vmatpush1.bf16.msra.mxu0 %v1652
    %1672 = vmatprep.subr.bf16.mxu0 0
    %1673 = vmatpush2.bf16.msra.mxu0 0
    %1674 = vmatprep.subr.bf16.mxu0 0
    %1675 = vmatpush2.bf16.msra.mxu0 0
    %1676 = vmatprep.subr.bf16.mxu0 0
    %1677 = vmatpush2.bf16.msra.mxu0 0
    %1678 = vmatprep.subr.bf16.mxu0 0
    %1679 = vmatpush2.bf16.msra.mxu0 0
    %1680 = vmatprep.subr.bf16.mxu0 0
    %1681 = vmatpush2.bf16.msra.mxu0 0
    %1682 = vmatprep.subr.bf16.mxu0 0
    %1683 = vmatpush2.bf16.msra.mxu0 0
    %1684 = vmatprep.subr.bf16.mxu0 0
    %1685 = vmatpush2.bf16.msra.mxu0 0
    %1686 = vmatprep.subr.bf16.mxu0 0
    %1687 = vmatpush2.bf16.msra.mxu0 0
    %1688 = vmatprep.mubr.bf16.mxu0 0
    %1689 = vmatmul.mubr.bf16.gmra.mxu0 %v1588
    %v1690 = vpop.f32.mrf.mxu0
    %v1691 = vadd.f32 0.0, %v1690
    %v1692 = vpop.f32.mrf.mxu0
    %v1693 = vpop.f32.mrf.mxu0
    %v1694 = vadd.f32 0.0, %v1693
    %v1695 = vpop.f32.mrf.mxu0
    %1696 = vmatprep.mubr.bf16.mxu0 0
    %1697 = vmatmul.mubr.bf16.gmra.mxu0 %v1591
    %v1698 = vpop.f32.mrf.mxu0
    %v1699 = vadd.f32 0.0, %v1698
    %v1700 = vpop.f32.mrf.mxu0
    %v1701 = vpop.f32.mrf.mxu0
    %v1702 = vadd.f32 0.0, %v1701
    %v1703 = vpop.f32.mrf.mxu0
    %1704 = vdwg.mxu0
    %v1705 = vpack.c.bf16 %v1694, %v1691
    %v1706 = vpack.c.bf16 %v1702, %v1699
    %v1708 = vsel %vm405, %v1572, 0
    %v1711 = vsel %vm405, %v1642, 0
    %1713 = vmatprep.subr.bf16.mxu0 0
    %1714 = vmatpush1.bf16.xpose.msra.mxu0 0
    %1715 = vmatprep.subr.bf16.mxu0 0
    %1716 = vmatpush1.bf16.xpose.msra.mxu0 0
    %1717 = vmatprep.subr.bf16.mxu0 0
    %1718 = vmatpush1.bf16.xpose.msra.mxu0 0
    %1719 = vmatprep.subr.bf16.mxu0 0
    %1720 = vmatpush1.bf16.xpose.msra.mxu0 0
    %1721 = vmatprep.subr.bf16.mxu0 0
    %1722 = vmatpush1.bf16.xpose.msra.mxu0 0
    %1723 = vmatprep.subr.bf16.mxu0 0
    %1724 = vmatpush1.bf16.xpose.msra.mxu0 0
    %1725 = vmatprep.subr.bf16.mxu0 0
    %1726 = vmatpush1.bf16.xpose.msra.mxu0 0
    %1727 = vmatprep.subr.bf16.mxu0 0
    %1728 = vmatpush1.bf16.xpose.msra.mxu0 %v1711
    %1729 = vmatprep.subr.bf16.mxu0 0
    %1730 = vmatpush2.bf16.xpose.msra.mxu0 0
    %1731 = vmatprep.subr.bf16.mxu0 0
    %1732 = vmatpush2.bf16.xpose.msra.mxu0 0
    %1733 = vmatprep.subr.bf16.mxu0 0
    %1734 = vmatpush2.bf16.xpose.msra.mxu0 0
    %1735 = vmatprep.subr.bf16.mxu0 0
    %1736 = vmatpush2.bf16.xpose.msra.mxu0 0
    %1737 = vmatprep.subr.bf16.mxu0 0
    %1738 = vmatpush2.bf16.xpose.msra.mxu0 0
    %1739 = vmatprep.subr.bf16.mxu0 0
    %1740 = vmatpush2.bf16.xpose.msra.mxu0 0
    %1741 = vmatprep.subr.bf16.mxu0 0
    %1742 = vmatpush2.bf16.xpose.msra.mxu0 0
    %1743 = vmatprep.subr.bf16.mxu0 0
    %1744 = vmatpush2.bf16.xpose.msra.mxu0 0
    %1745 = vmatprep.mubr.bf16.mxu0 0
    %1746 = vmatmul.mubr.bf16.gmra.mxu0 %v1708
    %v1747 = vpop.f32.mrf.mxu0
    %v1748 = vadd.f32 0.0, %v1747
    %v1749 = vpop.f32.mrf.mxu0
    %v1750 = vpop.f32.mrf.mxu0
    %v1751 = vpop.f32.mrf.mxu0
    %1752 = vdwg.mxu0
    %v1753 = vmul.f32 %v1748, 0.35355338
    %v1754 = vsel %vm872, %v1753, -inf
    %1755 = vmax.xlane.f32.xlu0 %v1754
    %v1756 = vpop.xlane.xlu0 %1755
    %v1757 = vsub.f32 %v1753, %v1756
    %v1758 = vmul.f32 %v1757, 1.442695
    %v1759 = vpow.pop %v1758
    %v1760 = vsel %vm872, %v1759, 0.0
    %1761 = vadd.xlane.f32.xlu0 %v1760
    %v1762 = vpop.xlane.xlu0 %1761
    %v1763 = vrcp.pop %v1762
    %v1764 = vmul.f32 %v1759, %v1763
    %1765 = vst.msk [vmem:[#allocation23] sm:$0xff] %vm872, %v1764
    %v1766 = vpack.c.bf16 %v1764, %v1764
    %v1768 = vsel %vm872, %v1766, 0
    %1770 = vmatprep.subr.bf16.mxu0 0
    %1771 = vmatpush1.bf16.msra.mxu0 0
    %1772 = vmatprep.subr.bf16.mxu0 0
    %1773 = vmatpush1.bf16.msra.mxu0 0
    %1774 = vmatprep.subr.bf16.mxu0 0
    %1775 = vmatpush1.bf16.msra.mxu0 0
    %1776 = vmatprep.subr.bf16.mxu0 0
    %1777 = vmatpush1.bf16.msra.mxu0 0
    %1778 = vmatprep.subr.bf16.mxu0 0
    %1779 = vmatpush1.bf16.msra.mxu0 0
    %1780 = vmatprep.subr.bf16.mxu0 0
    %1781 = vmatpush1.bf16.msra.mxu0 0
    %1782 = vmatprep.subr.bf16.mxu0 0
    %1783 = vmatpush1.bf16.msra.mxu0 0
    %1784 = vmatprep.subr.bf16.mxu0 0
    %1785 = vmatpush1.bf16.msra.mxu0 %v1705
    %1786 = vmatprep.subr.bf16.mxu0 0
    %1787 = vmatpush2.bf16.msra.mxu0 0
    %1788 = vmatprep.subr.bf16.mxu0 0
    %1789 = vmatpush2.bf16.msra.mxu0 0
    %1790 = vmatprep.subr.bf16.mxu0 0
    %1791 = vmatpush2.bf16.msra.mxu0 0
    %1792 = vmatprep.subr.bf16.mxu0 0
    %1793 = vmatpush2.bf16.msra.mxu0 0
    %1794 = vmatprep.subr.bf16.mxu0 0
    %1795 = vmatpush2.bf16.msra.mxu0 0
    %1796 = vmatprep.subr.bf16.mxu0 0
    %1797 = vmatpush2.bf16.msra.mxu0 0
    %1798 = vmatprep.subr.bf16.mxu0 0
    %1799 = vmatpush2.bf16.msra.mxu0 0
    %1800 = vmatprep.subr.bf16.mxu0 0
    %1801 = vmatpush2.bf16.msra.mxu0 0
    %1802 = vmatprep.mubr.bf16.mxu0 0
    %1803 = vmatmul.mubr.bf16.gmra.mxu0 %v1768
    %v1804 = vpop.f32.mrf.mxu0
    %v1805 = vadd.f32 0.0, %v1804
    %v1806 = vpop.f32.mrf.mxu0
    %v1807 = vpop.f32.mrf.mxu0
    %v1808 = vpop.f32.mrf.mxu0
    %1809 = vdwg.mxu0
    %1811 = vrot.lane.b32.xlu0 %v1572, 120
    %v1812 = vpop.permute.xlu0 %1811
    %1814 = vrot.lane.b32.xlu0 %v1642, 120
    %v1815 = vpop.permute.xlu0 %1814
    %v1817 = vsel %vm405, %v1812, 0
    %v1820 = vsel %vm405, %v1815, 0
    %1822 = vmatprep.subr.bf16.mxu0 0
    %1823 = vmatpush1.bf16.xpose.msra.mxu0 0
    %1824 = vmatprep.subr.bf16.mxu0 0
    %1825 = vmatpush1.bf16.xpose.msra.mxu0 0
    %1826 = vmatprep.subr.bf16.mxu0 0
    %1827 = vmatpush1.bf16.xpose.msra.mxu0 0
    %1828 = vmatprep.subr.bf16.mxu0 0
    %1829 = vmatpush1.bf16.xpose.msra.mxu0 0
    %1830 = vmatprep.subr.bf16.mxu0 0
    %1831 = vmatpush1.bf16.xpose.msra.mxu0 0
    %1832 = vmatprep.subr.bf16.mxu0 0
    %1833 = vmatpush1.bf16.xpose.msra.mxu0 0
    %1834 = vmatprep.subr.bf16.mxu0 0
    %1835 = vmatpush1.bf16.xpose.msra.mxu0 0
    %1836 = vmatprep.subr.bf16.mxu0 0
    %1837 = vmatpush1.bf16.xpose.msra.mxu0 %v1820
    %1838 = vmatprep.subr.bf16.mxu0 0
    %1839 = vmatpush2.bf16.xpose.msra.mxu0 0
    %1840 = vmatprep.subr.bf16.mxu0 0
    %1841 = vmatpush2.bf16.xpose.msra.mxu0 0
    %1842 = vmatprep.subr.bf16.mxu0 0
    %1843 = vmatpush2.bf16.xpose.msra.mxu0 0
    %1844 = vmatprep.subr.bf16.mxu0 0
    %1845 = vmatpush2.bf16.xpose.msra.mxu0 0
    %1846 = vmatprep.subr.bf16.mxu0 0
    %1847 = vmatpush2.bf16.xpose.msra.mxu0 0
    %1848 = vmatprep.subr.bf16.mxu0 0
    %1849 = vmatpush2.bf16.xpose.msra.mxu0 0
    %1850 = vmatprep.subr.bf16.mxu0 0
    %1851 = vmatpush2.bf16.xpose.msra.mxu0 0
    %1852 = vmatprep.subr.bf16.mxu0 0
    %1853 = vmatpush2.bf16.xpose.msra.mxu0 0
    %1854 = vmatprep.mubr.bf16.mxu0 0
    %1855 = vmatmul.mubr.bf16.gmra.mxu0 %v1817
    %v1856 = vpop.f32.mrf.mxu0
    %v1857 = vadd.f32 0.0, %v1856
    %v1858 = vpop.f32.mrf.mxu0
    %v1859 = vpop.f32.mrf.mxu0
    %v1860 = vpop.f32.mrf.mxu0
    %1861 = vdwg.mxu0
    %v1862 = vmul.f32 %v1857, 0.35355338
    %v1863 = vsel %vm872, %v1862, -inf
    %1864 = vmax.xlane.f32.xlu0 %v1863
    %v1865 = vpop.xlane.xlu0 %1864
    %v1866 = vsub.f32 %v1862, %v1865
    %v1867 = vmul.f32 %v1866, 1.442695
    %v1868 = vpow.pop %v1867
    %v1869 = vsel %vm872, %v1868, 0.0
    %1870 = vadd.xlane.f32.xlu0 %v1869
    %v1871 = vpop.xlane.xlu0 %1870
    %v1872 = vrcp.pop %v1871
    %v1873 = vmul.f32 %v1868, %v1872
    %s1874 = scalar_lea.vmem [#allocation23], 8
    %1875 = vst.msk [vmem:[%s1874] sm:$0xff] %vm872, %v1873
    %v1876 = vpack.c.bf16 %v1873, %v1873
    %1878 = vrot.lane.b32.xlu0 %v1705, 120
    %v1879 = vpop.permute.xlu0 %1878
    %v1882 = vsel %vm872, %v1876, 0
    %1884 = vmatprep.subr.bf16.mxu0 0
    %1885 = vmatpush1.bf16.msra.mxu0 0
    %1886 = vmatprep.subr.bf16.mxu0 0
    %1887 = vmatpush1.bf16.msra.mxu0 0
    %1888 = vmatprep.subr.bf16.mxu0 0
    %1889 = vmatpush1.bf16.msra.mxu0 0
    %1890 = vmatprep.subr.bf16.mxu0 0
    %1891 = vmatpush1.bf16.msra.mxu0 0
    %1892 = vmatprep.subr.bf16.mxu0 0
    %1893 = vmatpush1.bf16.msra.mxu0 0
    %1894 = vmatprep.subr.bf16.mxu0 0
    %1895 = vmatpush1.bf16.msra.mxu0 0
    %1896 = vmatprep.subr.bf16.mxu0 0
    %1897 = vmatpush1.bf16.msra.mxu0 0
    %1898 = vmatprep.subr.bf16.mxu0 0
    %1899 = vmatpush1.bf16.msra.mxu0 %v1879
    %1900 = vmatprep.subr.bf16.mxu0 0
    %1901 = vmatpush2.bf16.msra.mxu0 0
    %1902 = vmatprep.subr.bf16.mxu0 0
    %1903 = vmatpush2.bf16.msra.mxu0 0
    %1904 = vmatprep.subr.bf16.mxu0 0
    %1905 = vmatpush2.bf16.msra.mxu0 0
    %1906 = vmatprep.subr.bf16.mxu0 0
    %1907 = vmatpush2.bf16.msra.mxu0 0
    %1908 = vmatprep.subr.bf16.mxu0 0
    %1909 = vmatpush2.bf16.msra.mxu0 0
    %1910 = vmatprep.subr.bf16.mxu0 0
    %1911 = vmatpush2.bf16.msra.mxu0 0
    %1912 = vmatprep.subr.bf16.mxu0 0
    %1913 = vmatpush2.bf16.msra.mxu0 0
    %1914 = vmatprep.subr.bf16.mxu0 0
    %1915 = vmatpush2.bf16.msra.mxu0 0
    %1916 = vmatprep.mubr.bf16.mxu0 0
    %1917 = vmatmul.mubr.bf16.gmra.mxu0 %v1882
    %v1918 = vpop.f32.mrf.mxu0
    %v1919 = vadd.f32 0.0, %v1918
    %v1920 = vpop.f32.mrf.mxu0
    %v1921 = vpop.f32.mrf.mxu0
    %v1922 = vpop.f32.mrf.mxu0
    %1923 = vdwg.mxu0
    %1924 = vrot.lane.b32.xlu0 %v1572, 112
    %v1925 = vpop.permute.xlu0 %1924
    %1926 = vrot.lane.b32.xlu0 %v1642, 112
    %v1927 = vpop.permute.xlu0 %1926
    %v1929 = vsel %vm405, %v1925, 0
    %v1932 = vsel %vm405, %v1927, 0
    %1934 = vmatprep.subr.bf16.mxu0 0
    %1935 = vmatpush1.bf16.xpose.msra.mxu0 0
    %1936 = vmatprep.subr.bf16.mxu0 0
    %1937 = vmatpush1.bf16.xpose.msra.mxu0 0
    %1938 = vmatprep.subr.bf16.mxu0 0
    %1939 = vmatpush1.bf16.xpose.msra.mxu0 0
    %1940 = vmatprep.subr.bf16.mxu0 0
    %1941 = vmatpush1.bf16.xpose.msra.mxu0 0
    %1942 = vmatprep.subr.bf16.mxu0 0
    %1943 = vmatpush1.bf16.xpose.msra.mxu0 0
    %1944 = vmatprep.subr.bf16.mxu0 0
    %1945 = vmatpush1.bf16.xpose.msra.mxu0 0
    %1946 = vmatprep.subr.bf16.mxu0 0
    %1947 = vmatpush1.bf16.xpose.msra.mxu0 0
    %1948 = vmatprep.subr.bf16.mxu0 0
    %1949 = vmatpush1.bf16.xpose.msra.mxu0 %v1932
    %1950 = vmatprep.subr.bf16.mxu0 0
    %1951 = vmatpush2.bf16.xpose.msra.mxu0 0
    %1952 = vmatprep.subr.bf16.mxu0 0
    %1953 = vmatpush2.bf16.xpose.msra.mxu0 0
    %1954 = vmatprep.subr.bf16.mxu0 0
    %1955 = vmatpush2.bf16.xpose.msra.mxu0 0
    %1956 = vmatprep.subr.bf16.mxu0 0
    %1957 = vmatpush2.bf16.xpose.msra.mxu0 0
    %1958 = vmatprep.subr.bf16.mxu0 0
    %1959 = vmatpush2.bf16.xpose.msra.mxu0 0
    %1960 = vmatprep.subr.bf16.mxu0 0
    %1961 = vmatpush2.bf16.xpose.msra.mxu0 0
    %1962 = vmatprep.subr.bf16.mxu0 0
    %1963 = vmatpush2.bf16.xpose.msra.mxu0 0
    %1964 = vmatprep.subr.bf16.mxu0 0
    %1965 = vmatpush2.bf16.xpose.msra.mxu0 0
    %1966 = vmatprep.mubr.bf16.mxu0 0
    %1967 = vmatmul.mubr.bf16.gmra.mxu0 %v1929
    %v1968 = vpop.f32.mrf.mxu0
    %v1969 = vadd.f32 0.0, %v1968
    %v1970 = vpop.f32.mrf.mxu0
    %v1971 = vpop.f32.mrf.mxu0
    %v1972 = vpop.f32.mrf.mxu0
    %1973 = vdwg.mxu0
    %v1974 = vmul.f32 %v1969, 0.35355338
    %v1975 = vsel %vm872, %v1974, -inf
    %1976 = vmax.xlane.f32.xlu0 %v1975
    %v1977 = vpop.xlane.xlu0 %1976
    %v1978 = vsub.f32 %v1974, %v1977
    %v1979 = vmul.f32 %v1978, 1.442695
    %v1980 = vpow.pop %v1979
    %v1981 = vsel %vm872, %v1980, 0.0
    %1982 = vadd.xlane.f32.xlu0 %v1981
    %v1983 = vpop.xlane.xlu0 %1982
    %v1984 = vrcp.pop %v1983
    %v1985 = vmul.f32 %v1980, %v1984
    %s1986 = scalar_lea.vmem [#allocation23], 16
    %1987 = vst.msk [vmem:[%s1986] sm:$0xff] %vm872, %v1985
    %v1988 = vpack.c.bf16 %v1985, %v1985
    %1989 = vrot.lane.b32.xlu0 %v1705, 112
    %v1990 = vpop.permute.xlu0 %1989
    %v1993 = vsel %vm872, %v1988, 0
    %1995 = vmatprep.subr.bf16.mxu0 0
    %1996 = vmatpush1.bf16.msra.mxu0 0
    %1997 = vmatprep.subr.bf16.mxu0 0
    %1998 = vmatpush1.bf16.msra.mxu0 0
    %1999 = vmatprep.subr.bf16.mxu0 0
    %2000 = vmatpush1.bf16.msra.mxu0 0
    %2001 = vmatprep.subr.bf16.mxu0 0
    %2002 = vmatpush1.bf16.msra.mxu0 0
    %2003 = vmatprep.subr.bf16.mxu0 0
    %2004 = vmatpush1.bf16.msra.mxu0 0
    %2005 = vmatprep.subr.bf16.mxu0 0
    %2006 = vmatpush1.bf16.msra.mxu0 0
    %2007 = vmatprep.subr.bf16.mxu0 0
    %2008 = vmatpush1.bf16.msra.mxu0 0
    %2009 = vmatprep.subr.bf16.mxu0 0
    %2010 = vmatpush1.bf16.msra.mxu0 %v1990
    %2011 = vmatprep.subr.bf16.mxu0 0
    %2012 = vmatpush2.bf16.msra.mxu0 0
    %2013 = vmatprep.subr.bf16.mxu0 0
    %2014 = vmatpush2.bf16.msra.mxu0 0
    %2015 = vmatprep.subr.bf16.mxu0 0
    %2016 = vmatpush2.bf16.msra.mxu0 0
    %2017 = vmatprep.subr.bf16.mxu0 0
    %2018 = vmatpush2.bf16.msra.mxu0 0
    %2019 = vmatprep.subr.bf16.mxu0 0
    %2020 = vmatpush2.bf16.msra.mxu0 0
    %2021 = vmatprep.subr.bf16.mxu0 0
    %2022 = vmatpush2.bf16.msra.mxu0 0
    %2023 = vmatprep.subr.bf16.mxu0 0
    %2024 = vmatpush2.bf16.msra.mxu0 0
    %2025 = vmatprep.subr.bf16.mxu0 0
    %2026 = vmatpush2.bf16.msra.mxu0 0
    %2027 = vmatprep.mubr.bf16.mxu0 0
    %2028 = vmatmul.mubr.bf16.gmra.mxu0 %v1993
    %v2029 = vpop.f32.mrf.mxu0
    %v2030 = vadd.f32 0.0, %v2029
    %v2031 = vpop.f32.mrf.mxu0
    %v2032 = vpop.f32.mrf.mxu0
    %v2033 = vpop.f32.mrf.mxu0
    %2034 = vdwg.mxu0
    %2035 = vrot.lane.b32.xlu0 %v1572, 104
    %v2036 = vpop.permute.xlu0 %2035
    %2037 = vrot.lane.b32.xlu0 %v1642, 104
    %v2038 = vpop.permute.xlu0 %2037
    %v2040 = vsel %vm405, %v2036, 0
    %v2043 = vsel %vm405, %v2038, 0
    %2045 = vmatprep.subr.bf16.mxu0 0
    %2046 = vmatpush1.bf16.xpose.msra.mxu0 0
    %2047 = vmatprep.subr.bf16.mxu0 0
    %2048 = vmatpush1.bf16.xpose.msra.mxu0 0
    %2049 = vmatprep.subr.bf16.mxu0 0
    %2050 = vmatpush1.bf16.xpose.msra.mxu0 0
    %2051 = vmatprep.subr.bf16.mxu0 0
    %2052 = vmatpush1.bf16.xpose.msra.mxu0 0
    %2053 = vmatprep.subr.bf16.mxu0 0
    %2054 = vmatpush1.bf16.xpose.msra.mxu0 0
    %2055 = vmatprep.subr.bf16.mxu0 0
    %2056 = vmatpush1.bf16.xpose.msra.mxu0 0
    %2057 = vmatprep.subr.bf16.mxu0 0
    %2058 = vmatpush1.bf16.xpose.msra.mxu0 0
    %2059 = vmatprep.subr.bf16.mxu0 0
    %2060 = vmatpush1.bf16.xpose.msra.mxu0 %v2043
    %2061 = vmatprep.subr.bf16.mxu0 0
    %2062 = vmatpush2.bf16.xpose.msra.mxu0 0
    %2063 = vmatprep.subr.bf16.mxu0 0
    %2064 = vmatpush2.bf16.xpose.msra.mxu0 0
    %2065 = vmatprep.subr.bf16.mxu0 0
    %2066 = vmatpush2.bf16.xpose.msra.mxu0 0
    %2067 = vmatprep.subr.bf16.mxu0 0
    %2068 = vmatpush2.bf16.xpose.msra.mxu0 0
    %2069 = vmatprep.subr.bf16.mxu0 0
    %2070 = vmatpush2.bf16.xpose.msra.mxu0 0
    %2071 = vmatprep.subr.bf16.mxu0 0
    %2072 = vmatpush2.bf16.xpose.msra.mxu0 0
    %2073 = vmatprep.subr.bf16.mxu0 0
    %2074 = vmatpush2.bf16.xpose.msra.mxu0 0
    %2075 = vmatprep.subr.bf16.mxu0 0
    %2076 = vmatpush2.bf16.xpose.msra.mxu0 0
    %2077 = vmatprep.mubr.bf16.mxu0 0
    %2078 = vmatmul.mubr.bf16.gmra.mxu0 %v2040
    %v2079 = vpop.f32.mrf.mxu0
    %v2080 = vadd.f32 0.0, %v2079
    %v2081 = vpop.f32.mrf.mxu0
    %v2082 = vpop.f32.mrf.mxu0
    %v2083 = vpop.f32.mrf.mxu0
    %2084 = vdwg.mxu0
    %v2085 = vmul.f32 %v2080, 0.35355338
    %v2086 = vsel %vm872, %v2085, -inf
    %2087 = vmax.xlane.f32.xlu0 %v2086
    %v2088 = vpop.xlane.xlu0 %2087
    %v2089 = vsub.f32 %v2085, %v2088
    %v2090 = vmul.f32 %v2089, 1.442695
    %v2091 = vpow.pop %v2090
    %v2092 = vsel %vm872, %v2091, 0.0
    %2093 = vadd.xlane.f32.xlu0 %v2092
    %v2094 = vpop.xlane.xlu0 %2093
    %v2095 = vrcp.pop %v2094
    %v2096 = vmul.f32 %v2091, %v2095
    %s2097 = scalar_lea.vmem [#allocation23], 24
    %2098 = vst.msk [vmem:[%s2097] sm:$0xff] %vm872, %v2096
    %v2099 = vpack.c.bf16 %v2096, %v2096
    %2100 = vrot.lane.b32.xlu0 %v1705, 104
    %v2101 = vpop.permute.xlu0 %2100
    %v2104 = vsel %vm872, %v2099, 0
    %2106 = vmatprep.subr.bf16.mxu0 0
    %2107 = vmatpush1.bf16.msra.mxu0 0
    %2108 = vmatprep.subr.bf16.mxu0 0
    %2109 = vmatpush1.bf16.msra.mxu0 0
    %2110 = vmatprep.subr.bf16.mxu0 0
    %2111 = vmatpush1.bf16.msra.mxu0 0
    %2112 = vmatprep.subr.bf16.mxu0 0
    %2113 = vmatpush1.bf16.msra.mxu0 0
    %2114 = vmatprep.subr.bf16.mxu0 0
    %2115 = vmatpush1.bf16.msra.mxu0 0
    %2116 = vmatprep.subr.bf16.mxu0 0
    %2117 = vmatpush1.bf16.msra.mxu0 0
    %2118 = vmatprep.subr.bf16.mxu0 0
    %2119 = vmatpush1.bf16.msra.mxu0 0
    %2120 = vmatprep.subr.bf16.mxu0 0
    %2121 = vmatpush1.bf16.msra.mxu0 %v2101
    %2122 = vmatprep.subr.bf16.mxu0 0
    %2123 = vmatpush2.bf16.msra.mxu0 0
    %2124 = vmatprep.subr.bf16.mxu0 0
    %2125 = vmatpush2.bf16.msra.mxu0 0
    %2126 = vmatprep.subr.bf16.mxu0 0
    %2127 = vmatpush2.bf16.msra.mxu0 0
    %2128 = vmatprep.subr.bf16.mxu0 0
    %2129 = vmatpush2.bf16.msra.mxu0 0
    %2130 = vmatprep.subr.bf16.mxu0 0
    %2131 = vmatpush2.bf16.msra.mxu0 0
    %2132 = vmatprep.subr.bf16.mxu0 0
    %2133 = vmatpush2.bf16.msra.mxu0 0
    %2134 = vmatprep.subr.bf16.mxu0 0
    %2135 = vmatpush2.bf16.msra.mxu0 0
    %2136 = vmatprep.subr.bf16.mxu0 0
    %2137 = vmatpush2.bf16.msra.mxu0 0
    %2138 = vmatprep.mubr.bf16.mxu0 0
    %2139 = vmatmul.mubr.bf16.gmra.mxu0 %v2104
    %v2140 = vpop.f32.mrf.mxu0
    %v2141 = vadd.f32 0.0, %v2140
    %v2142 = vpop.f32.mrf.mxu0
    %v2143 = vpop.f32.mrf.mxu0
    %v2144 = vpop.f32.mrf.mxu0
    %2145 = vdwg.mxu0
    %2147 = vrot.lane.b32.xlu0 %v1919, 8
    %v2148 = vpop.permute.xlu0 %2147
    %2151 = vrot.lane.b32.xlu0 %v2030, 16
    %v2152 = vpop.permute.xlu0 %2151
    %2155 = vrot.lane.b32.xlu0 %v2141, 24
    %v2156 = vpop.permute.xlu0 %2155
    %v2158 = vsel %vm405, %v1805, %v2148
    %v2159 = vsel %vm872, %v2158, %v2152
    %v2160 = vsel %vm874, %v2159, %v2156
    %v2161 = vpack.c.bf16 %v2160, %v2160
    %v2166 = vunpack.c.l.b16 %v1509
    %v2167 = vunpack.c.l.b16 %v1510
    %v2168 = vunpack.c.l.b16 %v1511
    %v2169 = vunpack.c.l.b16 %v1512
    %v2170 = vpack.c.b16 %v2167, %v2166
    %v2171 = vpack.c.b16 %v2169, %v2168
    %v2175 = vsel %vm251, %v2161, 0
    %2177 = vmatprep.subr.bf16.mxu0 0
    %2178 = vmatpush1.bf16.msra.mxu0 0
    %2179 = vmatprep.subr.bf16.mxu0 0
    %2180 = vmatpush1.bf16.msra.mxu0 0
    %2181 = vmatprep.subr.bf16.mxu0 0
    %2182 = vmatpush1.bf16.msra.mxu0 0
    %2183 = vmatprep.subr.bf16.mxu0 0
    %2184 = vmatpush1.bf16.msra.mxu0 0
    %2185 = vmatprep.subr.bf16.mxu0 0
    %2186 = vmatpush1.bf16.msra.mxu0 0
    %2187 = vmatprep.subr.bf16.mxu0 0
    %2188 = vmatpush1.bf16.msra.mxu0 0
    %2189 = vmatprep.subr.bf16.mxu0 0
    %2190 = vmatpush1.bf16.msra.mxu0 %v2171
    %2191 = vmatprep.subr.bf16.mxu0 0
    %2192 = vmatpush1.bf16.msra.mxu0 %v2170
    %2193 = vmatprep.subr.bf16.mxu0 0
    %2194 = vmatpush2.bf16.msra.mxu0 0
    %2195 = vmatprep.subr.bf16.mxu0 0
    %2196 = vmatpush2.bf16.msra.mxu0 0
    %2197 = vmatprep.subr.bf16.mxu0 0
    %2198 = vmatpush2.bf16.msra.mxu0 0
    %2199 = vmatprep.subr.bf16.mxu0 0
    %2200 = vmatpush2.bf16.msra.mxu0 0
    %2201 = vmatprep.subr.bf16.mxu0 0
    %2202 = vmatpush2.bf16.msra.mxu0 0
    %2203 = vmatprep.subr.bf16.mxu0 0
    %2204 = vmatpush2.bf16.msra.mxu0 0
    %2205 = vmatprep.subr.bf16.mxu0 0
    %2206 = vmatpush2.bf16.msra.mxu0 0
    %2207 = vmatprep.subr.bf16.mxu0 0
    %2208 = vmatpush2.bf16.msra.mxu0 0
    %2209 = vmatprep.mubr.bf16.mxu0 0
    %2210 = vmatmul.mubr.bf16.gmra.mxu0 %v2175
    %v2211 = vpop.f32.mrf.mxu0
    %v2212 = vadd.f32 0.0, %v2211
    %v2213 = vpop.f32.mrf.mxu0
    %v2214 = vpop.f32.mrf.mxu0
    %v2215 = vpop.f32.mrf.mxu0
    %2216 = vdwg.mxu0
    %2217 = vst.msk [vmem:[#allocation2] sm:$0xff] %vm251, %v2212
    %v2218 = vrot.slane %v1572, 4
    %v2220 = vsel %vm405, %v2218, 0
    %v2223 = vsel %vm405, %v1643, 0
    %2225 = vmatprep.subr.bf16.mxu0 0
    %2226 = vmatpush1.bf16.xpose.msra.mxu0 0
    %2227 = vmatprep.subr.bf16.mxu0 0
    %2228 = vmatpush1.bf16.xpose.msra.mxu0 0
    %2229 = vmatprep.subr.bf16.mxu0 0
    %2230 = vmatpush1.bf16.xpose.msra.mxu0 0
    %2231 = vmatprep.subr.bf16.mxu0 0
    %2232 = vmatpush1.bf16.xpose.msra.mxu0 0
    %2233 = vmatprep.subr.bf16.mxu0 0
    %2234 = vmatpush1.bf16.xpose.msra.mxu0 0
    %2235 = vmatprep.subr.bf16.mxu0 0
    %2236 = vmatpush1.bf16.xpose.msra.mxu0 0
    %2237 = vmatprep.subr.bf16.mxu0 0
    %2238 = vmatpush1.bf16.xpose.msra.mxu0 0
    %2239 = vmatprep.subr.bf16.mxu0 0
    %2240 = vmatpush1.bf16.xpose.msra.mxu0 %v2223
    %2241 = vmatprep.subr.bf16.mxu0 0
    %2242 = vmatpush2.bf16.xpose.msra.mxu0 0
    %2243 = vmatprep.subr.bf16.mxu0 0
    %2244 = vmatpush2.bf16.xpose.msra.mxu0 0
    %2245 = vmatprep.subr.bf16.mxu0 0
    %2246 = vmatpush2.bf16.xpose.msra.mxu0 0
    %2247 = vmatprep.subr.bf16.mxu0 0
    %2248 = vmatpush2.bf16.xpose.msra.mxu0 0
    %2249 = vmatprep.subr.bf16.mxu0 0
    %2250 = vmatpush2.bf16.xpose.msra.mxu0 0
    %2251 = vmatprep.subr.bf16.mxu0 0
    %2252 = vmatpush2.bf16.xpose.msra.mxu0 0
    %2253 = vmatprep.subr.bf16.mxu0 0
    %2254 = vmatpush2.bf16.xpose.msra.mxu0 0
    %2255 = vmatprep.subr.bf16.mxu0 0
    %2256 = vmatpush2.bf16.xpose.msra.mxu0 0
    %2257 = vmatprep.mubr.bf16.mxu0 0
    %2258 = vmatmul.mubr.bf16.gmra.mxu0 %v2220
    %v2259 = vpop.f32.mrf.mxu0
    %v2260 = vadd.f32 0.0, %v2259
    %v2261 = vpop.f32.mrf.mxu0
    %v2262 = vpop.f32.mrf.mxu0
    %v2263 = vpop.f32.mrf.mxu0
    %2264 = vdwg.mxu0
    %v2265 = vmul.f32 %v2260, 0.35355338
    %v2266 = vsel %vm872, %v2265, -inf
    %2267 = vmax.xlane.f32.xlu0 %v2266
    %v2268 = vpop.xlane.xlu0 %2267
    %v2269 = vsub.f32 %v2265, %v2268
    %v2270 = vmul.f32 %v2269, 1.442695
    %v2271 = vpow.pop %v2270
    %v2272 = vsel %vm872, %v2271, 0.0
    %2273 = vadd.xlane.f32.xlu0 %v2272
    %v2274 = vpop.xlane.xlu0 %2273
    %v2275 = vrcp.pop %v2274
    %v2276 = vmul.f32 %v2271, %v2275
    %s2277 = scalar_lea.vmem [#allocation23], 32
    %2278 = vst.msk [vmem:[%s2277] sm:$0xff] %vm872, %v2276
    %v2279 = vpack.c.bf16 %v2276, %v2276
    %v2281 = vsel %vm872, %v2279, 0
    %2283 = vmatprep.subr.bf16.mxu0 0
    %2284 = vmatpush1.bf16.msra.mxu0 0
    %2285 = vmatprep.subr.bf16.mxu0 0
    %2286 = vmatpush1.bf16.msra.mxu0 0
    %2287 = vmatprep.subr.bf16.mxu0 0
    %2288 = vmatpush1.bf16.msra.mxu0 0
    %2289 = vmatprep.subr.bf16.mxu0 0
    %2290 = vmatpush1.bf16.msra.mxu0 0
    %2291 = vmatprep.subr.bf16.mxu0 0
    %2292 = vmatpush1.bf16.msra.mxu0 0
    %2293 = vmatprep.subr.bf16.mxu0 0
    %2294 = vmatpush1.bf16.msra.mxu0 0
    %2295 = vmatprep.subr.bf16.mxu0 0
    %2296 = vmatpush1.bf16.msra.mxu0 0
    %2297 = vmatprep.subr.bf16.mxu0 0
    %2298 = vmatpush1.bf16.msra.mxu0 %v1706
    %2299 = vmatprep.subr.bf16.mxu0 0
    %2300 = vmatpush2.bf16.msra.mxu0 0
    %2301 = vmatprep.subr.bf16.mxu0 0
    %2302 = vmatpush2.bf16.msra.mxu0 0
    %2303 = vmatprep.subr.bf16.mxu0 0
    %2304 = vmatpush2.bf16.msra.mxu0 0
    %2305 = vmatprep.subr.bf16.mxu0 0
    %2306 = vmatpush2.bf16.msra.mxu0 0
    %2307 = vmatprep.subr.bf16.mxu0 0
    %2308 = vmatpush2.bf16.msra.mxu0 0
    %2309 = vmatprep.subr.bf16.mxu0 0
    %2310 = vmatpush2.bf16.msra.mxu0 0
    %2311 = vmatprep.subr.bf16.mxu0 0
    %2312 = vmatpush2.bf16.msra.mxu0 0
    %2313 = vmatprep.subr.bf16.mxu0 0
    %2314 = vmatpush2.bf16.msra.mxu0 0
    %2315 = vmatprep.mubr.bf16.mxu0 0
    %2316 = vmatmul.mubr.bf16.gmra.mxu0 %v2281
    %v2317 = vpop.f32.mrf.mxu0
    %v2318 = vadd.f32 0.0, %v2317
    %v2319 = vpop.f32.mrf.mxu0
    %v2320 = vpop.f32.mrf.mxu0
    %v2321 = vpop.f32.mrf.mxu0
    %2322 = vdwg.mxu0
    %2323 = vrot.lane.b32.xlu0 %v2218, 120
    %v2324 = vpop.permute.xlu0 %2323
    %2326 = vrot.lane.b32.xlu0 %v1643, 120
    %v2327 = vpop.permute.xlu0 %2326
    %v2329 = vsel %vm405, %v2324, 0
    %v2332 = vsel %vm405, %v2327, 0
    %2334 = vmatprep.subr.bf16.mxu0 0
    %2335 = vmatpush1.bf16.xpose.msra.mxu0 0
    %2336 = vmatprep.subr.bf16.mxu0 0
    %2337 = vmatpush1.bf16.xpose.msra.mxu0 0
    %2338 = vmatprep.subr.bf16.mxu0 0
    %2339 = vmatpush1.bf16.xpose.msra.mxu0 0
    %2340 = vmatprep.subr.bf16.mxu0 0
    %2341 = vmatpush1.bf16.xpose.msra.mxu0 0
    %2342 = vmatprep.subr.bf16.mxu0 0
    %2343 = vmatpush1.bf16.xpose.msra.mxu0 0
    %2344 = vmatprep.subr.bf16.mxu0 0
    %2345 = vmatpush1.bf16.xpose.msra.mxu0 0
    %2346 = vmatprep.subr.bf16.mxu0 0
    %2347 = vmatpush1.bf16.xpose.msra.mxu0 0
    %2348 = vmatprep.subr.bf16.mxu0 0
    %2349 = vmatpush1.bf16.xpose.msra.mxu0 %v2332
    %2350 = vmatprep.subr.bf16.mxu0 0
    %2351 = vmatpush2.bf16.xpose.msra.mxu0 0
    %2352 = vmatprep.subr.bf16.mxu0 0
    %2353 = vmatpush2.bf16.xpose.msra.mxu0 0
    %2354 = vmatprep.subr.bf16.mxu0 0
    %2355 = vmatpush2.bf16.xpose.msra.mxu0 0
    %2356 = vmatprep.subr.bf16.mxu0 0
    %2357 = vmatpush2.bf16.xpose.msra.mxu0 0
    %2358 = vmatprep.subr.bf16.mxu0 0
    %2359 = vmatpush2.bf16.xpose.msra.mxu0 0
    %2360 = vmatprep.subr.bf16.mxu0 0
    %2361 = vmatpush2.bf16.xpose.msra.mxu0 0
    %2362 = vmatprep.subr.bf16.mxu0 0
    %2363 = vmatpush2.bf16.xpose.msra.mxu0 0
    %2364 = vmatprep.subr.bf16.mxu0 0
    %2365 = vmatpush2.bf16.xpose.msra.mxu0 0
    %2366 = vmatprep.mubr.bf16.mxu0 0
    %2367 = vmatmul.mubr.bf16.gmra.mxu0 %v2329
    %v2368 = vpop.f32.mrf.mxu0
    %v2369 = vadd.f32 0.0, %v2368
    %v2370 = vpop.f32.mrf.mxu0
    %v2371 = vpop.f32.mrf.mxu0
    %v2372 = vpop.f32.mrf.mxu0
    %2373 = vdwg.mxu0
    %v2374 = vmul.f32 %v2369, 0.35355338
    %v2375 = vsel %vm872, %v2374, -inf
    %2376 = vmax.xlane.f32.xlu0 %v2375
    %v2377 = vpop.xlane.xlu0 %2376
    %v2378 = vsub.f32 %v2374, %v2377
    %v2379 = vmul.f32 %v2378, 1.442695
    %v2380 = vpow.pop %v2379
    %v2381 = vsel %vm872, %v2380, 0.0
    %2382 = vadd.xlane.f32.xlu0 %v2381
    %v2383 = vpop.xlane.xlu0 %2382
    %v2384 = vrcp.pop %v2383
    %v2385 = vmul.f32 %v2380, %v2384
    %s2386 = scalar_lea.vmem [#allocation23], 40
    %2387 = vst.msk [vmem:[%s2386] sm:$0xff] %vm872, %v2385
    %v2388 = vpack.c.bf16 %v2385, %v2385
    %2390 = vrot.lane.b32.xlu0 %v1706, 120
    %v2391 = vpop.permute.xlu0 %2390
    %v2394 = vsel %vm872, %v2388, 0
    %2396 = vmatprep.subr.bf16.mxu0 0
    %2397 = vmatpush1.bf16.msra.mxu0 0
    %2398 = vmatprep.subr.bf16.mxu0 0
    %2399 = vmatpush1.bf16.msra.mxu0 0
    %2400 = vmatprep.subr.bf16.mxu0 0
    %2401 = vmatpush1.bf16.msra.mxu0 0
    %2402 = vmatprep.subr.bf16.mxu0 0
    %2403 = vmatpush1.bf16.msra.mxu0 0
    %2404 = vmatprep.subr.bf16.mxu0 0
    %2405 = vmatpush1.bf16.msra.mxu0 0
    %2406 = vmatprep.subr.bf16.mxu0 0
    %2407 = vmatpush1.bf16.msra.mxu0 0
    %2408 = vmatprep.subr.bf16.mxu0 0
    %2409 = vmatpush1.bf16.msra.mxu0 0
    %2410 = vmatprep.subr.bf16.mxu0 0
    %2411 = vmatpush1.bf16.msra.mxu0 %v2391
    %2412 = vmatprep.subr.bf16.mxu0 0
    %2413 = vmatpush2.bf16.msra.mxu0 0
    %2414 = vmatprep.subr.bf16.mxu0 0
    %2415 = vmatpush2.bf16.msra.mxu0 0
    %2416 = vmatprep.subr.bf16.mxu0 0
    %2417 = vmatpush2.bf16.msra.mxu0 0
    %2418 = vmatprep.subr.bf16.mxu0 0
    %2419 = vmatpush2.bf16.msra.mxu0 0
    %2420 = vmatprep.subr.bf16.mxu0 0
    %2421 = vmatpush2.bf16.msra.mxu0 0
    %2422 = vmatprep.subr.bf16.mxu0 0
    %2423 = vmatpush2.bf16.msra.mxu0 0
    %2424 = vmatprep.subr.bf16.mxu0 0
    %2425 = vmatpush2.bf16.msra.mxu0 0
    %2426 = vmatprep.subr.bf16.mxu0 0
    %2427 = vmatpush2.bf16.msra.mxu0 0
    %2428 = vmatprep.mubr.bf16.mxu0 0
    %2429 = vmatmul.mubr.bf16.gmra.mxu0 %v2394
    %v2430 = vpop.f32.mrf.mxu0
    %v2431 = vadd.f32 0.0, %v2430
    %v2432 = vpop.f32.mrf.mxu0
    %v2433 = vpop.f32.mrf.mxu0
    %v2434 = vpop.f32.mrf.mxu0
    %2435 = vdwg.mxu0
    %2436 = vrot.lane.b32.xlu0 %v2218, 112
    %v2437 = vpop.permute.xlu0 %2436
    %2438 = vrot.lane.b32.xlu0 %v1643, 112
    %v2439 = vpop.permute.xlu0 %2438
    %v2441 = vsel %vm405, %v2437, 0
    %v2444 = vsel %vm405, %v2439, 0
    %2446 = vmatprep.subr.bf16.mxu0 0
    %2447 = vmatpush1.bf16.xpose.msra.mxu0 0
    %2448 = vmatprep.subr.bf16.mxu0 0
    %2449 = vmatpush1.bf16.xpose.msra.mxu0 0
    %2450 = vmatprep.subr.bf16.mxu0 0
    %2451 = vmatpush1.bf16.xpose.msra.mxu0 0
    %2452 = vmatprep.subr.bf16.mxu0 0
    %2453 = vmatpush1.bf16.xpose.msra.mxu0 0
    %2454 = vmatprep.subr.bf16.mxu0 0
    %2455 = vmatpush1.bf16.xpose.msra.mxu0 0
    %2456 = vmatprep.subr.bf16.mxu0 0
    %2457 = vmatpush1.bf16.xpose.msra.mxu0 0
    %2458 = vmatprep.subr.bf16.mxu0 0
    %2459 = vmatpush1.bf16.xpose.msra.mxu0 0
    %2460 = vmatprep.subr.bf16.mxu0 0
    %2461 = vmatpush1.bf16.xpose.msra.mxu0 %v2444
    %2462 = vmatprep.subr.bf16.mxu0 0
    %2463 = vmatpush2.bf16.xpose.msra.mxu0 0
    %2464 = vmatprep.subr.bf16.mxu0 0
    %2465 = vmatpush2.bf16.xpose.msra.mxu0 0
    %2466 = vmatprep.subr.bf16.mxu0 0
    %2467 = vmatpush2.bf16.xpose.msra.mxu0 0
    %2468 = vmatprep.subr.bf16.mxu0 0
    %2469 = vmatpush2.bf16.xpose.msra.mxu0 0
    %2470 = vmatprep.subr.bf16.mxu0 0
    %2471 = vmatpush2.bf16.xpose.msra.mxu0 0
    %2472 = vmatprep.subr.bf16.mxu0 0
    %2473 = vmatpush2.bf16.xpose.msra.mxu0 0
    %2474 = vmatprep.subr.bf16.mxu0 0
    %2475 = vmatpush2.bf16.xpose.msra.mxu0 0
    %2476 = vmatprep.subr.bf16.mxu0 0
    %2477 = vmatpush2.bf16.xpose.msra.mxu0 0
    %2478 = vmatprep.mubr.bf16.mxu0 0
    %2479 = vmatmul.mubr.bf16.gmra.mxu0 %v2441
    %v2480 = vpop.f32.mrf.mxu0
    %v2481 = vadd.f32 0.0, %v2480
    %v2482 = vpop.f32.mrf.mxu0
    %v2483 = vpop.f32.mrf.mxu0
    %v2484 = vpop.f32.mrf.mxu0
    %2485 = vdwg.mxu0
    %v2486 = vmul.f32 %v2481, 0.35355338
    %v2487 = vsel %vm872, %v2486, -inf
    %2488 = vmax.xlane.f32.xlu0 %v2487
    %v2489 = vpop.xlane.xlu0 %2488
    %v2490 = vsub.f32 %v2486, %v2489
    %v2491 = vmul.f32 %v2490, 1.442695
    %v2492 = vpow.pop %v2491
    %v2493 = vsel %vm872, %v2492, 0.0
    %2494 = vadd.xlane.f32.xlu0 %v2493
    %v2495 = vpop.xlane.xlu0 %2494
    %v2496 = vrcp.pop %v2495
    %v2497 = vmul.f32 %v2492, %v2496
    %s2498 = scalar_lea.vmem [#allocation23], 48
    %2499 = vst.msk [vmem:[%s2498] sm:$0xff] %vm872, %v2497
    %v2500 = vpack.c.bf16 %v2497, %v2497
    %2501 = vrot.lane.b32.xlu0 %v1706, 112
    %v2502 = vpop.permute.xlu0 %2501
    %v2505 = vsel %vm872, %v2500, 0
    %2507 = vmatprep.subr.bf16.mxu0 0
    %2508 = vmatpush1.bf16.msra.mxu0 0
    %2509 = vmatprep.subr.bf16.mxu0 0
    %2510 = vmatpush1.bf16.msra.mxu0 0
    %2511 = vmatprep.subr.bf16.mxu0 0
    %2512 = vmatpush1.bf16.msra.mxu0 0
    %2513 = vmatprep.subr.bf16.mxu0 0
    %2514 = vmatpush1.bf16.msra.mxu0 0
    %2515 = vmatprep.subr.bf16.mxu0 0
    %2516 = vmatpush1.bf16.msra.mxu0 0
    %2517 = vmatprep.subr.bf16.mxu0 0
    %2518 = vmatpush1.bf16.msra.mxu0 0
    %2519 = vmatprep.subr.bf16.mxu0 0
    %2520 = vmatpush1.bf16.msra.mxu0 0
    %2521 = vmatprep.subr.bf16.mxu0 0
    %2522 = vmatpush1.bf16.msra.mxu0 %v2502
    %2523 = vmatprep.subr.bf16.mxu0 0
    %2524 = vmatpush2.bf16.msra.mxu0 0
    %2525 = vmatprep.subr.bf16.mxu0 0
    %2526 = vmatpush2.bf16.msra.mxu0 0
    %2527 = vmatprep.subr.bf16.mxu0 0
    %2528 = vmatpush2.bf16.msra.mxu0 0
    %2529 = vmatprep.subr.bf16.mxu0 0
    %2530 = vmatpush2.bf16.msra.mxu0 0
    %2531 = vmatprep.subr.bf16.mxu0 0
    %2532 = vmatpush2.bf16.msra.mxu0 0
    %2533 = vmatprep.subr.bf16.mxu0 0
    %2534 = vmatpush2.bf16.msra.mxu0 0
    %2535 = vmatprep.subr.bf16.mxu0 0
    %2536 = vmatpush2.bf16.msra.mxu0 0
    %2537 = vmatprep.subr.bf16.mxu0 0
    %2538 = vmatpush2.bf16.msra.mxu0 0
    %2539 = vmatprep.mubr.bf16.mxu0 0
    %2540 = vmatmul.mubr.bf16.gmra.mxu0 %v2505
    %v2541 = vpop.f32.mrf.mxu0
    %v2542 = vadd.f32 0.0, %v2541
    %v2543 = vpop.f32.mrf.mxu0
    %v2544 = vpop.f32.mrf.mxu0
    %v2545 = vpop.f32.mrf.mxu0
    %2546 = vdwg.mxu0
    %2547 = vrot.lane.b32.xlu0 %v2218, 104
    %v2548 = vpop.permute.xlu0 %2547
    %2549 = vrot.lane.b32.xlu0 %v1643, 104
    %v2550 = vpop.permute.xlu0 %2549
    %v2552 = vsel %vm405, %v2548, 0
    %v2555 = vsel %vm405, %v2550, 0
    %2557 = vmatprep.subr.bf16.mxu0 0
    %2558 = vmatpush1.bf16.xpose.msra.mxu0 0
    %2559 = vmatprep.subr.bf16.mxu0 0
    %2560 = vmatpush1.bf16.xpose.msra.mxu0 0
    %2561 = vmatprep.subr.bf16.mxu0 0
    %2562 = vmatpush1.bf16.xpose.msra.mxu0 0
    %2563 = vmatprep.subr.bf16.mxu0 0
    %2564 = vmatpush1.bf16.xpose.msra.mxu0 0
    %2565 = vmatprep.subr.bf16.mxu0 0
    %2566 = vmatpush1.bf16.xpose.msra.mxu0 0
    %2567 = vmatprep.subr.bf16.mxu0 0
    %2568 = vmatpush1.bf16.xpose.msra.mxu0 0
    %2569 = vmatprep.subr.bf16.mxu0 0
    %2570 = vmatpush1.bf16.xpose.msra.mxu0 0
    %2571 = vmatprep.subr.bf16.mxu0 0
    %2572 = vmatpush1.bf16.xpose.msra.mxu0 %v2555
    %2573 = vmatprep.subr.bf16.mxu0 0
    %2574 = vmatpush2.bf16.xpose.msra.mxu0 0
    %2575 = vmatprep.subr.bf16.mxu0 0
    %2576 = vmatpush2.bf16.xpose.msra.mxu0 0
    %2577 = vmatprep.subr.bf16.mxu0 0
    %2578 = vmatpush2.bf16.xpose.msra.mxu0 0
    %2579 = vmatprep.subr.bf16.mxu0 0
    %2580 = vmatpush2.bf16.xpose.msra.mxu0 0
    %2581 = vmatprep.subr.bf16.mxu0 0
    %2582 = vmatpush2.bf16.xpose.msra.mxu0 0
    %2583 = vmatprep.subr.bf16.mxu0 0
    %2584 = vmatpush2.bf16.xpose.msra.mxu0 0
    %2585 = vmatprep.subr.bf16.mxu0 0
    %2586 = vmatpush2.bf16.xpose.msra.mxu0 0
    %2587 = vmatprep.subr.bf16.mxu0 0
    %2588 = vmatpush2.bf16.xpose.msra.mxu0 0
    %2589 = vmatprep.mubr.bf16.mxu0 0
    %2590 = vmatmul.mubr.bf16.gmra.mxu0 %v2552
    %v2591 = vpop.f32.mrf.mxu0
    %v2592 = vadd.f32 0.0, %v2591
    %v2593 = vpop.f32.mrf.mxu0
    %v2594 = vpop.f32.mrf.mxu0
    %v2595 = vpop.f32.mrf.mxu0
    %2596 = vdwg.mxu0
    %v2597 = vmul.f32 %v2592, 0.35355338
    %v2598 = vsel %vm872, %v2597, -inf
    %2599 = vmax.xlane.f32.xlu0 %v2598
    %v2600 = vpop.xlane.xlu0 %2599
    %v2601 = vsub.f32 %v2597, %v2600
    %v2602 = vmul.f32 %v2601, 1.442695
    %v2603 = vpow.pop %v2602
    %v2604 = vsel %vm872, %v2603, 0.0
    %2605 = vadd.xlane.f32.xlu0 %v2604
    %v2606 = vpop.xlane.xlu0 %2605
    %v2607 = vrcp.pop %v2606
    %v2608 = vmul.f32 %v2603, %v2607
    %s2609 = scalar_lea.vmem [#allocation23], 56
    %2610 = vst.msk [vmem:[%s2609] sm:$0xff] %vm872, %v2608
    %v2611 = vpack.c.bf16 %v2608, %v2608
    %2612 = vrot.lane.b32.xlu0 %v1706, 104
    %v2613 = vpop.permute.xlu0 %2612
    %v2616 = vsel %vm872, %v2611, 0
    %2618 = vmatprep.subr.bf16.mxu0 0
    %2619 = vmatpush1.bf16.msra.mxu0 0
    %2620 = vmatprep.subr.bf16.mxu0 0
    %2621 = vmatpush1.bf16.msra.mxu0 0
    %2622 = vmatprep.subr.bf16.mxu0 0
    %2623 = vmatpush1.bf16.msra.mxu0 0
    %2624 = vmatprep.subr.bf16.mxu0 0
    %2625 = vmatpush1.bf16.msra.mxu0 0
    %2626 = vmatprep.subr.bf16.mxu0 0
    %2627 = vmatpush1.bf16.msra.mxu0 0
    %2628 = vmatprep.subr.bf16.mxu0 0
    %2629 = vmatpush1.bf16.msra.mxu0 0
    %2630 = vmatprep.subr.bf16.mxu0 0
    %2631 = vmatpush1.bf16.msra.mxu0 0
    %2632 = vmatprep.subr.bf16.mxu0 0
    %2633 = vmatpush1.bf16.msra.mxu0 %v2613
    %2634 = vmatprep.subr.bf16.mxu0 0
    %2635 = vmatpush2.bf16.msra.mxu0 0
    %2636 = vmatprep.subr.bf16.mxu0 0
    %2637 = vmatpush2.bf16.msra.mxu0 0
    %2638 = vmatprep.subr.bf16.mxu0 0
    %2639 = vmatpush2.bf16.msra.mxu0 0
    %2640 = vmatprep.subr.bf16.mxu0 0
    %2641 = vmatpush2.bf16.msra.mxu0 0
    %2642 = vmatprep.subr.bf16.mxu0 0
    %2643 = vmatpush2.bf16.msra.mxu0 0
    %2644 = vmatprep.subr.bf16.mxu0 0
    %2645 = vmatpush2.bf16.msra.mxu0 0
    %2646 = vmatprep.subr.bf16.mxu0 0
    %2647 = vmatpush2.bf16.msra.mxu0 0
    %2648 = vmatprep.subr.bf16.mxu0 0
    %2649 = vmatpush2.bf16.msra.mxu0 0
    %2650 = vmatprep.mubr.bf16.mxu0 0
    %2651 = vmatmul.mubr.bf16.gmra.mxu0 %v2616
    %v2652 = vpop.f32.mrf.mxu0
    %v2653 = vadd.f32 0.0, %v2652
    %v2654 = vpop.f32.mrf.mxu0
    %v2655 = vpop.f32.mrf.mxu0
    %v2656 = vpop.f32.mrf.mxu0
    %2657 = vdwg.mxu0
    %2659 = vrot.lane.b32.xlu0 %v2431, 8
    %v2660 = vpop.permute.xlu0 %2659
    %2663 = vrot.lane.b32.xlu0 %v2542, 16
    %v2664 = vpop.permute.xlu0 %2663
    %2667 = vrot.lane.b32.xlu0 %v2653, 24
    %v2668 = vpop.permute.xlu0 %2667
    %v2670 = vsel %vm405, %v2318, %v2660
    %v2671 = vsel %vm872, %v2670, %v2664
    %v2672 = vsel %vm874, %v2671, %v2668
    %v2673 = vpack.c.bf16 %v2672, %v2672
    %v2675 = vsel %vm251, %v2673, 0
    %2677 = vmatprep.subr.bf16.mxu0 0
    %2678 = vmatpush1.bf16.msra.mxu0 0
    %2679 = vmatprep.subr.bf16.mxu0 0
    %2680 = vmatpush1.bf16.msra.mxu0 0
    %2681 = vmatprep.subr.bf16.mxu0 0
    %2682 = vmatpush1.bf16.msra.mxu0 0
    %2683 = vmatprep.subr.bf16.mxu0 0
    %2684 = vmatpush1.bf16.msra.mxu0 0
    %2685 = vmatprep.subr.bf16.mxu0 0
    %2686 = vmatpush1.bf16.msra.mxu0 0
    %2687 = vmatprep.subr.bf16.mxu0 0
    %2688 = vmatpush1.bf16.msra.mxu0 0
    %2689 = vmatprep.subr.bf16.mxu0 0
    %2690 = vmatpush1.bf16.msra.mxu0 %v2171
    %2691 = vmatprep.subr.bf16.mxu0 0
    %2692 = vmatpush1.bf16.msra.mxu0 %v2170
    %2693 = vmatprep.subr.bf16.mxu0 0
    %2694 = vmatpush2.bf16.msra.mxu0 0
    %2695 = vmatprep.subr.bf16.mxu0 0
    %2696 = vmatpush2.bf16.msra.mxu0 0
    %2697 = vmatprep.subr.bf16.mxu0 0
    %2698 = vmatpush2.bf16.msra.mxu0 0
    %2699 = vmatprep.subr.bf16.mxu0 0
    %2700 = vmatpush2.bf16.msra.mxu0 0
    %2701 = vmatprep.subr.bf16.mxu0 0
    %2702 = vmatpush2.bf16.msra.mxu0 0
    %2703 = vmatprep.subr.bf16.mxu0 0
    %2704 = vmatpush2.bf16.msra.mxu0 0
    %2705 = vmatprep.subr.bf16.mxu0 0
    %2706 = vmatpush2.bf16.msra.mxu0 0
    %2707 = vmatprep.subr.bf16.mxu0 0
    %2708 = vmatpush2.bf16.msra.mxu0 0
    %2709 = vmatprep.mubr.bf16.mxu0 0
    %2710 = vmatmul.mubr.bf16.gmra.mxu0 %v2675
    %v2711 = vpop.f32.mrf.mxu0
    %v2712 = vadd.f32 0.0, %v2711
    %v2713 = vpop.f32.mrf.mxu0
    %v2714 = vpop.f32.mrf.mxu0
    %v2715 = vpop.f32.mrf.mxu0
    %2716 = vdwg.mxu0
    %2717 = vst.msk [vmem:[#allocation2 + $0x8] sm:$0xff] %vm251, %v2712
    %v2718 = vld [vmem:[#allocation2] sm:$0xff]
    %v2719 = vld [vmem:[#allocation2 + $0x8] sm:$0xff]
    %v2720 = vadd.f32 %v2718, %v1495
    %v2721 = vadd.f32 %v2719, %v1496
    %v2722 = vsel %vm251, %v2720, 0.0
    %2723 = vadd.xlane.f32.xlu0 %v2722
    %v2724 = vpop.xlane.xlu0 %2723
    %v2725 = vsel %vm251, %v2721, 0.0
    %2726 = vadd.xlane.f32.xlu0 %v2725
    %v2727 = vpop.xlane.xlu0 %2726
    %v2728 = vmul.f32 %v2724, %v1456
    %v2729 = vmul.f32 %v2727, %v1456
    %v2730 = vmul.f32 %v2720, %v2720
    %v2731 = vmul.f32 %v2721, %v2721
    %v2732 = vsel %vm251, %v2730, 0.0
    %2733 = vadd.xlane.f32.xlu0 %v2732
    %v2734 = vpop.xlane.xlu0 %2733
    %v2735 = vsel %vm251, %v2731, 0.0
    %2736 = vadd.xlane.f32.xlu0 %v2735
    %v2737 = vpop.xlane.xlu0 %2736
    %v2738 = vmul.f32 %v2734, %v1456
    %v2739 = vmul.f32 %v2737, %v1456
    %v2740 = vmul.f32 %v2728, %v2728
    %v2741 = vmul.f32 %v2729, %v2729
    %v2742 = vsub.f32 %v2738, %v2740
    %v2743 = vsub.f32 %v2739, %v2741
    %v2744 = vsub.f32 %v2720, %v2728
    %v2745 = vsub.f32 %v2721, %v2729
    %v2746 = vadd.f32 %v2742, 1e-06
    %v2747 = vadd.f32 %v2743, 1e-06
    %v2748 = vrsqrt.pop %v2746
    %v2749 = vrsqrt.pop %v2747
    %v2750 = vmul.f32 %v2744, %v2748
    %v2751 = vmul.f32 %v2745, %v2749
    %v2753 = vlaneseq
    %v2754 = vshrl.u32 %v2753, 7
    %v2755 = vsub.s32 0, %v2754
    %v2756 = vrot.slane %v1513, %v2755
    %v2758 = vmul.f32 %v2750, %v2756
    %v2759 = vmul.f32 %v2751, %v2756
    %v2761 = vlaneseq
    %v2762 = vshrl.u32 %v2761, 7
    %v2763 = vsub.s32 0, %v2762
    %v2764 = vrot.slane %v1514, %v2763
    %v2766 = vadd.f32 %v2758, %v2764
    %v2767 = vadd.f32 %v2759, %v2764
    %v2768 = vpack.c.bf16 %v2767, %v2766
    %v2769 = vld [vmem:[#allocation18] sm:$0xf]
    %v2770 = vld [vmem:[#allocation18 + $0x4] sm:$0xf]
    %v2771 = vld [vmem:[#allocation18 + $0x8] sm:$0xf]
    %v2772 = vld [vmem:[#allocation18 + $0xc] sm:$0xf]
    %v2773 = vld [vmem:[%s16] sm:$0x1]
    %v2775 = vlaneseq
    %v2776 = vshrl.u32 %v2775, 7
    %v2777 = vsub.s32 0, %v2776
    %v2778 = vrot.slane %v2773, %v2777
    %v2784 = vunpack.c.l.b16 %v2769
    %v2785 = vunpack.c.l.b16 %v2770
    %v2786 = vunpack.c.l.b16 %v2771
    %v2787 = vunpack.c.l.b16 %v2772
    %v2788 = vpack.c.b16 %v2785, %v2784
    %v2789 = vpack.c.b16 %v2787, %v2786
    %v2793 = vsel %vm251, %v2768, 0
    %2795 = vmatprep.subr.bf16.mxu0 0
    %2796 = vmatpush1.bf16.msra.mxu0 0
    %2797 = vmatprep.subr.bf16.mxu0 0
    %2798 = vmatpush1.bf16.msra.mxu0 0
    %2799 = vmatprep.subr.bf16.mxu0 0
    %2800 = vmatpush1.bf16.msra.mxu0 0
    %2801 = vmatprep.subr.bf16.mxu0 0
    %2802 = vmatpush1.bf16.msra.mxu0 0
    %2803 = vmatprep.subr.bf16.mxu0 0
    %2804 = vmatpush1.bf16.msra.mxu0 0
    %2805 = vmatprep.subr.bf16.mxu0 0
    %2806 = vmatpush1.bf16.msra.mxu0 0
    %2807 = vmatprep.subr.bf16.mxu0 0
    %2808 = vmatpush1.bf16.msra.mxu0 %v2789
    %2809 = vmatprep.subr.bf16.mxu0 0
    %2810 = vmatpush1.bf16.msra.mxu0 %v2788
    %2811 = vmatprep.subr.bf16.mxu0 0
    %2812 = vmatpush2.bf16.msra.mxu0 0
    %2813 = vmatprep.subr.bf16.mxu0 0
    %2814 = vmatpush2.bf16.msra.mxu0 0
    %2815 = vmatprep.subr.bf16.mxu0 0
    %2816 = vmatpush2.bf16.msra.mxu0 0
    %2817 = vmatprep.subr.bf16.mxu0 0
    %2818 = vmatpush2.bf16.msra.mxu0 0
    %2819 = vmatprep.subr.bf16.mxu0 0
    %2820 = vmatpush2.bf16.msra.mxu0 0
    %2821 = vmatprep.subr.bf16.mxu0 0
    %2822 = vmatpush2.bf16.msra.mxu0 0
    %2823 = vmatprep.subr.bf16.mxu0 0
    %2824 = vmatpush2.bf16.msra.mxu0 0
    %2825 = vmatprep.subr.bf16.mxu0 0
    %2826 = vmatpush2.bf16.msra.mxu0 0
    %2827 = vmatprep.mubr.bf16.mxu0 0
    %2828 = vmatmul.mubr.bf16.gmra.mxu0 %v2793
    %v2829 = vpop.f32.mrf.mxu0
    %v2830 = vadd.f32 %v2778, %v2829
    %v2831 = vpop.f32.mrf.mxu0
    %v2832 = vpop.f32.mrf.mxu0
    %v2833 = vadd.f32 %v2778, %v2832
    %v2834 = vpop.f32.mrf.mxu0
    %2835 = vdwg.mxu0
    %v2836 = vmax.f32 %v2830, 0.0
    %v2837 = vmax.f32 %v2833, 0.0
    %v2838 = vpack.c.bf16 %v2837, %v2836
    %v2839 = vld [vmem:[%s17] sm:$0xf]
    %v2840 = vld [vmem:[%s17 + $0x4] sm:$0xf]
    %v2841 = vld [vmem:[%s17 + $0x8] sm:$0xf]
    %v2842 = vld [vmem:[%s17 + $0xc] sm:$0xf]
    %v2843 = vld [vmem:[%s17 + $0x10] sm:$0xf]
    %v2844 = vld [vmem:[%s17 + $0x14] sm:$0xf]
    %v2845 = vld [vmem:[%s17 + $0x18] sm:$0xf]
    %v2846 = vld [vmem:[%s17 + $0x1c] sm:$0xf]
    %v2847 = vld [vmem:[%s18] sm:$0x1]
    %v2849 = vlaneseq
    %v2850 = vshrl.u32 %v2849, 7
    %v2851 = vsub.s32 0, %v2850
    %v2852 = vrot.slane %v2847, %v2851
    %v2862 = vunpack.c.l.b16 %v2839
    %v2863 = vunpack.c.l.b16 %v2840
    %v2864 = vunpack.c.l.b16 %v2841
    %v2865 = vunpack.c.l.b16 %v2842
    %v2866 = vunpack.c.l.b16 %v2843
    %v2867 = vunpack.c.l.b16 %v2844
    %v2868 = vunpack.c.l.b16 %v2845
    %v2869 = vunpack.c.l.b16 %v2846
    %v2870 = vpack.c.b16 %v2863, %v2862
    %v2871 = vpack.c.b16 %v2865, %v2864
    %v2872 = vpack.c.b16 %v2867, %v2866
    %v2873 = vpack.c.b16 %v2869, %v2868
    %vm2878 = vcmask 523264
    %v2880 = vsel %vm2878, %v2838, 0
    %2882 = vmatprep.subr.bf16.mxu0 0
    %2883 = vmatpush1.bf16.msra.mxu0 0
    %2884 = vmatprep.subr.bf16.mxu0 0
    %2885 = vmatpush1.bf16.msra.mxu0 0
    %2886 = vmatprep.subr.bf16.mxu0 0
    %2887 = vmatpush1.bf16.msra.mxu0 0
    %2888 = vmatprep.subr.bf16.mxu0 0
    %2889 = vmatpush1.bf16.msra.mxu0 0
    %2890 = vmatprep.subr.bf16.mxu0 0
    %2891 = vmatpush1.bf16.msra.mxu0 %v2873
    %2892 = vmatprep.subr.bf16.mxu0 0
    %2893 = vmatpush1.bf16.msra.mxu0 %v2872
    %2894 = vmatprep.subr.bf16.mxu0 0
    %2895 = vmatpush1.bf16.msra.mxu0 %v2871
    %2896 = vmatprep.subr.bf16.mxu0 0
    %2897 = vmatpush1.bf16.msra.mxu0 %v2870
    %2898 = vmatprep.subr.bf16.mxu0 0
    %2899 = vmatpush2.bf16.msra.mxu0 0
    %2900 = vmatprep.subr.bf16.mxu0 0
    %2901 = vmatpush2.bf16.msra.mxu0 0
    %2902 = vmatprep.subr.bf16.mxu0 0
    %2903 = vmatpush2.bf16.msra.mxu0 0
    %2904 = vmatprep.subr.bf16.mxu0 0
    %2905 = vmatpush2.bf16.msra.mxu0 0
    %2906 = vmatprep.subr.bf16.mxu0 0
    %2907 = vmatpush2.bf16.msra.mxu0 0
    %2908 = vmatprep.subr.bf16.mxu0 0
    %2909 = vmatpush2.bf16.msra.mxu0 0
    %2910 = vmatprep.subr.bf16.mxu0 0
    %2911 = vmatpush2.bf16.msra.mxu0 0
    %2912 = vmatprep.subr.bf16.mxu0 0
    %2913 = vmatpush2.bf16.msra.mxu0 0
    %2914 = vmatprep.mubr.bf16.mxu0 0
    %2915 = vmatmul.mubr.bf16.gmra.mxu0 %v2880
    %v2916 = vpop.f32.mrf.mxu0
    %v2917 = vadd.f32 %v2852, %v2916
    %v2918 = vpop.f32.mrf.mxu0
    %v2919 = vpop.f32.mrf.mxu0
    %v2920 = vadd.f32 %v2852, %v2919
    %v2921 = vpop.f32.mrf.mxu0
    %2922 = vdwg.mxu0
    %v2923 = vadd.f32 %v2917, %v2766
    %v2924 = vadd.f32 %v2920, %v2767
    %v2925 = vld [vmem:[%s19] sm:$0x1]
    %v2926 = vld [vmem:[%s20] sm:$0x1]
    %v2927 = vsel %vm251, %v2923, 0.0
    %2928 = vadd.xlane.f32.xlu0 %v2927
    %v2929 = vpop.xlane.xlu0 %2928
    %v2930 = vsel %vm251, %v2924, 0.0
    %2931 = vadd.xlane.f32.xlu0 %v2930
    %v2932 = vpop.xlane.xlu0 %2931
    %v2933 = vmul.f32 %v2929, %v1456
    %v2934 = vmul.f32 %v2932, %v1456
    %v2935 = vmul.f32 %v2923, %v2923
    %v2936 = vmul.f32 %v2924, %v2924
    %v2937 = vsel %vm251, %v2935, 0.0
    %2938 = vadd.xlane.f32.xlu0 %v2937
    %v2939 = vpop.xlane.xlu0 %2938
    %v2940 = vsel %vm251, %v2936, 0.0
    %2941 = vadd.xlane.f32.xlu0 %v2940
    %v2942 = vpop.xlane.xlu0 %2941
    %v2943 = vmul.f32 %v2939, %v1456
    %v2944 = vmul.f32 %v2942, %v1456
    %v2945 = vmul.f32 %v2933, %v2933
    %v2946 = vmul.f32 %v2934, %v2934
    %v2947 = vsub.f32 %v2943, %v2945
    %v2948 = vsub.f32 %v2944, %v2946
    %v2949 = vsub.f32 %v2923, %v2933
    %v2950 = vsub.f32 %v2924, %v2934
    %v2951 = vadd.f32 %v2947, 1e-06
    %v2952 = vadd.f32 %v2948, 1e-06
    %v2953 = vrsqrt.pop %v2951
    %v2954 = vrsqrt.pop %v2952
    %v2955 = vmul.f32 %v2949, %v2953
    %v2956 = vmul.f32 %v2950, %v2954
    %v2958 = vlaneseq
    %v2959 = vshrl.u32 %v2958, 7
    %v2960 = vsub.s32 0, %v2959
    %v2961 = vrot.slane %v2925, %v2960
    %v2963 = vmul.f32 %v2955, %v2961
    %v2964 = vmul.f32 %v2956, %v2961
    %v2966 = vlaneseq
    %v2967 = vshrl.u32 %v2966, 7
    %v2968 = vsub.s32 0, %v2967
    %v2969 = vrot.slane %v2926, %v2968
    %v2971 = vadd.f32 %v2963, %v2969
    %v2972 = vadd.f32 %v2964, %v2969
    %2973 = vst.msk [vmem:[#allocation20] sm:$0xff] %vm251, %v2971
    %2974 = vst.msk [vmem:[#allocation20 + $0x8] sm:$0xff] %vm251, %v2972
    // Predicated region
    $region126: #{tpu_custom_call.1} parent=1 // pred_check
      _
    $region127: #{tpu_custom_call.1} parent=1 // pred_check_branch
      %2976 = sbr.rel (0) target = $region129
    $region128: #{tpu_custom_call.1} parent=1 // pred_region
      %s2978 = ssub.s32 256, 256
      %2979 = vsyncadd [#allocation5], %s2978
      %s2980 = sshll.u32 [#allocation20], 4
      %s2981 = int_to_ptr.vmem [resolvable:$true] %s2980
      %2986 = dma.vmem_to_hbm [thread:$0]  %s2981, 256, %s21, [#allocation5], 128, 128, 8
    $region129: #{tpu_custom_call.1} parent=1 // pred_fallthru
      _
    // Predicated region
    $region130: #{tpu_custom_call.1} parent=1 // pred_check
      _
    $region131: #{tpu_custom_call.1} parent=1 // pred_check_branch
      %2988 = sbr.rel (0) target = $region133
    $region132: #{tpu_custom_call.1} parent=1 // pred_region
      %s2990 = ssub.s32 1024, 1024
      %2991 = vsyncadd [#allocation22], %s2990
      %s2992 = sshll.u32 [#allocation21], 4
      %s2993 = int_to_ptr.vmem [resolvable:$true] %s2992
      %2998 = dma.vmem_to_hbm [thread:$0]  %s2993, 1024, %s22, [#allocation22], 128, 128, 8
    $region133: #{tpu_custom_call.1} parent=1 // pred_fallthru
      _
    // Predicated region
    $region134: #{tpu_custom_call.1} parent=1 // pred_check
      _
    $region135: #{tpu_custom_call.1} parent=1 // pred_check_branch
      %3000 = sbr.rel (0) target = $region137
    $region136: #{tpu_custom_call.1} parent=1 // pred_region
      %s3002 = ssub.s32 1024, 1024
      %3003 = vsyncadd [#allocation22], %s3002
      %s3004 = sshll.u32 [#allocation23], 4
      %s3005 = int_to_ptr.vmem [resolvable:$true] %s3004
      %3010 = dma.vmem_to_hbm [thread:$0]  %s3005, 1024, %s23, [#allocation22], 128, 128, 8
    $region137: #{tpu_custom_call.1} parent=1 // pred_fallthru
      _
    // Predicated region
    $region138: #{tpu_custom_call.1} parent=1 // pred_check
      _
    $region139: #{tpu_custom_call.1} parent=1 // pred_check_branch
      %3012 = sbr.rel (0) target = $region141
    $region140: #{tpu_custom_call.1} parent=1 // pred_region
      %3013 = dma.done [#allocation5], 256
    $region141: #{tpu_custom_call.1} parent=1 // pred_fallthru
      _
    // Predicated region
    $region142: #{tpu_custom_call.1} parent=1 // pred_check
      _
    $region143: #{tpu_custom_call.1} parent=1 // pred_check_branch
      %3015 = sbr.rel (0) target = $region145
    $region144: #{tpu_custom_call.1} parent=1 // pred_region
      %3016 = dma.done [#allocation22], 1024
    $region145: #{tpu_custom_call.1} parent=1 // pred_fallthru
      _
    // Predicated region
    $region146: #{tpu_custom_call.1} parent=1 // pred_check
      _
    $region147: #{tpu_custom_call.1} parent=1 // pred_check_branch
      %3018 = sbr.rel (0) target = $region149
    $region148: #{tpu_custom_call.1} parent=1 // pred_region
      %3019 = dma.done [#allocation22], 1024
    $region149: #{tpu_custom_call.1} parent=1 // pred_fallthru
      _
    %3020 = vsyncpa [#allocation4], 1
    %3021 = vsyncpa [#allocation7], 1
    %3022 = vsyncpa [#allocation10], 1
    %3023 = vsyncpa [#allocation13], 1
    %3024 = vsyncpa [#allocation16], 1
    %3025 = vsyncpa [#allocation19], 1
    %3026 = vsyncpa [#allocation5], 1
    %3027 = vsyncpa [#allocation22], 1

// kernel: tpu_custom_call.1
$region0: #{tpu_custom_call.1}
  #allocation0 [shape = 'u32[]', space=smem, size = 0x4, offset = 0x4, fixed_abs, tag = 'smem constant byte address 0x4 - core index']
  #allocation1 [shape = 'u32[144,128]{1,0:T(1,128)}', space=vmem, size = 0x12000, scoped, tag = 'internal scratch']
  #allocation2 [shape = 'f32[16,32]{1,0:T(8,128)}', space=vmem, size = 0x2000, scoped, tag = 'scratch operand']
  %s0 = inlined_call_operand.vmem [shape: f32[2,8,32], index: 0, kind: input, shape index: {}]
  %s1 = inlined_call_operand.vmem [shape: f32[2,16,32], index: 1, kind: input, shape index: {}]
  %s2 = inlined_call_operand.hbm [shape: bf16[2,8,8], index: 2, kind: input, shape index: {}]
  %s3 = inlined_call_operand.hbm [shape: bf16[32,32], index: 3, kind: input, shape index: {}]
  %s4 = inlined_call_operand.hbm [shape: bf16[32,32], index: 4, kind: input, shape index: {}]
  %s5 = inlined_call_operand.hbm [shape: bf16[32,32], index: 5, kind: input, shape index: {}]
  %s6 = inlined_call_operand.hbm [shape: bf16[32,32], index: 6, kind: input, shape index: {}]
  %s7 = inlined_call_operand.vmem [shape: f32[1,32], index: 7, kind: input, shape index: {}]
  %s8 = inlined_call_operand.vmem [shape: f32[1,32], index: 8, kind: input, shape index: {}]
  %s9 = inlined_call_operand.hbm [shape: bf16[32,32], index: 9, kind: input, shape index: {}]
  %s10 = inlined_call_operand.hbm [shape: bf16[32,32], index: 10, kind: input, shape index: {}]
  %s11 = inlined_call_operand.hbm [shape: bf16[32,32], index: 11, kind: input, shape index: {}]
  %s12 = inlined_call_operand.hbm [shape: bf16[32,32], index: 12, kind: input, shape index: {}]
  %s13 = inlined_call_operand.vmem [shape: f32[1,32], index: 13, kind: input, shape index: {}]
  %s14 = inlined_call_operand.vmem [shape: f32[1,32], index: 14, kind: input, shape index: {}]
  %s15 = inlined_call_operand.hbm [shape: bf16[32,64], index: 15, kind: input, shape index: {}]
  %s16 = inlined_call_operand.vmem [shape: f32[1,64], index: 16, kind: input, shape index: {}]
  %s17 = inlined_call_operand.vmem [shape: bf16[64,32], index: 17, kind: input, shape index: {}]
  %s18 = inlined_call_operand.vmem [shape: f32[1,32], index: 18, kind: input, shape index: {}]
  %s19 = inlined_call_operand.vmem [shape: f32[1,32], index: 19, kind: input, shape index: {}]
  %s20 = inlined_call_operand.vmem [shape: f32[1,32], index: 20, kind: input, shape index: {}]
  %s21 = inlined_call_operand.hbm [shape: f32[2,8,32], index: 21, kind: output, shape index: {0}]
  %s22 = inlined_call_operand.hbm [shape: f32[2,4,8,8], index: 22, kind: output, shape index: {1}]
  %s23 = inlined_call_operand.hbm [shape: f32[2,4,8,16], index: 23, kind: output, shape index: {2}]
  %24 = xla_tuple %s21, %s22, %s23
  %s25 = sld [smem:[#allocation0]]
  $region150: #{tpu_custom_call.1} parent=0
    _
  %s27 = ssub.s32 1, %s25
  %s28 = scalar_select 0, %s27, %s25
  $region1: #{tpu_custom_call.1} parent=0
    #allocation3 [shape = 'u8[4096]{0}', space=vmem, size = 0x1000, scoped, tag = 'input window, operand 2, single buffered']
    #allocation4 [shape = 's32[1]{0}', space=sflag, size = 0x4, scoped, tag = 'scoped memory for tpu_custom_call.1']
    #allocation5 [shape = 's32[1]{0}', space=sflag, size = 0x4, scoped, tag = 'scoped memory for tpu_custom_call.1']
    #allocation6 [shape = 'u8[8192]{0}', space=vmem, size = 0x2000, scoped, tag = 'input window, operand 3, single buffered']
    #allocation7 [shape = 's32[1]{0}', space=sflag, size = 0x4, scoped, tag = 'scoped memory for tpu_custom_call.1']
    #allocation8 [shape = 'u8[8192]{0}', space=vmem, size = 0x2000, scoped, tag = 'input window, operand 4, single buffered']
    #allocation9 [shape = 'u8[8192]{0}', space=vmem, size = 0x2000, scoped, tag = 'input window, operand 5, single buffered']
    #allocation10 [shape = 's32[1]{0}', space=sflag, size = 0x4, scoped, tag = 'scoped memory for tpu_custom_call.1']
    #allocation11 [shape = 'u8[8192]{0}', space=vmem, size = 0x2000, scoped, tag = 'input window, operand 6, single buffered']
    #allocation12 [shape = 'u8[8192]{0}', space=vmem, size = 0x2000, scoped, tag = 'input window, operand 9, single buffered']
    #allocation13 [shape = 's32[1]{0}', space=sflag, size = 0x4, scoped, tag = 'scoped memory for tpu_custom_call.1']
    #allocation14 [shape = 'u8[8192]{0}', space=vmem, size = 0x2000, scoped, tag = 'input window, operand 10, single buffered']
    #allocation15 [shape = 'u8[8192]{0}', space=vmem, size = 0x2000, scoped, tag = 'input window, operand 11, single buffered']
    #allocation16 [shape = 's32[1]{0}', space=sflag, size = 0x4, scoped, tag = 'scoped memory for tpu_custom_call.1']
    #allocation17 [shape = 'u8[8192]{0}', space=vmem, size = 0x2000, scoped, tag = 'input window, operand 12, single buffered']
    #allocation18 [shape = 'u8[8192]{0}', space=vmem, size = 0x2000, scoped, tag = 'input window, operand 15, single buffered']
    #allocation19 [shape = 's32[1]{0}', space=sflag, size = 0x4, scoped, tag = 'scoped memory for tpu_custom_call.1']
    #allocation20 [shape = 'u8[8192]{0}', space=vmem, size = 0x2000, scoped, tag = 'output window, operand 0, single buffered']
    #allocation21 [shape = 'u8[32768]{0}', space=vmem, size = 0x8000, scoped, tag = 'output window, operand 1, single buffered']
    #allocation22 [shape = 's32[1]{0}', space=sflag, size = 0x4, scoped, tag = 'scoped memory for tpu_custom_call.1']
    #allocation23 [shape = 'u8[32768]{0}', space=vmem, size = 0x8000, scoped, tag = 'output window, operand 2, single buffered']
    %29 = vsyncpa [#allocation4], 0
    %30 = vsyncpa [#allocation7], 0
    %31 = vsyncpa [#allocation10], 0
    %32 = vsyncpa [#allocation13], 0
    %33 = vsyncpa [#allocation16], 0
    %34 = vsyncpa [#allocation19], 0
    %35 = vsyncpa [#allocation5], 0
    %36 = vsyncpa [#allocation22], 0
    // Predicated region
    $region2: #{tpu_custom_call.1} parent=1 // pred_check
      _
    $region3: #{tpu_custom_call.1} parent=1 // pred_check_branch
      %38 = sbr.rel (0) target = $region5
    $region4: #{tpu_custom_call.1} parent=1 // pred_region
      _
    $region5: #{tpu_custom_call.1} parent=1 // pred_fallthru
      _
    // Predicated region
    $region6: #{tpu_custom_call.1} parent=1 // pred_check
      _
    $region7: #{tpu_custom_call.1} parent=1 // pred_check_branch
      %40 = sbr.rel (0) target = $region9
    $region8: #{tpu_custom_call.1} parent=1 // pred_region
      _
    $region9: #{tpu_custom_call.1} parent=1 // pred_fallthru
      _
    // Predicated region
    $region10: #{tpu_custom_call.1} parent=1 // pred_check
      _
    $region11: #{tpu_custom_call.1} parent=1 // pred_check_branch
      %42 = sbr.rel (0) target = $region13
    $region12: #{tpu_custom_call.1} parent=1 // pred_region
      %s44 = ssub.s32 128, 128
      %45 = vsyncadd [#allocation4], %s44
      %s46 = sshll.u32 [#allocation3], 4
      %s47 = int_to_ptr.vmem [resolvable:$true] %s46
      %52 = dma.hbm_to_vmem [thread:$0]  %s2, 128, %s47, [#allocation4], 64, 64, 4
    $region13: #{tpu_custom_call.1} parent=1 // pred_fallthru
      _
    // Predicated region
    $region14: #{tpu_custom_call.1} parent=1 // pred_check
      _
    $region15: #{tpu_custom_call.1} parent=1 // pred_check_branch
      %54 = sbr.rel (0) target = $region17
    $region16: #{tpu_custom_call.1} parent=1 // pred_region
      %s56 = ssub.s32 256, 256
      %57 = vsyncadd [#allocation7], %s56
      %s58 = sshll.u32 [#allocation6], 4
      %s59 = int_to_ptr.vmem [resolvable:$true] %s58
      %64 = dma.hbm_to_vmem [thread:$0]  %s3, 256, %s59, [#allocation7], 64, 64, 4
    $region17: #{tpu_custom_call.1} parent=1 // pred_fallthru
      _
    // Predicated region
    $region18: #{tpu_custom_call.1} parent=1 // pred_check
      _
    $region19: #{tpu_custom_call.1} parent=1 // pred_check_branch
      %66 = sbr.rel (0) target = $region21
    $region20: #{tpu_custom_call.1} parent=1 // pred_region
      %s68 = ssub.s32 256, 256
      %69 = vsyncadd [#allocation7], %s68
      %s70 = sshll.u32 [#allocation8], 4
      %s71 = int_to_ptr.vmem [resolvable:$true] %s70
      %76 = dma.hbm_to_vmem [thread:$0]  %s4, 256, %s71, [#allocation7], 64, 64, 4
    $region21: #{tpu_custom_call.1} parent=1 // pred_fallthru
      _
    // Predicated region
    $region22: #{tpu_custom_call.1} parent=1 // pred_check
      _
    $region23: #{tpu_custom_call.1} parent=1 // pred_check_branch
      %78 = sbr.rel (0) target = $region25
    $region24: #{tpu_custom_call.1} parent=1 // pred_region
      %s80 = ssub.s32 256, 256
      %81 = vsyncadd [#allocation10], %s80
      %s82 = sshll.u32 [#allocation9], 4
      %s83 = int_to_ptr.vmem [resolvable:$true] %s82
      %88 = dma.hbm_to_vmem [thread:$0]  %s5, 256, %s83, [#allocation10], 64, 64, 4
    $region25: #{tpu_custom_call.1} parent=1 // pred_fallthru
      _
    // Predicated region
    $region26: #{tpu_custom_call.1} parent=1 // pred_check
      _
    $region27: #{tpu_custom_call.1} parent=1 // pred_check_branch
      %90 = sbr.rel (0) target = $region29
    $region28: #{tpu_custom_call.1} parent=1 // pred_region
      %s92 = ssub.s32 256, 256
      %93 = vsyncadd [#allocation10], %s92
      %s94 = sshll.u32 [#allocation11], 4
      %s95 = int_to_ptr.vmem [resolvable:$true] %s94
      %100 = dma.hbm_to_vmem [thread:$0]  %s6, 256, %s95, [#allocation10], 64, 64, 4
    $region29: #{tpu_custom_call.1} parent=1 // pred_fallthru
      _
    // Predicated region
    $region30: #{tpu_custom_call.1} parent=1 // pred_check
      _
    $region31: #{tpu_custom_call.1} parent=1 // pred_check_branch
      %102 = sbr.rel (0) target = $region33
    $region32: #{tpu_custom_call.1} parent=1 // pred_region
      _
    $region33: #{tpu_custom_call.1} parent=1 // pred_fallthru
      _
    // Predicated region
    $region34: #{tpu_custom_call.1} parent=1 // pred_check
      _
    $region35: #{tpu_custom_call.1} parent=1 // pred_check_branch
      %104 = sbr.rel (0) target = $region37
    $region36: #{tpu_custom_call.1} parent=1 // pred_region
      _
    $region37: #{tpu_custom_call.1} parent=1 // pred_fallthru
      _
    // Predicated region
    $region38: #{tpu_custom_call.1} parent=1 // pred_check
      _
    $region39: #{tpu_custom_call.1} parent=1 // pred_check_branch
      %106 = sbr.rel (0) target = $region41
    $region40: #{tpu_custom_call.1} parent=1 // pred_region
      %s108 = ssub.s32 256, 256
      %109 = vsyncadd [#allocation13], %s108
      %s110 = sshll.u32 [#allocation12], 4
      %s111 = int_to_ptr.vmem [resolvable:$true] %s110
      %116 = dma.hbm_to_vmem [thread:$0]  %s9, 256, %s111, [#allocation13], 64, 64, 4
    $region41: #{tpu_custom_call.1} parent=1 // pred_fallthru
      _
    // Predicated region
    $region42: #{tpu_custom_call.1} parent=1 // pred_check
      _
    $region43: #{tpu_custom_call.1} parent=1 // pred_check_branch
      %118 = sbr.rel (0) target = $region45
    $region44: #{tpu_custom_call.1} parent=1 // pred_region
      %s120 = ssub.s32 256, 256
      %121 = vsyncadd [#allocation13], %s120
      %s122 = sshll.u32 [#allocation14], 4
      %s123 = int_to_ptr.vmem [resolvable:$true] %s122
      %128 = dma.hbm_to_vmem [thread:$0]  %s10, 256, %s123, [#allocation13], 64, 64, 4
    $region45: #{tpu_custom_call.1} parent=1 // pred_fallthru
      _
    // Predicated region
    $region46: #{tpu_custom_call.1} parent=1 // pred_check
      _
    $region47: #{tpu_custom_call.1} parent=1 // pred_check_branch
      %130 = sbr.rel (0) target = $region49
    $region48: #{tpu_custom_call.1} parent=1 // pred_region
      %s132 = ssub.s32 256, 256
      %133 = vsyncadd [#allocation16], %s132
      %s134 = sshll.u32 [#allocation15], 4
      %s135 = int_to_ptr.vmem [resolvable:$true] %s134
      %140 = dma.hbm_to_vmem [thread:$0]  %s11, 256, %s135, [#allocation16], 64, 64, 4
    $region49: #{tpu_custom_call.1} parent=1 // pred_fallthru
      _
    // Predicated region
    $region50: #{tpu_custom_call.1} parent=1 // pred_check
      _
    $region51: #{tpu_custom_call.1} parent=1 // pred_check_branch
      %142 = sbr.rel (0) target = $region53
    $region52: #{tpu_custom_call.1} parent=1 // pred_region
      %s144 = ssub.s32 256, 256
      %145 = vsyncadd [#allocation16], %s144
      %s146 = sshll.u32 [#allocation17], 4
      %s147 = int_to_ptr.vmem [resolvable:$true] %s146
      %152 = dma.hbm_to_vmem [thread:$0]  %s12, 256, %s147, [#allocation16], 64, 64, 4
    $region53: #{tpu_custom_call.1} parent=1 // pred_fallthru
      _
    // Predicated region
    $region54: #{tpu_custom_call.1} parent=1 // pred_check
      _
    $region55: #{tpu_custom_call.1} parent=1 // pred_check_branch
      %154 = sbr.rel (0) target = $region57
    $region56: #{tpu_custom_call.1} parent=1 // pred_region
      _
    $region57: #{tpu_custom_call.1} parent=1 // pred_fallthru
      _
    // Predicated region
    $region58: #{tpu_custom_call.1} parent=1 // pred_check
      _
    $region59: #{tpu_custom_call.1} parent=1 // pred_check_branch
      %156 = sbr.rel (0) target = $region61
    $region60: #{tpu_custom_call.1} parent=1 // pred_region
      _
    $region61: #{tpu_custom_call.1} parent=1 // pred_fallthru
      _
    // Predicated region
    $region62: #{tpu_custom_call.1} parent=1 // pred_check
      _
    $region63: #{tpu_custom_call.1} parent=1 // pred_check_branch
      %158 = sbr.rel (0) target = $region65
    $region64: #{tpu_custom_call.1} parent=1 // pred_region
      %s160 = ssub.s32 256, 256
      %161 = vsyncadd [#allocation19], %s160
      %s162 = sshll.u32 [#allocation18], 4
      %s163 = int_to_ptr.vmem [resolvable:$true] %s162
      %168 = dma.hbm_to_vmem [thread:$0]  %s15, 256, %s163, [#allocation19], 64, 64, 4
    $region65: #{tpu_custom_call.1} parent=1 // pred_fallthru
      _
    // Predicated region
    $region66: #{tpu_custom_call.1} parent=1 // pred_check
      _
    $region67: #{tpu_custom_call.1} parent=1 // pred_check_branch
      %170 = sbr.rel (0) target = $region69
    $region68: #{tpu_custom_call.1} parent=1 // pred_region
      _
    $region69: #{tpu_custom_call.1} parent=1 // pred_fallthru
      _
    // Predicated region
    $region70: #{tpu_custom_call.1} parent=1 // pred_check
      _
    $region71: #{tpu_custom_call.1} parent=1 // pred_check_branch
      %172 = sbr.rel (0) target = $region73
    $region72: #{tpu_custom_call.1} parent=1 // pred_region
      _
    $region73: #{tpu_custom_call.1} parent=1 // pred_fallthru
      _
    // Predicated region
    $region74: #{tpu_custom_call.1} parent=1 // pred_check
      _
    $region75: #{tpu_custom_call.1} parent=1 // pred_check_branch
      %174 = sbr.rel (0) target = $region77
    $region76: #{tpu_custom_call.1} parent=1 // pred_region
      _
    $region77: #{tpu_custom_call.1} parent=1 // pred_fallthru
      _
    // Predicated region
    $region78: #{tpu_custom_call.1} parent=1 // pred_check
      _
    $region79: #{tpu_custom_call.1} parent=1 // pred_check_branch
      %176 = sbr.rel (0) target = $region81
    $region80: #{tpu_custom_call.1} parent=1 // pred_region
      _
    $region81: #{tpu_custom_call.1} parent=1 // pred_fallthru
      _
    // Predicated region
    $region82: #{tpu_custom_call.1} parent=1 // pred_check
      _
    $region83: #{tpu_custom_call.1} parent=1 // pred_check_branch
      %178 = sbr.rel (0) target = $region85
    $region84: #{tpu_custom_call.1} parent=1 // pred_region
      _
    $region85: #{tpu_custom_call.1} parent=1 // pred_fallthru
      _
    // Predicated region
    $region86: #{tpu_custom_call.1} parent=1 // pred_check
      _
    $region87: #{tpu_custom_call.1} parent=1 // pred_check_branch
      %180 = sbr.rel (0) target = $region89
    $region88: #{tpu_custom_call.1} parent=1 // pred_region
      %181 = dma.done [#allocation4], 128
    $region89: #{tpu_custom_call.1} parent=1 // pred_fallthru
      _
    // Predicated region
    $region90: #{tpu_custom_call.1} parent=1 // pred_check
      _
    $region91: #{tpu_custom_call.1} parent=1 // pred_check_branch
      %183 = sbr.rel (0) target = $region93
    $region92: #{tpu_custom_call.1} parent=1 // pred_region
      %184 = dma.done [#allocation7], 256
    $region93: #{tpu_custom_call.1} parent=1 // pred_fallthru
      _
    // Predicated region
    $region94: #{tpu_custom_call.1} parent=1 // pred_check
      _
    $region95: #{tpu_custom_call.1} parent=1 // pred_check_branch
      %186 = sbr.rel (0) target = $region97
    $region96: #{tpu_custom_call.1} parent=1 // pred_region
      %187 = dma.done [#allocation7], 256
    $region97: #{tpu_custom_call.1} parent=1 // pred_fallthru
      _
    // Predicated region
    $region98: #{tpu_custom_call.1} parent=1 // pred_check
      _
    $region99: #{tpu_custom_call.1} parent=1 // pred_check_branch
      %189 = sbr.rel (0) target = $region101
    $region100: #{tpu_custom_call.1} parent=1 // pred_region
      %190 = dma.done [#allocation10], 256
    $region101: #{tpu_custom_call.1} parent=1 // pred_fallthru
      _
    // Predicated region
    $region102: #{tpu_custom_call.1} parent=1 // pred_check
      _
    $region103: #{tpu_custom_call.1} parent=1 // pred_check_branch
      %192 = sbr.rel (0) target = $region105
    $region104: #{tpu_custom_call.1} parent=1 // pred_region
      %193 = dma.done [#allocation10], 256
    $region105: #{tpu_custom_call.1} parent=1 // pred_fallthru
      _
    // Predicated region
    $region106: #{tpu_custom_call.1} parent=1 // pred_check
      _
    $region107: #{tpu_custom_call.1} parent=1 // pred_check_branch
      %195 = sbr.rel (0) target = $region109
    $region108: #{tpu_custom_call.1} parent=1 // pred_region
      %196 = dma.done [#allocation13], 256
    $region109: #{tpu_custom_call.1} parent=1 // pred_fallthru
      _
    // Predicated region
    $region110: #{tpu_custom_call.1} parent=1 // pred_check
      _
    $region111: #{tpu_custom_call.1} parent=1 // pred_check_branch
      %198 = sbr.rel (0) target = $region113
    $region112: #{tpu_custom_call.1} parent=1 // pred_region
      %199 = dma.done [#allocation13], 256
    $region113: #{tpu_custom_call.1} parent=1 // pred_fallthru
      _
    // Predicated region
    $region114: #{tpu_custom_call.1} parent=1 // pred_check
      _
    $region115: #{tpu_custom_call.1} parent=1 // pred_check_branch
      %201 = sbr.rel (0) target = $region117
    $region116: #{tpu_custom_call.1} parent=1 // pred_region
      %202 = dma.done [#allocation16], 256
    $region117: #{tpu_custom_call.1} parent=1 // pred_fallthru
      _
    // Predicated region
    $region118: #{tpu_custom_call.1} parent=1 // pred_check
      _
    $region119: #{tpu_custom_call.1} parent=1 // pred_check_branch
      %204 = sbr.rel (0) target = $region121
    $region120: #{tpu_custom_call.1} parent=1 // pred_region
      %205 = dma.done [#allocation16], 256
    $region121: #{tpu_custom_call.1} parent=1 // pred_fallthru
      _
    // Predicated region
    $region122: #{tpu_custom_call.1} parent=1 // pred_check
      _
    $region123: #{tpu_custom_call.1} parent=1 // pred_check_branch
      %207 = sbr.rel (0) target = $region125
    $region124: #{tpu_custom_call.1} parent=1 // pred_region
      %208 = dma.done [#allocation19], 256
    $region125: #{tpu_custom_call.1} parent=1 // pred_fallthru
      _
    %v210 = vld [vmem:[%s0] sm:$0xff]
    %v211 = vld [vmem:[%s0 + $0x8] sm:$0xff]
    %v212 = vld [vmem:[%s1] sm:$0xff]
    %v213 = vld [vmem:[%s1 + $0x8] sm:$0xff]
    %v214 = vld [vmem:[%s1 + $0x10] sm:$0xff]
    %v215 = vld [vmem:[%s1 + $0x18] sm:$0xff]
    %v216 = vld [vmem:[#allocation3] sm:$0xf]
    %v217 = vld [vmem:[#allocation3 + $0x4] sm:$0xf]
    %v218 = vunpack.c.l.bf16 %v216
    %v219 = vunpack.c.l.bf16 %v217
    %v220 = vld [vmem:[#allocation6] sm:$0xf]
    %v221 = vld [vmem:[#allocation6 + $0x4] sm:$0xf]
    %v222 = vld [vmem:[#allocation6 + $0x8] sm:$0xf]
    %v223 = vld [vmem:[#allocation6 + $0xc] sm:$0xf]
    %v224 = vld [vmem:[#allocation8] sm:$0xf]
    %v225 = vld [vmem:[#allocation8 + $0x4] sm:$0xf]
    %v226 = vld [vmem:[#allocation8 + $0x8] sm:$0xf]
    %v227 = vld [vmem:[#allocation8 + $0xc] sm:$0xf]
    %v228 = vld [vmem:[#allocation9] sm:$0xf]
    %v229 = vld [vmem:[#allocation9 + $0x4] sm:$0xf]
    %v230 = vld [vmem:[#allocation9 + $0x8] sm:$0xf]
    %v231 = vld [vmem:[#allocation9 + $0xc] sm:$0xf]
    %v232 = vld [vmem:[#allocation11] sm:$0xf]
    %v233 = vld [vmem:[#allocation11 + $0x4] sm:$0xf]
    %v234 = vld [vmem:[#allocation11 + $0x8] sm:$0xf]
    %v235 = vld [vmem:[#allocation11 + $0xc] sm:$0xf]
    %v236 = vld [vmem:[%s7] sm:$0x1]
    %v237 = vld [vmem:[%s8] sm:$0x1]
    %v238 = vpack.c.bf16 %v211, %v210
    %v243 = vunpack.c.l.b16 %v220
    %v244 = vunpack.c.l.b16 %v221
    %v245 = vunpack.c.l.b16 %v222
    %v246 = vunpack.c.l.b16 %v223
    %v247 = vpack.c.b16 %v244, %v243
    %v248 = vpack.c.b16 %v246, %v245
    %vm251 = vcmask 261120
    %v253 = vsel %vm251, %v238, 0
    %255 = vmatprep.subr.bf16.mxu0 0
    %256 = vmatpush1.bf16.msra.mxu0 0
    %257 = vmatprep.subr.bf16.mxu0 0
    %258 = vmatpush1.bf16.msra.mxu0 0
    %259 = vmatprep.subr.bf16.mxu0 0
    %260 = vmatpush1.bf16.msra.mxu0 0
    %261 = vmatprep.subr.bf16.mxu0 0
    %262 = vmatpush1.bf16.msra.mxu0 0
    %263 = vmatprep.subr.bf16.mxu0 0
    %264 = vmatpush1.bf16.msra.mxu0 0
    %265 = vmatprep.subr.bf16.mxu0 0
    %266 = vmatpush1.bf16.msra.mxu0 0
    %267 = vmatprep.subr.bf16.mxu0 0
    %268 = vmatpush1.bf16.msra.mxu0 %v248
    %269 = vmatprep.subr.bf16.mxu0 0
    %270 = vmatpush1.bf16.msra.mxu0 %v247
    %271 = vmatprep.subr.bf16.mxu0 0
    %272 = vmatpush2.bf16.msra.mxu0 0
    %273 = vmatprep.subr.bf16.mxu0 0
    %274 = vmatpush2.bf16.msra.mxu0 0
    %275 = vmatprep.subr.bf16.mxu0 0
    %276 = vmatpush2.bf16.msra.mxu0 0
    %277 = vmatprep.subr.bf16.mxu0 0
    %278 = vmatpush2.bf16.msra.mxu0 0
    %279 = vmatprep.subr.bf16.mxu0 0
    %280 = vmatpush2.bf16.msra.mxu0 0
    %281 = vmatprep.subr.bf16.mxu0 0
    %282 = vmatpush2.bf16.msra.mxu0 0
    %283 = vmatprep.subr.bf16.mxu0 0
    %284 = vmatpush2.bf16.msra.mxu0 0
    %285 = vmatprep.subr.bf16.mxu0 0
    %286 = vmatpush2.bf16.msra.mxu0 0
    %287 = vmatprep.mubr.bf16.mxu0 0
    %288 = vmatmul.mubr.bf16.gmra.mxu0 %v253
    %v289 = vpop.f32.mrf.mxu0
    %v290 = vadd.f32 0.0, %v289
    %v291 = vpop.f32.mrf.mxu0
    %v292 = vpop.f32.mrf.mxu0
    %v293 = vadd.f32 0.0, %v292
    %v294 = vpop.f32.mrf.mxu0
    %295 = vdwg.mxu0
    %v296 = vpack.c.bf16 %v293, %v290
    %v301 = vunpack.c.l.b16 %v224
    %v302 = vunpack.c.l.b16 %v225
    %v303 = vunpack.c.l.b16 %v226
    %v304 = vunpack.c.l.b16 %v227
    %v305 = vpack.c.b16 %v302, %v301
    %v306 = vpack.c.b16 %v304, %v303
    %309 = vmatprep.subr.bf16.mxu0 0
    %310 = vmatpush1.bf16.msra.mxu0 0
    %311 = vmatprep.subr.bf16.mxu0 0
    %312 = vmatpush1.bf16.msra.mxu0 0
    %313 = vmatprep.subr.bf16.mxu0 0
    %314 = vmatpush1.bf16.msra.mxu0 0
    %315 = vmatprep.subr.bf16.mxu0 0
    %316 = vmatpush1.bf16.msra.mxu0 0
    %317 = vmatprep.subr.bf16.mxu0 0
    %318 = vmatpush1.bf16.msra.mxu0 0
    %319 = vmatprep.subr.bf16.mxu0 0
    %320 = vmatpush1.bf16.msra.mxu0 0
    %321 = vmatprep.subr.bf16.mxu0 0
    %322 = vmatpush1.bf16.msra.mxu0 %v306
    %323 = vmatprep.subr.bf16.mxu0 0
    %324 = vmatpush1.bf16.msra.mxu0 %v305
    %325 = vmatprep.subr.bf16.mxu0 0
    %326 = vmatpush2.bf16.msra.mxu0 0
    %327 = vmatprep.subr.bf16.mxu0 0
    %328 = vmatpush2.bf16.msra.mxu0 0
    %329 = vmatprep.subr.bf16.mxu0 0
    %330 = vmatpush2.bf16.msra.mxu0 0
    %331 = vmatprep.subr.bf16.mxu0 0
    %332 = vmatpush2.bf16.msra.mxu0 0
    %333 = vmatprep.subr.bf16.mxu0 0
    %334 = vmatpush2.bf16.msra.mxu0 0
    %335 = vmatprep.subr.bf16.mxu0 0
    %336 = vmatpush2.bf16.msra.mxu0 0
    %337 = vmatprep.subr.bf16.mxu0 0
    %338 = vmatpush2.bf16.msra.mxu0 0
    %339 = vmatprep.subr.bf16.mxu0 0
    %340 = vmatpush2.bf16.msra.mxu0 0
    %341 = vmatprep.mubr.bf16.mxu0 0
    %342 = vmatmul.mubr.bf16.gmra.mxu0 %v253
    %v343 = vpop.f32.mrf.mxu0
    %v344 = vadd.f32 0.0, %v343
    %v345 = vpop.f32.mrf.mxu0
    %v346 = vpop.f32.mrf.mxu0
    %v347 = vadd.f32 0.0, %v346
    %v348 = vpop.f32.mrf.mxu0
    %349 = vdwg.mxu0
    %v350 = vpack.c.bf16 %v347, %v344
    %v355 = vunpack.c.l.b16 %v228
    %v356 = vunpack.c.l.b16 %v229
    %v357 = vunpack.c.l.b16 %v230
    %v358 = vunpack.c.l.b16 %v231
    %v359 = vpack.c.b16 %v356, %v355
    %v360 = vpack.c.b16 %v358, %v357
    %363 = vmatprep.subr.bf16.mxu0 0
    %364 = vmatpush1.bf16.msra.mxu0 0
    %365 = vmatprep.subr.bf16.mxu0 0
    %366 = vmatpush1.bf16.msra.mxu0 0
    %367 = vmatprep.subr.bf16.mxu0 0
    %368 = vmatpush1.bf16.msra.mxu0 0
    %369 = vmatprep.subr.bf16.mxu0 0
    %370 = vmatpush1.bf16.msra.mxu0 0
    %371 = vmatprep.subr.bf16.mxu0 0
    %372 = vmatpush1.bf16.msra.mxu0 0
    %373 = vmatprep.subr.bf16.mxu0 0
    %374 = vmatpush1.bf16.msra.mxu0 0
    %375 = vmatprep.subr.bf16.mxu0 0
    %376 = vmatpush1.bf16.msra.mxu0 %v360
    %377 = vmatprep.subr.bf16.mxu0 0
    %378 = vmatpush1.bf16.msra.mxu0 %v359
    %379 = vmatprep.subr.bf16.mxu0 0
    %380 = vmatpush2.bf16.msra.mxu0 0
    %381 = vmatprep.subr.bf16.mxu0 0
    %382 = vmatpush2.bf16.msra.mxu0 0
    %383 = vmatprep.subr.bf16.mxu0 0
    %384 = vmatpush2.bf16.msra.mxu0 0
    %385 = vmatprep.subr.bf16.mxu0 0
    %386 = vmatpush2.bf16.msra.mxu0 0
    %387 = vmatprep.subr.bf16.mxu0 0
    %388 = vmatpush2.bf16.msra.mxu0 0
    %389 = vmatprep.subr.bf16.mxu0 0
    %390 = vmatpush2.bf16.msra.mxu0 0
    %391 = vmatprep.subr.bf16.mxu0 0
    %392 = vmatpush2.bf16.msra.mxu0 0
    %393 = vmatprep.subr.bf16.mxu0 0
    %394 = vmatpush2.bf16.msra.mxu0 0
    %395 = vmatprep.mubr.bf16.mxu0 0
    %396 = vmatmul.mubr.bf16.gmra.mxu0 %v253
    %v397 = vpop.f32.mrf.mxu0
    %v398 = vadd.f32 0.0, %v397
    %v399 = vpop.f32.mrf.mxu0
    %v400 = vpop.f32.mrf.mxu0
    %v401 = vadd.f32 0.0, %v400
    %v402 = vpop.f32.mrf.mxu0
    %403 = vdwg.mxu0
    %v404 = vpack.c.bf16 %v401, %v398
    %vm405 = vcmask 64512
    %v407 = vsel %vm405, %v296, 0
    %v410 = vsel %vm405, %v350, 0
    %412 = vmatprep.subr.bf16.mxu0 0
    %413 = vmatpush1.bf16.xpose.msra.mxu0 0
    %414 = vmatprep.subr.bf16.mxu0 0
    %415 = vmatpush1.bf16.xpose.msra.mxu0 0
    %416 = vmatprep.subr.bf16.mxu0 0
    %417 = vmatpush1.bf16.xpose.msra.mxu0 0
    %418 = vmatprep.subr.bf16.mxu0 0
    %419 = vmatpush1.bf16.xpose.msra.mxu0 0
    %420 = vmatprep.subr.bf16.mxu0 0
    %421 = vmatpush1.bf16.xpose.msra.mxu0 0
    %422 = vmatprep.subr.bf16.mxu0 0
    %423 = vmatpush1.bf16.xpose.msra.mxu0 0
    %424 = vmatprep.subr.bf16.mxu0 0
    %425 = vmatpush1.bf16.xpose.msra.mxu0 0
    %426 = vmatprep.subr.bf16.mxu0 0
    %427 = vmatpush1.bf16.xpose.msra.mxu0 %v410
    %428 = vmatprep.subr.bf16.mxu0 0
    %429 = vmatpush2.bf16.xpose.msra.mxu0 0
    %430 = vmatprep.subr.bf16.mxu0 0
    %431 = vmatpush2.bf16.xpose.msra.mxu0 0
    %432 = vmatprep.subr.bf16.mxu0 0
    %433 = vmatpush2.bf16.xpose.msra.mxu0 0
    %434 = vmatprep.subr.bf16.mxu0 0
    %435 = vmatpush2.bf16.xpose.msra.mxu0 0
    %436 = vmatprep.subr.bf16.mxu0 0
    %437 = vmatpush2.bf16.xpose.msra.mxu0 0
    %438 = vmatprep.subr.bf16.mxu0 0
    %439 = vmatpush2.bf16.xpose.msra.mxu0 0
    %440 = vmatprep.subr.bf16.mxu0 0
    %441 = vmatpush2.bf16.xpose.msra.mxu0 0
    %442 = vmatprep.subr.bf16.mxu0 0
    %443 = vmatpush2.bf16.xpose.msra.mxu0 0
    %444 = vmatprep.mubr.bf16.mxu0 0
    %445 = vmatmul.mubr.bf16.gmra.mxu0 %v407
    %v446 = vpop.f32.mrf.mxu0
    %v447 = vadd.f32 0.0, %v446
    %v448 = vpop.f32.mrf.mxu0
    %v449 = vpop.f32.mrf.mxu0
    %v450 = vpop.f32.mrf.mxu0
    %451 = vdwg.mxu0
    %v452 = vmul.f32 %v447, 0.35355338
    %v453 = vadd.f32 %v452, %v218
    %v454 = vsel %vm405, %v453, -inf
    %455 = vmax.xlane.f32.xlu0 %v454
    %v456 = vpop.xlane.xlu0 %455
    %v457 = vsub.f32 %v453, %v456
    %v458 = vmul.f32 %v457, 1.442695
    %v459 = vpow.pop %v458
    %v460 = vsel %vm405, %v459, 0.0
    %461 = vadd.xlane.f32.xlu0 %v460
    %v462 = vpop.xlane.xlu0 %461
    %v463 = vrcp.pop %v462
    %v464 = vmul.f32 %v459, %v463
    %465 = vst.msk [vmem:[#allocation21] sm:$0xff] %vm405, %v464
    %v466 = vpack.c.bf16 %v464, %v464
    %v468 = vsel %vm405, %v466, 0
    %vm470 = vcmask 1043456
    %v472 = vsel %vm470, %v404, 0
    %474 = vmatprep.subr.bf16.mxu0 0
    %475 = vmatpush1.bf16.msra.mxu0 0
    %476 = vmatprep.subr.bf16.mxu0 0
    %477 = vmatpush1.bf16.msra.mxu0 0
    %478 = vmatprep.subr.bf16.mxu0 0
    %479 = vmatpush1.bf16.msra.mxu0 0
    %480 = vmatprep.subr.bf16.mxu0 0
    %481 = vmatpush1.bf16.msra.mxu0 0
    %482 = vmatprep.subr.bf16.mxu0 0
    %483 = vmatpush1.bf16.msra.mxu0 0
    %484 = vmatprep.subr.bf16.mxu0 0
    %485 = vmatpush1.bf16.msra.mxu0 0
    %486 = vmatprep.subr.bf16.mxu0 0
    %487 = vmatpush1.bf16.msra.mxu0 0
    %488 = vmatprep.subr.bf16.mxu0 0
    %489 = vmatpush1.bf16.msra.mxu0 %v472
    %490 = vmatprep.subr.bf16.mxu0 0
    %491 = vmatpush2.bf16.msra.mxu0 0
    %492 = vmatprep.subr.bf16.mxu0 0
    %493 = vmatpush2.bf16.msra.mxu0 0
    %494 = vmatprep.subr.bf16.mxu0 0
    %495 = vmatpush2.bf16.msra.mxu0 0
    %496 = vmatprep.subr.bf16.mxu0 0
    %497 = vmatpush2.bf16.msra.mxu0 0
    %498 = vmatprep.subr.bf16.mxu0 0
    %499 = vmatpush2.bf16.msra.mxu0 0
    %500 = vmatprep.subr.bf16.mxu0 0
    %501 = vmatpush2.bf16.msra.mxu0 0
    %502 = vmatprep.subr.bf16.mxu0 0
    %503 = vmatpush2.bf16.msra.mxu0 0
    %504 = vmatprep.subr.bf16.mxu0 0
    %505 = vmatpush2.bf16.msra.mxu0 0
    %506 = vmatprep.mubr.bf16.mxu0 0
    %507 = vmatmul.mubr.bf16.gmra.mxu0 %v468
    %v508 = vpop.f32.mrf.mxu0
    %v509 = vadd.f32 0.0, %v508
    %v510 = vpop.f32.mrf.mxu0
    %v511 = vpop.f32.mrf.mxu0
    %v512 = vpop.f32.mrf.mxu0
    %513 = vdwg.mxu0
    %515 = vrot.lane.b32.xlu0 %v296, 120
    %v516 = vpop.permute.xlu0 %515
    %518 = vrot.lane.b32.xlu0 %v350, 120
    %v519 = vpop.permute.xlu0 %518
    %v521 = vsel %vm405, %v516, 0
    %v524 = vsel %vm405, %v519, 0
    %526 = vmatprep.subr.bf16.mxu0 0
    %527 = vmatpush1.bf16.xpose.msra.mxu0 0
    %528 = vmatprep.subr.bf16.mxu0 0
    %529 = vmatpush1.bf16.xpose.msra.mxu0 0
    %530 = vmatprep.subr.bf16.mxu0 0
    %531 = vmatpush1.bf16.xpose.msra.mxu0 0
    %532 = vmatprep.subr.bf16.mxu0 0
    %533 = vmatpush1.bf16.xpose.msra.mxu0 0
    %534 = vmatprep.subr.bf16.mxu0 0
    %535 = vmatpush1.bf16.xpose.msra.mxu0 0
    %536 = vmatprep.subr.bf16.mxu0 0
    %537 = vmatpush1.bf16.xpose.msra.mxu0 0
    %538 = vmatprep.subr.bf16.mxu0 0
    %539 = vmatpush1.bf16.xpose.msra.mxu0 0
    %540 = vmatprep.subr.bf16.mxu0 0
    %541 = vmatpush1.bf16.xpose.msra.mxu0 %v524
    %542 = vmatprep.subr.bf16.mxu0 0
    %543 = vmatpush2.bf16.xpose.msra.mxu0 0
    %544 = vmatprep.subr.bf16.mxu0 0
    %545 = vmatpush2.bf16.xpose.msra.mxu0 0
    %546 = vmatprep.subr.bf16.mxu0 0
    %547 = vmatpush2.bf16.xpose.msra.mxu0 0
    %548 = vmatprep.subr.bf16.mxu0 0
    %549 = vmatpush2.bf16.xpose.msra.mxu0 0
    %550 = vmatprep.subr.bf16.mxu0 0
    %551 = vmatpush2.bf16.xpose.msra.mxu0 0
    %552 = vmatprep.subr.bf16.mxu0 0
    %553 = vmatpush2.bf16.xpose.msra.mxu0 0
    %554 = vmatprep.subr.bf16.mxu0 0
    %555 = vmatpush2.bf16.xpose.msra.mxu0 0
    %556 = vmatprep.subr.bf16.mxu0 0
    %557 = vmatpush2.bf16.xpose.msra.mxu0 0
    %558 = vmatprep.mubr.bf16.mxu0 0
    %559 = vmatmul.mubr.bf16.gmra.mxu0 %v521
    %v560 = vpop.f32.mrf.mxu0
    %v561 = vadd.f32 0.0, %v560
    %v562 = vpop.f32.mrf.mxu0
    %v563 = vpop.f32.mrf.mxu0
    %v564 = vpop.f32.mrf.mxu0
    %565 = vdwg.mxu0
    %v566 = vmul.f32 %v561, 0.35355338
    %v567 = vadd.f32 %v566, %v218
    %v568 = vsel %vm405, %v567, -inf
    %569 = vmax.xlane.f32.xlu0 %v568
    %v570 = vpop.xlane.xlu0 %569
    %v571 = vsub.f32 %v567, %v570
    %v572 = vmul.f32 %v571, 1.442695
    %v573 = vpow.pop %v572
    %v574 = vsel %vm405, %v573, 0.0
    %575 = vadd.xlane.f32.xlu0 %v574
    %v576 = vpop.xlane.xlu0 %575
    %v577 = vrcp.pop %v576
    %v578 = vmul.f32 %v573, %v577
    %s579 = scalar_lea.vmem [#allocation21], 8
    %580 = vst.msk [vmem:[%s579] sm:$0xff] %vm405, %v578
    %v581 = vpack.c.bf16 %v578, %v578
    %583 = vrot.lane.b32.xlu0 %v404, 120
    %v584 = vpop.permute.xlu0 %583
    %v586 = vsel %vm405, %v581, 0
    %v589 = vsel %vm470, %v584, 0
    %591 = vmatprep.subr.bf16.mxu0 0
    %592 = vmatpush1.bf16.msra.mxu0 0
    %593 = vmatprep.subr.bf16.mxu0 0
    %594 = vmatpush1.bf16.msra.mxu0 0
    %595 = vmatprep.subr.bf16.mxu0 0
    %596 = vmatpush1.bf16.msra.mxu0 0
    %597 = vmatprep.subr.bf16.mxu0 0
    %598 = vmatpush1.bf16.msra.mxu0 0
    %599 = vmatprep.subr.bf16.mxu0 0
    %600 = vmatpush1.bf16.msra.mxu0 0
    %601 = vmatprep.subr.bf16.mxu0 0
    %602 = vmatpush1.bf16.msra.mxu0 0
    %603 = vmatprep.subr.bf16.mxu0 0
    %604 = vmatpush1.bf16.msra.mxu0 0
    %605 = vmatprep.subr.bf16.mxu0 0
    %606 = vmatpush1.bf16.msra.mxu0 %v589
    %607 = vmatprep.subr.bf16.mxu0 0
    %608 = vmatpush2.bf16.msra.mxu0 0
    %609 = vmatprep.subr.bf16.mxu0 0
    %610 = vmatpush2.bf16.msra.mxu0 0
    %611 = vmatprep.subr.bf16.mxu0 0
    %612 = vmatpush2.bf16.msra.mxu0 0
    %613 = vmatprep.subr.bf16.mxu0 0
    %614 = vmatpush2.bf16.msra.mxu0 0
    %615 = vmatprep.subr.bf16.mxu0 0
    %616 = vmatpush2.bf16.msra.mxu0 0
    %617 = vmatprep.subr.bf16.mxu0 0
    %618 = vmatpush2.bf16.msra.mxu0 0
    %619 = vmatprep.subr.bf16.mxu0 0
    %620 = vmatpush2.bf16.msra.mxu0 0
    %621 = vmatprep.subr.bf16.mxu0 0
    %622 = vmatpush2.bf16.msra.mxu0 0
    %623 = vmatprep.mubr.bf16.mxu0 0
    %624 = vmatmul.mubr.bf16.gmra.mxu0 %v586
    %v625 = vpop.f32.mrf.mxu0
    %v626 = vadd.f32 0.0, %v625
    %v627 = vpop.f32.mrf.mxu0
    %v628 = vpop.f32.mrf.mxu0
    %v629 = vpop.f32.mrf.mxu0
    %630 = vdwg.mxu0
    %631 = vrot.lane.b32.xlu0 %v296, 112
    %v632 = vpop.permute.xlu0 %631
    %633 = vrot.lane.b32.xlu0 %v350, 112
    %v634 = vpop.permute.xlu0 %633
    %v636 = vsel %vm405, %v632, 0
    %v639 = vsel %vm405, %v634, 0
    %641 = vmatprep.subr.bf16.mxu0 0
    %642 = vmatpush1.bf16.xpose.msra.mxu0 0
    %643 = vmatprep.subr.bf16.mxu0 0
    %644 = vmatpush1.bf16.xpose.msra.mxu0 0
    %645 = vmatprep.subr.bf16.mxu0 0
    %646 = vmatpush1.bf16.xpose.msra.mxu0 0
    %647 = vmatprep.subr.bf16.mxu0 0
    %648 = vmatpush1.bf16.xpose.msra.mxu0 0
    %649 = vmatprep.subr.bf16.mxu0 0
    %650 = vmatpush1.bf16.xpose.msra.mxu0 0
    %651 = vmatprep.subr.bf16.mxu0 0
    %652 = vmatpush1.bf16.xpose.msra.mxu0 0
    %653 = vmatprep.subr.bf16.mxu0 0
    %654 = vmatpush1.bf16.xpose.msra.mxu0 0
    %655 = vmatprep.subr.bf16.mxu0 0
    %656 = vmatpush1.bf16.xpose.msra.mxu0 %v639
    %657 = vmatprep.subr.bf16.mxu0 0
    %658 = vmatpush2.bf16.xpose.msra.mxu0 0
    %659 = vmatprep.subr.bf16.mxu0 0
    %660 = vmatpush2.bf16.xpose.msra.mxu0 0
    %661 = vmatprep.subr.bf16.mxu0 0
    %662 = vmatpush2.bf16.xpose.msra.mxu0 0
    %663 = vmatprep.subr.bf16.mxu0 0
    %664 = vmatpush2.bf16.xpose.msra.mxu0 0
    %665 = vmatprep.subr.bf16.mxu0 0
    %666 = vmatpush2.bf16.xpose.msra.mxu0 0
    %667 = vmatprep.subr.bf16.mxu0 0
    %668 = vmatpush2.bf16.xpose.msra.mxu0 0
    %669 = vmatprep.subr.bf16.mxu0 0
    %670 = vmatpush2.bf16.xpose.msra.mxu0 0
    %671 = vmatprep.subr.bf16.mxu0 0
    %672 = vmatpush2.bf16.xpose.msra.mxu0 0
    %673 = vmatprep.mubr.bf16.mxu0 0
    %674 = vmatmul.mubr.bf16.gmra.mxu0 %v636
    %v675 = vpop.f32.mrf.mxu0
    %v676 = vadd.f32 0.0, %v675
    %v677 = vpop.f32.mrf.mxu0
    %v678 = vpop.f32.mrf.mxu0
    %v679 = vpop.f32.mrf.mxu0
    %680 = vdwg.mxu0
    %v681 = vmul.f32 %v676, 0.35355338
    %v682 = vadd.f32 %v681, %v218
    %v683 = vsel %vm405, %v682, -inf
    %684 = vmax.xlane.f32.xlu0 %v683
    %v685 = vpop.xlane.xlu0 %684
    %v686 = vsub.f32 %v682, %v685
    %v687 = vmul.f32 %v686, 1.442695
    %v688 = vpow.pop %v687
    %v689 = vsel %vm405, %v688, 0.0
    %690 = vadd.xlane.f32.xlu0 %v689
    %v691 = vpop.xlane.xlu0 %690
    %v692 = vrcp.pop %v691
    %v693 = vmul.f32 %v688, %v692
    %s694 = scalar_lea.vmem [#allocation21], 16
    %695 = vst.msk [vmem:[%s694] sm:$0xff] %vm405, %v693
    %v696 = vpack.c.bf16 %v693, %v693
    %697 = vrot.lane.b32.xlu0 %v404, 112
    %v698 = vpop.permute.xlu0 %697
    %v700 = vsel %vm405, %v696, 0
    %v703 = vsel %vm470, %v698, 0
    %705 = vmatprep.subr.bf16.mxu0 0
    %706 = vmatpush1.bf16.msra.mxu0 0
    %707 = vmatprep.subr.bf16.mxu0 0
    %708 = vmatpush1.bf16.msra.mxu0 0
    %709 = vmatprep.subr.bf16.mxu0 0
    %710 = vmatpush1.bf16.msra.mxu0 0
    %711 = vmatprep.subr.bf16.mxu0 0
    %712 = vmatpush1.bf16.msra.mxu0 0
    %713 = vmatprep.subr.bf16.mxu0 0
    %714 = vmatpush1.bf16.msra.mxu0 0
    %715 = vmatprep.subr.bf16.mxu0 0
    %716 = vmatpush1.bf16.msra.mxu0 0
    %717 = vmatprep.subr.bf16.mxu0 0
    %718 = vmatpush1.bf16.msra.mxu0 0
    %719 = vmatprep.subr.bf16.mxu0 0
    %720 = vmatpush1.bf16.msra.mxu0 %v703
    %721 = vmatprep.subr.bf16.mxu0 0
    %722 = vmatpush2.bf16.msra.mxu0 0
    %723 = vmatprep.subr.bf16.mxu0 0
    %724 = vmatpush2.bf16.msra.mxu0 0
    %725 = vmatprep.subr.bf16.mxu0 0
    %726 = vmatpush2.bf16.msra.mxu0 0
    %727 = vmatprep.subr.bf16.mxu0 0
    %728 = vmatpush2.bf16.msra.mxu0 0
    %729 = vmatprep.subr.bf16.mxu0 0
    %730 = vmatpush2.bf16.msra.mxu0 0
    %731 = vmatprep.subr.bf16.mxu0 0
    %732 = vmatpush2.bf16.msra.mxu0 0
    %733 = vmatprep.subr.bf16.mxu0 0
    %734 = vmatpush2.bf16.msra.mxu0 0
    %735 = vmatprep.subr.bf16.mxu0 0
    %736 = vmatpush2.bf16.msra.mxu0 0
    %737 = vmatprep.mubr.bf16.mxu0 0
    %738 = vmatmul.mubr.bf16.gmra.mxu0 %v700
    %v739 = vpop.f32.mrf.mxu0
    %v740 = vadd.f32 0.0, %v739
    %v741 = vpop.f32.mrf.mxu0
    %v742 = vpop.f32.mrf.mxu0
    %v743 = vpop.f32.mrf.mxu0
    %744 = vdwg.mxu0
    %745 = vrot.lane.b32.xlu0 %v296, 104
    %v746 = vpop.permute.xlu0 %745
    %747 = vrot.lane.b32.xlu0 %v350, 104
    %v748 = vpop.permute.xlu0 %747
    %v750 = vsel %vm405, %v746, 0
    %v753 = vsel %vm405, %v748, 0
    %755 = vmatprep.subr.bf16.mxu0 0
    %756 = vmatpush1.bf16.xpose.msra.mxu0 0
    %757 = vmatprep.subr.bf16.mxu0 0
    %758 = vmatpush1.bf16.xpose.msra.mxu0 0
    %759 = vmatprep.subr.bf16.mxu0 0
    %760 = vmatpush1.bf16.xpose.msra.mxu0 0
    %761 = vmatprep.subr.bf16.mxu0 0
    %762 = vmatpush1.bf16.xpose.msra.mxu0 0
    %763 = vmatprep.subr.bf16.mxu0 0
    %764 = vmatpush1.bf16.xpose.msra.mxu0 0
    %765 = vmatprep.subr.bf16.mxu0 0
    %766 = vmatpush1.bf16.xpose.msra.mxu0 0
    %767 = vmatprep.subr.bf16.mxu0 0
    %768 = vmatpush1.bf16.xpose.msra.mxu0 0
    %769 = vmatprep.subr.bf16.mxu0 0
    %770 = vmatpush1.bf16.xpose.msra.mxu0 %v753
    %771 = vmatprep.subr.bf16.mxu0 0
    %772 = vmatpush2.bf16.xpose.msra.mxu0 0
    %773 = vmatprep.subr.bf16.mxu0 0
    %774 = vmatpush2.bf16.xpose.msra.mxu0 0
    %775 = vmatprep.subr.bf16.mxu0 0
    %776 = vmatpush2.bf16.xpose.msra.mxu0 0
    %777 = vmatprep.subr.bf16.mxu0 0
    %778 = vmatpush2.bf16.xpose.msra.mxu0 0
    %779 = vmatprep.subr.bf16.mxu0 0
    %780 = vmatpush2.bf16.xpose.msra.mxu0 0
    %781 = vmatprep.subr.bf16.mxu0 0
    %782 = vmatpush2.bf16.xpose.msra.mxu0 0
    %783 = vmatprep.subr.bf16.mxu0 0
    %784 = vmatpush2.bf16.xpose.msra.mxu0 0
    %785 = vmatprep.subr.bf16.mxu0 0
    %786 = vmatpush2.bf16.xpose.msra.mxu0 0
    %787 = vmatprep.mubr.bf16.mxu0 0
    %788 = vmatmul.mubr.bf16.gmra.mxu0 %v750
    %v789 = vpop.f32.mrf.mxu0
    %v790 = vadd.f32 0.0, %v789
    %v791 = vpop.f32.mrf.mxu0
    %v792 = vpop.f32.mrf.mxu0
    %v793 = vpop.f32.mrf.mxu0
    %794 = vdwg.mxu0
    %v795 = vmul.f32 %v790, 0.35355338
    %v796 = vadd.f32 %v795, %v218
    %v797 = vsel %vm405, %v796, -inf
    %798 = vmax.xlane.f32.xlu0 %v797
    %v799 = vpop.xlane.xlu0 %798
    %v800 = vsub.f32 %v796, %v799
    %v801 = vmul.f32 %v800, 1.442695
    %v802 = vpow.pop %v801
    %v803 = vsel %vm405, %v802, 0.0
    %804 = vadd.xlane.f32.xlu0 %v803
    %v805 = vpop.xlane.xlu0 %804
    %v806 = vrcp.pop %v805
    %v807 = vmul.f32 %v802, %v806
    %s808 = scalar_lea.vmem [#allocation21], 24
    %809 = vst.msk [vmem:[%s808] sm:$0xff] %vm405, %v807
    %v810 = vpack.c.bf16 %v807, %v807
    %811 = vrot.lane.b32.xlu0 %v404, 104
    %v812 = vpop.permute.xlu0 %811
    %v814 = vsel %vm405, %v810, 0
    %v817 = vsel %vm470, %v812, 0
    %819 = vmatprep.subr.bf16.mxu0 0
    %820 = vmatpush1.bf16.msra.mxu0 0
    %821 = vmatprep.subr.bf16.mxu0 0
    %822 = vmatpush1.bf16.msra.mxu0 0
    %823 = vmatprep.subr.bf16.mxu0 0
    %824 = vmatpush1.bf16.msra.mxu0 0
    %825 = vmatprep.subr.bf16.mxu0 0
    %826 = vmatpush1.bf16.msra.mxu0 0
    %827 = vmatprep.subr.bf16.mxu0 0
    %828 = vmatpush1.bf16.msra.mxu0 0
    %829 = vmatprep.subr.bf16.mxu0 0
    %830 = vmatpush1.bf16.msra.mxu0 0
    %831 = vmatprep.subr.bf16.mxu0 0
    %832 = vmatpush1.bf16.msra.mxu0 0
    %833 = vmatprep.subr.bf16.mxu0 0
    %834 = vmatpush1.bf16.msra.mxu0 %v817
    %835 = vmatprep.subr.bf16.mxu0 0
    %836 = vmatpush2.bf16.msra.mxu0 0
    %837 = vmatprep.subr.bf16.mxu0 0
    %838 = vmatpush2.bf16.msra.mxu0 0
    %839 = vmatprep.subr.bf16.mxu0 0
    %840 = vmatpush2.bf16.msra.mxu0 0
    %841 = vmatprep.subr.bf16.mxu0 0
    %842 = vmatpush2.bf16.msra.mxu0 0
    %843 = vmatprep.subr.bf16.mxu0 0
    %844 = vmatpush2.bf16.msra.mxu0 0
    %845 = vmatprep.subr.bf16.mxu0 0
    %846 = vmatpush2.bf16.msra.mxu0 0
    %847 = vmatprep.subr.bf16.mxu0 0
    %848 = vmatpush2.bf16.msra.mxu0 0
    %849 = vmatprep.subr.bf16.mxu0 0
    %850 = vmatpush2.bf16.msra.mxu0 0
    %851 = vmatprep.mubr.bf16.mxu0 0
    %852 = vmatmul.mubr.bf16.gmra.mxu0 %v814
    %v853 = vpop.f32.mrf.mxu0
    %v854 = vadd.f32 0.0, %v853
    %v855 = vpop.f32.mrf.mxu0
    %v856 = vpop.f32.mrf.mxu0
    %v857 = vpop.f32.mrf.mxu0
    %858 = vdwg.mxu0
    %860 = vrot.lane.b32.xlu0 %v626, 8
    %v861 = vpop.permute.xlu0 %860
    %864 = vrot.lane.b32.xlu0 %v740, 16
    %v865 = vpop.permute.xlu0 %864
    %868 = vrot.lane.b32.xlu0 %v854, 24
    %v869 = vpop.permute.xlu0 %868
    %v871 = vsel %vm405, %v509, %v861
    %vm872 = vcmask 130048
    %v873 = vsel %vm872, %v871, %v865
    %vm874 = vcmask 195584
    %v875 = vsel %vm874, %v873, %v869
    %v876 = vpack.c.bf16 %v875, %v875
    %v881 = vunpack.c.l.b16 %v232
    %v882 = vunpack.c.l.b16 %v233
    %v883 = vunpack.c.l.b16 %v234
    %v884 = vunpack.c.l.b16 %v235
    %v885 = vpack.c.b16 %v882, %v881
    %v886 = vpack.c.b16 %v884, %v883
    %v890 = vsel %vm251, %v876, 0
    %892 = vmatprep.subr.bf16.mxu0 0
    %893 = vmatpush1.bf16.msra.mxu0 0
    %894 = vmatprep.subr.bf16.mxu0 0
    %895 = vmatpush1.bf16.msra.mxu0 0
    %896 = vmatprep.subr.bf16.mxu0 0
    %897 = vmatpush1.bf16.msra.mxu0 0
    %898 = vmatprep.subr.bf16.mxu0 0
    %899 = vmatpush1.bf16.msra.mxu0 0
    %900 = vmatprep.subr.bf16.mxu0 0
    %901 = vmatpush1.bf16.msra.mxu0 0
    %902 = vmatprep.subr.bf16.mxu0 0
    %903 = vmatpush1.bf16.msra.mxu0 0
    %904 = vmatprep.subr.bf16.mxu0 0
    %905 = vmatpush1.bf16.msra.mxu0 %v886
    %906 = vmatprep.subr.bf16.mxu0 0
    %907 = vmatpush1.bf16.msra.mxu0 %v885
    %908 = vmatprep.subr.bf16.mxu0 0
    %909 = vmatpush2.bf16.msra.mxu0 0
    %910 = vmatprep.subr.bf16.mxu0 0
    %911 = vmatpush2.bf16.msra.mxu0 0
    %912 = vmatprep.subr.bf16.mxu0 0
    %913 = vmatpush2.bf16.msra.mxu0 0
    %914 = vmatprep.subr.bf16.mxu0 0
    %915 = vmatpush2.bf16.msra.mxu0 0
    %916 = vmatprep.subr.bf16.mxu0 0
    %917 = vmatpush2.bf16.msra.mxu0 0
    %918 = vmatprep.subr.bf16.mxu0 0
    %919 = vmatpush2.bf16.msra.mxu0 0
    %920 = vmatprep.subr.bf16.mxu0 0
    %921 = vmatpush2.bf16.msra.mxu0 0
    %922 = vmatprep.subr.bf16.mxu0 0
    %923 = vmatpush2.bf16.msra.mxu0 0
    %924 = vmatprep.mubr.bf16.mxu0 0
    %925 = vmatmul.mubr.bf16.gmra.mxu0 %v890
    %v926 = vpop.f32.mrf.mxu0
    %v927 = vadd.f32 0.0, %v926
    %v928 = vpop.f32.mrf.mxu0
    %v929 = vpop.f32.mrf.mxu0
    %v930 = vpop.f32.mrf.mxu0
    %931 = vdwg.mxu0
    %932 = vst.msk [vmem:[#allocation2] sm:$0xff] %vm251, %v927
    %v933 = vrot.slane %v296, 4
    %v934 = vrot.slane %v350, 4
    %v936 = vsel %vm405, %v933, 0
    %v939 = vsel %vm405, %v934, 0
    %941 = vmatprep.subr.bf16.mxu0 0
    %942 = vmatpush1.bf16.xpose.msra.mxu0 0
    %943 = vmatprep.subr.bf16.mxu0 0
    %944 = vmatpush1.bf16.xpose.msra.mxu0 0
    %945 = vmatprep.subr.bf16.mxu0 0
    %946 = vmatpush1.bf16.xpose.msra.mxu0 0
    %947 = vmatprep.subr.bf16.mxu0 0
    %948 = vmatpush1.bf16.xpose.msra.mxu0 0
    %949 = vmatprep.subr.bf16.mxu0 0
    %950 = vmatpush1.bf16.xpose.msra.mxu0 0
    %951 = vmatprep.subr.bf16.mxu0 0
    %952 = vmatpush1.bf16.xpose.msra.mxu0 0
    %953 = vmatprep.subr.bf16.mxu0 0
    %954 = vmatpush1.bf16.xpose.msra.mxu0 0
    %955 = vmatprep.subr.bf16.mxu0 0
    %956 = vmatpush1.bf16.xpose.msra.mxu0 %v939
    %957 = vmatprep.subr.bf16.mxu0 0
    %958 = vmatpush2.bf16.xpose.msra.mxu0 0
    %959 = vmatprep.subr.bf16.mxu0 0
    %960 = vmatpush2.bf16.xpose.msra.mxu0 0
    %961 = vmatprep.subr.bf16.mxu0 0
    %962 = vmatpush2.bf16.xpose.msra.mxu0 0
    %963 = vmatprep.subr.bf16.mxu0 0
    %964 = vmatpush2.bf16.xpose.msra.mxu0 0
    %965 = vmatprep.subr.bf16.mxu0 0
    %966 = vmatpush2.bf16.xpose.msra.mxu0 0
    %967 = vmatprep.subr.bf16.mxu0 0
    %968 = vmatpush2.bf16.xpose.msra.mxu0 0
    %969 = vmatprep.subr.bf16.mxu0 0
    %970 = vmatpush2.bf16.xpose.msra.mxu0 0
    %971 = vmatprep.subr.bf16.mxu0 0
    %972 = vmatpush2.bf16.xpose.msra.mxu0 0
    %973 = vmatprep.mubr.bf16.mxu0 0
    %974 = vmatmul.mubr.bf16.gmra.mxu0 %v936
    %v975 = vpop.f32.mrf.mxu0
    %v976 = vadd.f32 0.0, %v975
    %v977 = vpop.f32.mrf.mxu0
    %v978 = vpop.f32.mrf.mxu0
    %v979 = vpop.f32.mrf.mxu0
    %980 = vdwg.mxu0
    %v981 = vmul.f32 %v976, 0.35355338
    %v982 = vadd.f32 %v981, %v219
    %v983 = vsel %vm405, %v982, -inf
    %984 = vmax.xlane.f32.xlu0 %v983
    %v985 = vpop.xlane.xlu0 %984
    %v986 = vsub.f32 %v982, %v985
    %v987 = vmul.f32 %v986, 1.442695
    %v988 = vpow.pop %v987
    %v989 = vsel %vm405, %v988, 0.0
    %990 = vadd.xlane.f32.xlu0 %v989
    %v991 = vpop.xlane.xlu0 %990
    %v992 = vrcp.pop %v991
    %v993 = vmul.f32 %v988, %v992
    %s994 = scalar_lea.vmem [#allocation21], 32
    %995 = vst.msk [vmem:[%s994] sm:$0xff] %vm405, %v993
    %v996 = vpack.c.bf16 %v993, %v993
    %v997 = vrot.slane %v404, 4
    %v999 = vsel %vm405, %v996, 0
    %v1002 = vsel %vm470, %v997, 0
    %1004 = vmatprep.subr.bf16.mxu0 0
    %1005 = vmatpush1.bf16.msra.mxu0 0
    %1006 = vmatprep.subr.bf16.mxu0 0
    %1007 = vmatpush1.bf16.msra.mxu0 0
    %1008 = vmatprep.subr.bf16.mxu0 0
    %1009 = vmatpush1.bf16.msra.mxu0 0
    %1010 = vmatprep.subr.bf16.mxu0 0
    %1011 = vmatpush1.bf16.msra.mxu0 0
    %1012 = vmatprep.subr.bf16.mxu0 0
    %1013 = vmatpush1.bf16.msra.mxu0 0
    %1014 = vmatprep.subr.bf16.mxu0 0
    %1015 = vmatpush1.bf16.msra.mxu0 0
    %1016 = vmatprep.subr.bf16.mxu0 0
    %1017 = vmatpush1.bf16.msra.mxu0 0
    %1018 = vmatprep.subr.bf16.mxu0 0
    %1019 = vmatpush1.bf16.msra.mxu0 %v1002
    %1020 = vmatprep.subr.bf16.mxu0 0
    %1021 = vmatpush2.bf16.msra.mxu0 0
    %1022 = vmatprep.subr.bf16.mxu0 0
    %1023 = vmatpush2.bf16.msra.mxu0 0
    %1024 = vmatprep.subr.bf16.mxu0 0
    %1025 = vmatpush2.bf16.msra.mxu0 0
    %1026 = vmatprep.subr.bf16.mxu0 0
    %1027 = vmatpush2.bf16.msra.mxu0 0
    %1028 = vmatprep.subr.bf16.mxu0 0
    %1029 = vmatpush2.bf16.msra.mxu0 0
    %1030 = vmatprep.subr.bf16.mxu0 0
    %1031 = vmatpush2.bf16.msra.mxu0 0
    %1032 = vmatprep.subr.bf16.mxu0 0
    %1033 = vmatpush2.bf16.msra.mxu0 0
    %1034 = vmatprep.subr.bf16.mxu0 0
    %1035 = vmatpush2.bf16.msra.mxu0 0
    %1036 = vmatprep.mubr.bf16.mxu0 0
    %1037 = vmatmul.mubr.bf16.gmra.mxu0 %v999
    %v1038 = vpop.f32.mrf.mxu0
    %v1039 = vadd.f32 0.0, %v1038
    %v1040 = vpop.f32.mrf.mxu0
    %v1041 = vpop.f32.mrf.mxu0
    %v1042 = vpop.f32.mrf.mxu0
    %1043 = vdwg.mxu0
    %1044 = vrot.lane.b32.xlu0 %v933, 120
    %v1045 = vpop.permute.xlu0 %1044
    %1046 = vrot.lane.b32.xlu0 %v934, 120
    %v1047 = vpop.permute.xlu0 %1046
    %v1049 = vsel %vm405, %v1045, 0
    %v1052 = vsel %vm405, %v1047, 0
    %1054 = vmatprep.subr.bf16.mxu0 0
    %1055 = vmatpush1.bf16.xpose.msra.mxu0 0
    %1056 = vmatprep.subr.bf16.mxu0 0
    %1057 = vmatpush1.bf16.xpose.msra.mxu0 0
    %1058 = vmatprep.subr.bf16.mxu0 0
    %1059 = vmatpush1.bf16.xpose.msra.mxu0 0
    %1060 = vmatprep.subr.bf16.mxu0 0
    %1061 = vmatpush1.bf16.xpose.msra.mxu0 0
    %1062 = vmatprep.subr.bf16.mxu0 0
    %1063 = vmatpush1.bf16.xpose.msra.mxu0 0
    %1064 = vmatprep.subr.bf16.mxu0 0
    %1065 = vmatpush1.bf16.xpose.msra.mxu0 0
    %1066 = vmatprep.subr.bf16.mxu0 0
    %1067 = vmatpush1.bf16.xpose.msra.mxu0 0
    %1068 = vmatprep.subr.bf16.mxu0 0
    %1069 = vmatpush1.bf16.xpose.msra.mxu0 %v1052
    %1070 = vmatprep.subr.bf16.mxu0 0
    %1071 = vmatpush2.bf16.xpose.msra.mxu0 0
    %1072 = vmatprep.subr.bf16.mxu0 0
    %1073 = vmatpush2.bf16.xpose.msra.mxu0 0
    %1074 = vmatprep.subr.bf16.mxu0 0
    %1075 = vmatpush2.bf16.xpose.msra.mxu0 0
    %1076 = vmatprep.subr.bf16.mxu0 0
    %1077 = vmatpush2.bf16.xpose.msra.mxu0 0
    %1078 = vmatprep.subr.bf16.mxu0 0
    %1079 = vmatpush2.bf16.xpose.msra.mxu0 0
    %1080 = vmatprep.subr.bf16.mxu0 0
    %1081 = vmatpush2.bf16.xpose.msra.mxu0 0
    %1082 = vmatprep.subr.bf16.mxu0 0
    %1083 = vmatpush2.bf16.xpose.msra.mxu0 0
    %1084 = vmatprep.subr.bf16.mxu0 0
    %1085 = vmatpush2.bf16.xpose.msra.mxu0 0
    %1086 = vmatprep.mubr.bf16.mxu0 0
    %1087 = vmatmul.mubr.bf16.gmra.mxu0 %v1049
    %v1088 = vpop.f32.mrf.mxu0
    %v1089 = vadd.f32 0.0, %v1088
    %v1090 = vpop.f32.mrf.mxu0
    %v1091 = vpop.f32.mrf.mxu0
    %v1092 = vpop.f32.mrf.mxu0
    %1093 = vdwg.mxu0
    %v1094 = vmul.f32 %v1089, 0.35355338
    %v1095 = vadd.f32 %v1094, %v219
    %v1096 = vsel %vm405, %v1095, -inf
    %1097 = vmax.xlane.f32.xlu0 %v1096
    %v1098 = vpop.xlane.xlu0 %1097
    %v1099 = vsub.f32 %v1095, %v1098
    %v1100 = vmul.f32 %v1099, 1.442695
    %v1101 = vpow.pop %v1100
    %v1102 = vsel %vm405, %v1101, 0.0
    %1103 = vadd.xlane.f32.xlu0 %v1102
    %v1104 = vpop.xlane.xlu0 %1103
    %v1105 = vrcp.pop %v1104
    %v1106 = vmul.f32 %v1101, %v1105
    %s1107 = scalar_lea.vmem [#allocation21], 40
    %1108 = vst.msk [vmem:[%s1107] sm:$0xff] %vm405, %v1106
    %v1109 = vpack.c.bf16 %v1106, %v1106
    %1110 = vrot.lane.b32.xlu0 %v997, 120
    %v1111 = vpop.permute.xlu0 %1110
    %v1113 = vsel %vm405, %v1109, 0
    %v1116 = vsel %vm470, %v1111, 0
    %1118 = vmatprep.subr.bf16.mxu0 0
    %1119 = vmatpush1.bf16.msra.mxu0 0
    %1120 = vmatprep.subr.bf16.mxu0 0
    %1121 = vmatpush1.bf16.msra.mxu0 0
    %1122 = vmatprep.subr.bf16.mxu0 0
    %1123 = vmatpush1.bf16.msra.mxu0 0
    %1124 = vmatprep.subr.bf16.mxu0 0
    %1125 = vmatpush1.bf16.msra.mxu0 0
    %1126 = vmatprep.subr.bf16.mxu0 0
    %1127 = vmatpush1.bf16.msra.mxu0 0
    %1128 = vmatprep.subr.bf16.mxu0 0
    %1129 = vmatpush1.bf16.msra.mxu0 0
    %1130 = vmatprep.subr.bf16.mxu0 0
    %1131 = vmatpush1.bf16.msra.mxu0 0
    %1132 = vmatprep.subr.bf16.mxu0 0
    %1133 = vmatpush1.bf16.msra.mxu0 %v1116
    %1134 = vmatprep.subr.bf16.mxu0 0
    %1135 = vmatpush2.bf16.msra.mxu0 0
    %1136 = vmatprep.subr.bf16.mxu0 0
    %1137 = vmatpush2.bf16.msra.mxu0 0
    %1138 = vmatprep.subr.bf16.mxu0 0
    %1139 = vmatpush2.bf16.msra.mxu0 0
    %1140 = vmatprep.subr.bf16.mxu0 0
    %1141 = vmatpush2.bf16.msra.mxu0 0
    %1142 = vmatprep.subr.bf16.mxu0 0
    %1143 = vmatpush2.bf16.msra.mxu0 0
    %1144 = vmatprep.subr.bf16.mxu0 0
    %1145 = vmatpush2.bf16.msra.mxu0 0
    %1146 = vmatprep.subr.bf16.mxu0 0
    %1147 = vmatpush2.bf16.msra.mxu0 0
    %1148 = vmatprep.subr.bf16.mxu0 0
    %1149 = vmatpush2.bf16.msra.mxu0 0
    %1150 = vmatprep.mubr.bf16.mxu0 0
    %1151 = vmatmul.mubr.bf16.gmra.mxu0 %v1113
    %v1152 = vpop.f32.mrf.mxu0
    %v1153 = vadd.f32 0.0, %v1152
    %v1154 = vpop.f32.mrf.mxu0
    %v1155 = vpop.f32.mrf.mxu0
    %v1156 = vpop.f32.mrf.mxu0
    %1157 = vdwg.mxu0
    %1158 = vrot.lane.b32.xlu0 %v933, 112
    %v1159 = vpop.permute.xlu0 %1158
    %1160 = vrot.lane.b32.xlu0 %v934, 112
    %v1161 = vpop.permute.xlu0 %1160
    %v1163 = vsel %vm405, %v1159, 0
    %v1166 = vsel %vm405, %v1161, 0
    %1168 = vmatprep.subr.bf16.mxu0 0
    %1169 = vmatpush1.bf16.xpose.msra.mxu0 0
    %1170 = vmatprep.subr.bf16.mxu0 0
    %1171 = vmatpush1.bf16.xpose.msra.mxu0 0
    %1172 = vmatprep.subr.bf16.mxu0 0
    %1173 = vmatpush1.bf16.xpose.msra.mxu0 0
    %1174 = vmatprep.subr.bf16.mxu0 0
    %1175 = vmatpush1.bf16.xpose.msra.mxu0 0
    %1176 = vmatprep.subr.bf16.mxu0 0
    %1177 = vmatpush1.bf16.xpose.msra.mxu0 0
    %1178 = vmatprep.subr.bf16.mxu0 0
    %1179 = vmatpush1.bf16.xpose.msra.mxu0 0
    %1180 = vmatprep.subr.bf16.mxu0 0
    %1181 = vmatpush1.bf16.xpose.msra.mxu0 0
    %1182 = vmatprep.subr.bf16.mxu0 0
    %1183 = vmatpush1.bf16.xpose.msra.mxu0 %v1166
    %1184 = vmatprep.subr.bf16.mxu0 0
    %1185 = vmatpush2.bf16.xpose.msra.mxu0 0
    %1186 = vmatprep.subr.bf16.mxu0 0
    %1187 = vmatpush2.bf16.xpose.msra.mxu0 0
    %1188 = vmatprep.subr.bf16.mxu0 0
    %1189 = vmatpush2.bf16.xpose.msra.mxu0 0
    %1190 = vmatprep.subr.bf16.mxu0 0
    %1191 = vmatpush2.bf16.xpose.msra.mxu0 0
    %1192 = vmatprep.subr.bf16.mxu0 0
    %1193 = vmatpush2.bf16.xpose.msra.mxu0 0
    %1194 = vmatprep.subr.bf16.mxu0 0
    %1195 = vmatpush2.bf16.xpose.msra.mxu0 0
    %1196 = vmatprep.subr.bf16.mxu0 0
    %1197 = vmatpush2.bf16.xpose.msra.mxu0 0
    %1198 = vmatprep.subr.bf16.mxu0 0
    %1199 = vmatpush2.bf16.xpose.msra.mxu0 0
    %1200 = vmatprep.mubr.bf16.mxu0 0
    %1201 = vmatmul.mubr.bf16.gmra.mxu0 %v1163
    %v1202 = vpop.f32.mrf.mxu0
    %v1203 = vadd.f32 0.0, %v1202
    %v1204 = vpop.f32.mrf.mxu0
    %v1205 = vpop.f32.mrf.mxu0
    %v1206 = vpop.f32.mrf.mxu0
    %1207 = vdwg.mxu0
    %v1208 = vmul.f32 %v1203, 0.35355338
    %v1209 = vadd.f32 %v1208, %v219
    %v1210 = vsel %vm405, %v1209, -inf
    %1211 = vmax.xlane.f32.xlu0 %v1210
    %v1212 = vpop.xlane.xlu0 %1211
    %v1213 = vsub.f32 %v1209, %v1212
    %v1214 = vmul.f32 %v1213, 1.442695
    %v1215 = vpow.pop %v1214
    %v1216 = vsel %vm405, %v1215, 0.0
    %1217 = vadd.xlane.f32.xlu0 %v1216
    %v1218 = vpop.xlane.xlu0 %1217
    %v1219 = vrcp.pop %v1218
    %v1220 = vmul.f32 %v1215, %v1219
    %s1221 = scalar_lea.vmem [#allocation21], 48
    %1222 = vst.msk [vmem:[%s1221] sm:$0xff] %vm405, %v1220
    %v1223 = vpack.c.bf16 %v1220, %v1220
    %1224 = vrot.lane.b32.xlu0 %v997, 112
    %v1225 = vpop.permute.xlu0 %1224
    %v1227 = vsel %vm405, %v1223, 0
    %v1230 = vsel %vm470, %v1225, 0
    %1232 = vmatprep.subr.bf16.mxu0 0
    %1233 = vmatpush1.bf16.msra.mxu0 0
    %1234 = vmatprep.subr.bf16.mxu0 0
    %1235 = vmatpush1.bf16.msra.mxu0 0
    %1236 = vmatprep.subr.bf16.mxu0 0
    %1237 = vmatpush1.bf16.msra.mxu0 0
    %1238 = vmatprep.subr.bf16.mxu0 0
    %1239 = vmatpush1.bf16.msra.mxu0 0
    %1240 = vmatprep.subr.bf16.mxu0 0
    %1241 = vmatpush1.bf16.msra.mxu0 0
    %1242 = vmatprep.subr.bf16.mxu0 0
    %1243 = vmatpush1.bf16.msra.mxu0 0
    %1244 = vmatprep.subr.bf16.mxu0 0
    %1245 = vmatpush1.bf16.msra.mxu0 0
    %1246 = vmatprep.subr.bf16.mxu0 0
    %1247 = vmatpush1.bf16.msra.mxu0 %v1230
    %1248 = vmatprep.subr.bf16.mxu0 0
    %1249 = vmatpush2.bf16.msra.mxu0 0
    %1250 = vmatprep.subr.bf16.mxu0 0
    %1251 = vmatpush2.bf16.msra.mxu0 0
    %1252 = vmatprep.subr.bf16.mxu0 0
    %1253 = vmatpush2.bf16.msra.mxu0 0
    %1254 = vmatprep.subr.bf16.mxu0 0
    %1255 = vmatpush2.bf16.msra.mxu0 0
    %1256 = vmatprep.subr.bf16.mxu0 0
    %1257 = vmatpush2.bf16.msra.mxu0 0
    %1258 = vmatprep.subr.bf16.mxu0 0
    %1259 = vmatpush2.bf16.msra.mxu0 0
    %1260 = vmatprep.subr.bf16.mxu0 0
    %1261 = vmatpush2.bf16.msra.mxu0 0
    %1262 = vmatprep.subr.bf16.mxu0 0
    %1263 = vmatpush2.bf16.msra.mxu0 0
    %1264 = vmatprep.mubr.bf16.mxu0 0
    %1265 = vmatmul.mubr.bf16.gmra.mxu0 %v1227
    %v1266 = vpop.f32.mrf.mxu0
    %v1267 = vadd.f32 0.0, %v1266
    %v1268 = vpop.f32.mrf.mxu0
    %v1269 = vpop.f32.mrf.mxu0
    %v1270 = vpop.f32.mrf.mxu0
    %1271 = vdwg.mxu0
    %1272 = vrot.lane.b32.xlu0 %v933, 104
    %v1273 = vpop.permute.xlu0 %1272
    %1274 = vrot.lane.b32.xlu0 %v934, 104
    %v1275 = vpop.permute.xlu0 %1274
    %v1277 = vsel %vm405, %v1273, 0
    %v1280 = vsel %vm405, %v1275, 0
    %1282 = vmatprep.subr.bf16.mxu0 0
    %1283 = vmatpush1.bf16.xpose.msra.mxu0 0
    %1284 = vmatprep.subr.bf16.mxu0 0
    %1285 = vmatpush1.bf16.xpose.msra.mxu0 0
    %1286 = vmatprep.subr.bf16.mxu0 0
    %1287 = vmatpush1.bf16.xpose.msra.mxu0 0
    %1288 = vmatprep.subr.bf16.mxu0 0
    %1289 = vmatpush1.bf16.xpose.msra.mxu0 0
    %1290 = vmatprep.subr.bf16.mxu0 0
    %1291 = vmatpush1.bf16.xpose.msra.mxu0 0
    %1292 = vmatprep.subr.bf16.mxu0 0
    %1293 = vmatpush1.bf16.xpose.msra.mxu0 0
    %1294 = vmatprep.subr.bf16.mxu0 0
    %1295 = vmatpush1.bf16.xpose.msra.mxu0 0
    %1296 = vmatprep.subr.bf16.mxu0 0
    %1297 = vmatpush1.bf16.xpose.msra.mxu0 %v1280
    %1298 = vmatprep.subr.bf16.mxu0 0
    %1299 = vmatpush2.bf16.xpose.msra.mxu0 0
    %1300 = vmatprep.subr.bf16.mxu0 0
    %1301 = vmatpush2.bf16.xpose.msra.mxu0 0
    %1302 = vmatprep.subr.bf16.mxu0 0
    %1303 = vmatpush2.bf16.xpose.msra.mxu0 0
    %1304 = vmatprep.subr.bf16.mxu0 0
    %1305 = vmatpush2.bf16.xpose.msra.mxu0 0
    %1306 = vmatprep.subr.bf16.mxu0 0
    %1307 = vmatpush2.bf16.xpose.msra.mxu0 0
    %1308 = vmatprep.subr.bf16.mxu0 0
    %1309 = vmatpush2.bf16.xpose.msra.mxu0 0
    %1310 = vmatprep.subr.bf16.mxu0 0
    %1311 = vmatpush2.bf16.xpose.msra.mxu0 0
    %1312 = vmatprep.subr.bf16.mxu0 0
    %1313 = vmatpush2.bf16.xpose.msra.mxu0 0
    %1314 = vmatprep.mubr.bf16.mxu0 0
    %1315 = vmatmul.mubr.bf16.gmra.mxu0 %v1277
    %v1316 = vpop.f32.mrf.mxu0
    %v1317 = vadd.f32 0.0, %v1316
    %v1318 = vpop.f32.mrf.mxu0
    %v1319 = vpop.f32.mrf.mxu0
    %v1320 = vpop.f32.mrf.mxu0
    %1321 = vdwg.mxu0
    %v1322 = vmul.f32 %v1317, 0.35355338
    %v1323 = vadd.f32 %v1322, %v219
    %v1324 = vsel %vm405, %v1323, -inf
    %1325 = vmax.xlane.f32.xlu0 %v1324
    %v1326 = vpop.xlane.xlu0 %1325
    %v1327 = vsub.f32 %v1323, %v1326
    %v1328 = vmul.f32 %v1327, 1.442695
    %v1329 = vpow.pop %v1328
    %v1330 = vsel %vm405, %v1329, 0.0
    %1331 = vadd.xlane.f32.xlu0 %v1330
    %v1332 = vpop.xlane.xlu0 %1331
    %v1333 = vrcp.pop %v1332
    %v1334 = vmul.f32 %v1329, %v1333
    %s1335 = scalar_lea.vmem [#allocation21], 56
    %1336 = vst.msk [vmem:[%s1335] sm:$0xff] %vm405, %v1334
    %v1337 = vpack.c.bf16 %v1334, %v1334
    %1338 = vrot.lane.b32.xlu0 %v997, 104
    %v1339 = vpop.permute.xlu0 %1338
    %v1341 = vsel %vm405, %v1337, 0
    %v1344 = vsel %vm470, %v1339, 0
    %1346 = vmatprep.subr.bf16.mxu0 0
    %1347 = vmatpush1.bf16.msra.mxu0 0
    %1348 = vmatprep.subr.bf16.mxu0 0
    %1349 = vmatpush1.bf16.msra.mxu0 0
    %1350 = vmatprep.subr.bf16.mxu0 0
    %1351 = vmatpush1.bf16.msra.mxu0 0
    %1352 = vmatprep.subr.bf16.mxu0 0
    %1353 = vmatpush1.bf16.msra.mxu0 0
    %1354 = vmatprep.subr.bf16.mxu0 0
    %1355 = vmatpush1.bf16.msra.mxu0 0
    %1356 = vmatprep.subr.bf16.mxu0 0
    %1357 = vmatpush1.bf16.msra.mxu0 0
    %1358 = vmatprep.subr.bf16.mxu0 0
    %1359 = vmatpush1.bf16.msra.mxu0 0
    %1360 = vmatprep.subr.bf16.mxu0 0
    %1361 = vmatpush1.bf16.msra.mxu0 %v1344
    %1362 = vmatprep.subr.bf16.mxu0 0
    %1363 = vmatpush2.bf16.msra.mxu0 0
    %1364 = vmatprep.subr.bf16.mxu0 0
    %1365 = vmatpush2.bf16.msra.mxu0 0
    %1366 = vmatprep.subr.bf16.mxu0 0
    %1367 = vmatpush2.bf16.msra.mxu0 0
    %1368 = vmatprep.subr.bf16.mxu0 0
    %1369 = vmatpush2.bf16.msra.mxu0 0
    %1370 = vmatprep.subr.bf16.mxu0 0
    %1371 = vmatpush2.bf16.msra.mxu0 0
    %1372 = vmatprep.subr.bf16.mxu0 0
    %1373 = vmatpush2.bf16.msra.mxu0 0
    %1374 = vmatprep.subr.bf16.mxu0 0
    %1375 = vmatpush2.bf16.msra.mxu0 0
    %1376 = vmatprep.subr.bf16.mxu0 0
    %1377 = vmatpush2.bf16.msra.mxu0 0
    %1378 = vmatprep.mubr.bf16.mxu0 0
    %1379 = vmatmul.mubr.bf16.gmra.mxu0 %v1341
    %v1380 = vpop.f32.mrf.mxu0
    %v1381 = vadd.f32 0.0, %v1380
    %v1382 = vpop.f32.mrf.mxu0
    %v1383 = vpop.f32.mrf.mxu0
    %v1384 = vpop.f32.mrf.mxu0
    %1385 = vdwg.mxu0
    %1387 = vrot.lane.b32.xlu0 %v1153, 8
    %v1388 = vpop.permute.xlu0 %1387
    %1391 = vrot.lane.b32.xlu0 %v1267, 16
    %v1392 = vpop.permute.xlu0 %1391
    %1395 = vrot.lane.b32.xlu0 %v1381, 24
    %v1396 = vpop.permute.xlu0 %1395
    %v1398 = vsel %vm405, %v1039, %v1388
    %v1399 = vsel %vm872, %v1398, %v1392
    %v1400 = vsel %vm874, %v1399, %v1396
    %v1401 = vpack.c.bf16 %v1400, %v1400
    %v1403 = vsel %vm251, %v1401, 0
    %1405 = vmatprep.subr.bf16.mxu0 0
    %1406 = vmatpush1.bf16.msra.mxu0 0
    %1407 = vmatprep.subr.bf16.mxu0 0
    %1408 = vmatpush1.bf16.msra.mxu0 0
    %1409 = vmatprep.subr.bf16.mxu0 0
    %1410 = vmatpush1.bf16.msra.mxu0 0
    %1411 = vmatprep.subr.bf16.mxu0 0
    %1412 = vmatpush1.bf16.msra.mxu0 0
    %1413 = vmatprep.subr.bf16.mxu0 0
    %1414 = vmatpush1.bf16.msra.mxu0 0
    %1415 = vmatprep.subr.bf16.mxu0 0
    %1416 = vmatpush1.bf16.msra.mxu0 0
    %1417 = vmatprep.subr.bf16.mxu0 0
    %1418 = vmatpush1.bf16.msra.mxu0 %v886
    %1419 = vmatprep.subr.bf16.mxu0 0
    %1420 = vmatpush1.bf16.msra.mxu0 %v885
    %1421 = vmatprep.subr.bf16.mxu0 0
    %1422 = vmatpush2.bf16.msra.mxu0 0
    %1423 = vmatprep.subr.bf16.mxu0 0
    %1424 = vmatpush2.bf16.msra.mxu0 0
    %1425 = vmatprep.subr.bf16.mxu0 0
    %1426 = vmatpush2.bf16.msra.mxu0 0
    %1427 = vmatprep.subr.bf16.mxu0 0
    %1428 = vmatpush2.bf16.msra.mxu0 0
    %1429 = vmatprep.subr.bf16.mxu0 0
    %1430 = vmatpush2.bf16.msra.mxu0 0
    %1431 = vmatprep.subr.bf16.mxu0 0
    %1432 = vmatpush2.bf16.msra.mxu0 0
    %1433 = vmatprep.subr.bf16.mxu0 0
    %1434 = vmatpush2.bf16.msra.mxu0 0
    %1435 = vmatprep.subr.bf16.mxu0 0
    %1436 = vmatpush2.bf16.msra.mxu0 0
    %1437 = vmatprep.mubr.bf16.mxu0 0
    %1438 = vmatmul.mubr.bf16.gmra.mxu0 %v1403
    %v1439 = vpop.f32.mrf.mxu0
    %v1440 = vadd.f32 0.0, %v1439
    %v1441 = vpop.f32.mrf.mxu0
    %v1442 = vpop.f32.mrf.mxu0
    %v1443 = vpop.f32.mrf.mxu0
    %1444 = vdwg.mxu0
    %1445 = vst.msk [vmem:[#allocation2 + $0x8] sm:$0xff] %vm251, %v1440
    %v1446 = vld [vmem:[#allocation2] sm:$0xff]
    %v1447 = vld [vmem:[#allocation2 + $0x8] sm:$0xff]
    %v1448 = vadd.f32 %v1446, %v210
    %v1449 = vadd.f32 %v1447, %v211
    %v1450 = vsel %vm251, %v1448, 0.0
    %1451 = vadd.xlane.f32.xlu0 %v1450
    %v1452 = vpop.xlane.xlu0 %1451
    %v1453 = vsel %vm251, %v1449, 0.0
    %1454 = vadd.xlane.f32.xlu0 %v1453
    %v1455 = vpop.xlane.xlu0 %1454
    %v1456 = vrcp.pop 32.0
    %v1457 = vmul.f32 %v1452, %v1456
    %v1458 = vmul.f32 %v1455, %v1456
    %v1459 = vmul.f32 %v1448, %v1448
    %v1460 = vmul.f32 %v1449, %v1449
    %v1461 = vsel %vm251, %v1459, 0.0
    %1462 = vadd.xlane.f32.xlu0 %v1461
    %v1463 = vpop.xlane.xlu0 %1462
    %v1464 = vsel %vm251, %v1460, 0.0
    %1465 = vadd.xlane.f32.xlu0 %v1464
    %v1466 = vpop.xlane.xlu0 %1465
    %v1467 = vmul.f32 %v1463, %v1456
    %v1468 = vmul.f32 %v1466, %v1456
    %v1469 = vmul.f32 %v1457, %v1457
    %v1470 = vmul.f32 %v1458, %v1458
    %v1471 = vsub.f32 %v1467, %v1469
    %v1472 = vsub.f32 %v1468, %v1470
    %v1473 = vsub.f32 %v1448, %v1457
    %v1474 = vsub.f32 %v1449, %v1458
    %v1475 = vadd.f32 %v1471, 1e-06
    %v1476 = vadd.f32 %v1472, 1e-06
    %v1477 = vrsqrt.pop %v1475
    %v1478 = vrsqrt.pop %v1476
    %v1479 = vmul.f32 %v1473, %v1477
    %v1480 = vmul.f32 %v1474, %v1478
    %v1482 = vlaneseq
    %v1483 = vshrl.u32 %v1482, 7
    %v1484 = vsub.s32 0, %v1483
    %v1485 = vrot.slane %v236, %v1484
    %v1487 = vmul.f32 %v1479, %v1485
    %v1488 = vmul.f32 %v1480, %v1485
    %v1490 = vlaneseq
    %v1491 = vshrl.u32 %v1490, 7
    %v1492 = vsub.s32 0, %v1491
    %v1493 = vrot.slane %v237, %v1492
    %v1495 = vadd.f32 %v1487, %v1493
    %v1496 = vadd.f32 %v1488, %v1493
    %v1497 = vld [vmem:[#allocation12] sm:$0xf]
    %v1498 = vld [vmem:[#allocation12 + $0x4] sm:$0xf]
    %v1499 = vld [vmem:[#allocation12 + $0x8] sm:$0xf]
    %v1500 = vld [vmem:[#allocation12 + $0xc] sm:$0xf]
    %v1501 = vld [vmem:[#allocation14] sm:$0xf]
    %v1502 = vld [vmem:[#allocation14 + $0x4] sm:$0xf]
    %v1503 = vld [vmem:[#allocation14 + $0x8] sm:$0xf]
    %v1504 = vld [vmem:[#allocation14 + $0xc] sm:$0xf]
    %v1505 = vld [vmem:[#allocation15] sm:$0xf]
    %v1506 = vld [vmem:[#allocation15 + $0x4] sm:$0xf]
    %v1507 = vld [vmem:[#allocation15 + $0x8] sm:$0xf]
    %v1508 = vld [vmem:[#allocation15 + $0xc] sm:$0xf]
    %v1509 = vld [vmem:[#allocation17] sm:$0xf]
    %v1510 = vld [vmem:[#allocation17 + $0x4] sm:$0xf]
    %v1511 = vld [vmem:[#allocation17 + $0x8] sm:$0xf]
    %v1512 = vld [vmem:[#allocation17 + $0xc] sm:$0xf]
    %v1513 = vld [vmem:[%s13] sm:$0x1]
    %v1514 = vld [vmem:[%s14] sm:$0x1]
    %v1515 = vpack.c.bf16 %v1496, %v1495
    %v1520 = vunpack.c.l.b16 %v1497
    %v1521 = vunpack.c.l.b16 %v1498
    %v1522 = vunpack.c.l.b16 %v1499
    %v1523 = vunpack.c.l.b16 %v1500
    %v1524 = vpack.c.b16 %v1521, %v1520
    %v1525 = vpack.c.b16 %v1523, %v1522
    %v1529 = vsel %vm251, %v1515, 0
    %1531 = vmatprep.subr.bf16.mxu0 0
    %1532 = vmatpush1.bf16.msra.mxu0 0
    %1533 = vmatprep.subr.bf16.mxu0 0
    %1534 = vmatpush1.bf16.msra.mxu0 0
    %1535 = vmatprep.subr.bf16.mxu0 0
    %1536 = vmatpush1.bf16.msra.mxu0 0
    %1537 = vmatprep.subr.bf16.mxu0 0
    %1538 = vmatpush1.bf16.msra.mxu0 0
    %1539 = vmatprep.subr.bf16.mxu0 0
    %1540 = vmatpush1.bf16.msra.mxu0 0
    %1541 = vmatprep.subr.bf16.mxu0 0
    %1542 = vmatpush1.bf16.msra.mxu0 0
    %1543 = vmatprep.subr.bf16.mxu0 0
    %1544 = vmatpush1.bf16.msra.mxu0 %v1525
    %1545 = vmatprep.subr.bf16.mxu0 0
    %1546 = vmatpush1.bf16.msra.mxu0 %v1524
    %1547 = vmatprep.subr.bf16.mxu0 0
    %1548 = vmatpush2.bf16.msra.mxu0 0
    %1549 = vmatprep.subr.bf16.mxu0 0
    %1550 = vmatpush2.bf16.msra.mxu0 0
    %1551 = vmatprep.subr.bf16.mxu0 0
    %1552 = vmatpush2.bf16.msra.mxu0 0
    %1553 = vmatprep.subr.bf16.mxu0 0
    %1554 = vmatpush2.bf16.msra.mxu0 0
    %1555 = vmatprep.subr.bf16.mxu0 0
    %1556 = vmatpush2.bf16.msra.mxu0 0
    %1557 = vmatprep.subr.bf16.mxu0 0
    %1558 = vmatpush2.bf16.msra.mxu0 0
    %1559 = vmatprep.subr.bf16.mxu0 0
    %1560 = vmatpush2.bf16.msra.mxu0 0
    %1561 = vmatprep.subr.bf16.mxu0 0
    %1562 = vmatpush2.bf16.msra.mxu0 0
    %1563 = vmatprep.mubr.bf16.mxu0 0
    %1564 = vmatmul.mubr.bf16.gmra.mxu0 %v1529
    %v1565 = vpop.f32.mrf.mxu0
    %v1566 = vadd.f32 0.0, %v1565
    %v1567 = vpop.f32.mrf.mxu0
    %v1568 = vpop.f32.mrf.mxu0
    %v1569 = vadd.f32 0.0, %v1568
    %v1570 = vpop.f32.mrf.mxu0
    %1571 = vdwg.mxu0
    %v1572 = vpack.c.bf16 %v1569, %v1566
    %v1573 = vpack.c.bf16 %v213, %v212
    %v1574 = vpack.c.bf16 %v215, %v214
    %v1579 = vunpack.c.l.b16 %v1501
    %v1580 = vunpack.c.l.b16 %v1502
    %v1581 = vunpack.c.l.b16 %v1503
    %v1582 = vunpack.c.l.b16 %v1504
    %v1583 = vpack.c.b16 %v1580, %v1579
    %v1584 = vpack.c.b16 %v1582, %v1581
    %v1588 = vsel %vm251, %v1573, 0
    %v1591 = vsel %vm251, %v1574, 0
    %1593 = vmatprep.subr.bf16.mxu0 0
    %1594 = vmatpush1.bf16.msra.mxu0 0
    %1595 = vmatprep.subr.bf16.mxu0 0
    %1596 = vmatpush1.bf16.msra.mxu0 0
    %1597 = vmatprep.subr.bf16.mxu0 0
    %1598 = vmatpush1.bf16.msra.mxu0 0
    %1599 = vmatprep.subr.bf16.mxu0 0
    %1600 = vmatpush1.bf16.msra.mxu0 0
    %1601 = vmatprep.subr.bf16.mxu0 0
    %1602 = vmatpush1.bf16.msra.mxu0 0
    %1603 = vmatprep.subr.bf16.mxu0 0
    %1604 = vmatpush1.bf16.msra.mxu0 0
    %1605 = vmatprep.subr.bf16.mxu0 0
    %1606 = vmatpush1.bf16.msra.mxu0 %v1584
    %1607 = vmatprep.subr.bf16.mxu0 0
    %1608 = vmatpush1.bf16.msra.mxu0 %v1583
    %1609 = vmatprep.subr.bf16.mxu0 0
    %1610 = vmatpush2.bf16.msra.mxu0 0
    %1611 = vmatprep.subr.bf16.mxu0 0
    %1612 = vmatpush2.bf16.msra.mxu0 0
    %1613 = vmatprep.subr.bf16.mxu0 0
    %1614 = vmatpush2.bf16.msra.mxu0 0
    %1615 = vmatprep.subr.bf16.mxu0 0
    %1616 = vmatpush2.bf16.msra.mxu0 0
    %1617 = vmatprep.subr.bf16.mxu0 0
    %1618 = vmatpush2.bf16.msra.mxu0 0
    %1619 = vmatprep.subr.bf16.mxu0 0
    %1620 = vmatpush2.bf16.msra.mxu0 0
    %1621 = vmatprep.subr.bf16.mxu0 0
    %1622 = vmatpush2.bf16.msra.mxu0 0
    %1623 = vmatprep.subr.bf16.mxu0 0
    %1624 = vmatpush2.bf16.msra.mxu0 0
    %1625 = vmatprep.mubr.bf16.mxu0 0
    %1626 = vmatmul.mubr.bf16.gmra.mxu0 %v1588
    %v1627 = vpop.f32.mrf.mxu0
    %v1628 = vadd.f32 0.0, %v1627
    %v1629 = vpop.f32.mrf.mxu0
    %v1630 = vpop.f32.mrf.mxu0
    %v1631 = vadd.f32 0.0, %v1630
    %v1632 = vpop.f32.mrf.mxu0
    %1633 = vmatprep.mubr.bf16.mxu0 0
    %1634 = vmatmul.mubr.bf16.gmra.mxu0 %v1591
    %v1635 = vpop.f32.mrf.mxu0
    %v1636 = vadd.f32 0.0, %v1635
    %v1637 = vpop.f32.mrf.mxu0
    %v1638 = vpop.f32.mrf.mxu0
    %v1639 = vadd.f32 0.0, %v1638
    %v1640 = vpop.f32.mrf.mxu0
    %1641 = vdwg.mxu0
    %v1642 = vpack.c.bf16 %v1631, %v1628
    %v1643 = vpack.c.bf16 %v1639, %v1636
    %v1648 = vunpack.c.l.b16 %v1505
    %v1649 = vunpack.c.l.b16 %v1506
    %v1650 = vunpack.c.l.b16 %v1507
    %v1651 = vunpack.c.l.b16 %v1508
    %v1652 = vpack.c.b16 %v1649, %v1648
    %v1653 = vpack.c.b16 %v1651, %v1650
    %1656 = vmatprep.subr.bf16.mxu0 0
    %1657 = vmatpush1.bf16.msra.mxu0 0
    %1658 = vmatprep.subr.bf16.mxu0 0
    %1659 = vmatpush1.bf16.msra.mxu0 0
    %1660 = vmatprep.subr.bf16.mxu0 0
    %1661 = vmatpush1.bf16.msra.mxu0 0
    %1662 = vmatprep.subr.bf16.mxu0 0
    %1663 = vmatpush1.bf16.msra.mxu0 0
    %1664 = vmatprep.subr.bf16.mxu0 0
    %1665 = vmatpush1.bf16.msra.mxu0 0
    %1666 = vmatprep.subr.bf16.mxu0 0
    %1667 = vmatpush1.bf16.msra.mxu0 0
    %1668 = vmatprep.subr.bf16.mxu0 0
    %1669 = vmatpush1.bf16.msra.mxu0 %v1653
    %1670 = vmatprep.subr.bf16.mxu0 0
    %1671 = vmatpush1.bf16.msra.mxu0 %v1652
    %1672 = vmatprep.subr.bf16.mxu0 0
    %1673 = vmatpush2.bf16.msra.mxu0 0
    %1674 = vmatprep.subr.bf16.mxu0 0
    %1675 = vmatpush2.bf16.msra.mxu0 0
    %1676 = vmatprep.subr.bf16.mxu0 0
    %1677 = vmatpush2.bf16.msra.mxu0 0
    %1678 = vmatprep.subr.bf16.mxu0 0
    %1679 = vmatpush2.bf16.msra.mxu0 0
    %1680 = vmatprep.subr.bf16.mxu0 0
    %1681 = vmatpush2.bf16.msra.mxu0 0
    %1682 = vmatprep.subr.bf16.mxu0 0
    %1683 = vmatpush2.bf16.msra.mxu0 0
    %1684 = vmatprep.subr.bf16.mxu0 0
    %1685 = vmatpush2.bf16.msra.mxu0 0
    %1686 = vmatprep.subr.bf16.mxu0 0
    %1687 = vmatpush2.bf16.msra.mxu0 0
    %1688 = vmatprep.mubr.bf16.mxu0 0
    %1689 = vmatmul.mubr.bf16.gmra.mxu0 %v1588
    %v1690 = vpop.f32.mrf.mxu0
    %v1691 = vadd.f32 0.0, %v1690
    %v1692 = vpop.f32.mrf.mxu0
    %v1693 = vpop.f32.mrf.mxu0
    %v1694 = vadd.f32 0.0, %v1693
    %v1695 = vpop.f32.mrf.mxu0
    %1696 = vmatprep.mubr.bf16.mxu0 0
    %1697 = vmatmul.mubr.bf16.gmra.mxu0 %v1591
    %v1698 = vpop.f32.mrf.mxu0
    %v1699 = vadd.f32 0.0, %v1698
    %v1700 = vpop.f32.mrf.mxu0
    %v1701 = vpop.f32.mrf.mxu0
    %v1702 = vadd.f32 0.0, %v1701
    %v1703 = vpop.f32.mrf.mxu0
    %1704 = vdwg.mxu0
    %v1705 = vpack.c.bf16 %v1694, %v1691
    %v1706 = vpack.c.bf16 %v1702, %v1699
    %v1708 = vsel %vm405, %v1572, 0
    %v1711 = vsel %vm405, %v1642, 0
    %1713 = vmatprep.subr.bf16.mxu0 0
    %1714 = vmatpush1.bf16.xpose.msra.mxu0 0
    %1715 = vmatprep.subr.bf16.mxu0 0
    %1716 = vmatpush1.bf16.xpose.msra.mxu0 0
    %1717 = vmatprep.subr.bf16.mxu0 0
    %1718 = vmatpush1.bf16.xpose.msra.mxu0 0
    %1719 = vmatprep.subr.bf16.mxu0 0
    %1720 = vmatpush1.bf16.xpose.msra.mxu0 0
    %1721 = vmatprep.subr.bf16.mxu0 0
    %1722 = vmatpush1.bf16.xpose.msra.mxu0 0
    %1723 = vmatprep.subr.bf16.mxu0 0
    %1724 = vmatpush1.bf16.xpose.msra.mxu0 0
    %1725 = vmatprep.subr.bf16.mxu0 0
    %1726 = vmatpush1.bf16.xpose.msra.mxu0 0
    %1727 = vmatprep.subr.bf16.mxu0 0
    %1728 = vmatpush1.bf16.xpose.msra.mxu0 %v1711
    %1729 = vmatprep.subr.bf16.mxu0 0
    %1730 = vmatpush2.bf16.xpose.msra.mxu0 0
    %1731 = vmatprep.subr.bf16.mxu0 0
    %1732 = vmatpush2.bf16.xpose.msra.mxu0 0
    %1733 = vmatprep.subr.bf16.mxu0 0
    %1734 = vmatpush2.bf16.xpose.msra.mxu0 0
    %1735 = vmatprep.subr.bf16.mxu0 0
    %1736 = vmatpush2.bf16.xpose.msra.mxu0 0
    %1737 = vmatprep.subr.bf16.mxu0 0
    %1738 = vmatpush2.bf16.xpose.msra.mxu0 0
    %1739 = vmatprep.subr.bf16.mxu0 0
    %1740 = vmatpush2.bf16.xpose.msra.mxu0 0
    %1741 = vmatprep.subr.bf16.mxu0 0
    %1742 = vmatpush2.bf16.xpose.msra.mxu0 0
    %1743 = vmatprep.subr.bf16.mxu0 0
    %1744 = vmatpush2.bf16.xpose.msra.mxu0 0
    %1745 = vmatprep.mubr.bf16.mxu0 0
    %1746 = vmatmul.mubr.bf16.gmra.mxu0 %v1708
    %v1747 = vpop.f32.mrf.mxu0
    %v1748 = vadd.f32 0.0, %v1747
    %v1749 = vpop.f32.mrf.mxu0
    %v1750 = vpop.f32.mrf.mxu0
    %v1751 = vpop.f32.mrf.mxu0
    %1752 = vdwg.mxu0
    %v1753 = vmul.f32 %v1748, 0.35355338
    %v1754 = vsel %vm872, %v1753, -inf
    %1755 = vmax.xlane.f32.xlu0 %v1754
    %v1756 = vpop.xlane.xlu0 %1755
    %v1757 = vsub.f32 %v1753, %v1756
    %v1758 = vmul.f32 %v1757, 1.442695
    %v1759 = vpow.pop %v1758
    %v1760 = vsel %vm872, %v1759, 0.0
    %1761 = vadd.xlane.f32.xlu0 %v1760
    %v1762 = vpop.xlane.xlu0 %1761
    %v1763 = vrcp.pop %v1762
    %v1764 = vmul.f32 %v1759, %v1763
    %1765 = vst.msk [vmem:[#allocation23] sm:$0xff] %vm872, %v1764
    %v1766 = vpack.c.bf16 %v1764, %v1764
    %v1768 = vsel %vm872, %v1766, 0
    %1770 = vmatprep.subr.bf16.mxu0 0
    %1771 = vmatpush1.bf16.msra.mxu0 0
    %1772 = vmatprep.subr.bf16.mxu0 0
    %1773 = vmatpush1.bf16.msra.mxu0 0
    %1774 = vmatprep.subr.bf16.mxu0 0
    %1775 = vmatpush1.bf16.msra.mxu0 0
    %1776 = vmatprep.subr.bf16.mxu0 0
    %1777 = vmatpush1.bf16.msra.mxu0 0
    %1778 = vmatprep.subr.bf16.mxu0 0
    %1779 = vmatpush1.bf16.msra.mxu0 0
    %1780 = vmatprep.subr.bf16.mxu0 0
    %1781 = vmatpush1.bf16.msra.mxu0 0
    %1782 = vmatprep.subr.bf16.mxu0 0
    %1783 = vmatpush1.bf16.msra.mxu0 0
    %1784 = vmatprep.subr.bf16.mxu0 0
    %1785 = vmatpush1.bf16.msra.mxu0 %v1705
    %1786 = vmatprep.subr.bf16.mxu0 0
    %1787 = vmatpush2.bf16.msra.mxu0 0
    %1788 = vmatprep.subr.bf16.mxu0 0
    %1789 = vmatpush2.bf16.msra.mxu0 0
    %1790 = vmatprep.subr.bf16.mxu0 0
    %1791 = vmatpush2.bf16.msra.mxu0 0
    %1792 = vmatprep.subr.bf16.mxu0 0
    %1793 = vmatpush2.bf16.msra.mxu0 0
    %1794 = vmatprep.subr.bf16.mxu0 0
    %1795 = vmatpush2.bf16.msra.mxu0 0
    %1796 = vmatprep.subr.bf16.mxu0 0
    %1797 = vmatpush2.bf16.msra.mxu0 0
    %1798 = vmatprep.subr.bf16.mxu0 0
    %1799 = vmatpush2.bf16.msra.mxu0 0
    %1800 = vmatprep.subr.bf16.mxu0 0
    %1801 = vmatpush2.bf16.msra.mxu0 0
    %1802 = vmatprep.mubr.bf16.mxu0 0
    %1803 = vmatmul.mubr.bf16.gmra.mxu0 %v1768
    %v1804 = vpop.f32.mrf.mxu0
    %v1805 = vadd.f32 0.0, %v1804
    %v1806 = vpop.f32.mrf.mxu0
    %v1807 = vpop.f32.mrf.mxu0
    %v1808 = vpop.f32.mrf.mxu0
    %1809 = vdwg.mxu0
    %1811 = vrot.lane.b32.xlu0 %v1572, 120
    %v1812 = vpop.permute.xlu0 %1811
    %1814 = vrot.lane.b32.xlu0 %v1642, 120
    %v1815 = vpop.permute.xlu0 %1814
    %v1817 = vsel %vm405, %v1812, 0
    %v1820 = vsel %vm405, %v1815, 0
    %1822 = vmatprep.subr.bf16.mxu0 0
    %1823 = vmatpush1.bf16.xpose.msra.mxu0 0
    %1824 = vmatprep.subr.bf16.mxu0 0
    %1825 = vmatpush1.bf16.xpose.msra.mxu0 0
    %1826 = vmatprep.subr.bf16.mxu0 0
    %1827 = vmatpush1.bf16.xpose.msra.mxu0 0
    %1828 = vmatprep.subr.bf16.mxu0 0
    %1829 = vmatpush1.bf16.xpose.msra.mxu0 0
    %1830 = vmatprep.subr.bf16.mxu0 0
    %1831 = vmatpush1.bf16.xpose.msra.mxu0 0
    %1832 = vmatprep.subr.bf16.mxu0 0
    %1833 = vmatpush1.bf16.xpose.msra.mxu0 0
    %1834 = vmatprep.subr.bf16.mxu0 0
    %1835 = vmatpush1.bf16.xpose.msra.mxu0 0
    %1836 = vmatprep.subr.bf16.mxu0 0
    %1837 = vmatpush1.bf16.xpose.msra.mxu0 %v1820
    %1838 = vmatprep.subr.bf16.mxu0 0
    %1839 = vmatpush2.bf16.xpose.msra.mxu0 0
    %1840 = vmatprep.subr.bf16.mxu0 0
    %1841 = vmatpush2.bf16.xpose.msra.mxu0 0
    %1842 = vmatprep.subr.bf16.mxu0 0
    %1843 = vmatpush2.bf16.xpose.msra.mxu0 0
    %1844 = vmatprep.subr.bf16.mxu0 0
    %1845 = vmatpush2.bf16.xpose.msra.mxu0 0
    %1846 = vmatprep.subr.bf16.mxu0 0
    %1847 = vmatpush2.bf16.xpose.msra.mxu0 0
    %1848 = vmatprep.subr.bf16.mxu0 0
    %1849 = vmatpush2.bf16.xpose.msra.mxu0 0
    %1850 = vmatprep.subr.bf16.mxu0 0
    %1851 = vmatpush2.bf16.xpose.msra.mxu0 0
    %1852 = vmatprep.subr.bf16.mxu0 0
    %1853 = vmatpush2.bf16.xpose.msra.mxu0 0
    %1854 = vmatprep.mubr.bf16.mxu0 0
    %1855 = vmatmul.mubr.bf16.gmra.mxu0 %v1817
    %v1856 = vpop.f32.mrf.mxu0
    %v1857 = vadd.f32 0.0, %v1856
    %v1858 = vpop.f32.mrf.mxu0
    %v1859 = vpop.f32.mrf.mxu0
    %v1860 = vpop.f32.mrf.mxu0
    %1861 = vdwg.mxu0
    %v1862 = vmul.f32 %v1857, 0.35355338
    %v1863 = vsel %vm872, %v1862, -inf
    %1864 = vmax.xlane.f32.xlu0 %v1863
    %v1865 = vpop.xlane.xlu0 %1864
    %v1866 = vsub.f32 %v1862, %v1865
    %v1867 = vmul.f32 %v1866, 1.442695
    %v1868 = vpow.pop %v1867
    %v1869 = vsel %vm872, %v1868, 0.0
    %1870 = vadd.xlane.f32.xlu0 %v1869
    %v1871 = vpop.xlane.xlu0 %1870
    %v1872 = vrcp.pop %v1871
    %v1873 = vmul.f32 %v1868, %v1872
    %s1874 = scalar_lea.vmem [#allocation23], 8
    %1875 = vst.msk [vmem:[%s1874] sm:$0xff] %vm872, %v1873
    %v1876 = vpack.c.bf16 %v1873, %v1873
    %1878 = vrot.lane.b32.xlu0 %v1705, 120
    %v1879 = vpop.permute.xlu0 %1878
    %v1882 = vsel %vm872, %v1876, 0
    %1884 = vmatprep.subr.bf16.mxu0 0
    %1885 = vmatpush1.bf16.msra.mxu0 0
    %1886 = vmatprep.subr.bf16.mxu0 0
    %1887 = vmatpush1.bf16.msra.mxu0 0
    %1888 = vmatprep.subr.bf16.mxu0 0
    %1889 = vmatpush1.bf16.msra.mxu0 0
    %1890 = vmatprep.subr.bf16.mxu0 0
    %1891 = vmatpush1.bf16.msra.mxu0 0
    %1892 = vmatprep.subr.bf16.mxu0 0
    %1893 = vmatpush1.bf16.msra.mxu0 0
    %1894 = vmatprep.subr.bf16.mxu0 0
    %1895 = vmatpush1.bf16.msra.mxu0 0
    %1896 = vmatprep.subr.bf16.mxu0 0
    %1897 = vmatpush1.bf16.msra.mxu0 0
    %1898 = vmatprep.subr.bf16.mxu0 0
    %1899 = vmatpush1.bf16.msra.mxu0 %v1879
    %1900 = vmatprep.subr.bf16.mxu0 0
    %1901 = vmatpush2.bf16.msra.mxu0 0
    %1902 = vmatprep.subr.bf16.mxu0 0
    %1903 = vmatpush2.bf16.msra.mxu0 0
    %1904 = vmatprep.subr.bf16.mxu0 0
    %1905 = vmatpush2.bf16.msra.mxu0 0
    %1906 = vmatprep.subr.bf16.mxu0 0
    %1907 = vmatpush2.bf16.msra.mxu0 0
    %1908 = vmatprep.subr.bf16.mxu0 0
    %1909 = vmatpush2.bf16.msra.mxu0 0
    %1910 = vmatprep.subr.bf16.mxu0 0
    %1911 = vmatpush2.bf16.msra.mxu0 0
    %1912 = vmatprep.subr.bf16.mxu0 0
    %1913 = vmatpush2.bf16.msra.mxu0 0
    %1914 = vmatprep.subr.bf16.mxu0 0
    %1915 = vmatpush2.bf16.msra.mxu0 0
    %1916 = vmatprep.mubr.bf16.mxu0 0
    %1917 = vmatmul.mubr.bf16.gmra.mxu0 %v1882
    %v1918 = vpop.f32.mrf.mxu0
    %v1919 = vadd.f32 0.0, %v1918
    %v1920 = vpop.f32.mrf.mxu0
    %v1921 = vpop.f32.mrf.mxu0
    %v1922 = vpop.f32.mrf.mxu0
    %1923 = vdwg.mxu0
    %1924 = vrot.lane.b32.xlu0 %v1572, 112
    %v1925 = vpop.permute.xlu0 %1924
    %1926 = vrot.lane.b32.xlu0 %v1642, 112
    %v1927 = vpop.permute.xlu0 %1926
    %v1929 = vsel %vm405, %v1925, 0
    %v1932 = vsel %vm405, %v1927, 0
    %1934 = vmatprep.subr.bf16.mxu0 0
    %1935 = vmatpush1.bf16.xpose.msra.mxu0 0
    %1936 = vmatprep.subr.bf16.mxu0 0
    %1937 = vmatpush1.bf16.xpose.msra.mxu0 0
    %1938 = vmatprep.subr.bf16.mxu0 0
    %1939 = vmatpush1.bf16.xpose.msra.mxu0 0
    %1940 = vmatprep.subr.bf16.mxu0 0
    %1941 = vmatpush1.bf16.xpose.msra.mxu0 0
    %1942 = vmatprep.subr.bf16.mxu0 0
    %1943 = vmatpush1.bf16.xpose.msra.mxu0 0
    %1944 = vmatprep.subr.bf16.mxu0 0
    %1945 = vmatpush1.bf16.xpose.msra.mxu0 0
    %1946 = vmatprep.subr.bf16.mxu0 0
    %1947 = vmatpush1.bf16.xpose.msra.mxu0 0
    %1948 = vmatprep.subr.bf16.mxu0 0
    %1949 = vmatpush1.bf16.xpose.msra.mxu0 %v1932
    %1950 = vmatprep.subr.bf16.mxu0 0
    %1951 = vmatpush2.bf16.xpose.msra.mxu0 0
    %1952 = vmatprep.subr.bf16.mxu0 0
    %1953 = vmatpush2.bf16.xpose.msra.mxu0 0
    %1954 = vmatprep.subr.bf16.mxu0 0
    %1955 = vmatpush2.bf16.xpose.msra.mxu0 0
    %1956 = vmatprep.subr.bf16.mxu0 0
    %1957 = vmatpush2.bf16.xpose.msra.mxu0 0
    %1958 = vmatprep.subr.bf16.mxu0 0
    %1959 = vmatpush2.bf16.xpose.msra.mxu0 0
    %1960 = vmatprep.subr.bf16.mxu0 0
    %1961 = vmatpush2.bf16.xpose.msra.mxu0 0
    %1962 = vmatprep.subr.bf16.mxu0 0
    %1963 = vmatpush2.bf16.xpose.msra.mxu0 0
    %1964 = vmatprep.subr.bf16.mxu0 0
    %1965 = vmatpush2.bf16.xpose.msra.mxu0 0
    %1966 = vmatprep.mubr.bf16.mxu0 0
    %1967 = vmatmul.mubr.bf16.gmra.mxu0 %v1929
    %v1968 = vpop.f32.mrf.mxu0
    %v1969 = vadd.f32 0.0, %v1968
    %v1970 = vpop.f32.mrf.mxu0
    %v1971 = vpop.f32.mrf.mxu0
    %v1972 = vpop.f32.mrf.mxu0
    %1973 = vdwg.mxu0
    %v1974 = vmul.f32 %v1969, 0.35355338
    %v1975 = vsel %vm872, %v1974, -inf
    %1976 = vmax.xlane.f32.xlu0 %v1975
    %v1977 = vpop.xlane.xlu0 %1976
    %v1978 = vsub.f32 %v1974, %v1977
    %v1979 = vmul.f32 %v1978, 1.442695
    %v1980 = vpow.pop %v1979
    %v1981 = vsel %vm872, %v1980, 0.0
    %1982 = vadd.xlane.f32.xlu0 %v1981
    %v1983 = vpop.xlane.xlu0 %1982
    %v1984 = vrcp.pop %v1983
    %v1985 = vmul.f32 %v1980, %v1984
    %s1986 = scalar_lea.vmem [#allocation23], 16
    %1987 = vst.msk [vmem:[%s1986] sm:$0xff] %vm872, %v1985
    %v1988 = vpack.c.bf16 %v1985, %v1985
    %1989 = vrot.lane.b32.xlu0 %v1705, 112
    %v1990 = vpop.permute.xlu0 %1989
    %v1993 = vsel %vm872, %v1988, 0
    %1995 = vmatprep.subr.bf16.mxu0 0
    %1996 = vmatpush1.bf16.msra.mxu0 0
    %1997 = vmatprep.subr.bf16.mxu0 0
    %1998 = vmatpush1.bf16.msra.mxu0 0
    %1999 = vmatprep.subr.bf16.mxu0 0
    %2000 = vmatpush1.bf16.msra.mxu0 0
    %2001 = vmatprep.subr.bf16.mxu0 0
    %2002 = vmatpush1.bf16.msra.mxu0 0
    %2003 = vmatprep.subr.bf16.mxu0 0
    %2004 = vmatpush1.bf16.msra.mxu0 0
    %2005 = vmatprep.subr.bf16.mxu0 0
    %2006 = vmatpush1.bf16.msra.mxu0 0
    %2007 = vmatprep.subr.bf16.mxu0 0
    %2008 = vmatpush1.bf16.msra.mxu0 0
    %2009 = vmatprep.subr.bf16.mxu0 0
    %2010 = vmatpush1.bf16.msra.mxu0 %v1990
    %2011 = vmatprep.subr.bf16.mxu0 0
    %2012 = vmatpush2.bf16.msra.mxu0 0
    %2013 = vmatprep.subr.bf16.mxu0 0
    %2014 = vmatpush2.bf16.msra.mxu0 0
    %2015 = vmatprep.subr.bf16.mxu0 0
    %2016 = vmatpush2.bf16.msra.mxu0 0
    %2017 = vmatprep.subr.bf16.mxu0 0
    %2018 = vmatpush2.bf16.msra.mxu0 0
    %2019 = vmatprep.subr.bf16.mxu0 0
    %2020 = vmatpush2.bf16.msra.mxu0 0
    %2021 = vmatprep.subr.bf16.mxu0 0
    %2022 = vmatpush2.bf16.msra.mxu0 0
    %2023 = vmatprep.subr.bf16.mxu0 0
    %2024 = vmatpush2.bf16.msra.mxu0 0
    %2025 = vmatprep.subr.bf16.mxu0 0
    %2026 = vmatpush2.bf16.msra.mxu0 0
    %2027 = vmatprep.mubr.bf16.mxu0 0
    %2028 = vmatmul.mubr.bf16.gmra.mxu0 %v1993
    %v2029 = vpop.f32.mrf.mxu0
    %v2030 = vadd.f32 0.0, %v2029
    %v2031 = vpop.f32.mrf.mxu0
    %v2032 = vpop.f32.mrf.mxu0
    %v2033 = vpop.f32.mrf.mxu0
    %2034 = vdwg.mxu0
    %2035 = vrot.lane.b32.xlu0 %v1572, 104
    %v2036 = vpop.permute.xlu0 %2035
    %2037 = vrot.lane.b32.xlu0 %v1642, 104
    %v2038 = vpop.permute.xlu0 %2037
    %v2040 = vsel %vm405, %v2036, 0
    %v2043 = vsel %vm405, %v2038, 0
    %2045 = vmatprep.subr.bf16.mxu0 0
    %2046 = vmatpush1.bf16.xpose.msra.mxu0 0
    %2047 = vmatprep.subr.bf16.mxu0 0
    %2048 = vmatpush1.bf16.xpose.msra.mxu0 0
    %2049 = vmatprep.subr.bf16.mxu0 0
    %2050 = vmatpush1.bf16.xpose.msra.mxu0 0
    %2051 = vmatprep.subr.bf16.mxu0 0
    %2052 = vmatpush1.bf16.xpose.msra.mxu0 0
    %2053 = vmatprep.subr.bf16.mxu0 0
    %2054 = vmatpush1.bf16.xpose.msra.mxu0 0
    %2055 = vmatprep.subr.bf16.mxu0 0
    %2056 = vmatpush1.bf16.xpose.msra.mxu0 0
    %2057 = vmatprep.subr.bf16.mxu0 0
    %2058 = vmatpush1.bf16.xpose.msra.mxu0 0
    %2059 = vmatprep.subr.bf16.mxu0 0
    %2060 = vmatpush1.bf16.xpose.msra.mxu0 %v2043
    %2061 = vmatprep.subr.bf16.mxu0 0
    %2062 = vmatpush2.bf16.xpose.msra.mxu0 0
    %2063 = vmatprep.subr.bf16.mxu0 0
    %2064 = vmatpush2.bf16.xpose.msra.mxu0 0
    %2065 = vmatprep.subr.bf16.mxu0 0
    %2066 = vmatpush2.bf16.xpose.msra.mxu0 0
    %2067 = vmatprep.subr.bf16.mxu0 0
    %2068 = vmatpush2.bf16.xpose.msra.mxu0 0
    %2069 = vmatprep.subr.bf16.mxu0 0
    %2070 = vmatpush2.bf16.xpose.msra.mxu0 0
    %2071 = vmatprep.subr.bf16.mxu0 0
    %2072 = vmatpush2.bf16.xpose.msra.mxu0 0
    %2073 = vmatprep.subr.bf16.mxu0 0
    %2074 = vmatpush2.bf16.xpose.msra.mxu0 0
    %2075 = vmatprep.subr.bf16.mxu0 0
    %2076 = vmatpush2.bf16.xpose.msra.mxu0 0
    %2077 = vmatprep.mubr.bf16.mxu0 0
    %2078 = vmatmul.mubr.bf16.gmra.mxu0 %v2040
    %v2079 = vpop.f32.mrf.mxu0
    %v2080 = vadd.f32 0.0, %v2079
    %v2081 = vpop.f32.mrf.mxu0
    %v2082 = vpop.f32.mrf.mxu0
    %v2083 = vpop.f32.mrf.mxu0
    %2084 = vdwg.mxu0
    %v2085 = vmul.f32 %v2080, 0.35355338
    %v2086 = vsel %vm872, %v2085, -inf
    %2087 = vmax.xlane.f32.xlu0 %v2086
    %v2088 = vpop.xlane.xlu0 %2087
    %v2089 = vsub.f32 %v2085, %v2088
    %v2090 = vmul.f32 %v2089, 1.442695
    %v2091 = vpow.pop %v2090
    %v2092 = vsel %vm872, %v2091, 0.0
    %2093 = vadd.xlane.f32.xlu0 %v2092
    %v2094 = vpop.xlane.xlu0 %2093
    %v2095 = vrcp.pop %v2094
    %v2096 = vmul.f32 %v2091, %v2095
    %s2097 = scalar_lea.vmem [#allocation23], 24
    %2098 = vst.msk [vmem:[%s2097] sm:$0xff] %vm872, %v2096
    %v2099 = vpack.c.bf16 %v2096, %v2096
    %2100 = vrot.lane.b32.xlu0 %v1705, 104
    %v2101 = vpop.permute.xlu0 %2100
    %v2104 = vsel %vm872, %v2099, 0
    %2106 = vmatprep.subr.bf16.mxu0 0
    %2107 = vmatpush1.bf16.msra.mxu0 0
    %2108 = vmatprep.subr.bf16.mxu0 0
    %2109 = vmatpush1.bf16.msra.mxu0 0
    %2110 = vmatprep.subr.bf16.mxu0 0
    %2111 = vmatpush1.bf16.msra.mxu0 0
    %2112 = vmatprep.subr.bf16.mxu0 0
    %2113 = vmatpush1.bf16.msra.mxu0 0
    %2114 = vmatprep.subr.bf16.mxu0 0
    %2115 = vmatpush1.bf16.msra.mxu0 0
    %2116 = vmatprep.subr.bf16.mxu0 0
    %2117 = vmatpush1.bf16.msra.mxu0 0
    %2118 = vmatprep.subr.bf16.mxu0 0
    %2119 = vmatpush1.bf16.msra.mxu0 0
    %2120 = vmatprep.subr.bf16.mxu0 0
    %2121 = vmatpush1.bf16.msra.mxu0 %v2101
    %2122 = vmatprep.subr.bf16.mxu0 0
    %2123 = vmatpush2.bf16.msra.mxu0 0
    %2124 = vmatprep.subr.bf16.mxu0 0
    %2125 = vmatpush2.bf16.msra.mxu0 0
    %2126 = vmatprep.subr.bf16.mxu0 0
    %2127 = vmatpush2.bf16.msra.mxu0 0
    %2128 = vmatprep.subr.bf16.mxu0 0
    %2129 = vmatpush2.bf16.msra.mxu0 0
    %2130 = vmatprep.subr.bf16.mxu0 0
    %2131 = vmatpush2.bf16.msra.mxu0 0
    %2132 = vmatprep.subr.bf16.mxu0 0
    %2133 = vmatpush2.bf16.msra.mxu0 0
    %2134 = vmatprep.subr.bf16.mxu0 0
    %2135 = vmatpush2.bf16.msra.mxu0 0
    %2136 = vmatprep.subr.bf16.mxu0 0
    %2137 = vmatpush2.bf16.msra.mxu0 0
    %2138 = vmatprep.mubr.bf16.mxu0 0
    %2139 = vmatmul.mubr.bf16.gmra.mxu0 %v2104
    %v2140 = vpop.f32.mrf.mxu0
    %v2141 = vadd.f32 0.0, %v2140
    %v2142 = vpop.f32.mrf.mxu0
    %v2143 = vpop.f32.mrf.mxu0
    %v2144 = vpop.f32.mrf.mxu0
    %2145 = vdwg.mxu0
    %2147 = vrot.lane.b32.xlu0 %v1919, 8
    %v2148 = vpop.permute.xlu0 %2147
    %2151 = vrot.lane.b32.xlu0 %v2030, 16
    %v2152 = vpop.permute.xlu0 %2151
    %2155 = vrot.lane.b32.xlu0 %v2141, 24
    %v2156 = vpop.permute.xlu0 %2155
    %v2158 = vsel %vm405, %v1805, %v2148
    %v2159 = vsel %vm872, %v2158, %v2152
    %v2160 = vsel %vm874, %v2159, %v2156
    %v2161 = vpack.c.bf16 %v2160, %v2160
    %v2166 = vunpack.c.l.b16 %v1509
    %v2167 = vunpack.c.l.b16 %v1510
    %v2168 = vunpack.c.l.b16 %v1511
    %v2169 = vunpack.c.l.b16 %v1512
    %v2170 = vpack.c.b16 %v2167, %v2166
    %v2171 = vpack.c.b16 %v2169, %v2168
    %v2175 = vsel %vm251, %v2161, 0
    %2177 = vmatprep.subr.bf16.mxu0 0
    %2178 = vmatpush1.bf16.msra.mxu0 0
    %2179 = vmatprep.subr.bf16.mxu0 0
    %2180 = vmatpush1.bf16.msra.mxu0 0
    %2181 = vmatprep.subr.bf16.mxu0 0
    %2182 = vmatpush1.bf16.msra.mxu0 0
    %2183 = vmatprep.subr.bf16.mxu0 0
    %2184 = vmatpush1.bf16.msra.mxu0 0
    %2185 = vmatprep.subr.bf16.mxu0 0
    %2186 = vmatpush1.bf16.msra.mxu0 0
    %2187 = vmatprep.subr.bf16.mxu0 0
    %2188 = vmatpush1.bf16.msra.mxu0 0
    %2189 = vmatprep.subr.bf16.mxu0 0
    %2190 = vmatpush1.bf16.msra.mxu0 %v2171
    %2191 = vmatprep.subr.bf16.mxu0 0
    %2192 = vmatpush1.bf16.msra.mxu0 %v2170
    %2193 = vmatprep.subr.bf16.mxu0 0
    %2194 = vmatpush2.bf16.msra.mxu0 0
    %2195 = vmatprep.subr.bf16.mxu0 0
    %2196 = vmatpush2.bf16.msra.mxu0 0
    %2197 = vmatprep.subr.bf16.mxu0 0
    %2198 = vmatpush2.bf16.msra.mxu0 0
    %2199 = vmatprep.subr.bf16.mxu0 0
    %2200 = vmatpush2.bf16.msra.mxu0 0
    %2201 = vmatprep.subr.bf16.mxu0 0
    %2202 = vmatpush2.bf16.msra.mxu0 0
    %2203 = vmatprep.subr.bf16.mxu0 0
    %2204 = vmatpush2.bf16.msra.mxu0 0
    %2205 = vmatprep.subr.bf16.mxu0 0
    %2206 = vmatpush2.bf16.msra.mxu0 0
    %2207 = vmatprep.subr.bf16.mxu0 0
    %2208 = vmatpush2.bf16.msra.mxu0 0
    %2209 = vmatprep.mubr.bf16.mxu0 0
    %2210 = vmatmul.mubr.bf16.gmra.mxu0 %v2175
    %v2211 = vpop.f32.mrf.mxu0
    %v2212 = vadd.f32 0.0, %v2211
    %v2213 = vpop.f32.mrf.mxu0
    %v2214 = vpop.f32.mrf.mxu0
    %v2215 = vpop.f32.mrf.mxu0
    %2216 = vdwg.mxu0
    %2217 = vst.msk [vmem:[#allocation2] sm:$0xff] %vm251, %v2212
    %v2218 = vrot.slane %v1572, 4
    %v2220 = vsel %vm405, %v2218, 0
    %v2223 = vsel %vm405, %v1643, 0
    %2225 = vmatprep.subr.bf16.mxu0 0
    %2226 = vmatpush1.bf16.xpose.msra.mxu0 0
    %2227 = vmatprep.subr.bf16.mxu0 0
    %2228 = vmatpush1.bf16.xpose.msra.mxu0 0
    %2229 = vmatprep.subr.bf16.mxu0 0
    %2230 = vmatpush1.bf16.xpose.msra.mxu0 0
    %2231 = vmatprep.subr.bf16.mxu0 0
    %2232 = vmatpush1.bf16.xpose.msra.mxu0 0
    %2233 = vmatprep.subr.bf16.mxu0 0
    %2234 = vmatpush1.bf16.xpose.msra.mxu0 0
    %2235 = vmatprep.subr.bf16.mxu0 0
    %2236 = vmatpush1.bf16.xpose.msra.mxu0 0
    %2237 = vmatprep.subr.bf16.mxu0 0
    %2238 = vmatpush1.bf16.xpose.msra.mxu0 0
    %2239 = vmatprep.subr.bf16.mxu0 0
    %2240 = vmatpush1.bf16.xpose.msra.mxu0 %v2223
    %2241 = vmatprep.subr.bf16.mxu0 0
    %2242 = vmatpush2.bf16.xpose.msra.mxu0 0
    %2243 = vmatprep.subr.bf16.mxu0 0
    %2244 = vmatpush2.bf16.xpose.msra.mxu0 0
    %2245 = vmatprep.subr.bf16.mxu0 0
    %2246 = vmatpush2.bf16.xpose.msra.mxu0 0
    %2247 = vmatprep.subr.bf16.mxu0 0
    %2248 = vmatpush2.bf16.xpose.msra.mxu0 0
    %2249 = vmatprep.subr.bf16.mxu0 0
    %2250 = vmatpush2.bf16.xpose.msra.mxu0 0
    %2251 = vmatprep.subr.bf16.mxu0 0
    %2252 = vmatpush2.bf16.xpose.msra.mxu0 0
    %2253 = vmatprep.subr.bf16.mxu0 0
    %2254 = vmatpush2.bf16.xpose.msra.mxu0 0
    %2255 = vmatprep.subr.bf16.mxu0 0
    %2256 = vmatpush2.bf16.xpose.msra.mxu0 0
    %2257 = vmatprep.mubr.bf16.mxu0 0
    %2258 = vmatmul.mubr.bf16.gmra.mxu0 %v2220
    %v2259 = vpop.f32.mrf.mxu0
    %v2260 = vadd.f32 0.0, %v2259
    %v2261 = vpop.f32.mrf.mxu0
    %v2262 = vpop.f32.mrf.mxu0
    %v2263 = vpop.f32.mrf.mxu0
    %2264 = vdwg.mxu0
    %v2265 = vmul.f32 %v2260, 0.35355338
    %v2266 = vsel %vm872, %v2265, -inf
    %2267 = vmax.xlane.f32.xlu0 %v2266
    %v2268 = vpop.xlane.xlu0 %2267
    %v2269 = vsub.f32 %v2265, %v2268
    %v2270 = vmul.f32 %v2269, 1.442695
    %v2271 = vpow.pop %v2270
    %v2272 = vsel %vm872, %v2271, 0.0
    %2273 = vadd.xlane.f32.xlu0 %v2272
    %v2274 = vpop.xlane.xlu0 %2273
    %v2275 = vrcp.pop %v2274
    %v2276 = vmul.f32 %v2271, %v2275
    %s2277 = scalar_lea.vmem [#allocation23], 32
    %2278 = vst.msk [vmem:[%s2277] sm:$0xff] %vm872, %v2276
    %v2279 = vpack.c.bf16 %v2276, %v2276
    %v2281 = vsel %vm872, %v2279, 0
    %2283 = vmatprep.subr.bf16.mxu0 0
    %2284 = vmatpush1.bf16.msra.mxu0 0
    %2285 = vmatprep.subr.bf16.mxu0 0
    %2286 = vmatpush1.bf16.msra.mxu0 0
    %2287 = vmatprep.subr.bf16.mxu0 0
    %2288 = vmatpush1.bf16.msra.mxu0 0
    %2289 = vmatprep.subr.bf16.mxu0 0
    %2290 = vmatpush1.bf16.msra.mxu0 0
    %2291 = vmatprep.subr.bf16.mxu0 0
    %2292 = vmatpush1.bf16.msra.mxu0 0
    %2293 = vmatprep.subr.bf16.mxu0 0
    %2294 = vmatpush1.bf16.msra.mxu0 0
    %2295 = vmatprep.subr.bf16.mxu0 0
    %2296 = vmatpush1.bf16.msra.mxu0 0
    %2297 = vmatprep.subr.bf16.mxu0 0
    %2298 = vmatpush1.bf16.msra.mxu0 %v1706
    %2299 = vmatprep.subr.bf16.mxu0 0
    %2300 = vmatpush2.bf16.msra.mxu0 0
    %2301 = vmatprep.subr.bf16.mxu0 0
    %2302 = vmatpush2.bf16.msra.mxu0 0
    %2303 = vmatprep.subr.bf16.mxu0 0
    %2304 = vmatpush2.bf16.msra.mxu0 0
    %2305 = vmatprep.subr.bf16.mxu0 0
    %2306 = vmatpush2.bf16.msra.mxu0 0
    %2307 = vmatprep.subr.bf16.mxu0 0
    %2308 = vmatpush2.bf16.msra.mxu0 0
    %2309 = vmatprep.subr.bf16.mxu0 0
    %2310 = vmatpush2.bf16.msra.mxu0 0
    %2311 = vmatprep.subr.bf16.mxu0 0
    %2312 = vmatpush2.bf16.msra.mxu0 0
    %2313 = vmatprep.subr.bf16.mxu0 0
    %2314 = vmatpush2.bf16.msra.mxu0 0
    %2315 = vmatprep.mubr.bf16.mxu0 0
    %2316 = vmatmul.mubr.bf16.gmra.mxu0 %v2281
    %v2317 = vpop.f32.mrf.mxu0
    %v2318 = vadd.f32 0.0, %v2317
    %v2319 = vpop.f32.mrf.mxu0
    %v2320 = vpop.f32.mrf.mxu0
    %v2321 = vpop.f32.mrf.mxu0
    %2322 = vdwg.mxu0
    %2323 = vrot.lane.b32.xlu0 %v2218, 120
    %v2324 = vpop.permute.xlu0 %2323
    %2326 = vrot.lane.b32.xlu0 %v1643, 120
    %v2327 = vpop.permute.xlu0 %2326
    %v2329 = vsel %vm405, %v2324, 0
    %v2332 = vsel %vm405, %v2327, 0
    %2334 = vmatprep.subr.bf16.mxu0 0
    %2335 = vmatpush1.bf16.xpose.msra.mxu0 0
    %2336 = vmatprep.subr.bf16.mxu0 0
    %2337 = vmatpush1.bf16.xpose.msra.mxu0 0
    %2338 = vmatprep.subr.bf16.mxu0 0
    %2339 = vmatpush1.bf16.xpose.msra.mxu0 0
    %2340 = vmatprep.subr.bf16.mxu0 0
    %2341 = vmatpush1.bf16.xpose.msra.mxu0 0
    %2342 = vmatprep.subr.bf16.mxu0 0
    %2343 = vmatpush1.bf16.xpose.msra.mxu0 0
    %2344 = vmatprep.subr.bf16.mxu0 0
    %2345 = vmatpush1.bf16.xpose.msra.mxu0 0
    %2346 = vmatprep.subr.bf16.mxu0 0
    %2347 = vmatpush1.bf16.xpose.msra.mxu0 0
    %2348 = vmatprep.subr.bf16.mxu0 0
    %2349 = vmatpush1.bf16.xpose.msra.mxu0 %v2332
    %2350 = vmatprep.subr.bf16.mxu0 0
    %2351 = vmatpush2.bf16.xpose.msra.mxu0 0
    %2352 = vmatprep.subr.bf16.mxu0 0
    %2353 = vmatpush2.bf16.xpose.msra.mxu0 0
    %2354 = vmatprep.subr.bf16.mxu0 0
    %2355 = vmatpush2.bf16.xpose.msra.mxu0 0
    %2356 = vmatprep.subr.bf16.mxu0 0
    %2357 = vmatpush2.bf16.xpose.msra.mxu0 0
    %2358 = vmatprep.subr.bf16.mxu0 0
    %2359 = vmatpush2.bf16.xpose.msra.mxu0 0
    %2360 = vmatprep.subr.bf16.mxu0 0
    %2361 = vmatpush2.bf16.xpose.msra.mxu0 0
    %2362 = vmatprep.subr.bf16.mxu0 0
    %2363 = vmatpush2.bf16.xpose.msra.mxu0 0
    %2364 = vmatprep.subr.bf16.mxu0 0
    %2365 = vmatpush2.bf16.xpose.msra.mxu0 0
    %2366 = vmatprep.mubr.bf16.mxu0 0
    %2367 = vmatmul.mubr.bf16.gmra.mxu0 %v2329
    %v2368 = vpop.f32.mrf.mxu0
    %v2369 = vadd.f32 0.0, %v2368
    %v2370 = vpop.f32.mrf.mxu0
    %v2371 = vpop.f32.mrf.mxu0
    %v2372 = vpop.f32.mrf.mxu0
    %2373 = vdwg.mxu0
    %v2374 = vmul.f32 %v2369, 0.35355338
    %v2375 = vsel %vm872, %v2374, -inf
    %2376 = vmax.xlane.f32.xlu0 %v2375
    %v2377 = vpop.xlane.xlu0 %2376
    %v2378 = vsub.f32 %v2374, %v2377
    %v2379 = vmul.f32 %v2378, 1.442695
    %v2380 = vpow.pop %v2379
    %v2381 = vsel %vm872, %v2380, 0.0
    %2382 = vadd.xlane.f32.xlu0 %v2381
    %v2383 = vpop.xlane.xlu0 %2382
    %v2384 = vrcp.pop %v2383
    %v2385 = vmul.f32 %v2380, %v2384
    %s2386 = scalar_lea.vmem [#allocation23], 40
    %2387 = vst.msk [vmem:[%s2386] sm:$0xff] %vm872, %v2385
    %v2388 = vpack.c.bf16 %v2385, %v2385
    %2390 = vrot.lane.b32.xlu0 %v1706, 120
    %v2391 = vpop.permute.xlu0 %2390
    %v2394 = vsel %vm872, %v2388, 0
    %2396 = vmatprep.subr.bf16.mxu0 0
    %2397 = vmatpush1.bf16.msra.mxu0 0
    %2398 = vmatprep.subr.bf16.mxu0 0
    %2399 = vmatpush1.bf16.msra.mxu0 0
    %2400 = vmatprep.subr.bf16.mxu0 0
    %2401 = vmatpush1.bf16.msra.mxu0 0
    %2402 = vmatprep.subr.bf16.mxu0 0
    %2403 = vmatpush1.bf16.msra.mxu0 0
    %2404 = vmatprep.subr.bf16.mxu0 0
    %2405 = vmatpush1.bf16.msra.mxu0 0
    %2406 = vmatprep.subr.bf16.mxu0 0
    %2407 = vmatpush1.bf16.msra.mxu0 0
    %2408 = vmatprep.subr.bf16.mxu0 0
    %2409 = vmatpush1.bf16.msra.mxu0 0
    %2410 = vmatprep.subr.bf16.mxu0 0
    %2411 = vmatpush1.bf16.msra.mxu0 %v2391
    %2412 = vmatprep.subr.bf16.mxu0 0
    %2413 = vmatpush2.bf16.msra.mxu0 0
    %2414 = vmatprep.subr.bf16.mxu0 0
    %2415 = vmatpush2.bf16.msra.mxu0 0
    %2416 = vmatprep.subr.bf16.mxu0 0
    %2417 = vmatpush2.bf16.msra.mxu0 0
    %2418 = vmatprep.subr.bf16.mxu0 0
    %2419 = vmatpush2.bf16.msra.mxu0 0
    %2420 = vmatprep.subr.bf16.mxu0 0
    %2421 = vmatpush2.bf16.msra.mxu0 0
    %2422 = vmatprep.subr.bf16.mxu0 0
    %2423 = vmatpush2.bf16.msra.mxu0 0
    %2424 = vmatprep.subr.bf16.mxu0 0
    %2425 = vmatpush2.bf16.msra.mxu0 0
    %2426 = vmatprep.subr.bf16.mxu0 0
    %2427 = vmatpush2.bf16.msra.mxu0 0
    %2428 = vmatprep.mubr.bf16.mxu0 0
    %2429 = vmatmul.mubr.bf16.gmra.mxu0 %v2394
    %v2430 = vpop.f32.mrf.mxu0
    %v2431 = vadd.f32 0.0, %v2430
    %v2432 = vpop.f32.mrf.mxu0
    %v2433 = vpop.f32.mrf.mxu0
    %v2434 = vpop.f32.mrf.mxu0
    %2435 = vdwg.mxu0
    %2436 = vrot.lane.b32.xlu0 %v2218, 112
    %v2437 = vpop.permute.xlu0 %2436
    %2438 = vrot.lane.b32.xlu0 %v1643, 112
    %v2439 = vpop.permute.xlu0 %2438
    %v2441 = vsel %vm405, %v2437, 0
    %v2444 = vsel %vm405, %v2439, 0
    %2446 = vmatprep.subr.bf16.mxu0 0
    %2447 = vmatpush1.bf16.xpose.msra.mxu0 0
    %2448 = vmatprep.subr.bf16.mxu0 0
    %2449 = vmatpush1.bf16.xpose.msra.mxu0 0
    %2450 = vmatprep.subr.bf16.mxu0 0
    %2451 = vmatpush1.bf16.xpose.msra.mxu0 0
    %2452 = vmatprep.subr.bf16.mxu0 0
    %2453 = vmatpush1.bf16.xpose.msra.mxu0 0
    %2454 = vmatprep.subr.bf16.mxu0 0
    %2455 = vmatpush1.bf16.xpose.msra.mxu0 0
    %2456 = vmatprep.subr.bf16.mxu0 0
    %2457 = vmatpush1.bf16.xpose.msra.mxu0 0
    %2458 = vmatprep.subr.bf16.mxu0 0
    %2459 = vmatpush1.bf16.xpose.msra.mxu0 0
    %2460 = vmatprep.subr.bf16.mxu0 0
    %2461 = vmatpush1.bf16.xpose.msra.mxu0 %v2444
    %2462 = vmatprep.subr.bf16.mxu0 0
    %2463 = vmatpush2.bf16.xpose.msra.mxu0 0
    %2464 = vmatprep.subr.bf16.mxu0 0
    %2465 = vmatpush2.bf16.xpose.msra.mxu0 0
    %2466 = vmatprep.subr.bf16.mxu0 0
    %2467 = vmatpush2.bf16.xpose.msra.mxu0 0
    %2468 = vmatprep.subr.bf16.mxu0 0
    %2469 = vmatpush2.bf16.xpose.msra.mxu0 0
    %2470 = vmatprep.subr.bf16.mxu0 0
    %2471 = vmatpush2.bf16.xpose.msra.mxu0 0
    %2472 = vmatprep.subr.bf16.mxu0 0
    %2473 = vmatpush2.bf16.xpose.msra.mxu0 0
    %2474 = vmatprep.subr.bf16.mxu0 0
    %2475 = vmatpush2.bf16.xpose.msra.mxu0 0
    %2476 = vmatprep.subr.bf16.mxu0 0
    %2477 = vmatpush2.bf16.xpose.msra.mxu0 0
    %2478 = vmatprep.mubr.bf16.mxu0 0
    %2479 = vmatmul.mubr.bf16.gmra.mxu0 %v2441
    %v2480 = vpop.f32.mrf.mxu0
    %v2481 = vadd.f32 0.0, %v2480
    %v2482 = vpop.f32.mrf.mxu0
    %v2483 = vpop.f32.mrf.mxu0
    %v2484 = vpop.f32.mrf.mxu0
    %2485 = vdwg.mxu0
    %v2486 = vmul.f32 %v2481, 0.35355338
    %v2487 = vsel %vm872, %v2486, -inf
    %2488 = vmax.xlane.f32.xlu0 %v2487
    %v2489 = vpop.xlane.xlu0 %2488
    %v2490 = vsub.f32 %v2486, %v2489
    %v2491 = vmul.f32 %v2490, 1.442695
    %v2492 = vpow.pop %v2491
    %v2493 = vsel %vm872, %v2492, 0.0
    %2494 = vadd.xlane.f32.xlu0 %v2493
    %v2495 = vpop.xlane.xlu0 %2494
    %v2496 = vrcp.pop %v2495
    %v2497 = vmul.f32 %v2492, %v2496
    %s2498 = scalar_lea.vmem [#allocation23], 48
    %2499 = vst.msk [vmem:[%s2498] sm:$0xff] %vm872, %v2497
    %v2500 = vpack.c.bf16 %v2497, %v2497
    %2501 = vrot.lane.b32.xlu0 %v1706, 112
    %v2502 = vpop.permute.xlu0 %2501
    %v2505 = vsel %vm872, %v2500, 0
    %2507 = vmatprep.subr.bf16.mxu0 0
    %2508 = vmatpush1.bf16.msra.mxu0 0
    %2509 = vmatprep.subr.bf16.mxu0 0
    %2510 = vmatpush1.bf16.msra.mxu0 0
    %2511 = vmatprep.subr.bf16.mxu0 0
    %2512 = vmatpush1.bf16.msra.mxu0 0
    %2513 = vmatprep.subr.bf16.mxu0 0
    %2514 = vmatpush1.bf16.msra.mxu0 0
    %2515 = vmatprep.subr.bf16.mxu0 0
    %2516 = vmatpush1.bf16.msra.mxu0 0
    %2517 = vmatprep.subr.bf16.mxu0 0
    %2518 = vmatpush1.bf16.msra.mxu0 0
    %2519 = vmatprep.subr.bf16.mxu0 0
    %2520 = vmatpush1.bf16.msra.mxu0 0
    %2521 = vmatprep.subr.bf16.mxu0 0
    %2522 = vmatpush1.bf16.msra.mxu0 %v2502
    %2523 = vmatprep.subr.bf16.mxu0 0
    %2524 = vmatpush2.bf16.msra.mxu0 0
    %2525 = vmatprep.subr.bf16.mxu0 0
    %2526 = vmatpush2.bf16.msra.mxu0 0
    %2527 = vmatprep.subr.bf16.mxu0 0
    %2528 = vmatpush2.bf16.msra.mxu0 0
    %2529 = vmatprep.subr.bf16.mxu0 0
    %2530 = vmatpush2.bf16.msra.mxu0 0
    %2531 = vmatprep.subr.bf16.mxu0 0
    %2532 = vmatpush2.bf16.msra.mxu0 0
    %2533 = vmatprep.subr.bf16.mxu0 0
    %2534 = vmatpush2.bf16.msra.mxu0 0
    %2535 = vmatprep.subr.bf16.mxu0 0
    %2536 = vmatpush2.bf16.msra.mxu0 0
    %2537 = vmatprep.subr.bf16.mxu0 0
    %2538 = vmatpush2.bf16.msra.mxu0 0
    %2539 = vmatprep.mubr.bf16.mxu0 0
    %2540 = vmatmul.mubr.bf16.gmra.mxu0 %v2505
    %v2541 = vpop.f32.mrf.mxu0
    %v2542 = vadd.f32 0.0, %v2541
    %v2543 = vpop.f32.mrf.mxu0
    %v2544 = vpop.f32.mrf.mxu0
    %v2545 = vpop.f32.mrf.mxu0
    %2546 = vdwg.mxu0
    %2547 = vrot.lane.b32.xlu0 %v2218, 104
    %v2548 = vpop.permute.xlu0 %2547
    %2549 = vrot.lane.b32.xlu0 %v1643, 104
    %v2550 = vpop.permute.xlu0 %2549
    %v2552 = vsel %vm405, %v2548, 0
    %v2555 = vsel %vm405, %v2550, 0
    %2557 = vmatprep.subr.bf16.mxu0 0
    %2558 = vmatpush1.bf16.xpose.msra.mxu0 0
    %2559 = vmatprep.subr.bf16.mxu0 0
    %2560 = vmatpush1.bf16.xpose.msra.mxu0 0
    %2561 = vmatprep.subr.bf16.mxu0 0
    %2562 = vmatpush1.bf16.xpose.msra.mxu0 0
    %2563 = vmatprep.subr.bf16.mxu0 0
    %2564 = vmatpush1.bf16.xpose.msra.mxu0 0
    %2565 = vmatprep.subr.bf16.mxu0 0
    %2566 = vmatpush1.bf16.xpose.msra.mxu0 0
    %2567 = vmatprep.subr.bf16.mxu0 0
    %2568 = vmatpush1.bf16.xpose.msra.mxu0 0
    %2569 = vmatprep.subr.bf16.mxu0 0
    %2570 = vmatpush1.bf16.xpose.msra.mxu0 0
    %2571 = vmatprep.subr.bf16.mxu0 0
    %2572 = vmatpush1.bf16.xpose.msra.mxu0 %v2555
    %2573 = vmatprep.subr.bf16.mxu0 0
    %2574 = vmatpush2.bf16.xpose.msra.mxu0 0
    %2575 = vmatprep.subr.bf16.mxu0 0
    %2576 = vmatpush2.bf16.xpose.msra.mxu0 0
    %2577 = vmatprep.subr.bf16.mxu0 0
    %2578 = vmatpush2.bf16.xpose.msra.mxu0 0
    %2579 = vmatprep.subr.bf16.mxu0 0
    %2580 = vmatpush2.bf16.xpose.msra.mxu0 0
    %2581 = vmatprep.subr.bf16.mxu0 0
    %2582 = vmatpush2.bf16.xpose.msra.mxu0 0
    %2583 = vmatprep.subr.bf16.mxu0 0
    %2584 = vmatpush2.bf16.xpose.msra.mxu0 0
    %2585 = vmatprep.subr.bf16.mxu0 0
    %2586 = vmatpush2.bf16.xpose.msra.mxu0 0
    %2587 = vmatprep.subr.bf16.mxu0 0
    %2588 = vmatpush2.bf16.xpose.msra.mxu0 0
    %2589 = vmatprep.mubr.bf16.mxu0 0
    %2590 = vmatmul.mubr.bf16.gmra.mxu0 %v2552
    %v2591 = vpop.f32.mrf.mxu0
    %v2592 = vadd.f32 0.0, %v2591
    %v2593 = vpop.f32.mrf.mxu0
    %v2594 = vpop.f32.mrf.mxu0
    %v2595 = vpop.f32.mrf.mxu0
    %2596 = vdwg.mxu0
    %v2597 = vmul.f32 %v2592, 0.35355338
    %v2598 = vsel %vm872, %v2597, -inf
    %2599 = vmax.xlane.f32.xlu0 %v2598
    %v2600 = vpop.xlane.xlu0 %2599
    %v2601 = vsub.f32 %v2597, %v2600
    %v2602 = vmul.f32 %v2601, 1.442695
    %v2603 = vpow.pop %v2602
    %v2604 = vsel %vm872, %v2603, 0.0
    %2605 = vadd.xlane.f32.xlu0 %v2604
    %v2606 = vpop.xlane.xlu0 %2605
    %v2607 = vrcp.pop %v2606
    %v2608 = vmul.f32 %v2603, %v2607
    %s2609 = scalar_lea.vmem [#allocation23], 56
    %2610 = vst.msk [vmem:[%s2609] sm:$0xff] %vm872, %v2608
    %v2611 = vpack.c.bf16 %v2608, %v2608
    %2612 = vrot.lane.b32.xlu0 %v1706, 104
    %v2613 = vpop.permute.xlu0 %2612
    %v2616 = vsel %vm872, %v2611, 0
    %2618 = vmatprep.subr.bf16.mxu0 0
    %2619 = vmatpush1.bf16.msra.mxu0 0
    %2620 = vmatprep.subr.bf16.mxu0 0
    %2621 = vmatpush1.bf16.msra.mxu0 0
    %2622 = vmatprep.subr.bf16.mxu0 0
    %2623 = vmatpush1.bf16.msra.mxu0 0
    %2624 = vmatprep.subr.bf16.mxu0 0
    %2625 = vmatpush1.bf16.msra.mxu0 0
    %2626 = vmatprep.subr.bf16.mxu0 0
    %2627 = vmatpush1.bf16.msra.mxu0 0
    %2628 = vmatprep.subr.bf16.mxu0 0
    %2629 = vmatpush1.bf16.msra.mxu0 0
    %2630 = vmatprep.subr.bf16.mxu0 0
    %2631 = vmatpush1.bf16.msra.mxu0 0
    %2632 = vmatprep.subr.bf16.mxu0 0
    %2633 = vmatpush1.bf16.msra.mxu0 %v2613
    %2634 = vmatprep.subr.bf16.mxu0 0
    %2635 = vmatpush2.bf16.msra.mxu0 0
    %2636 = vmatprep.subr.bf16.mxu0 0
    %2637 = vmatpush2.bf16.msra.mxu0 0
    %2638 = vmatprep.subr.bf16.mxu0 0
    %2639 = vmatpush2.bf16.msra.mxu0 0
    %2640 = vmatprep.subr.bf16.mxu0 0
    %2641 = vmatpush2.bf16.msra.mxu0 0
    %2642 = vmatprep.subr.bf16.mxu0 0
    %2643 = vmatpush2.bf16.msra.mxu0 0
    %2644 = vmatprep.subr.bf16.mxu0 0
    %2645 = vmatpush2.bf16.msra.mxu0 0
    %2646 = vmatprep.subr.bf16.mxu0 0
    %2647 = vmatpush2.bf16.msra.mxu0 0
    %2648 = vmatprep.subr.bf16.mxu0 0
    %2649 = vmatpush2.bf16.msra.mxu0 0
    %2650 = vmatprep.mubr.bf16.mxu0 0
    %2651 = vmatmul.mubr.bf16.gmra.mxu0 %v2616
    %v2652 = vpop.f32.mrf.mxu0
    %v2653 = vadd.f32 0.0, %v2652
    %v2654 = vpop.f32.mrf.mxu0
    %v2655 = vpop.f32.mrf.mxu0
    %v2656 = vpop.f32.mrf.mxu0
    %2657 = vdwg.mxu0
    %2659 = vrot.lane.b32.xlu0 %v2431, 8
    %v2660 = vpop.permute.xlu0 %2659
    %2663 = vrot.lane.b32.xlu0 %v2542, 16
    %v2664 = vpop.permute.xlu0 %2663
    %2667 = vrot.lane.b32.xlu0 %v2653, 24
    %v2668 = vpop.permute.xlu0 %2667
    %v2670 = vsel %vm405, %v2318, %v2660
    %v2671 = vsel %vm872, %v2670, %v2664
    %v2672 = vsel %vm874, %v2671, %v2668
    %v2673 = vpack.c.bf16 %v2672, %v2672
    %v2675 = vsel %vm251, %v2673, 0
    %2677 = vmatprep.subr.bf16.mxu0 0
    %2678 = vmatpush1.bf16.msra.mxu0 0
    %2679 = vmatprep.subr.bf16.mxu0 0
    %2680 = vmatpush1.bf16.msra.mxu0 0
    %2681 = vmatprep.subr.bf16.mxu0 0
    %2682 = vmatpush1.bf16.msra.mxu0 0
    %2683 = vmatprep.subr.bf16.mxu0 0
    %2684 = vmatpush1.bf16.msra.mxu0 0
    %2685 = vmatprep.subr.bf16.mxu0 0
    %2686 = vmatpush1.bf16.msra.mxu0 0
    %2687 = vmatprep.subr.bf16.mxu0 0
    %2688 = vmatpush1.bf16.msra.mxu0 0
    %2689 = vmatprep.subr.bf16.mxu0 0
    %2690 = vmatpush1.bf16.msra.mxu0 %v2171
    %2691 = vmatprep.subr.bf16.mxu0 0
    %2692 = vmatpush1.bf16.msra.mxu0 %v2170
    %2693 = vmatprep.subr.bf16.mxu0 0
    %2694 = vmatpush2.bf16.msra.mxu0 0
    %2695 = vmatprep.subr.bf16.mxu0 0
    %2696 = vmatpush2.bf16.msra.mxu0 0
    %2697 = vmatprep.subr.bf16.mxu0 0
    %2698 = vmatpush2.bf16.msra.mxu0 0
    %2699 = vmatprep.subr.bf16.mxu0 0
    %2700 = vmatpush2.bf16.msra.mxu0 0
    %2701 = vmatprep.subr.bf16.mxu0 0
    %2702 = vmatpush2.bf16.msra.mxu0 0
    %2703 = vmatprep.subr.bf16.mxu0 0
    %2704 = vmatpush2.bf16.msra.mxu0 0
    %2705 = vmatprep.subr.bf16.mxu0 0
    %2706 = vmatpush2.bf16.msra.mxu0 0
    %2707 = vmatprep.subr.bf16.mxu0 0
    %2708 = vmatpush2.bf16.msra.mxu0 0
    %2709 = vmatprep.mubr.bf16.mxu0 0
    %2710 = vmatmul.mubr.bf16.gmra.mxu0 %v2675
    %v2711 = vpop.f32.mrf.mxu0
    %v2712 = vadd.f32 0.0, %v2711
    %v2713 = vpop.f32.mrf.mxu0
    %v2714 = vpop.f32.mrf.mxu0
    %v2715 = vpop.f32.mrf.mxu0
    %2716 = vdwg.mxu0
    %2717 = vst.msk [vmem:[#allocation2 + $0x8] sm:$0xff] %vm251, %v2712
    %v2718 = vld [vmem:[#allocation2] sm:$0xff]
    %v2719 = vld [vmem:[#allocation2 + $0x8] sm:$0xff]
    %v2720 = vadd.f32 %v2718, %v1495
    %v2721 = vadd.f32 %v2719, %v1496
    %v2722 = vsel %vm251, %v2720, 0.0
    %2723 = vadd.xlane.f32.xlu0 %v2722
    %v2724 = vpop.xlane.xlu0 %2723
    %v2725 = vsel %vm251, %v2721, 0.0
    %2726 = vadd.xlane.f32.xlu0 %v2725
    %v2727 = vpop.xlane.xlu0 %2726
    %v2728 = vmul.f32 %v2724, %v1456
    %v2729 = vmul.f32 %v2727, %v1456
    %v2730 = vmul.f32 %v2720, %v2720
    %v2731 = vmul.f32 %v2721, %v2721
    %v2732 = vsel %vm251, %v2730, 0.0
    %2733 = vadd.xlane.f32.xlu0 %v2732
    %v2734 = vpop.xlane.xlu0 %2733
    %v2735 = vsel %vm251, %v2731, 0.0
    %2736 = vadd.xlane.f32.xlu0 %v2735
    %v2737 = vpop.xlane.xlu0 %2736
    %v2738 = vmul.f32 %v2734, %v1456
    %v2739 = vmul.f32 %v2737, %v1456
    %v2740 = vmul.f32 %v2728, %v2728
    %v2741 = vmul.f32 %v2729, %v2729
    %v2742 = vsub.f32 %v2738, %v2740
    %v2743 = vsub.f32 %v2739, %v2741
    %v2744 = vsub.f32 %v2720, %v2728
    %v2745 = vsub.f32 %v2721, %v2729
    %v2746 = vadd.f32 %v2742, 1e-06
    %v2747 = vadd.f32 %v2743, 1e-06
    %v2748 = vrsqrt.pop %v2746
    %v2749 = vrsqrt.pop %v2747
    %v2750 = vmul.f32 %v2744, %v2748
    %v2751 = vmul.f32 %v2745, %v2749
    %v2753 = vlaneseq
    %v2754 = vshrl.u32 %v2753, 7
    %v2755 = vsub.s32 0, %v2754
    %v2756 = vrot.slane %v1513, %v2755
    %v2758 = vmul.f32 %v2750, %v2756
    %v2759 = vmul.f32 %v2751, %v2756
    %v2761 = vlaneseq
    %v2762 = vshrl.u32 %v2761, 7
    %v2763 = vsub.s32 0, %v2762
    %v2764 = vrot.slane %v1514, %v2763
    %v2766 = vadd.f32 %v2758, %v2764
    %v2767 = vadd.f32 %v2759, %v2764
    %v2768 = vpack.c.bf16 %v2767, %v2766
    %v2769 = vld [vmem:[#allocation18] sm:$0xf]
    %v2770 = vld [vmem:[#allocation18 + $0x4] sm:$0xf]
    %v2771 = vld [vmem:[#allocation18 + $0x8] sm:$0xf]
    %v2772 = vld [vmem:[#allocation18 + $0xc] sm:$0xf]
    %v2773 = vld [vmem:[%s16] sm:$0x1]
    %v2775 = vlaneseq
    %v2776 = vshrl.u32 %v2775, 7
    %v2777 = vsub.s32 0, %v2776
    %v2778 = vrot.slane %v2773, %v2777
    %v2784 = vunpack.c.l.b16 %v2769
    %v2785 = vunpack.c.l.b16 %v2770
    %v2786 = vunpack.c.l.b16 %v2771
    %v2787 = vunpack.c.l.b16 %v2772
    %v2788 = vpack.c.b16 %v2785, %v2784
    %v2789 = vpack.c.b16 %v2787, %v2786
    %v2793 = vsel %vm251, %v2768, 0
    %2795 = vmatprep.subr.bf16.mxu0 0
    %2796 = vmatpush1.bf16.msra.mxu0 0
    %2797 = vmatprep.subr.bf16.mxu0 0
    %2798 = vmatpush1.bf16.msra.mxu0 0
    %2799 = vmatprep.subr.bf16.mxu0 0
    %2800 = vmatpush1.bf16.msra.mxu0 0
    %2801 = vmatprep.subr.bf16.mxu0 0
    %2802 = vmatpush1.bf16.msra.mxu0 0
    %2803 = vmatprep.subr.bf16.mxu0 0
    %2804 = vmatpush1.bf16.msra.mxu0 0
    %2805 = vmatprep.subr.bf16.mxu0 0
    %2806 = vmatpush1.bf16.msra.mxu0 0
    %2807 = vmatprep.subr.bf16.mxu0 0
    %2808 = vmatpush1.bf16.msra.mxu0 %v2789
    %2809 = vmatprep.subr.bf16.mxu0 0
    %2810 = vmatpush1.bf16.msra.mxu0 %v2788
    %2811 = vmatprep.subr.bf16.mxu0 0
    %2812 = vmatpush2.bf16.msra.mxu0 0
    %2813 = vmatprep.subr.bf16.mxu0 0
    %2814 = vmatpush2.bf16.msra.mxu0 0
    %2815 = vmatprep.subr.bf16.mxu0 0
    %2816 = vmatpush2.bf16.msra.mxu0 0
    %2817 = vmatprep.subr.bf16.mxu0 0
    %2818 = vmatpush2.bf16.msra.mxu0 0
    %2819 = vmatprep.subr.bf16.mxu0 0
    %2820 = vmatpush2.bf16.msra.mxu0 0
    %2821 = vmatprep.subr.bf16.mxu0 0
    %2822 = vmatpush2.bf16.msra.mxu0 0
    %2823 = vmatprep.subr.bf16.mxu0 0
    %2824 = vmatpush2.bf16.msra.mxu0 0
    %2825 = vmatprep.subr.bf16.mxu0 0
    %2826 = vmatpush2.bf16.msra.mxu0 0
    %2827 = vmatprep.mubr.bf16.mxu0 0
    %2828 = vmatmul.mubr.bf16.gmra.mxu0 %v2793
    %v2829 = vpop.f32.mrf.mxu0
    %v2830 = vadd.f32 %v2778, %v2829
    %v2831 = vpop.f32.mrf.mxu0
    %v2832 = vpop.f32.mrf.mxu0
    %v2833 = vadd.f32 %v2778, %v2832
    %v2834 = vpop.f32.mrf.mxu0
    %2835 = vdwg.mxu0
    %v2836 = vmax.f32 %v2830, 0.0
    %v2837 = vmax.f32 %v2833, 0.0
    %v2838 = vpack.c.bf16 %v2837, %v2836
    %v2839 = vld [vmem:[%s17] sm:$0xf]
    %v2840 = vld [vmem:[%s17 + $0x4] sm:$0xf]
    %v2841 = vld [vmem:[%s17 + $0x8] sm:$0xf]
    %v2842 = vld [vmem:[%s17 + $0xc] sm:$0xf]
    %v2843 = vld [vmem:[%s17 + $0x10] sm:$0xf]
    %v2844 = vld [vmem:[%s17 + $0x14] sm:$0xf]
    %v2845 = vld [vmem:[%s17 + $0x18] sm:$0xf]
    %v2846 = vld [vmem:[%s17 + $0x1c] sm:$0xf]
    %v2847 = vld [vmem:[%s18] sm:$0x1]
    %v2849 = vlaneseq
    %v2850 = vshrl.u32 %v2849, 7
    %v2851 = vsub.s32 0, %v2850
    %v2852 = vrot.slane %v2847, %v2851
    %v2862 = vunpack.c.l.b16 %v2839
    %v2863 = vunpack.c.l.b16 %v2840
    %v2864 = vunpack.c.l.b16 %v2841
    %v2865 = vunpack.c.l.b16 %v2842
    %v2866 = vunpack.c.l.b16 %v2843
    %v2867 = vunpack.c.l.b16 %v2844
    %v2868 = vunpack.c.l.b16 %v2845
    %v2869 = vunpack.c.l.b16 %v2846
    %v2870 = vpack.c.b16 %v2863, %v2862
    %v2871 = vpack.c.b16 %v2865, %v2864
    %v2872 = vpack.c.b16 %v2867, %v2866
    %v2873 = vpack.c.b16 %v2869, %v2868
    %vm2878 = vcmask 523264
    %v2880 = vsel %vm2878, %v2838, 0
    %2882 = vmatprep.subr.bf16.mxu0 0
    %2883 = vmatpush1.bf16.msra.mxu0 0
    %2884 = vmatprep.subr.bf16.mxu0 0
    %2885 = vmatpush1.bf16.msra.mxu0 0
    %2886 = vmatprep.subr.bf16.mxu0 0
    %2887 = vmatpush1.bf16.msra.mxu0 0
    %2888 = vmatprep.subr.bf16.mxu0 0
    %2889 = vmatpush1.bf16.msra.mxu0 0
    %2890 = vmatprep.subr.bf16.mxu0 0
    %2891 = vmatpush1.bf16.msra.mxu0 %v2873
    %2892 = vmatprep.subr.bf16.mxu0 0
    %2893 = vmatpush1.bf16.msra.mxu0 %v2872
    %2894 = vmatprep.subr.bf16.mxu0 0
    %2895 = vmatpush1.bf16.msra.mxu0 %v2871
    %2896 = vmatprep.subr.bf16.mxu0 0
    %2897 = vmatpush1.bf16.msra.mxu0 %v2870
    %2898 = vmatprep.subr.bf16.mxu0 0
    %2899 = vmatpush2.bf16.msra.mxu0 0
    %2900 = vmatprep.subr.bf16.mxu0 0
    %2901 = vmatpush2.bf16.msra.mxu0 0
    %2902 = vmatprep.subr.bf16.mxu0 0
    %2903 = vmatpush2.bf16.msra.mxu0 0
    %2904 = vmatprep.subr.bf16.mxu0 0
    %2905 = vmatpush2.bf16.msra.mxu0 0
    %2906 = vmatprep.subr.bf16.mxu0 0
    %2907 = vmatpush2.bf16.msra.mxu0 0
    %2908 = vmatprep.subr.bf16.mxu0 0
    %2909 = vmatpush2.bf16.msra.mxu0 0
    %2910 = vmatprep.subr.bf16.mxu0 0
    %2911 = vmatpush2.bf16.msra.mxu0 0
    %2912 = vmatprep.subr.bf16.mxu0 0
    %2913 = vmatpush2.bf16.msra.mxu0 0
    %2914 = vmatprep.mubr.bf16.mxu0 0
    %2915 = vmatmul.mubr.bf16.gmra.mxu0 %v2880
    %v2916 = vpop.f32.mrf.mxu0
    %v2917 = vadd.f32 %v2852, %v2916
    %v2918 = vpop.f32.mrf.mxu0
    %v2919 = vpop.f32.mrf.mxu0
    %v2920 = vadd.f32 %v2852, %v2919
    %v2921 = vpop.f32.mrf.mxu0
    %2922 = vdwg.mxu0
    %v2923 = vadd.f32 %v2917, %v2766
    %v2924 = vadd.f32 %v2920, %v2767
    %v2925 = vld [vmem:[%s19] sm:$0x1]
    %v2926 = vld [vmem:[%s20] sm:$0x1]
    %v2927 = vsel %vm251, %v2923, 0.0
    %2928 = vadd.xlane.f32.xlu0 %v2927
    %v2929 = vpop.xlane.xlu0 %2928
    %v2930 = vsel %vm251, %v2924, 0.0
    %2931 = vadd.xlane.f32.xlu0 %v2930
    %v2932 = vpop.xlane.xlu0 %2931
    %v2933 = vmul.f32 %v2929, %v1456
    %v2934 = vmul.f32 %v2932, %v1456
    %v2935 = vmul.f32 %v2923, %v2923
    %v2936 = vmul.f32 %v2924, %v2924
    %v2937 = vsel %vm251, %v2935, 0.0
    %2938 = vadd.xlane.f32.xlu0 %v2937
    %v2939 = vpop.xlane.xlu0 %2938
    %v2940 = vsel %vm251, %v2936, 0.0
    %2941 = vadd.xlane.f32.xlu0 %v2940
    %v2942 = vpop.xlane.xlu0 %2941
    %v2943 = vmul.f32 %v2939, %v1456
    %v2944 = vmul.f32 %v2942, %v1456
    %v2945 = vmul.f32 %v2933, %v2933
    %v2946 = vmul.f32 %v2934, %v2934
    %v2947 = vsub.f32 %v2943, %v2945
    %v2948 = vsub.f32 %v2944, %v2946
    %v2949 = vsub.f32 %v2923, %v2933
    %v2950 = vsub.f32 %v2924, %v2934
    %v2951 = vadd.f32 %v2947, 1e-06
    %v2952 = vadd.f32 %v2948, 1e-06
    %v2953 = vrsqrt.pop %v2951
    %v2954 = vrsqrt.pop %v2952
    %v2955 = vmul.f32 %v2949, %v2953
    %v2956 = vmul.f32 %v2950, %v2954
    %v2958 = vlaneseq
    %v2959 = vshrl.u32 %v2958, 7
    %v2960 = vsub.s32 0, %v2959
    %v2961 = vrot.slane %v2925, %v2960
    %v2963 = vmul.f32 %v2955, %v2961
    %v2964 = vmul.f32 %v2956, %v2961
    %v2966 = vlaneseq
    %v2967 = vshrl.u32 %v2966, 7
    %v2968 = vsub.s32 0, %v2967
    %v2969 = vrot.slane %v2926, %v2968
    %v2971 = vadd.f32 %v2963, %v2969
    %v2972 = vadd.f32 %v2964, %v2969
    %2973 = vst.msk [vmem:[#allocation20] sm:$0xff] %vm251, %v2971
    %2974 = vst.msk [vmem:[#allocation20 + $0x8] sm:$0xff] %vm251, %v2972
    // Predicated region
    $region126: #{tpu_custom_call.1} parent=1 // pred_check
      _
    $region127: #{tpu_custom_call.1} parent=1 // pred_check_branch
      %2976 = sbr.rel (0) target = $region129
    $region128: #{tpu_custom_call.1} parent=1 // pred_region
      %s2978 = ssub.s32 256, 256
      %2979 = vsyncadd [#allocation5], %s2978
      %s2980 = sshll.u32 [#allocation20], 4
      %s2981 = int_to_ptr.vmem [resolvable:$true] %s2980
      %2986 = dma.vmem_to_hbm [thread:$0]  %s2981, 256, %s21, [#allocation5], 128, 128, 8
    $region129: #{tpu_custom_call.1} parent=1 // pred_fallthru
      _
    // Predicated region
    $region130: #{tpu_custom_call.1} parent=1 // pred_check
      _
    $region131: #{tpu_custom_call.1} parent=1 // pred_check_branch
      %2988 = sbr.rel (0) target = $region133
    $region132: #{tpu_custom_call.1} parent=1 // pred_region
      %s2990 = ssub.s32 1024, 1024
      %2991 = vsyncadd [#allocation22], %s2990
      %s2992 = sshll.u32 [#allocation21], 4
      %s2993 = int_to_ptr.vmem [resolvable:$true] %s2992
      %2998 = dma.vmem_to_hbm [thread:$0]  %s2993, 1024, %s22, [#allocation22], 128, 128, 8
    $region133: #{tpu_custom_call.1} parent=1 // pred_fallthru
      _
    // Predicated region
    $region134: #{tpu_custom_call.1} parent=1 // pred_check
      _
    $region135: #{tpu_custom_call.1} parent=1 // pred_check_branch
      %3000 = sbr.rel (0) target = $region137
    $region136: #{tpu_custom_call.1} parent=1 // pred_region
      %s3002 = ssub.s32 1024, 1024
      %3003 = vsyncadd [#allocation22], %s3002
      %s3004 = sshll.u32 [#allocation23], 4
      %s3005 = int_to_ptr.vmem [resolvable:$true] %s3004
      %3010 = dma.vmem_to_hbm [thread:$0]  %s3005, 1024, %s23, [#allocation22], 128, 128, 8
    $region137: #{tpu_custom_call.1} parent=1 // pred_fallthru
      _
    // Predicated region
    $region138: #{tpu_custom_call.1} parent=1 // pred_check
      _
    $region139: #{tpu_custom_call.1} parent=1 // pred_check_branch
      %3012 = sbr.rel (0) target = $region141
    $region140: #{tpu_custom_call.1} parent=1 // pred_region
      %3013 = dma.done [#allocation5], 256
    $region141: #{tpu_custom_call.1} parent=1 // pred_fallthru
      _
    // Predicated region
    $region142: #{tpu_custom_call.1} parent=1 // pred_check
      _
    $region143: #{tpu_custom_call.1} parent=1 // pred_check_branch
      %3015 = sbr.rel (0) target = $region145
    $region144: #{tpu_custom_call.1} parent=1 // pred_region
      %3016 = dma.done [#allocation22], 1024
    $region145: #{tpu_custom_call.1} parent=1 // pred_fallthru
      _
    // Predicated region
    $region146: #{tpu_custom_call.1} parent=1 // pred_check
      _
    $region147: #{tpu_custom_call.1} parent=1 // pred_check_branch
      %3018 = sbr.rel (0) target = $region149
    $region148: #{tpu_custom_call.1} parent=1 // pred_region
      %3019 = dma.done [#allocation22], 1024
    $region149: #{tpu_custom_call.1} parent=1 // pred_fallthru
      _
    %3020 = vsyncpa [#allocation4], 1
    %3021 = vsyncpa [#allocation7], 1
    %3022 = vsyncpa [#allocation10], 1
    %3023 = vsyncpa [#allocation13], 1
    %3024 = vsyncpa [#allocation16], 1
    %3025 = vsyncpa [#allocation19], 1
    %3026 = vsyncpa [#allocation5], 1
    %3027 = vsyncpa [#allocation22], 1

</llo_original>
